<compile_context>
chip_gen: v5e
topology: v5e:2x2
jax: 0.10.0
libtpu: 0.0.40
codegen_flags: <defaults>
</compile_context>

<pallas_src>
import functools
import numpy as np
import jax
import jax.numpy as jnp
from jax import lax
from jax.experimental import pallas as pl
from jax.experimental.pallas import tpu as pltpu


# ---------------------------------------------------------------------------
# Per-generation tuning helpers
# ---------------------------------------------------------------------------
@functools.lru_cache(maxsize=None)
def _vmem_limit_bytes():
    """~96 MiB on 128 MiB-VMEM chips (v5e/v6e), ~48 MiB on v7x (64 MiB physical)."""
    try:
        cap = int(pltpu.get_tpu_info().vmem_capacity_bytes)
    except Exception:
        return 32 * 1024 * 1024
    return int(min(96 * 1024 * 1024, max(32 * 1024 * 1024, (cap * 3) // 4)))


def _pick_dz(N, D, Hp, Wp, Cin, H, W, Cout, itemsize):
    """Largest depth batch DZ (divisor of D, <=8) whose double-buffered blocks fit a
    small budget, preferring >=2 total grid steps so megacore chips keep both cores busy."""
    budget = 12 * 1024 * 1024
    best = 1
    for dz in range(1, min(D, 8) + 1):
        if D % dz:
            continue
        if dz > 1 and N * (D // dz) < 2:
            continue
        in_bytes = 2 * (dz + 2) * Hp * Wp * Cin * itemsize   # double-buffered input window
        out_bytes = 2 * dz * H * W * Cout * itemsize          # double-buffered output block
        if in_bytes + out_bytes <= budget:
            best = dz
    return best


# ---------------------------------------------------------------------------
# Pallas kernel: 3x3x3 'same' conv (stride 1, padding 1, no bias) + ReLU, NDHWC
# ---------------------------------------------------------------------------
def _conv3d_relu_kernel(DZ, H, W, xm_ref, xh1_ref, xh2_ref, w_ref, o_ref):
    """One (n, depth-block) step producing DZ output depth slices.

    xm_ref : (1, DZ, Hp, Wp, Cin)   padded input depth slabs [z*DZ, z*DZ+DZ)
    xh1_ref: (1, 1,  Hp, Wp, Cin)   padded input depth slab   z*DZ+DZ
    xh2_ref: (1, 1,  Hp, Wp, Cin)   padded input depth slab   z*DZ+DZ+1
    w_ref  : (3, 9*Cin, Cout)       per-kx weights; contraction ordered (ky, kz, Cin)
    o_ref  : (1, DZ, H*W, Cout)
    """
    Cin = xm_ref.shape[-1]

    def slab(d):                      # d in [0, DZ+2), static Python index
        if d < DZ:
            return xm_ref[0, d]
        if d == DZ:
            return xh1_ref[0, 0]
        return xh2_ref[0, 0]

    for zz in range(DZ):              # static unroll over the depth batch
        # Fold kz and ky taps into the contraction axis: each dot contracts 9*Cin.
        zcat = jnp.concatenate([slab(zz + kz) for kz in range(3)], axis=-1)     # (Hp, Wp, 3Cin)
        ycat = jnp.concatenate([zcat[ky:ky + H] for ky in range(3)], axis=-1)   # (H,  Wp, 9Cin)
        acc = None
        for kx in range(3):
            lhs = ycat[:, kx:kx + W, :].reshape(H * W, 9 * Cin)
            part = jnp.dot(lhs, w_ref[kx], preferred_element_type=jnp.float32)
            acc = part if acc is None else acc + part           # register accumulation
        o_ref[0, zz] = jnp.maximum(acc, 0.0).astype(o_ref.dtype)


def _conv3x3x3_relu(x_ndhwc, w_flat, mxu_dtype=None):
    """3x3x3 'same' conv (padding=1, stride 1, bias=False) + ReLU on NDHWC input.

    w_flat: (3, 9*Cin, Cout) pre-flattened weights indexed [kx, (ky, kz, Cin), Cout].
    """
    N, D, H, W, Cin = x_ndhwc.shape
    Cout = w_flat.shape[-1]
    assert w_flat.shape == (3, 9 * Cin, Cout)

    out_dtype = x_ndhwc.dtype
    # Pad the (already normalized) input once: conv zero-padding == zeros of the GN output.
    xp = jnp.pad(x_ndhwc, ((0, 0), (1, 1), (1, 1), (1, 1), (0, 0)))
    if mxu_dtype is not None:          # optional bf16 feed for v6e/v7x MXU; accumulation stays f32
        xp = xp.astype(mxu_dtype)
        w_flat = w_flat.astype(mxu_dtype)
    Hp, Wp = H + 2, W + 2
    DZ = _pick_dz(N, D, Hp, Wp, Cin, H, W, Cout, xp.dtype.itemsize)

    kern = functools.partial(_conv3d_relu_kernel, DZ, H, W)
    out = pl.pallas_call(
        kern,
        out_shape=jax.ShapeDtypeStruct((N, D, H * W, Cout), out_dtype),
        grid=(N, D // DZ),
        in_specs=[
            # Depth-batched window per step as three NON-overlapping views of the same padded
            # array: DZ main slabs + 2 halo slabs -> exactly DZ+2 slabs fetched per step.
            pl.BlockSpec((1, DZ, Hp, Wp, Cin), lambda n, z: (n, z, 0, 0, 0)),
            pl.BlockSpec((1, 1, Hp, Wp, Cin), lambda n, z: (n, z * DZ + DZ, 0, 0, 0)),
            pl.BlockSpec((1, 1, Hp, Wp, Cin), lambda n, z: (n, z * DZ + DZ + 1, 0, 0, 0)),
            pl.BlockSpec((3, 9 * Cin, Cout), lambda n, z: (0, 0, 0)),   # VMEM-resident weights
        ],
        # Store MXU-native (H*W, Cout) rows; the (N, D, H, W, Cout) reshape below is free.
        out_specs=pl.BlockSpec((1, DZ, H * W, Cout), lambda n, z: (n, z, 0, 0)),
        compiler_params=pltpu.CompilerParams(
            dimension_semantics=("parallel", "parallel"),
            vmem_limit_bytes=_vmem_limit_bytes()),
    )(xp, xp, xp, w_flat)
    return out.reshape(N, D, H, W, Cout)


# ---------------------------------------------------------------------------
# Thin JAX glue: pooling + GroupNorm (memory-bound; conv hot path is in Pallas)
# ---------------------------------------------------------------------------
def _resolve_num_groups(num_channels, num_groups):
    # mirrors create_conv: fall back to a single group when channels < num_groups
    if num_channels < num_groups:
        num_groups = 1
    assert num_channels % num_groups == 0
    return num_groups


def _group_norm_ndhwc(x, gamma, beta, num_groups, eps=1e-5):
    N, D, H, W, C = x.shape
    g = num_groups
    xg = x.reshape(N, D, H, W, g, C // g)
    mean = xg.mean(axis=(1, 2, 3, 5), keepdims=True)
    var = xg.var(axis=(1, 2, 3, 5), keepdims=True)
    xn = ((xg - mean) * lax.rsqrt(var + eps)).reshape(N, D, H, W, C)
    # XLA fuses this normalize+affine into the jnp.pad producer -> one HBM pass before the conv.
    return xn * gamma + beta


def _pool3d_ndhwc(x, k, pool_type):
    # TODO(synk): pooling is a memory-bound reshape+reduce left to XLA; it could be fused
    # into the first conv layer's GN-stats pass / input DMA.
    N, D, H, W, C = x.shape
    Do, Ho, Wo = D // k, H // k, W // k
    xr = x[:, :Do * k, :Ho * k, :Wo * k, :].reshape(N, Do, k, Ho, k, Wo, k, C)
    if pool_type == 'max':
        return xr.max(axis=(2, 4, 6))
    return xr.mean(axis=(2, 4, 6))


# ---------------------------------------------------------------------------
# Module wrapper mirroring pytorch3dunet Encoder
# ---------------------------------------------------------------------------
class EncoderPallas:
    """Encoder = optional MaxPool3d/AvgPool3d + DoubleConv(encoder=True, order='gcr')."""

    def __init__(self, in_channels, out_channels, conv_kernel_size=3,
                 apply_pooling=True, pool_kernel_size=2, pool_type='max',
                 conv_layer_order='gcr', num_groups=8, padding=1, *,
                 key=None, dtype=jnp.float32):
        assert pool_type in ('max', 'avg')
        # TODO(synk): only the default layer order 'gcr' (GroupNorm->Conv3d->ReLU) with
        # kernel_size=3, padding=1 is implemented.
        assert conv_layer_order == 'gcr' and conv_kernel_size == 3 and padding == 1
        self.apply_pooling = apply_pooling
        self.pool_kernel_size = pool_kernel_size
        self.pool_type = pool_type

        # DoubleConv(encoder=True) channel plumbing
        conv1_in = in_channels
        conv1_out = max(out_channels // 2, in_channels)
        conv2_in, conv2_out = conv1_out, out_channels

        if key is None:
            key = jax.random.PRNGKey(42)
        keys = jax.random.split(key, 6)
        self.layers = []
        for i, (cin, cout) in enumerate(((conv1_in, conv1_out), (conv2_in, conv2_out))):
            kw, kg, kb = keys[3 * i:3 * i + 3]
            bound = 1.0 / np.sqrt(cin * conv_kernel_size ** 3)
            # PyTorch Conv3d layout (Cout, Cin, kz, ky, kx); bias=False because 'g' in order
            w_oikkk = jax.random.uniform(kw, (cout, cin, 3, 3, 3), dtype, -bound, bound)
            gamma = jax.random.uniform(kg, (cin,), dtype, 0.5, 1.5)
            beta = jax.random.uniform(kb, (cin,), dtype, -0.5, 0.5)
            groups = _resolve_num_groups(cin, num_groups)   # GN sits before the conv
            # Pre-flatten weights for the folded-tap kernel: (kx, (ky, kz, Cin), Cout)
            w_flat = jnp.transpose(w_oikkk, (4, 3, 2, 1, 0)).reshape(3, 9 * cin, cout)
            self.layers.append(dict(
                w_oikkk=w_oikkk, w_flat=w_flat,
                gamma=gamma, beta=beta, groups=groups))

    def __call__(self, x_ncdhw, mxu_dtype=None):
        x = jnp.transpose(x_ncdhw, (0, 2, 3, 4, 1))            # NCDHW -> NDHWC
        if self.apply_pooling:
            x = _pool3d_ndhwc(x, self.pool_kernel_size, self.pool_type)
        for lyr in self.layers:
            x = _group_norm_ndhwc(x, lyr['gamma'], lyr['beta'], lyr['groups'])
            x = _conv3x3x3_relu(x, lyr['w_flat'], mxu_dtype=mxu_dtype)  # Pallas: conv + ReLU
        return jnp.transpose(x, (0, 4, 1, 2, 3))               # back to NCDHW


# ---------------------------------------------------------------------------
# Pure-JAX reference (NCDHW, XLA conv) for validation only
# ---------------------------------------------------------------------------
def _encoder_ref(x_ncdhw, module):
    x = x_ncdhw
    if module.apply_pooling:
        k = module.pool_kernel_size
        if module.pool_type == 'max':
            x = lax.reduce_window(x, -jnp.inf, lax.max,
                                  (1, 1, k, k, k), (1, 1, k, k, k), 'VALID')
        else:
            x = lax.reduce_window(x, 0.0, lax.add,
                                  (1, 1, k, k, k), (1, 1, k, k, k), 'VALID') / (k ** 3)
    for lyr in module.layers:
        C = lyr['gamma'].shape[0]
        g = lyr['groups']
        N, _, D, H, W = x.shape
        xg = x.reshape(N, g, C // g, D, H, W)
        mean = xg.mean(axis=(2, 3, 4, 5), keepdims=True)
        var = xg.var(axis=(2, 3, 4, 5), keepdims=True)
        xn = ((xg - mean) / jnp.sqrt(var + 1e-5)).reshape(N, C, D, H, W)
        xn = xn * lyr['gamma'].reshape(1, C, 1, 1, 1) + lyr['beta'].reshape(1, C, 1, 1, 1)
        y = lax.conv_general_dilated(
            xn, lyr['w_oikkk'], window_strides=(1, 1, 1),
            padding=[(1, 1), (1, 1), (1, 1)],
            dimension_numbers=('NCDHW', 'OIDHW', 'NCDHW'),
            precision=lax.Precision.HIGHEST)
        x = jnp.maximum(y, 0.0)
    return x


if __name__ == "__main__":
    root = jax.random.PRNGKey(0)
    k_x, k_params = jax.random.split(root)

    N, C_in, C_out = 2, 4, 16
    D = H = W = 16
    x = jax.random.normal(k_x, (N, C_in, D, H, W), jnp.float32)

    enc = EncoderPallas(C_in, C_out, key=k_params)
    fwd = jax.jit(lambda inp: enc(inp))
    y = jax.block_until_ready(fwd(x))
    assert y.shape == (N, C_out, D // 2, H // 2, W // 2), y.shape

    y_ref = jax.block_until_ready(_encoder_ref(x, enc))
    np.testing.assert_allclose(np.asarray(y), np.asarray(y_ref), rtol=1e-3, atol=1e-3)

    print("KERNEL_OK")
</pallas_src>

<mosaic_0001>
module attributes {stable_mosaic.version = 11 : i64} {
  func.func @_conv3d_relu_kernel(%arg0: i32, %arg1: i32, %arg2: memref<1x8x10x10x4xf32, #tpu.memory_space<vmem>>, %arg3: memref<1x1x10x10x4xf32, #tpu.memory_space<vmem>>, %arg4: memref<1x1x10x10x4xf32, #tpu.memory_space<vmem>>, %arg5: memref<3x36x8xf32, #tpu.memory_space<vmem>>, %arg6: memref<1x8x64x8xf32, #tpu.memory_space<vmem>>) attributes {dimension_semantics = [#tpu.dimension_semantics<parallel>, #tpu.dimension_semantics<parallel>], iteration_bounds = array<i64: 2, 1>, scalar_prefetch = 0 : i64, scratch_operands = 0 : i64, tpu.core_type = #tpu.core_type<tc>, window_params = [{transform_indices = @transform_0, window_bounds = array<i64: 1, 8, 10, 10, 4>}, {transform_indices = @transform_1, window_bounds = array<i64: 1, 1, 10, 10, 4>}, {transform_indices = @transform_2, window_bounds = array<i64: 1, 1, 10, 10, 4>}, {pipeline_mode = #tpu.pipeline_mode<synchronous>, transform_indices = @transform_3, window_bounds = array<i64: 3, 36, 8>}, {transform_indices = @transform_4, window_bounds = array<i64: 1, 8, 64, 8>}]} {
    %c0 = arith.constant 0 : index
    %c0_0 = arith.constant 0 : index
    %c0_1 = arith.constant 0 : index
    %c0_2 = arith.constant 0 : index
    %c0_3 = arith.constant 0 : index
    %0 = vector.load %arg2[%c0, %c0_0, %c0_1, %c0_2, %c0_3] : memref<1x8x10x10x4xf32, #tpu.memory_space<vmem>>, vector<1x1x10x10x4xf32>
    %1 = vector.shape_cast %0 : vector<1x1x10x10x4xf32> to vector<10x10x4xf32>
    %c0_4 = arith.constant 0 : index
    %c1 = arith.constant 1 : index
    %c0_5 = arith.constant 0 : index
    %c0_6 = arith.constant 0 : index
    %c0_7 = arith.constant 0 : index
    %2 = vector.load %arg2[%c0_4, %c1, %c0_5, %c0_6, %c0_7] : memref<1x8x10x10x4xf32, #tpu.memory_space<vmem>>, vector<1x1x10x10x4xf32>
    %3 = vector.shape_cast %2 : vector<1x1x10x10x4xf32> to vector<10x10x4xf32>
    %c0_8 = arith.constant 0 : index
    %c2 = arith.constant 2 : index
    %c0_9 = arith.constant 0 : index
    %c0_10 = arith.constant 0 : index
    %c0_11 = arith.constant 0 : index
    %4 = vector.load %arg2[%c0_8, %c2, %c0_9, %c0_10, %c0_11] : memref<1x8x10x10x4xf32, #tpu.memory_space<vmem>>, vector<1x1x10x10x4xf32>
    %5 = vector.shape_cast %4 : vector<1x1x10x10x4xf32> to vector<10x10x4xf32>
    %6 = tpu.concatenate %1, %3, %5 in 2 : vector<10x10x4xf32>, vector<10x10x4xf32>, vector<10x10x4xf32> -> vector<10x10x12xf32>
    %7 = vector.extract_strided_slice %6 {offsets = [0, 0, 0], sizes = [8, 10, 12], strides = [1, 1, 1]} : vector<10x10x12xf32> to vector<8x10x12xf32>
    %8 = vector.extract_strided_slice %6 {offsets = [1, 0, 0], sizes = [8, 10, 12], strides = [1, 1, 1]} : vector<10x10x12xf32> to vector<8x10x12xf32>
    %9 = vector.extract_strided_slice %6 {offsets = [2, 0, 0], sizes = [8, 10, 12], strides = [1, 1, 1]} : vector<10x10x12xf32> to vector<8x10x12xf32>
    %10 = tpu.concatenate %7, %8, %9 in 2 : vector<8x10x12xf32>, vector<8x10x12xf32>, vector<8x10x12xf32> -> vector<8x10x36xf32>
    %11 = vector.extract_strided_slice %10 {offsets = [0, 0, 0], sizes = [8, 8, 36], strides = [1, 1, 1]} : vector<8x10x36xf32> to vector<8x8x36xf32>
    %12 = vector.shape_cast %11 : vector<8x8x36xf32> to vector<64x36xf32>
    %c0_12 = arith.constant 0 : index
    %c0_13 = arith.constant 0 : index
    %c0_14 = arith.constant 0 : index
    %13 = vector.load %arg5[%c0_12, %c0_13, %c0_14] : memref<3x36x8xf32, #tpu.memory_space<vmem>>, vector<1x36x8xf32>
    %14 = vector.shape_cast %13 : vector<1x36x8xf32> to vector<36x8xf32>
    %cst = arith.constant dense<0.000000e+00> : vector<64x8xf32>
    %15 = tpu.matmul %12, %14, %cst {dimension_numbers = #tpu.dot_dimension_numbers<[1], [0], [0], [1], [0, 0, 1, 1], [], []>} : vector<64x36xf32>, vector<36x8xf32>, vector<64x8xf32> -> vector<64x8xf32>
    %16 = vector.extract_strided_slice %10 {offsets = [0, 1, 0], sizes = [8, 8, 36], strides = [1, 1, 1]} : vector<8x10x36xf32> to vector<8x8x36xf32>
    %17 = vector.shape_cast %16 : vector<8x8x36xf32> to vector<64x36xf32>
    %c1_15 = arith.constant 1 : index
    %c0_16 = arith.constant 0 : index
    %c0_17 = arith.constant 0 : index
    %18 = vector.load %arg5[%c1_15, %c0_16, %c0_17] : memref<3x36x8xf32, #tpu.memory_space<vmem>>, vector<1x36x8xf32>
    %19 = vector.shape_cast %18 : vector<1x36x8xf32> to vector<36x8xf32>
    %cst_18 = arith.constant dense<0.000000e+00> : vector<64x8xf32>
    %20 = tpu.matmul %17, %19, %cst_18 {dimension_numbers = #tpu.dot_dimension_numbers<[1], [0], [0], [1], [0, 0, 1, 1], [], []>} : vector<64x36xf32>, vector<36x8xf32>, vector<64x8xf32> -> vector<64x8xf32>
    %21 = arith.addf %15, %20 : vector<64x8xf32>
    %22 = vector.extract_strided_slice %10 {offsets = [0, 2, 0], sizes = [8, 8, 36], strides = [1, 1, 1]} : vector<8x10x36xf32> to vector<8x8x36xf32>
    %23 = vector.shape_cast %22 : vector<8x8x36xf32> to vector<64x36xf32>
    %c2_19 = arith.constant 2 : index
    %c0_20 = arith.constant 0 : index
    %c0_21 = arith.constant 0 : index
    %24 = vector.load %arg5[%c2_19, %c0_20, %c0_21] : memref<3x36x8xf32, #tpu.memory_space<vmem>>, vector<1x36x8xf32>
    %25 = vector.shape_cast %24 : vector<1x36x8xf32> to vector<36x8xf32>
    %cst_22 = arith.constant dense<0.000000e+00> : vector<64x8xf32>
    %26 = tpu.matmul %23, %25, %cst_22 {dimension_numbers = #tpu.dot_dimension_numbers<[1], [0], [0], [1], [0, 0, 1, 1], [], []>} : vector<64x36xf32>, vector<36x8xf32>, vector<64x8xf32> -> vector<64x8xf32>
    %27 = arith.addf %21, %26 : vector<64x8xf32>
    %cst_23 = arith.constant 0.000000e+00 : f32
    %28 = vector.broadcast %cst_23 : f32 to vector<64x8xf32>
    %29 = arith.maximumf %27, %28 : vector<64x8xf32>
    %c0_24 = arith.constant 0 : index
    %c0_25 = arith.constant 0 : index
    %c0_26 = arith.constant 0 : index
    %c0_27 = arith.constant 0 : index
    %30 = vector.load %arg6[%c0_24, %c0_25, %c0_26, %c0_27] : memref<1x8x64x8xf32, #tpu.memory_space<vmem>>, vector<1x1x64x8xf32>
    %31 = vector.shape_cast %30 : vector<1x1x64x8xf32> to vector<64x8xf32>
    %32 = vector.shape_cast %29 : vector<64x8xf32> to vector<1x1x64x8xf32>
    tpu.vector_store %arg6[%c0_24, %c0_25, %c0_26, %c0_27], %32 {strides = array<i32>} : memref<1x8x64x8xf32, #tpu.memory_space<vmem>>, vector<1x1x64x8xf32>,
    %c0_28 = arith.constant 0 : index
    %c1_29 = arith.constant 1 : index
    %c0_30 = arith.constant 0 : index
    %c0_31 = arith.constant 0 : index
    %c0_32 = arith.constant 0 : index
    %33 = vector.load %arg2[%c0_28, %c1_29, %c0_30, %c0_31, %c0_32] : memref<1x8x10x10x4xf32, #tpu.memory_space<vmem>>, vector<1x1x10x10x4xf32>
    %34 = vector.shape_cast %33 : vector<1x1x10x10x4xf32> to vector<10x10x4xf32>
    %c0_33 = arith.constant 0 : index
    %c2_34 = arith.constant 2 : index
    %c0_35 = arith.constant 0 : index
    %c0_36 = arith.constant 0 : index
    %c0_37 = arith.constant 0 : index
    %35 = vector.load %arg2[%c0_33, %c2_34, %c0_35, %c0_36, %c0_37] : memref<1x8x10x10x4xf32, #tpu.memory_space<vmem>>, vector<1x1x10x10x4xf32>
    %36 = vector.shape_cast %35 : vector<1x1x10x10x4xf32> to vector<10x10x4xf32>
    %c0_38 = arith.constant 0 : index
    %c3 = arith.constant 3 : index
    %c0_39 = arith.constant 0 : index
    %c0_40 = arith.constant 0 : index
    %c0_41 = arith.constant 0 : index
    %37 = vector.load %arg2[%c0_38, %c3, %c0_39, %c0_40, %c0_41] : memref<1x8x10x10x4xf32, #tpu.memory_space<vmem>>, vector<1x1x10x10x4xf32>
    %38 = vector.shape_cast %37 : vector<1x1x10x10x4xf32> to vector<10x10x4xf32>
    %39 = tpu.concatenate %34, %36, %38 in 2 : vector<10x10x4xf32>, vector<10x10x4xf32>, vector<10x10x4xf32> -> vector<10x10x12xf32>
    %40 = vector.extract_strided_slice %39 {offsets = [0, 0, 0], sizes = [8, 10, 12], strides = [1, 1, 1]} : vector<10x10x12xf32> to vector<8x10x12xf32>
    %41 = vector.extract_strided_slice %39 {offsets = [1, 0, 0], sizes = [8, 10, 12], strides = [1, 1, 1]} : vector<10x10x12xf32> to vector<8x10x12xf32>
    %42 = vector.extract_strided_slice %39 {offsets = [2, 0, 0], sizes = [8, 10, 12], strides = [1, 1, 1]} : vector<10x10x12xf32> to vector<8x10x12xf32>
    %43 = tpu.concatenate %40, %41, %42 in 2 : vector<8x10x12xf32>, vector<8x10x12xf32>, vector<8x10x12xf32> -> vector<8x10x36xf32>
    %44 = vector.extract_strided_slice %43 {offsets = [0, 0, 0], sizes = [8, 8, 36], strides = [1, 1, 1]} : vector<8x10x36xf32> to vector<8x8x36xf32>
    %45 = vector.shape_cast %44 : vector<8x8x36xf32> to vector<64x36xf32>
    %c0_42 = arith.constant 0 : index
    %c0_43 = arith.constant 0 : index
    %c0_44 = arith.constant 0 : index
    %46 = vector.load %arg5[%c0_42, %c0_43, %c0_44] : memref<3x36x8xf32, #tpu.memory_space<vmem>>, vector<1x36x8xf32>
    %47 = vector.shape_cast %46 : vector<1x36x8xf32> to vector<36x8xf32>
    %cst_45 = arith.constant dense<0.000000e+00> : vector<64x8xf32>
    %48 = tpu.matmul %45, %47, %cst_45 {dimension_numbers = #tpu.dot_dimension_numbers<[1], [0], [0], [1], [0, 0, 1, 1], [], []>} : vector<64x36xf32>, vector<36x8xf32>, vector<64x8xf32> -> vector<64x8xf32>
    %49 = vector.extract_strided_slice %43 {offsets = [0, 1, 0], sizes = [8, 8, 36], strides = [1, 1, 1]} : vector<8x10x36xf32> to vector<8x8x36xf32>
    %50 = vector.shape_cast %49 : vector<8x8x36xf32> to vector<64x36xf32>
    %c1_46 = arith.constant 1 : index
    %c0_47 = arith.constant 0 : index
    %c0_48 = arith.constant 0 : index
    %51 = vector.load %arg5[%c1_46, %c0_47, %c0_48] : memref<3x36x8xf32, #tpu.memory_space<vmem>>, vector<1x36x8xf32>
    %52 = vector.shape_cast %51 : vector<1x36x8xf32> to vector<36x8xf32>
    %cst_49 = arith.constant dense<0.000000e+00> : vector<64x8xf32>
    %53 = tpu.matmul %50, %52, %cst_49 {dimension_numbers = #tpu.dot_dimension_numbers<[1], [0], [0], [1], [0, 0, 1, 1], [], []>} : vector<64x36xf32>, vector<36x8xf32>, vector<64x8xf32> -> vector<64x8xf32>
    %54 = arith.addf %48, %53 : vector<64x8xf32>
    %55 = vector.extract_strided_slice %43 {offsets = [0, 2, 0], sizes = [8, 8, 36], strides = [1, 1, 1]} : vector<8x10x36xf32> to vector<8x8x36xf32>
    %56 = vector.shape_cast %55 : vector<8x8x36xf32> to vector<64x36xf32>
    %c2_50 = arith.constant 2 : index
    %c0_51 = arith.constant 0 : index
    %c0_52 = arith.constant 0 : index
    %57 = vector.load %arg5[%c2_50, %c0_51, %c0_52] : memref<3x36x8xf32, #tpu.memory_space<vmem>>, vector<1x36x8xf32>
    %58 = vector.shape_cast %57 : vector<1x36x8xf32> to vector<36x8xf32>
    %cst_53 = arith.constant dense<0.000000e+00> : vector<64x8xf32>
    %59 = tpu.matmul %56, %58, %cst_53 {dimension_numbers = #tpu.dot_dimension_numbers<[1], [0], [0], [1], [0, 0, 1, 1], [], []>} : vector<64x36xf32>, vector<36x8xf32>, vector<64x8xf32> -> vector<64x8xf32>
    %60 = arith.addf %54, %59 : vector<64x8xf32>
    %cst_54 = arith.constant 0.000000e+00 : f32
    %61 = vector.broadcast %cst_54 : f32 to vector<64x8xf32>
    %62 = arith.maximumf %60, %61 : vector<64x8xf32>
    %c0_55 = arith.constant 0 : index
    %c1_56 = arith.constant 1 : index
    %c0_57 = arith.constant 0 : index
    %c0_58 = arith.constant 0 : index
    %63 = vector.load %arg6[%c0_55, %c1_56, %c0_57, %c0_58] : memref<1x8x64x8xf32, #tpu.memory_space<vmem>>, vector<1x1x64x8xf32>
    %64 = vector.shape_cast %63 : vector<1x1x64x8xf32> to vector<64x8xf32>
    %65 = vector.shape_cast %62 : vector<64x8xf32> to vector<1x1x64x8xf32>
    tpu.vector_store %arg6[%c0_55, %c1_56, %c0_57, %c0_58], %65 {strides = array<i32>} : memref<1x8x64x8xf32, #tpu.memory_space<vmem>>, vector<1x1x64x8xf32>,
    %c0_59 = arith.constant 0 : index
    %c2_60 = arith.constant 2 : index
    %c0_61 = arith.constant 0 : index
    %c0_62 = arith.constant 0 : index
    %c0_63 = arith.constant 0 : index
    %66 = vector.load %arg2[%c0_59, %c2_60, %c0_61, %c0_62, %c0_63] : memref<1x8x10x10x4xf32, #tpu.memory_space<vmem>>, vector<1x1x10x10x4xf32>
    %67 = vector.shape_cast %66 : vector<1x1x10x10x4xf32> to vector<10x10x4xf32>
    %c0_64 = arith.constant 0 : index
    %c3_65 = arith.constant 3 : index
    %c0_66 = arith.constant 0 : index
    %c0_67 = arith.constant 0 : index
    %c0_68 = arith.constant 0 : index
    %68 = vector.load %arg2[%c0_64, %c3_65, %c0_66, %c0_67, %c0_68] : memref<1x8x10x10x4xf32, #tpu.memory_space<vmem>>, vector<1x1x10x10x4xf32>
    %69 = vector.shape_cast %68 : vector<1x1x10x10x4xf32> to vector<10x10x4xf32>
    %c0_69 = arith.constant 0 : index
    %c4 = arith.constant 4 : index
    %c0_70 = arith.constant 0 : index
    %c0_71 = arith.constant 0 : index
    %c0_72 = arith.constant 0 : index
    %70 = vector.load %arg2[%c0_69, %c4, %c0_70, %c0_71, %c0_72] : memref<1x8x10x10x4xf32, #tpu.memory_space<vmem>>, vector<1x1x10x10x4xf32>
    %71 = vector.shape_cast %70 : vector<1x1x10x10x4xf32> to vector<10x10x4xf32>
    %72 = tpu.concatenate %67, %69, %71 in 2 : vector<10x10x4xf32>, vector<10x10x4xf32>, vector<10x10x4xf32> -> vector<10x10x12xf32>
    %73 = vector.extract_strided_slice %72 {offsets = [0, 0, 0], sizes = [8, 10, 12], strides = [1, 1, 1]} : vector<10x10x12xf32> to vector<8x10x12xf32>
    %74 = vector.extract_strided_slice %72 {offsets = [1, 0, 0], sizes = [8, 10, 12], strides = [1, 1, 1]} : vector<10x10x12xf32> to vector<8x10x12xf32>
    %75 = vector.extract_strided_slice %72 {offsets = [2, 0, 0], sizes = [8, 10, 12], strides = [1, 1, 1]} : vector<10x10x12xf32> to vector<8x10x12xf32>
    %76 = tpu.concatenate %73, %74, %75 in 2 : vector<8x10x12xf32>, vector<8x10x12xf32>, vector<8x10x12xf32> -> vector<8x10x36xf32>
    %77 = vector.extract_strided_slice %76 {offsets = [0, 0, 0], sizes = [8, 8, 36], strides = [1, 1, 1]} : vector<8x10x36xf32> to vector<8x8x36xf32>
    %78 = vector.shape_cast %77 : vector<8x8x36xf32> to vector<64x36xf32>
    %c0_73 = arith.constant 0 : index
    %c0_74 = arith.constant 0 : index
    %c0_75 = arith.constant 0 : index
    %79 = vector.load %arg5[%c0_73, %c0_74, %c0_75] : memref<3x36x8xf32, #tpu.memory_space<vmem>>, vector<1x36x8xf32>
    %80 = vector.shape_cast %79 : vector<1x36x8xf32> to vector<36x8xf32>
    %cst_76 = arith.constant dense<0.000000e+00> : vector<64x8xf32>
    %81 = tpu.matmul %78, %80, %cst_76 {dimension_numbers = #tpu.dot_dimension_numbers<[1], [0], [0], [1], [0, 0, 1, 1], [], []>} : vector<64x36xf32>, vector<36x8xf32>, vector<64x8xf32> -> vector<64x8xf32>
    %82 = vector.extract_strided_slice %76 {offsets = [0, 1, 0], sizes = [8, 8, 36], strides = [1, 1, 1]} : vector<8x10x36xf32> to vector<8x8x36xf32>
    %83 = vector.shape_cast %82 : vector<8x8x36xf32> to vector<64x36xf32>
    %c1_77 = arith.constant 1 : index
    %c0_78 = arith.constant 0 : index
    %c0_79 = arith.constant 0 : index
    %84 = vector.load %arg5[%c1_77, %c0_78, %c0_79] : memref<3x36x8xf32, #tpu.memory_space<vmem>>, vector<1x36x8xf32>
    %85 = vector.shape_cast %84 : vector<1x36x8xf32> to vector<36x8xf32>
    %cst_80 = arith.constant dense<0.000000e+00> : vector<64x8xf32>
    %86 = tpu.matmul %83, %85, %cst_80 {dimension_numbers = #tpu.dot_dimension_numbers<[1], [0], [0], [1], [0, 0, 1, 1], [], []>} : vector<64x36xf32>, vector<36x8xf32>, vector<64x8xf32> -> vector<64x8xf32>
    %87 = arith.addf %81, %86 : vector<64x8xf32>
    %88 = vector.extract_strided_slice %76 {offsets = [0, 2, 0], sizes = [8, 8, 36], strides = [1, 1, 1]} : vector<8x10x36xf32> to vector<8x8x36xf32>
    %89 = vector.shape_cast %88 : vector<8x8x36xf32> to vector<64x36xf32>
    %c2_81 = arith.constant 2 : index
    %c0_82 = arith.constant 0 : index
    %c0_83 = arith.constant 0 : index
    %90 = vector.load %arg5[%c2_81, %c0_82, %c0_83] : memref<3x36x8xf32, #tpu.memory_space<vmem>>, vector<1x36x8xf32>
    %91 = vector.shape_cast %90 : vector<1x36x8xf32> to vector<36x8xf32>
    %cst_84 = arith.constant dense<0.000000e+00> : vector<64x8xf32>
    %92 = tpu.matmul %89, %91, %cst_84 {dimension_numbers = #tpu.dot_dimension_numbers<[1], [0], [0], [1], [0, 0, 1, 1], [], []>} : vector<64x36xf32>, vector<36x8xf32>, vector<64x8xf32> -> vector<64x8xf32>
    %93 = arith.addf %87, %92 : vector<64x8xf32>
    %cst_85 = arith.constant 0.000000e+00 : f32
    %94 = vector.broadcast %cst_85 : f32 to vector<64x8xf32>
    %95 = arith.maximumf %93, %94 : vector<64x8xf32>
    %c0_86 = arith.constant 0 : index
    %c2_87 = arith.constant 2 : index
    %c0_88 = arith.constant 0 : index
    %c0_89 = arith.constant 0 : index
    %96 = vector.load %arg6[%c0_86, %c2_87, %c0_88, %c0_89] : memref<1x8x64x8xf32, #tpu.memory_space<vmem>>, vector<1x1x64x8xf32>
    %97 = vector.shape_cast %96 : vector<1x1x64x8xf32> to vector<64x8xf32>
    %98 = vector.shape_cast %95 : vector<64x8xf32> to vector<1x1x64x8xf32>
    tpu.vector_store %arg6[%c0_86, %c2_87, %c0_88, %c0_89], %98 {strides = array<i32>} : memref<1x8x64x8xf32, #tpu.memory_space<vmem>>, vector<1x1x64x8xf32>,
    %c0_90 = arith.constant 0 : index
    %c3_91 = arith.constant 3 : index
    %c0_92 = arith.constant 0 : index
    %c0_93 = arith.constant 0 : index
    %c0_94 = arith.constant 0 : index
    %99 = vector.load %arg2[%c0_90, %c3_91, %c0_92, %c0_93, %c0_94] : memref<1x8x10x10x4xf32, #tpu.memory_space<vmem>>, vector<1x1x10x10x4xf32>
    %100 = vector.shape_cast %99 : vector<1x1x10x10x4xf32> to vector<10x10x4xf32>
    %c0_95 = arith.constant 0 : index
    %c4_96 = arith.constant 4 : index
    %c0_97 = arith.constant 0 : index
    %c0_98 = arith.constant 0 : index
    %c0_99 = arith.constant 0 : index
    %101 = vector.load %arg2[%c0_95, %c4_96, %c0_97, %c0_98, %c0_99] : memref<1x8x10x10x4xf32, #tpu.memory_space<vmem>>, vector<1x1x10x10x4xf32>
    %102 = vector.shape_cast %101 : vector<1x1x10x10x4xf32> to vector<10x10x4xf32>
    %c0_100 = arith.constant 0 : index
    %c5 = arith.constant 5 : index
    %c0_101 = arith.constant 0 : index
    %c0_102 = arith.constant 0 : index
    %c0_103 = arith.constant 0 : index
    %103 = vector.load %arg2[%c0_100, %c5, %c0_101, %c0_102, %c0_103] : memref<1x8x10x10x4xf32, #tpu.memory_space<vmem>>, vector<1x1x10x10x4xf32>
    %104 = vector.shape_cast %103 : vector<1x1x10x10x4xf32> to vector<10x10x4xf32>
    %105 = tpu.concatenate %100, %102, %104 in 2 : vector<10x10x4xf32>, vector<10x10x4xf32>, vector<10x10x4xf32> -> vector<10x10x12xf32>
    %106 = vector.extract_strided_slice %105 {offsets = [0, 0, 0], sizes = [8, 10, 12], strides = [1, 1, 1]} : vector<10x10x12xf32> to vector<8x10x12xf32>
    %107 = vector.extract_strided_slice %105 {offsets = [1, 0, 0], sizes = [8, 10, 12], strides = [1, 1, 1]} : vector<10x10x12xf32> to vector<8x10x12xf32>
    %108 = vector.extract_strided_slice %105 {offsets = [2, 0, 0], sizes = [8, 10, 12], strides = [1, 1, 1]} : vector<10x10x12xf32> to vector<8x10x12xf32>
    %109 = tpu.concatenate %106, %107, %108 in 2 : vector<8x10x12xf32>, vector<8x10x12xf32>, vector<8x10x12xf32> -> vector<8x10x36xf32>
    %110 = vector.extract_strided_slice %109 {offsets = [0, 0, 0], sizes = [8, 8, 36], strides = [1, 1, 1]} : vector<8x10x36xf32> to vector<8x8x36xf32>
    %111 = vector.shape_cast %110 : vector<8x8x36xf32> to vector<64x36xf32>
    %c0_104 = arith.constant 0 : index
    %c0_105 = arith.constant 0 : index
    %c0_106 = arith.constant 0 : index
    %112 = vector.load %arg5[%c0_104, %c0_105, %c0_106] : memref<3x36x8xf32, #tpu.memory_space<vmem>>, vector<1x36x8xf32>
    %113 = vector.shape_cast %112 : vector<1x36x8xf32> to vector<36x8xf32>
    %cst_107 = arith.constant dense<0.000000e+00> : vector<64x8xf32>
    %114 = tpu.matmul %111, %113, %cst_107 {dimension_numbers = #tpu.dot_dimension_numbers<[1], [0], [0], [1], [0, 0, 1, 1], [], []>} : vector<64x36xf32>, vector<36x8xf32>, vector<64x8xf32> -> vector<64x8xf32>
    %115 = vector.extract_strided_slice %109 {offsets = [0, 1, 0], sizes = [8, 8, 36], strides = [1, 1, 1]} : vector<8x10x36xf32> to vector<8x8x36xf32>
    %116 = vector.shape_cast %115 : vector<8x8x36xf32> to vector<64x36xf32>
    %c1_108 = arith.constant 1 : index
    %c0_109 = arith.constant 0 : index
    %c0_110 = arith.constant 0 : index
    %117 = vector.load %arg5[%c1_108, %c0_109, %c0_110] : memref<3x36x8xf32, #tpu.memory_space<vmem>>, vector<1x36x8xf32>
    %118 = vector.shape_cast %117 : vector<1x36x8xf32> to vector<36x8xf32>
    %cst_111 = arith.constant dense<0.000000e+00> : vector<64x8xf32>
    %119 = tpu.matmul %116, %118, %cst_111 {dimension_numbers = #tpu.dot_dimension_numbers<[1], [0], [0], [1], [0, 0, 1, 1], [], []>} : vector<64x36xf32>, vector<36x8xf32>, vector<64x8xf32> -> vector<64x8xf32>
    %120 = arith.addf %114, %119 : vector<64x8xf32>
    %121 = vector.extract_strided_slice %109 {offsets = [0, 2, 0], sizes = [8, 8, 36], strides = [1, 1, 1]} : vector<8x10x36xf32> to vector<8x8x36xf32>
    %122 = vector.shape_cast %121 : vector<8x8x36xf32> to vector<64x36xf32>
    %c2_112 = arith.constant 2 : index
    %c0_113 = arith.constant 0 : index
    %c0_114 = arith.constant 0 : index
    %123 = vector.load %arg5[%c2_112, %c0_113, %c0_114] : memref<3x36x8xf32, #tpu.memory_space<vmem>>, vector<1x36x8xf32>
    %124 = vector.shape_cast %123 : vector<1x36x8xf32> to vector<36x8xf32>
    %cst_115 = arith.constant dense<0.000000e+00> : vector<64x8xf32>
    %125 = tpu.matmul %122, %124, %cst_115 {dimension_numbers = #tpu.dot_dimension_numbers<[1], [0], [0], [1], [0, 0, 1, 1], [], []>} : vector<64x36xf32>, vector<36x8xf32>, vector<64x8xf32> -> vector<64x8xf32>
    %126 = arith.addf %120, %125 : vector<64x8xf32>
    %cst_116 = arith.constant 0.000000e+00 : f32
    %127 = vector.broadcast %cst_116 : f32 to vector<64x8xf32>
    %128 = arith.maximumf %126, %127 : vector<64x8xf32>
    %c0_117 = arith.constant 0 : index
    %c3_118 = arith.constant 3 : index
    %c0_119 = arith.constant 0 : index
    %c0_120 = arith.constant 0 : index
    %129 = vector.load %arg6[%c0_117, %c3_118, %c0_119, %c0_120] : memref<1x8x64x8xf32, #tpu.memory_space<vmem>>, vector<1x1x64x8xf32>
    %130 = vector.shape_cast %129 : vector<1x1x64x8xf32> to vector<64x8xf32>
    %131 = vector.shape_cast %128 : vector<64x8xf32> to vector<1x1x64x8xf32>
    tpu.vector_store %arg6[%c0_117, %c3_118, %c0_119, %c0_120], %131 {strides = array<i32>} : memref<1x8x64x8xf32, #tpu.memory_space<vmem>>, vector<1x1x64x8xf32>,
    %c0_121 = arith.constant 0 : index
    %c4_122 = arith.constant 4 : index
    %c0_123 = arith.constant 0 : index
    %c0_124 = arith.constant 0 : index
    %c0_125 = arith.constant 0 : index
    %132 = vector.load %arg2[%c0_121, %c4_122, %c0_123, %c0_124, %c0_125] : memref<1x8x10x10x4xf32, #tpu.memory_space<vmem>>, vector<1x1x10x10x4xf32>
    %133 = vector.shape_cast %132 : vector<1x1x10x10x4xf32> to vector<10x10x4xf32>
    %c0_126 = arith.constant 0 : index
    %c5_127 = arith.constant 5 : index
    %c0_128 = arith.constant 0 : index
    %c0_129 = arith.constant 0 : index
    %c0_130 = arith.constant 0 : index
    %134 = vector.load %arg2[%c0_126, %c5_127, %c0_128, %c0_129, %c0_130] : memref<1x8x10x10x4xf32, #tpu.memory_space<vmem>>, vector<1x1x10x10x4xf32>
    %135 = vector.shape_cast %134 : vector<1x1x10x10x4xf32> to vector<10x10x4xf32>
    %c0_131 = arith.constant 0 : index
    %c6 = arith.constant 6 : index
    %c0_132 = arith.constant 0 : index
    %c0_133 = arith.constant 0 : index
    %c0_134 = arith.constant 0 : index
    %136 = vector.load %arg2[%c0_131, %c6, %c0_132, %c0_133, %c0_134] : memref<1x8x10x10x4xf32, #tpu.memory_space<vmem>>, vector<1x1x10x10x4xf32>
    %137 = vector.shape_cast %136 : vector<1x1x10x10x4xf32> to vector<10x10x4xf32>
    %138 = tpu.concatenate %133, %135, %137 in 2 : vector<10x10x4xf32>, vector<10x10x4xf32>, vector<10x10x4xf32> -> vector<10x10x12xf32>
    %139 = vector.extract_strided_slice %138 {offsets = [0, 0, 0], sizes = [8, 10, 12], strides = [1, 1, 1]} : vector<10x10x12xf32> to vector<8x10x12xf32>
    %140 = vector.extract_strided_slice %138 {offsets = [1, 0, 0], sizes = [8, 10, 12], strides = [1, 1, 1]} : vector<10x10x12xf32> to vector<8x10x12xf32>
    %141 = vector.extract_strided_slice %138 {offsets = [2, 0, 0], sizes = [8, 10, 12], strides = [1, 1, 1]} : vector<10x10x12xf32> to vector<8x10x12xf32>
    %142 = tpu.concatenate %139, %140, %141 in 2 : vector<8x10x12xf32>, vector<8x10x12xf32>, vector<8x10x12xf32> -> vector<8x10x36xf32>
    %143 = vector.extract_strided_slice %142 {offsets = [0, 0, 0], sizes = [8, 8, 36], strides = [1, 1, 1]} : vector<8x10x36xf32> to vector<8x8x36xf32>
    %144 = vector.shape_cast %143 : vector<8x8x36xf32> to vector<64x36xf32>
    %c0_135 = arith.constant 0 : index
    %c0_136 = arith.constant 0 : index
    %c0_137 = arith.constant 0 : index
    %145 = vector.load %arg5[%c0_135, %c0_136, %c0_137] : memref<3x36x8xf32, #tpu.memory_space<vmem>>, vector<1x36x8xf32>
    %146 = vector.shape_cast %145 : vector<1x36x8xf32> to vector<36x8xf32>
    %cst_138 = arith.constant dense<0.000000e+00> : vector<64x8xf32>
    %147 = tpu.matmul %144, %146, %cst_138 {dimension_numbers = #tpu.dot_dimension_numbers<[1], [0], [0], [1], [0, 0, 1, 1], [], []>} : vector<64x36xf32>, vector<36x8xf32>, vector<64x8xf32> -> vector<64x8xf32>
    %148 = vector.extract_strided_slice %142 {offsets = [0, 1, 0], sizes = [8, 8, 36], strides = [1, 1, 1]} : vector<8x10x36xf32> to vector<8x8x36xf32>
    %149 = vector.shape_cast %148 : vector<8x8x36xf32> to vector<64x36xf32>
    %c1_139 = arith.constant 1 : index
    %c0_140 = arith.constant 0 : index
    %c0_141 = arith.constant 0 : index
    %150 = vector.load %arg5[%c1_139, %c0_140, %c0_141] : memref<3x36x8xf32, #tpu.memory_space<vmem>>, vector<1x36x8xf32>
    %151 = vector.shape_cast %150 : vector<1x36x8xf32> to vector<36x8xf32>
    %cst_142 = arith.constant dense<0.000000e+00> : vector<64x8xf32>
    %152 = tpu.matmul %149, %151, %cst_142 {dimension_numbers = #tpu.dot_dimension_numbers<[1], [0], [0], [1], [0, 0, 1, 1], [], []>} : vector<64x36xf32>, vector<36x8xf32>, vector<64x8xf32> -> vector<64x8xf32>
    %153 = arith.addf %147, %152 : vector<64x8xf32>
    %154 = vector.extract_strided_slice %142 {offsets = [0, 2, 0], sizes = [8, 8, 36], strides = [1, 1, 1]} : vector<8x10x36xf32> to vector<8x8x36xf32>
    %155 = vector.shape_cast %154 : vector<8x8x36xf32> to vector<64x36xf32>
    %c2_143 = arith.constant 2 : index
    %c0_144 = arith.constant 0 : index
    %c0_145 = arith.constant 0 : index
    %156 = vector.load %arg5[%c2_143, %c0_144, %c0_145] : memref<3x36x8xf32, #tpu.memory_space<vmem>>, vector<1x36x8xf32>
    %157 = vector.shape_cast %156 : vector<1x36x8xf32> to vector<36x8xf32>
    %cst_146 = arith.constant dense<0.000000e+00> : vector<64x8xf32>
    %158 = tpu.matmul %155, %157, %cst_146 {dimension_numbers = #tpu.dot_dimension_numbers<[1], [0], [0], [1], [0, 0, 1, 1], [], []>} : vector<64x36xf32>, vector<36x8xf32>, vector<64x8xf32> -> vector<64x8xf32>
    %159 = arith.addf %153, %158 : vector<64x8xf32>
    %cst_147 = arith.constant 0.000000e+00 : f32
    %160 = vector.broadcast %cst_147 : f32 to vector<64x8xf32>
    %161 = arith.maximumf %159, %160 : vector<64x8xf32>
    %c0_148 = arith.constant 0 : index
    %c4_149 = arith.constant 4 : index
    %c0_150 = arith.constant 0 : index
    %c0_151 = arith.constant 0 : index
    %162 = vector.load %arg6[%c0_148, %c4_149, %c0_150, %c0_151] : memref<1x8x64x8xf32, #tpu.memory_space<vmem>>, vector<1x1x64x8xf32>
    %163 = vector.shape_cast %162 : vector<1x1x64x8xf32> to vector<64x8xf32>
    %164 = vector.shape_cast %161 : vector<64x8xf32> to vector<1x1x64x8xf32>
    tpu.vector_store %arg6[%c0_148, %c4_149, %c0_150, %c0_151], %164 {strides = array<i32>} : memref<1x8x64x8xf32, #tpu.memory_space<vmem>>, vector<1x1x64x8xf32>,
    %c0_152 = arith.constant 0 : index
    %c5_153 = arith.constant 5 : index
    %c0_154 = arith.constant 0 : index
    %c0_155 = arith.constant 0 : index
    %c0_156 = arith.constant 0 : index
    %165 = vector.load %arg2[%c0_152, %c5_153, %c0_154, %c0_155, %c0_156] : memref<1x8x10x10x4xf32, #tpu.memory_space<vmem>>, vector<1x1x10x10x4xf32>
    %166 = vector.shape_cast %165 : vector<1x1x10x10x4xf32> to vector<10x10x4xf32>
    %c0_157 = arith.constant 0 : index
    %c6_158 = arith.constant 6 : index
    %c0_159 = arith.constant 0 : index
    %c0_160 = arith.constant 0 : index
    %c0_161 = arith.constant 0 : index
    %167 = vector.load %arg2[%c0_157, %c6_158, %c0_159, %c0_160, %c0_161] : memref<1x8x10x10x4xf32, #tpu.memory_space<vmem>>, vector<1x1x10x10x4xf32>
    %168 = vector.shape_cast %167 : vector<1x1x10x10x4xf32> to vector<10x10x4xf32>
    %c0_162 = arith.constant 0 : index
    %c7 = arith.constant 7 : index
    %c0_163 = arith.constant 0 : index
    %c0_164 = arith.constant 0 : index
    %c0_165 = arith.constant 0 : index
    %169 = vector.load %arg2[%c0_162, %c7, %c0_163, %c0_164, %c0_165] : memref<1x8x10x10x4xf32, #tpu.memory_space<vmem>>, vector<1x1x10x10x4xf32>
    %170 = vector.shape_cast %169 : vector<1x1x10x10x4xf32> to vector<10x10x4xf32>
    %171 = tpu.concatenate %166, %168, %170 in 2 : vector<10x10x4xf32>, vector<10x10x4xf32>, vector<10x10x4xf32> -> vector<10x10x12xf32>
    %172 = vector.extract_strided_slice %171 {offsets = [0, 0, 0], sizes = [8, 10, 12], strides = [1, 1, 1]} : vector<10x10x12xf32> to vector<8x10x12xf32>
    %173 = vector.extract_strided_slice %171 {offsets = [1, 0, 0], sizes = [8, 10, 12], strides = [1, 1, 1]} : vector<10x10x12xf32> to vector<8x10x12xf32>
    %174 = vector.extract_strided_slice %171 {offsets = [2, 0, 0], sizes = [8, 10, 12], strides = [1, 1, 1]} : vector<10x10x12xf32> to vector<8x10x12xf32>
    %175 = tpu.concatenate %172, %173, %174 in 2 : vector<8x10x12xf32>, vector<8x10x12xf32>, vector<8x10x12xf32> -> vector<8x10x36xf32>
    %176 = vector.extract_strided_slice %175 {offsets = [0, 0, 0], sizes = [8, 8, 36], strides = [1, 1, 1]} : vector<8x10x36xf32> to vector<8x8x36xf32>
    %177 = vector.shape_cast %176 : vector<8x8x36xf32> to vector<64x36xf32>
    %c0_166 = arith.constant 0 : index
    %c0_167 = arith.constant 0 : index
    %c0_168 = arith.constant 0 : index
    %178 = vector.load %arg5[%c0_166, %c0_167, %c0_168] : memref<3x36x8xf32, #tpu.memory_space<vmem>>, vector<1x36x8xf32>
    %179 = vector.shape_cast %178 : vector<1x36x8xf32> to vector<36x8xf32>
    %cst_169 = arith.constant dense<0.000000e+00> : vector<64x8xf32>
    %180 = tpu.matmul %177, %179, %cst_169 {dimension_numbers = #tpu.dot_dimension_numbers<[1], [0], [0], [1], [0, 0, 1, 1], [], []>} : vector<64x36xf32>, vector<36x8xf32>, vector<64x8xf32> -> vector<64x8xf32>
    %181 = vector.extract_strided_slice %175 {offsets = [0, 1, 0], sizes = [8, 8, 36], strides = [1, 1, 1]} : vector<8x10x36xf32> to vector<8x8x36xf32>
    %182 = vector.shape_cast %181 : vector<8x8x36xf32> to vector<64x36xf32>
    %c1_170 = arith.constant 1 : index
    %c0_171 = arith.constant 0 : index
    %c0_172 = arith.constant 0 : index
    %183 = vector.load %arg5[%c1_170, %c0_171, %c0_172] : memref<3x36x8xf32, #tpu.memory_space<vmem>>, vector<1x36x8xf32>
    %184 = vector.shape_cast %183 : vector<1x36x8xf32> to vector<36x8xf32>
    %cst_173 = arith.constant dense<0.000000e+00> : vector<64x8xf32>
    %185 = tpu.matmul %182, %184, %cst_173 {dimension_numbers = #tpu.dot_dimension_numbers<[1], [0], [0], [1], [0, 0, 1, 1], [], []>} : vector<64x36xf32>, vector<36x8xf32>, vector<64x8xf32> -> vector<64x8xf32>
    %186 = arith.addf %180, %185 : vector<64x8xf32>
    %187 = vector.extract_strided_slice %175 {offsets = [0, 2, 0], sizes = [8, 8, 36], strides = [1, 1, 1]} : vector<8x10x36xf32> to vector<8x8x36xf32>
    %188 = vector.shape_cast %187 : vector<8x8x36xf32> to vector<64x36xf32>
    %c2_174 = arith.constant 2 : index
    %c0_175 = arith.constant 0 : index
    %c0_176 = arith.constant 0 : index
    %189 = vector.load %arg5[%c2_174, %c0_175, %c0_176] : memref<3x36x8xf32, #tpu.memory_space<vmem>>, vector<1x36x8xf32>
    %190 = vector.shape_cast %189 : vector<1x36x8xf32> to vector<36x8xf32>
    %cst_177 = arith.constant dense<0.000000e+00> : vector<64x8xf32>
    %191 = tpu.matmul %188, %190, %cst_177 {dimension_numbers = #tpu.dot_dimension_numbers<[1], [0], [0], [1], [0, 0, 1, 1], [], []>} : vector<64x36xf32>, vector<36x8xf32>, vector<64x8xf32> -> vector<64x8xf32>
    %192 = arith.addf %186, %191 : vector<64x8xf32>
    %cst_178 = arith.constant 0.000000e+00 : f32
    %193 = vector.broadcast %cst_178 : f32 to vector<64x8xf32>
    %194 = arith.maximumf %192, %193 : vector<64x8xf32>
    %c0_179 = arith.constant 0 : index
    %c5_180 = arith.constant 5 : index
    %c0_181 = arith.constant 0 : index
    %c0_182 = arith.constant 0 : index
    %195 = vector.load %arg6[%c0_179, %c5_180, %c0_181, %c0_182] : memref<1x8x64x8xf32, #tpu.memory_space<vmem>>, vector<1x1x64x8xf32>
    %196 = vector.shape_cast %195 : vector<1x1x64x8xf32> to vector<64x8xf32>
    %197 = vector.shape_cast %194 : vector<64x8xf32> to vector<1x1x64x8xf32>
    tpu.vector_store %arg6[%c0_179, %c5_180, %c0_181, %c0_182], %197 {strides = array<i32>} : memref<1x8x64x8xf32, #tpu.memory_space<vmem>>, vector<1x1x64x8xf32>,
    %c0_183 = arith.constant 0 : index
    %c6_184 = arith.constant 6 : index
    %c0_185 = arith.constant 0 : index
    %c0_186 = arith.constant 0 : index
    %c0_187 = arith.constant 0 : index
    %198 = vector.load %arg2[%c0_183, %c6_184, %c0_185, %c0_186, %c0_187] : memref<1x8x10x10x4xf32, #tpu.memory_space<vmem>>, vector<1x1x10x10x4xf32>
    %199 = vector.shape_cast %198 : vector<1x1x10x10x4xf32> to vector<10x10x4xf32>
    %c0_188 = arith.constant 0 : index
    %c7_189 = arith.constant 7 : index
    %c0_190 = arith.constant 0 : index
    %c0_191 = arith.constant 0 : index
    %c0_192 = arith.constant 0 : index
    %200 = vector.load %arg2[%c0_188, %c7_189, %c0_190, %c0_191, %c0_192] : memref<1x8x10x10x4xf32, #tpu.memory_space<vmem>>, vector<1x1x10x10x4xf32>
    %201 = vector.shape_cast %200 : vector<1x1x10x10x4xf32> to vector<10x10x4xf32>
    %c0_193 = arith.constant 0 : index
    %c0_194 = arith.constant 0 : index
    %c0_195 = arith.constant 0 : index
    %c0_196 = arith.constant 0 : index
    %c0_197 = arith.constant 0 : index
    %202 = vector.load %arg3[%c0_193, %c0_194, %c0_195, %c0_196, %c0_197] : memref<1x1x10x10x4xf32, #tpu.memory_space<vmem>>, vector<1x1x10x10x4xf32>
    %203 = vector.shape_cast %202 : vector<1x1x10x10x4xf32> to vector<10x10x4xf32>
    %204 = tpu.concatenate %199, %201, %203 in 2 : vector<10x10x4xf32>, vector<10x10x4xf32>, vector<10x10x4xf32> -> vector<10x10x12xf32>
    %205 = vector.extract_strided_slice %204 {offsets = [0, 0, 0], sizes = [8, 10, 12], strides = [1, 1, 1]} : vector<10x10x12xf32> to vector<8x10x12xf32>
    %206 = vector.extract_strided_slice %204 {offsets = [1, 0, 0], sizes = [8, 10, 12], strides = [1, 1, 1]} : vector<10x10x12xf32> to vector<8x10x12xf32>
    %207 = vector.extract_strided_slice %204 {offsets = [2, 0, 0], sizes = [8, 10, 12], strides = [1, 1, 1]} : vector<10x10x12xf32> to vector<8x10x12xf32>
    %208 = tpu.concatenate %205, %206, %207 in 2 : vector<8x10x12xf32>, vector<8x10x12xf32>, vector<8x10x12xf32> -> vector<8x10x36xf32>
    %209 = vector.extract_strided_slice %208 {offsets = [0, 0, 0], sizes = [8, 8, 36], strides = [1, 1, 1]} : vector<8x10x36xf32> to vector<8x8x36xf32>
    %210 = vector.shape_cast %209 : vector<8x8x36xf32> to vector<64x36xf32>
    %c0_198 = arith.constant 0 : index
    %c0_199 = arith.constant 0 : index
    %c0_200 = arith.constant 0 : index
    %211 = vector.load %arg5[%c0_198, %c0_199, %c0_200] : memref<3x36x8xf32, #tpu.memory_space<vmem>>, vector<1x36x8xf32>
    %212 = vector.shape_cast %211 : vector<1x36x8xf32> to vector<36x8xf32>
    %cst_201 = arith.constant dense<0.000000e+00> : vector<64x8xf32>
    %213 = tpu.matmul %210, %212, %cst_201 {dimension_numbers = #tpu.dot_dimension_numbers<[1], [0], [0], [1], [0, 0, 1, 1], [], []>} : vector<64x36xf32>, vector<36x8xf32>, vector<64x8xf32> -> vector<64x8xf32>
    %214 = vector.extract_strided_slice %208 {offsets = [0, 1, 0], sizes = [8, 8, 36], strides = [1, 1, 1]} : vector<8x10x36xf32> to vector<8x8x36xf32>
    %215 = vector.shape_cast %214 : vector<8x8x36xf32> to vector<64x36xf32>
    %c1_202 = arith.constant 1 : index
    %c0_203 = arith.constant 0 : index
    %c0_204 = arith.constant 0 : index
    %216 = vector.load %arg5[%c1_202, %c0_203, %c0_204] : memref<3x36x8xf32, #tpu.memory_space<vmem>>, vector<1x36x8xf32>
    %217 = vector.shape_cast %216 : vector<1x36x8xf32> to vector<36x8xf32>
    %cst_205 = arith.constant dense<0.000000e+00> : vector<64x8xf32>
    %218 = tpu.matmul %215, %217, %cst_205 {dimension_numbers = #tpu.dot_dimension_numbers<[1], [0], [0], [1], [0, 0, 1, 1], [], []>} : vector<64x36xf32>, vector<36x8xf32>, vector<64x8xf32> -> vector<64x8xf32>
    %219 = arith.addf %213, %218 : vector<64x8xf32>
    %220 = vector.extract_strided_slice %208 {offsets = [0, 2, 0], sizes = [8, 8, 36], strides = [1, 1, 1]} : vector<8x10x36xf32> to vector<8x8x36xf32>
    %221 = vector.shape_cast %220 : vector<8x8x36xf32> to vector<64x36xf32>
    %c2_206 = arith.constant 2 : index
    %c0_207 = arith.constant 0 : index
    %c0_208 = arith.constant 0 : index
    %222 = vector.load %arg5[%c2_206, %c0_207, %c0_208] : memref<3x36x8xf32, #tpu.memory_space<vmem>>, vector<1x36x8xf32>
    %223 = vector.shape_cast %222 : vector<1x36x8xf32> to vector<36x8xf32>
    %cst_209 = arith.constant dense<0.000000e+00> : vector<64x8xf32>
    %224 = tpu.matmul %221, %223, %cst_209 {dimension_numbers = #tpu.dot_dimension_numbers<[1], [0], [0], [1], [0, 0, 1, 1], [], []>} : vector<64x36xf32>, vector<36x8xf32>, vector<64x8xf32> -> vector<64x8xf32>
    %225 = arith.addf %219, %224 : vector<64x8xf32>
    %cst_210 = arith.constant 0.000000e+00 : f32
    %226 = vector.broadcast %cst_210 : f32 to vector<64x8xf32>
    %227 = arith.maximumf %225, %226 : vector<64x8xf32>
    %c0_211 = arith.constant 0 : index
    %c6_212 = arith.constant 6 : index
    %c0_213 = arith.constant 0 : index
    %c0_214 = arith.constant 0 : index
    %228 = vector.load %arg6[%c0_211, %c6_212, %c0_213, %c0_214] : memref<1x8x64x8xf32, #tpu.memory_space<vmem>>, vector<1x1x64x8xf32>
    %229 = vector.shape_cast %228 : vector<1x1x64x8xf32> to vector<64x8xf32>
    %230 = vector.shape_cast %227 : vector<64x8xf32> to vector<1x1x64x8xf32>
    tpu.vector_store %arg6[%c0_211, %c6_212, %c0_213, %c0_214], %230 {strides = array<i32>} : memref<1x8x64x8xf32, #tpu.memory_space<vmem>>, vector<1x1x64x8xf32>,
    %c0_215 = arith.constant 0 : index
    %c7_216 = arith.constant 7 : index
    %c0_217 = arith.constant 0 : index
    %c0_218 = arith.constant 0 : index
    %c0_219 = arith.constant 0 : index
    %231 = vector.load %arg2[%c0_215, %c7_216, %c0_217, %c0_218, %c0_219] : memref<1x8x10x10x4xf32, #tpu.memory_space<vmem>>, vector<1x1x10x10x4xf32>
    %232 = vector.shape_cast %231 : vector<1x1x10x10x4xf32> to vector<10x10x4xf32>
    %c0_220 = arith.constant 0 : index
    %c0_221 = arith.constant 0 : index
    %c0_222 = arith.constant 0 : index
    %c0_223 = arith.constant 0 : index
    %c0_224 = arith.constant 0 : index
    %233 = vector.load %arg3[%c0_220, %c0_221, %c0_222, %c0_223, %c0_224] : memref<1x1x10x10x4xf32, #tpu.memory_space<vmem>>, vector<1x1x10x10x4xf32>
    %234 = vector.shape_cast %233 : vector<1x1x10x10x4xf32> to vector<10x10x4xf32>
    %c0_225 = arith.constant 0 : index
    %c0_226 = arith.constant 0 : index
    %c0_227 = arith.constant 0 : index
    %c0_228 = arith.constant 0 : index
    %c0_229 = arith.constant 0 : index
    %235 = vector.load %arg4[%c0_225, %c0_226, %c0_227, %c0_228, %c0_229] : memref<1x1x10x10x4xf32, #tpu.memory_space<vmem>>, vector<1x1x10x10x4xf32>
    %236 = vector.shape_cast %235 : vector<1x1x10x10x4xf32> to vector<10x10x4xf32>
    %237 = tpu.concatenate %232, %234, %236 in 2 : vector<10x10x4xf32>, vector<10x10x4xf32>, vector<10x10x4xf32> -> vector<10x10x12xf32>
    %238 = vector.extract_strided_slice %237 {offsets = [0, 0, 0], sizes = [8, 10, 12], strides = [1, 1, 1]} : vector<10x10x12xf32> to vector<8x10x12xf32>
    %239 = vector.extract_strided_slice %237 {offsets = [1, 0, 0], sizes = [8, 10, 12], strides = [1, 1, 1]} : vector<10x10x12xf32> to vector<8x10x12xf32>
    %240 = vector.extract_strided_slice %237 {offsets = [2, 0, 0], sizes = [8, 10, 12], strides = [1, 1, 1]} : vector<10x10x12xf32> to vector<8x10x12xf32>
    %241 = tpu.concatenate %238, %239, %240 in 2 : vector<8x10x12xf32>, vector<8x10x12xf32>, vector<8x10x12xf32> -> vector<8x10x36xf32>
    %242 = vector.extract_strided_slice %241 {offsets = [0, 0, 0], sizes = [8, 8, 36], strides = [1, 1, 1]} : vector<8x10x36xf32> to vector<8x8x36xf32>
    %243 = vector.shape_cast %242 : vector<8x8x36xf32> to vector<64x36xf32>
    %c0_230 = arith.constant 0 : index
    %c0_231 = arith.constant 0 : index
    %c0_232 = arith.constant 0 : index
    %244 = vector.load %arg5[%c0_230, %c0_231, %c0_232] : memref<3x36x8xf32, #tpu.memory_space<vmem>>, vector<1x36x8xf32>
    %245 = vector.shape_cast %244 : vector<1x36x8xf32> to vector<36x8xf32>
    %cst_233 = arith.constant dense<0.000000e+00> : vector<64x8xf32>
    %246 = tpu.matmul %243, %245, %cst_233 {dimension_numbers = #tpu.dot_dimension_numbers<[1], [0], [0], [1], [0, 0, 1, 1], [], []>} : vector<64x36xf32>, vector<36x8xf32>, vector<64x8xf32> -> vector<64x8xf32>
    %247 = vector.extract_strided_slice %241 {offsets = [0, 1, 0], sizes = [8, 8, 36], strides = [1, 1, 1]} : vector<8x10x36xf32> to vector<8x8x36xf32>
    %248 = vector.shape_cast %247 : vector<8x8x36xf32> to vector<64x36xf32>
    %c1_234 = arith.constant 1 : index
    %c0_235 = arith.constant 0 : index
    %c0_236 = arith.constant 0 : index
    %249 = vector.load %arg5[%c1_234, %c0_235, %c0_236] : memref<3x36x8xf32, #tpu.memory_space<vmem>>, vector<1x36x8xf32>
    %250 = vector.shape_cast %249 : vector<1x36x8xf32> to vector<36x8xf32>
    %cst_237 = arith.constant dense<0.000000e+00> : vector<64x8xf32>
    %251 = tpu.matmul %248, %250, %cst_237 {dimension_numbers = #tpu.dot_dimension_numbers<[1], [0], [0], [1], [0, 0, 1, 1], [], []>} : vector<64x36xf32>, vector<36x8xf32>, vector<64x8xf32> -> vector<64x8xf32>
    %252 = arith.addf %246, %251 : vector<64x8xf32>
    %253 = vector.extract_strided_slice %241 {offsets = [0, 2, 0], sizes = [8, 8, 36], strides = [1, 1, 1]} : vector<8x10x36xf32> to vector<8x8x36xf32>
    %254 = vector.shape_cast %253 : vector<8x8x36xf32> to vector<64x36xf32>
    %c2_238 = arith.constant 2 : index
    %c0_239 = arith.constant 0 : index
    %c0_240 = arith.constant 0 : index
    %255 = vector.load %arg5[%c2_238, %c0_239, %c0_240] : memref<3x36x8xf32, #tpu.memory_space<vmem>>, vector<1x36x8xf32>
    %256 = vector.shape_cast %255 : vector<1x36x8xf32> to vector<36x8xf32>
    %cst_241 = arith.constant dense<0.000000e+00> : vector<64x8xf32>
    %257 = tpu.matmul %254, %256, %cst_241 {dimension_numbers = #tpu.dot_dimension_numbers<[1], [0], [0], [1], [0, 0, 1, 1], [], []>} : vector<64x36xf32>, vector<36x8xf32>, vector<64x8xf32> -> vector<64x8xf32>
    %258 = arith.addf %252, %257 : vector<64x8xf32>
    %cst_242 = arith.constant 0.000000e+00 : f32
    %259 = vector.broadcast %cst_242 : f32 to vector<64x8xf32>
    %260 = arith.maximumf %258, %259 : vector<64x8xf32>
    %c0_243 = arith.constant 0 : index
    %c7_244 = arith.constant 7 : index
    %c0_245 = arith.constant 0 : index
    %c0_246 = arith.constant 0 : index
    %261 = vector.load %arg6[%c0_243, %c7_244, %c0_245, %c0_246] : memref<1x8x64x8xf32, #tpu.memory_space<vmem>>, vector<1x1x64x8xf32>
    %262 = vector.shape_cast %261 : vector<1x1x64x8xf32> to vector<64x8xf32>
    %263 = vector.shape_cast %260 : vector<64x8xf32> to vector<1x1x64x8xf32>
    tpu.vector_store %arg6[%c0_243, %c7_244, %c0_245, %c0_246], %263 {strides = array<i32>} : memref<1x8x64x8xf32, #tpu.memory_space<vmem>>, vector<1x1x64x8xf32>,
    return
  }
  func.func @transform_0(%arg0: i32, %arg1: i32) -> (i32, i32, i32, i32, i32) {
    %c0_i32 = arith.constant 0 : i32
    %c0_i32_0 = arith.constant 0 : i32
    %c0_i32_1 = arith.constant 0 : i32
    %c0_i32_2 = arith.constant 0 : i32
    return %arg0, %arg1, %c0_i32, %c0_i32_0, %c0_i32_1 : i32, i32, i32, i32, i32
  }
  func.func @transform_1(%arg0: i32, %arg1: i32) -> (i32, i32, i32, i32, i32) {
    %c8_i32 = arith.constant 8 : i32
    %0 = arith.muli %arg1, %c8_i32 : i32
    %c8_i32_0 = arith.constant 8 : i32
    %1 = arith.addi %0, %c8_i32_0 : i32
    %c0_i32 = arith.constant 0 : i32
    %c0_i32_1 = arith.constant 0 : i32
    %c0_i32_2 = arith.constant 0 : i32
    %c0_i32_3 = arith.constant 0 : i32
    return %arg0, %1, %c0_i32, %c0_i32_1, %c0_i32_2 : i32, i32, i32, i32, i32
  }
  func.func @transform_2(%arg0: i32, %arg1: i32) -> (i32, i32, i32, i32, i32) {
    %c8_i32 = arith.constant 8 : i32
    %0 = arith.muli %arg1, %c8_i32 : i32
    %c8_i32_0 = arith.constant 8 : i32
    %1 = arith.addi %0, %c8_i32_0 : i32
    %c1_i32 = arith.constant 1 : i32
    %2 = arith.addi %1, %c1_i32 : i32
    %c0_i32 = arith.constant 0 : i32
    %c0_i32_1 = arith.constant 0 : i32
    %c0_i32_2 = arith.constant 0 : i32
    %c0_i32_3 = arith.constant 0 : i32
    return %arg0, %2, %c0_i32, %c0_i32_1, %c0_i32_2 : i32, i32, i32, i32, i32
  }
  func.func @transform_3(%arg0: i32, %arg1: i32) -> (i32, i32, i32) {
    %c0_i32 = arith.constant 0 : i32
    %c0_i32_0 = arith.constant 0 : i32
    %c0_i32_1 = arith.constant 0 : i32
    %c0_i32_2 = arith.constant 0 : i32
    return %c0_i32, %c0_i32_0, %c0_i32_1 : i32, i32, i32
  }
  func.func @transform_4(%arg0: i32, %arg1: i32) -> (i32, i32, i32, i32) {
    %c0_i32 = arith.constant 0 : i32
    %c0_i32_0 = arith.constant 0 : i32
    %c0_i32_1 = arith.constant 0 : i32
    return %arg0, %arg1, %c0_i32, %c0_i32_0 : i32, i32, i32, i32
  }
}

module attributes {stable_mosaic.version = 11 : i64} {
  func.func @_conv3d_relu_kernel(%arg0: i32, %arg1: i32, %arg2: memref<1x8x10x10x8xf32, #tpu.memory_space<vmem>>, %arg3: memref<1x1x10x10x8xf32, #tpu.memory_space<vmem>>, %arg4: memref<1x1x10x10x8xf32, #tpu.memory_space<vmem>>, %arg5: memref<3x72x16xf32, #tpu.memory_space<vmem>>, %arg6: memref<1x8x64x16xf32, #tpu.memory_space<vmem>>) attributes {dimension_semantics = [#tpu.dimension_semantics<parallel>, #tpu.dimension_semantics<parallel>], iteration_bounds = array<i64: 2, 1>, scalar_prefetch = 0 : i64, scratch_operands = 0 : i64, tpu.core_type = #tpu.core_type<tc>, window_params = [{transform_indices = @transform_0, window_bounds = array<i64: 1, 8, 10, 10, 8>}, {transform_indices = @transform_1, window_bounds = array<i64: 1, 1, 10, 10, 8>}, {transform_indices = @transform_2, window_bounds = array<i64: 1, 1, 10, 10, 8>}, {pipeline_mode = #tpu.pipeline_mode<synchronous>, transform_indices = @transform_3, window_bounds = array<i64: 3, 72, 16>}, {transform_indices = @transform_4, window_bounds = array<i64: 1, 8, 64, 16>}]} {
    %c0 = arith.constant 0 : index
    %c0_0 = arith.constant 0 : index
    %c0_1 = arith.constant 0 : index
    %c0_2 = arith.constant 0 : index
    %c0_3 = arith.constant 0 : index
    %0 = vector.load %arg2[%c0, %c0_0, %c0_1, %c0_2, %c0_3] : memref<1x8x10x10x8xf32, #tpu.memory_space<vmem>>, vector<1x1x10x10x8xf32>
    %1 = vector.shape_cast %0 : vector<1x1x10x10x8xf32> to vector<10x10x8xf32>
    %c0_4 = arith.constant 0 : index
    %c1 = arith.constant 1 : index
    %c0_5 = arith.constant 0 : index
    %c0_6 = arith.constant 0 : index
    %c0_7 = arith.constant 0 : index
    %2 = vector.load %arg2[%c0_4, %c1, %c0_5, %c0_6, %c0_7] : memref<1x8x10x10x8xf32, #tpu.memory_space<vmem>>, vector<1x1x10x10x8xf32>
    %3 = vector.shape_cast %2 : vector<1x1x10x10x8xf32> to vector<10x10x8xf32>
    %c0_8 = arith.constant 0 : index
    %c2 = arith.constant 2 : index
    %c0_9 = arith.constant 0 : index
    %c0_10 = arith.constant 0 : index
    %c0_11 = arith.constant 0 : index
    %4 = vector.load %arg2[%c0_8, %c2, %c0_9, %c0_10, %c0_11] : memref<1x8x10x10x8xf32, #tpu.memory_space<vmem>>, vector<1x1x10x10x8xf32>
    %5 = vector.shape_cast %4 : vector<1x1x10x10x8xf32> to vector<10x10x8xf32>
    %6 = tpu.concatenate %1, %3, %5 in 2 : vector<10x10x8xf32>, vector<10x10x8xf32>, vector<10x10x8xf32> -> vector<10x10x24xf32>
    %7 = vector.extract_strided_slice %6 {offsets = [0, 0, 0], sizes = [8, 10, 24], strides = [1, 1, 1]} : vector<10x10x24xf32> to vector<8x10x24xf32>
    %8 = vector.extract_strided_slice %6 {offsets = [1, 0, 0], sizes = [8, 10, 24], strides = [1, 1, 1]} : vector<10x10x24xf32> to vector<8x10x24xf32>
    %9 = vector.extract_strided_slice %6 {offsets = [2, 0, 0], sizes = [8, 10, 24], strides = [1, 1, 1]} : vector<10x10x24xf32> to vector<8x10x24xf32>
    %10 = tpu.concatenate %7, %8, %9 in 2 : vector<8x10x24xf32>, vector<8x10x24xf32>, vector<8x10x24xf32> -> vector<8x10x72xf32>
    %11 = vector.extract_strided_slice %10 {offsets = [0, 0, 0], sizes = [8, 8, 72], strides = [1, 1, 1]} : vector<8x10x72xf32> to vector<8x8x72xf32>
    %12 = vector.shape_cast %11 : vector<8x8x72xf32> to vector<64x72xf32>
    %c0_12 = arith.constant 0 : index
    %c0_13 = arith.constant 0 : index
    %c0_14 = arith.constant 0 : index
    %13 = vector.load %arg5[%c0_12, %c0_13, %c0_14] : memref<3x72x16xf32, #tpu.memory_space<vmem>>, vector<1x72x16xf32>
    %14 = vector.shape_cast %13 : vector<1x72x16xf32> to vector<72x16xf32>
    %cst = arith.constant dense<0.000000e+00> : vector<64x16xf32>
    %15 = tpu.matmul %12, %14, %cst {dimension_numbers = #tpu.dot_dimension_numbers<[1], [0], [0], [1], [0, 0, 1, 1], [], []>} : vector<64x72xf32>, vector<72x16xf32>, vector<64x16xf32> -> vector<64x16xf32>
    %16 = vector.extract_strided_slice %10 {offsets = [0, 1, 0], sizes = [8, 8, 72], strides = [1, 1, 1]} : vector<8x10x72xf32> to vector<8x8x72xf32>
    %17 = vector.shape_cast %16 : vector<8x8x72xf32> to vector<64x72xf32>
    %c1_15 = arith.constant 1 : index
    %c0_16 = arith.constant 0 : index
    %c0_17 = arith.constant 0 : index
    %18 = vector.load %arg5[%c1_15, %c0_16, %c0_17] : memref<3x72x16xf32, #tpu.memory_space<vmem>>, vector<1x72x16xf32>
    %19 = vector.shape_cast %18 : vector<1x72x16xf32> to vector<72x16xf32>
    %cst_18 = arith.constant dense<0.000000e+00> : vector<64x16xf32>
    %20 = tpu.matmul %17, %19, %cst_18 {dimension_numbers = #tpu.dot_dimension_numbers<[1], [0], [0], [1], [0, 0, 1, 1], [], []>} : vector<64x72xf32>, vector<72x16xf32>, vector<64x16xf32> -> vector<64x16xf32>
    %21 = arith.addf %15, %20 : vector<64x16xf32>
    %22 = vector.extract_strided_slice %10 {offsets = [0, 2, 0], sizes = [8, 8, 72], strides = [1, 1, 1]} : vector<8x10x72xf32> to vector<8x8x72xf32>
    %23 = vector.shape_cast %22 : vector<8x8x72xf32> to vector<64x72xf32>
    %c2_19 = arith.constant 2 : index
    %c0_20 = arith.constant 0 : index
    %c0_21 = arith.constant 0 : index
    %24 = vector.load %arg5[%c2_19, %c0_20, %c0_21] : memref<3x72x16xf32, #tpu.memory_space<vmem>>, vector<1x72x16xf32>
    %25 = vector.shape_cast %24 : vector<1x72x16xf32> to vector<72x16xf32>
    %cst_22 = arith.constant dense<0.000000e+00> : vector<64x16xf32>
    %26 = tpu.matmul %23, %25, %cst_22 {dimension_numbers = #tpu.dot_dimension_numbers<[1], [0], [0], [1], [0, 0, 1, 1], [], []>} : vector<64x72xf32>, vector<72x16xf32>, vector<64x16xf32> -> vector<64x16xf32>
    %27 = arith.addf %21, %26 : vector<64x16xf32>
    %cst_23 = arith.constant 0.000000e+00 : f32
    %28 = vector.broadcast %cst_23 : f32 to vector<64x16xf32>
    %29 = arith.maximumf %27, %28 : vector<64x16xf32>
    %c0_24 = arith.constant 0 : index
    %c0_25 = arith.constant 0 : index
    %c0_26 = arith.constant 0 : index
    %c0_27 = arith.constant 0 : index
    %30 = vector.load %arg6[%c0_24, %c0_25, %c0_26, %c0_27] : memref<1x8x64x16xf32, #tpu.memory_space<vmem>>, vector<1x1x64x16xf32>
    %31 = vector.shape_cast %30 : vector<1x1x64x16xf32> to vector<64x16xf32>
    %32 = vector.shape_cast %29 : vector<64x16xf32> to vector<1x1x64x16xf32>
    tpu.vector_store %arg6[%c0_24, %c0_25, %c0_26, %c0_27], %32 {strides = array<i32>} : memref<1x8x64x16xf32, #tpu.memory_space<vmem>>, vector<1x1x64x16xf32>,
    %c0_28 = arith.constant 0 : index
    %c1_29 = arith.constant 1 : index
    %c0_30 = arith.constant 0 : index
    %c0_31 = arith.constant 0 : index
    %c0_32 = arith.constant 0 : index
    %33 = vector.load %arg2[%c0_28, %c1_29, %c0_30, %c0_31, %c0_32] : memref<1x8x10x10x8xf32, #tpu.memory_space<vmem>>, vector<1x1x10x10x8xf32>
    %34 = vector.shape_cast %33 : vector<1x1x10x10x8xf32> to vector<10x10x8xf32>
    %c0_33 = arith.constant 0 : index
    %c2_34 = arith.constant 2 : index
    %c0_35 = arith.constant 0 : index
    %c0_36 = arith.constant 0 : index
    %c0_37 = arith.constant 0 : index
    %35 = vector.load %arg2[%c0_33, %c2_34, %c0_35, %c0_36, %c0_37] : memref<1x8x10x10x8xf32, #tpu.memory_space<vmem>>, vector<1x1x10x10x8xf32>
    %36 = vector.shape_cast %35 : vector<1x1x10x10x8xf32> to vector<10x10x8xf32>
    %c0_38 = arith.constant 0 : index
    %c3 = arith.constant 3 : index
    %c0_39 = arith.constant 0 : index
    %c0_40 = arith.constant 0 : index
    %c0_41 = arith.constant 0 : index
    %37 = vector.load %arg2[%c0_38, %c3, %c0_39, %c0_40, %c0_41] : memref<1x8x10x10x8xf32, #tpu.memory_space<vmem>>, vector<1x1x10x10x8xf32>
    %38 = vector.shape_cast %37 : vector<1x1x10x10x8xf32> to vector<10x10x8xf32>
    %39 = tpu.concatenate %34, %36, %38 in 2 : vector<10x10x8xf32>, vector<10x10x8xf32>, vector<10x10x8xf32> -> vector<10x10x24xf32>
    %40 = vector.extract_strided_slice %39 {offsets = [0, 0, 0], sizes = [8, 10, 24], strides = [1, 1, 1]} : vector<10x10x24xf32> to vector<8x10x24xf32>
    %41 = vector.extract_strided_slice %39 {offsets = [1, 0, 0], sizes = [8, 10, 24], strides = [1, 1, 1]} : vector<10x10x24xf32> to vector<8x10x24xf32>
    %42 = vector.extract_strided_slice %39 {offsets = [2, 0, 0], sizes = [8, 10, 24], strides = [1, 1, 1]} : vector<10x10x24xf32> to vector<8x10x24xf32>
    %43 = tpu.concatenate %40, %41, %42 in 2 : vector<8x10x24xf32>, vector<8x10x24xf32>, vector<8x10x24xf32> -> vector<8x10x72xf32>
    %44 = vector.extract_strided_slice %43 {offsets = [0, 0, 0], sizes = [8, 8, 72], strides = [1, 1, 1]} : vector<8x10x72xf32> to vector<8x8x72xf32>
    %45 = vector.shape_cast %44 : vector<8x8x72xf32> to vector<64x72xf32>
    %c0_42 = arith.constant 0 : index
    %c0_43 = arith.constant 0 : index
    %c0_44 = arith.constant 0 : index
    %46 = vector.load %arg5[%c0_42, %c0_43, %c0_44] : memref<3x72x16xf32, #tpu.memory_space<vmem>>, vector<1x72x16xf32>
    %47 = vector.shape_cast %46 : vector<1x72x16xf32> to vector<72x16xf32>
    %cst_45 = arith.constant dense<0.000000e+00> : vector<64x16xf32>
    %48 = tpu.matmul %45, %47, %cst_45 {dimension_numbers = #tpu.dot_dimension_numbers<[1], [0], [0], [1], [0, 0, 1, 1], [], []>} : vector<64x72xf32>, vector<72x16xf32>, vector<64x16xf32> -> vector<64x16xf32>
    %49 = vector.extract_strided_slice %43 {offsets = [0, 1, 0], sizes = [8, 8, 72], strides = [1, 1, 1]} : vector<8x10x72xf32> to vector<8x8x72xf32>
    %50 = vector.shape_cast %49 : vector<8x8x72xf32> to vector<64x72xf32>
    %c1_46 = arith.constant 1 : index
    %c0_47 = arith.constant 0 : index
    %c0_48 = arith.constant 0 : index
    %51 = vector.load %arg5[%c1_46, %c0_47, %c0_48] : memref<3x72x16xf32, #tpu.memory_space<vmem>>, vector<1x72x16xf32>
    %52 = vector.shape_cast %51 : vector<1x72x16xf32> to vector<72x16xf32>
    %cst_49 = arith.constant dense<0.000000e+00> : vector<64x16xf32>
    %53 = tpu.matmul %50, %52, %cst_49 {dimension_numbers = #tpu.dot_dimension_numbers<[1], [0], [0], [1], [0, 0, 1, 1], [], []>} : vector<64x72xf32>, vector<72x16xf32>, vector<64x16xf32> -> vector<64x16xf32>
    %54 = arith.addf %48, %53 : vector<64x16xf32>
    %55 = vector.extract_strided_slice %43 {offsets = [0, 2, 0], sizes = [8, 8, 72], strides = [1, 1, 1]} : vector<8x10x72xf32> to vector<8x8x72xf32>
    %56 = vector.shape_cast %55 : vector<8x8x72xf32> to vector<64x72xf32>
    %c2_50 = arith.constant 2 : index
    %c0_51 = arith.constant 0 : index
    %c0_52 = arith.constant 0 : index
    %57 = vector.load %arg5[%c2_50, %c0_51, %c0_52] : memref<3x72x16xf32, #tpu.memory_space<vmem>>, vector<1x72x16xf32>
    %58 = vector.shape_cast %57 : vector<1x72x16xf32> to vector<72x16xf32>
    %cst_53 = arith.constant dense<0.000000e+00> : vector<64x16xf32>
    %59 = tpu.matmul %56, %58, %cst_53 {dimension_numbers = #tpu.dot_dimension_numbers<[1], [0], [0], [1], [0, 0, 1, 1], [], []>} : vector<64x72xf32>, vector<72x16xf32>, vector<64x16xf32> -> vector<64x16xf32>
    %60 = arith.addf %54, %59 : vector<64x16xf32>
    %cst_54 = arith.constant 0.000000e+00 : f32
    %61 = vector.broadcast %cst_54 : f32 to vector<64x16xf32>
    %62 = arith.maximumf %60, %61 : vector<64x16xf32>
    %c0_55 = arith.constant 0 : index
    %c1_56 = arith.constant 1 : index
    %c0_57 = arith.constant 0 : index
    %c0_58 = arith.constant 0 : index
    %63 = vector.load %arg6[%c0_55, %c1_56, %c0_57, %c0_58] : memref<1x8x64x16xf32, #tpu.memory_space<vmem>>, vector<1x1x64x16xf32>
    %64 = vector.shape_cast %63 : vector<1x1x64x16xf32> to vector<64x16xf32>
    %65 = vector.shape_cast %62 : vector<64x16xf32> to vector<1x1x64x16xf32>
    tpu.vector_store %arg6[%c0_55, %c1_56, %c0_57, %c0_58], %65 {strides = array<i32>} : memref<1x8x64x16xf32, #tpu.memory_space<vmem>>, vector<1x1x64x16xf32>,
    %c0_59 = arith.constant 0 : index
    %c2_60 = arith.constant 2 : index
    %c0_61 = arith.constant 0 : index
    %c0_62 = arith.constant 0 : index
    %c0_63 = arith.constant 0 : index
    %66 = vector.load %arg2[%c0_59, %c2_60, %c0_61, %c0_62, %c0_63] : memref<1x8x10x10x8xf32, #tpu.memory_space<vmem>>, vector<1x1x10x10x8xf32>
    %67 = vector.shape_cast %66 : vector<1x1x10x10x8xf32> to vector<10x10x8xf32>
    %c0_64 = arith.constant 0 : index
    %c3_65 = arith.constant 3 : index
    %c0_66 = arith.constant 0 : index
    %c0_67 = arith.constant 0 : index
    %c0_68 = arith.constant 0 : index
    %68 = vector.load %arg2[%c0_64, %c3_65, %c0_66, %c0_67, %c0_68] : memref<1x8x10x10x8xf32, #tpu.memory_space<vmem>>, vector<1x1x10x10x8xf32>
    %69 = vector.shape_cast %68 : vector<1x1x10x10x8xf32> to vector<10x10x8xf32>
    %c0_69 = arith.constant 0 : index
    %c4 = arith.constant 4 : index
    %c0_70 = arith.constant 0 : index
    %c0_71 = arith.constant 0 : index
    %c0_72 = arith.constant 0 : index
    %70 = vector.load %arg2[%c0_69, %c4, %c0_70, %c0_71, %c0_72] : memref<1x8x10x10x8xf32, #tpu.memory_space<vmem>>, vector<1x1x10x10x8xf32>
    %71 = vector.shape_cast %70 : vector<1x1x10x10x8xf32> to vector<10x10x8xf32>
    %72 = tpu.concatenate %67, %69, %71 in 2 : vector<10x10x8xf32>, vector<10x10x8xf32>, vector<10x10x8xf32> -> vector<10x10x24xf32>
    %73 = vector.extract_strided_slice %72 {offsets = [0, 0, 0], sizes = [8, 10, 24], strides = [1, 1, 1]} : vector<10x10x24xf32> to vector<8x10x24xf32>
    %74 = vector.extract_strided_slice %72 {offsets = [1, 0, 0], sizes = [8, 10, 24], strides = [1, 1, 1]} : vector<10x10x24xf32> to vector<8x10x24xf32>
    %75 = vector.extract_strided_slice %72 {offsets = [2, 0, 0], sizes = [8, 10, 24], strides = [1, 1, 1]} : vector<10x10x24xf32> to vector<8x10x24xf32>
    %76 = tpu.concatenate %73, %74, %75 in 2 : vector<8x10x24xf32>, vector<8x10x24xf32>, vector<8x10x24xf32> -> vector<8x10x72xf32>
    %77 = vector.extract_strided_slice %76 {offsets = [0, 0, 0], sizes = [8, 8, 72], strides = [1, 1, 1]} : vector<8x10x72xf32> to vector<8x8x72xf32>
    %78 = vector.shape_cast %77 : vector<8x8x72xf32> to vector<64x72xf32>
    %c0_73 = arith.constant 0 : index
    %c0_74 = arith.constant 0 : index
    %c0_75 = arith.constant 0 : index
    %79 = vector.load %arg5[%c0_73, %c0_74, %c0_75] : memref<3x72x16xf32, #tpu.memory_space<vmem>>, vector<1x72x16xf32>
    %80 = vector.shape_cast %79 : vector<1x72x16xf32> to vector<72x16xf32>
    %cst_76 = arith.constant dense<0.000000e+00> : vector<64x16xf32>
    %81 = tpu.matmul %78, %80, %cst_76 {dimension_numbers = #tpu.dot_dimension_numbers<[1], [0], [0], [1], [0, 0, 1, 1], [], []>} : vector<64x72xf32>, vector<72x16xf32>, vector<64x16xf32> -> vector<64x16xf32>
    %82 = vector.extract_strided_slice %76 {offsets = [0, 1, 0], sizes = [8, 8, 72], strides = [1, 1, 1]} : vector<8x10x72xf32> to vector<8x8x72xf32>
    %83 = vector.shape_cast %82 : vector<8x8x72xf32> to vector<64x72xf32>
    %c1_77 = arith.constant 1 : index
    %c0_78 = arith.constant 0 : index
    %c0_79 = arith.constant 0 : index
    %84 = vector.load %arg5[%c1_77, %c0_78, %c0_79] : memref<3x72x16xf32, #tpu.memory_space<vmem>>, vector<1x72x16xf32>
    %85 = vector.shape_cast %84 : vector<1x72x16xf32> to vector<72x16xf32>
    %cst_80 = arith.constant dense<0.000000e+00> : vector<64x16xf32>
    %86 = tpu.matmul %83, %85, %cst_80 {dimension_numbers = #tpu.dot_dimension_numbers<[1], [0], [0], [1], [0, 0, 1, 1], [], []>} : vector<64x72xf32>, vector<72x16xf32>, vector<64x16xf32> -> vector<64x16xf32>
    %87 = arith.addf %81, %86 : vector<64x16xf32>
    %88 = vector.extract_strided_slice %76 {offsets = [0, 2, 0], sizes = [8, 8, 72], strides = [1, 1, 1]} : vector<8x10x72xf32> to vector<8x8x72xf32>
    %89 = vector.shape_cast %88 : vector<8x8x72xf32> to vector<64x72xf32>
    %c2_81 = arith.constant 2 : index
    %c0_82 = arith.constant 0 : index
    %c0_83 = arith.constant 0 : index
    %90 = vector.load %arg5[%c2_81, %c0_82, %c0_83] : memref<3x72x16xf32, #tpu.memory_space<vmem>>, vector<1x72x16xf32>
    %91 = vector.shape_cast %90 : vector<1x72x16xf32> to vector<72x16xf32>
    %cst_84 = arith.constant dense<0.000000e+00> : vector<64x16xf32>
    %92 = tpu.matmul %89, %91, %cst_84 {dimension_numbers = #tpu.dot_dimension_numbers<[1], [0], [0], [1], [0, 0, 1, 1], [], []>} : vector<64x72xf32>, vector<72x16xf32>, vector<64x16xf32> -> vector<64x16xf32>
    %93 = arith.addf %87, %92 : vector<64x16xf32>
    %cst_85 = arith.constant 0.000000e+00 : f32
    %94 = vector.broadcast %cst_85 : f32 to vector<64x16xf32>
    %95 = arith.maximumf %93, %94 : vector<64x16xf32>
    %c0_86 = arith.constant 0 : index
    %c2_87 = arith.constant 2 : index
    %c0_88 = arith.constant 0 : index
    %c0_89 = arith.constant 0 : index
    %96 = vector.load %arg6[%c0_86, %c2_87, %c0_88, %c0_89] : memref<1x8x64x16xf32, #tpu.memory_space<vmem>>, vector<1x1x64x16xf32>
    %97 = vector.shape_cast %96 : vector<1x1x64x16xf32> to vector<64x16xf32>
    %98 = vector.shape_cast %95 : vector<64x16xf32> to vector<1x1x64x16xf32>
    tpu.vector_store %arg6[%c0_86, %c2_87, %c0_88, %c0_89], %98 {strides = array<i32>} : memref<1x8x64x16xf32, #tpu.memory_space<vmem>>, vector<1x1x64x16xf32>,
    %c0_90 = arith.constant 0 : index
    %c3_91 = arith.constant 3 : index
    %c0_92 = arith.constant 0 : index
    %c0_93 = arith.constant 0 : index
    %c0_94 = arith.constant 0 : index
    %99 = vector.load %arg2[%c0_90, %c3_91, %c0_92, %c0_93, %c0_94] : memref<1x8x10x10x8xf32, #tpu.memory_space<vmem>>, vector<1x1x10x10x8xf32>
    %100 = vector.shape_cast %99 : vector<1x1x10x10x8xf32> to vector<10x10x8xf32>
    %c0_95 = arith.constant 0 : index
    %c4_96 = arith.constant 4 : index
    %c0_97 = arith.constant 0 : index
    %c0_98 = arith.constant 0 : index
    %c0_99 = arith.constant 0 : index
    %101 = vector.load %arg2[%c0_95, %c4_96, %c0_97, %c0_98, %c0_99] : memref<1x8x10x10x8xf32, #tpu.memory_space<vmem>>, vector<1x1x10x10x8xf32>
    %102 = vector.shape_cast %101 : vector<1x1x10x10x8xf32> to vector<10x10x8xf32>
    %c0_100 = arith.constant 0 : index
    %c5 = arith.constant 5 : index
    %c0_101 = arith.constant 0 : index
    %c0_102 = arith.constant 0 : index
    %c0_103 = arith.constant 0 : index
    %103 = vector.load %arg2[%c0_100, %c5, %c0_101, %c0_102, %c0_103] : memref<1x8x10x10x8xf32, #tpu.memory_space<vmem>>, vector<1x1x10x10x8xf32>
    %104 = vector.shape_cast %103 : vector<1x1x10x10x8xf32> to vector<10x10x8xf32>
    %105 = tpu.concatenate %100, %102, %104 in 2 : vector<10x10x8xf32>, vector<10x10x8xf32>, vector<10x10x8xf32> -> vector<10x10x24xf32>
    %106 = vector.extract_strided_slice %105 {offsets = [0, 0, 0], sizes = [8, 10, 24], strides = [1, 1, 1]} : vector<10x10x24xf32> to vector<8x10x24xf32>
    %107 = vector.extract_strided_slice %105 {offsets = [1, 0, 0], sizes = [8, 10, 24], strides = [1, 1, 1]} : vector<10x10x24xf32> to vector<8x10x24xf32>
    %108 = vector.extract_strided_slice %105 {offsets = [2, 0, 0], sizes = [8, 10, 24], strides = [1, 1, 1]} : vector<10x10x24xf32> to vector<8x10x24xf32>
    %109 = tpu.concatenate %106, %107, %108 in 2 : vector<8x10x24xf32>, vector<8x10x24xf32>, vector<8x10x24xf32> -> vector<8x10x72xf32>
    %110 = vector.extract_strided_slice %109 {offsets = [0, 0, 0], sizes = [8, 8, 72], strides = [1, 1, 1]} : vector<8x10x72xf32> to vector<8x8x72xf32>
    %111 = vector.shape_cast %110 : vector<8x8x72xf32> to vector<64x72xf32>
    %c0_104 = arith.constant 0 : index
    %c0_105 = arith.constant 0 : index
    %c0_106 = arith.constant 0 : index
    %112 = vector.load %arg5[%c0_104, %c0_105, %c0_106] : memref<3x72x16xf32, #tpu.memory_space<vmem>>, vector<1x72x16xf32>
    %113 = vector.shape_cast %112 : vector<1x72x16xf32> to vector<72x16xf32>
    %cst_107 = arith.constant dense<0.000000e+00> : vector<64x16xf32>
    %114 = tpu.matmul %111, %113, %cst_107 {dimension_numbers = #tpu.dot_dimension_numbers<[1], [0], [0], [1], [0, 0, 1, 1], [], []>} : vector<64x72xf32>, vector<72x16xf32>, vector<64x16xf32> -> vector<64x16xf32>
    %115 = vector.extract_strided_slice %109 {offsets = [0, 1, 0], sizes = [8, 8, 72], strides = [1, 1, 1]} : vector<8x10x72xf32> to vector<8x8x72xf32>
    %116 = vector.shape_cast %115 : vector<8x8x72xf32> to vector<64x72xf32>
    %c1_108 = arith.constant 1 : index
    %c0_109 = arith.constant 0 : index
    %c0_110 = arith.constant 0 : index
    %117 = vector.load %arg5[%c1_108, %c0_109, %c0_110] : memref<3x72x16xf32, #tpu.memory_space<vmem>>, vector<1x72x16xf32>
    %118 = vector.shape_cast %117 : vector<1x72x16xf32> to vector<72x16xf32>
    %cst_111 = arith.constant dense<0.000000e+00> : vector<64x16xf32>
    %119 = tpu.matmul %116, %118, %cst_111 {dimension_numbers = #tpu.dot_dimension_numbers<[1], [0], [0], [1], [0, 0, 1, 1], [], []>} : vector<64x72xf32>, vector<72x16xf32>, vector<64x16xf32> -> vector<64x16xf32>
    %120 = arith.addf %114, %119 : vector<64x16xf32>
    %121 = vector.extract_strided_slice %109 {offsets = [0, 2, 0], sizes = [8, 8, 72], strides = [1, 1, 1]} : vector<8x10x72xf32> to vector<8x8x72xf32>
    %122 = vector.shape_cast %121 : vector<8x8x72xf32> to vector<64x72xf32>
    %c2_112 = arith.constant 2 : index
    %c0_113 = arith.constant 0 : index
    %c0_114 = arith.constant 0 : index
    %123 = vector.load %arg5[%c2_112, %c0_113, %c0_114] : memref<3x72x16xf32, #tpu.memory_space<vmem>>, vector<1x72x16xf32>
    %124 = vector.shape_cast %123 : vector<1x72x16xf32> to vector<72x16xf32>
    %cst_115 = arith.constant dense<0.000000e+00> : vector<64x16xf32>
    %125 = tpu.matmul %122, %124, %cst_115 {dimension_numbers = #tpu.dot_dimension_numbers<[1], [0], [0], [1], [0, 0, 1, 1], [], []>} : vector<64x72xf32>, vector<72x16xf32>, vector<64x16xf32> -> vector<64x16xf32>
    %126 = arith.addf %120, %125 : vector<64x16xf32>
    %cst_116 = arith.constant 0.000000e+00 : f32
    %127 = vector.broadcast %cst_116 : f32 to vector<64x16xf32>
    %128 = arith.maximumf %126, %127 : vector<64x16xf32>
    %c0_117 = arith.constant 0 : index
    %c3_118 = arith.constant 3 : index
    %c0_119 = arith.constant 0 : index
    %c0_120 = arith.constant 0 : index
    %129 = vector.load %arg6[%c0_117, %c3_118, %c0_119, %c0_120] : memref<1x8x64x16xf32, #tpu.memory_space<vmem>>, vector<1x1x64x16xf32>
    %130 = vector.shape_cast %129 : vector<1x1x64x16xf32> to vector<64x16xf32>
    %131 = vector.shape_cast %128 : vector<64x16xf32> to vector<1x1x64x16xf32>
    tpu.vector_store %arg6[%c0_117, %c3_118, %c0_119, %c0_120], %131 {strides = array<i32>} : memref<1x8x64x16xf32, #tpu.memory_space<vmem>>, vector<1x1x64x16xf32>,
    %c0_121 = arith.constant 0 : index
    %c4_122 = arith.constant 4 : index
    %c0_123 = arith.constant 0 : index
    %c0_124 = arith.constant 0 : index
    %c0_125 = arith.constant 0 : index
    %132 = vector.load %arg2[%c0_121, %c4_122, %c0_123, %c0_124, %c0_125] : memref<1x8x10x10x8xf32, #tpu.memory_space<vmem>>, vector<1x1x10x10x8xf32>
    %133 = vector.shape_cast %132 : vector<1x1x10x10x8xf32> to vector<10x10x8xf32>
    %c0_126 = arith.constant 0 : index
    %c5_127 = arith.constant 5 : index
    %c0_128 = arith.constant 0 : index
    %c0_129 = arith.constant 0 : index
    %c0_130 = arith.constant 0 : index
    %134 = vector.load %arg2[%c0_126, %c5_127, %c0_128, %c0_129, %c0_130] : memref<1x8x10x10x8xf32, #tpu.memory_space<vmem>>, vector<1x1x10x10x8xf32>
    %135 = vector.shape_cast %134 : vector<1x1x10x10x8xf32> to vector<10x10x8xf32>
    %c0_131 = arith.constant 0 : index
    %c6 = arith.constant 6 : index
    %c0_132 = arith.constant 0 : index
    %c0_133 = arith.constant 0 : index
    %c0_134 = arith.constant 0 : index
    %136 = vector.load %arg2[%c0_131, %c6, %c0_132, %c0_133, %c0_134] : memref<1x8x10x10x8xf32, #tpu.memory_space<vmem>>, vector<1x1x10x10x8xf32>
    %137 = vector.shape_cast %136 : vector<1x1x10x10x8xf32> to vector<10x10x8xf32>
    %138 = tpu.concatenate %133, %135, %137 in 2 : vector<10x10x8xf32>, vector<10x10x8xf32>, vector<10x10x8xf32> -> vector<10x10x24xf32>
    %139 = vector.extract_strided_slice %138 {offsets = [0, 0, 0], sizes = [8, 10, 24], strides = [1, 1, 1]} : vector<10x10x24xf32> to vector<8x10x24xf32>
    %140 = vector.extract_strided_slice %138 {offsets = [1, 0, 0], sizes = [8, 10, 24], strides = [1, 1, 1]} : vector<10x10x24xf32> to vector<8x10x24xf32>
    %141 = vector.extract_strided_slice %138 {offsets = [2, 0, 0], sizes = [8, 10, 24], strides = [1, 1, 1]} : vector<10x10x24xf32> to vector<8x10x24xf32>
    %142 = tpu.concatenate %139, %140, %141 in 2 : vector<8x10x24xf32>, vector<8x10x24xf32>, vector<8x10x24xf32> -> vector<8x10x72xf32>
    %143 = vector.extract_strided_slice %142 {offsets = [0, 0, 0], sizes = [8, 8, 72], strides = [1, 1, 1]} : vector<8x10x72xf32> to vector<8x8x72xf32>
    %144 = vector.shape_cast %143 : vector<8x8x72xf32> to vector<64x72xf32>
    %c0_135 = arith.constant 0 : index
    %c0_136 = arith.constant 0 : index
    %c0_137 = arith.constant 0 : index
    %145 = vector.load %arg5[%c0_135, %c0_136, %c0_137] : memref<3x72x16xf32, #tpu.memory_space<vmem>>, vector<1x72x16xf32>
    %146 = vector.shape_cast %145 : vector<1x72x16xf32> to vector<72x16xf32>
    %cst_138 = arith.constant dense<0.000000e+00> : vector<64x16xf32>
    %147 = tpu.matmul %144, %146, %cst_138 {dimension_numbers = #tpu.dot_dimension_numbers<[1], [0], [0], [1], [0, 0, 1, 1], [], []>} : vector<64x72xf32>, vector<72x16xf32>, vector<64x16xf32> -> vector<64x16xf32>
    %148 = vector.extract_strided_slice %142 {offsets = [0, 1, 0], sizes = [8, 8, 72], strides = [1, 1, 1]} : vector<8x10x72xf32> to vector<8x8x72xf32>
    %149 = vector.shape_cast %148 : vector<8x8x72xf32> to vector<64x72xf32>
    %c1_139 = arith.constant 1 : index
    %c0_140 = arith.constant 0 : index
    %c0_141 = arith.constant 0 : index
    %150 = vector.load %arg5[%c1_139, %c0_140, %c0_141] : memref<3x72x16xf32, #tpu.memory_space<vmem>>, vector<1x72x16xf32>
    %151 = vector.shape_cast %150 : vector<1x72x16xf32> to vector<72x16xf32>
    %cst_142 = arith.constant dense<0.000000e+00> : vector<64x16xf32>
    %152 = tpu.matmul %149, %151, %cst_142 {dimension_numbers = #tpu.dot_dimension_numbers<[1], [0], [0], [1], [0, 0, 1, 1], [], []>} : vector<64x72xf32>, vector<72x16xf32>, vector<64x16xf32> -> vector<64x16xf32>
    %153 = arith.addf %147, %152 : vector<64x16xf32>
    %154 = vector.extract_strided_slice %142 {offsets = [0, 2, 0], sizes = [8, 8, 72], strides = [1, 1, 1]} : vector<8x10x72xf32> to vector<8x8x72xf32>
    %155 = vector.shape_cast %154 : vector<8x8x72xf32> to vector<64x72xf32>
    %c2_143 = arith.constant 2 : index
    %c0_144 = arith.constant 0 : index
    %c0_145 = arith.constant 0 : index
    %156 = vector.load %arg5[%c2_143, %c0_144, %c0_145] : memref<3x72x16xf32, #tpu.memory_space<vmem>>, vector<1x72x16xf32>
    %157 = vector.shape_cast %156 : vector<1x72x16xf32> to vector<72x16xf32>
    %cst_146 = arith.constant dense<0.000000e+00> : vector<64x16xf32>
    %158 = tpu.matmul %155, %157, %cst_146 {dimension_numbers = #tpu.dot_dimension_numbers<[1], [0], [0], [1], [0, 0, 1, 1], [], []>} : vector<64x72xf32>, vector<72x16xf32>, vector<64x16xf32> -> vector<64x16xf32>
    %159 = arith.addf %153, %158 : vector<64x16xf32>
    %cst_147 = arith.constant 0.000000e+00 : f32
    %160 = vector.broadcast %cst_147 : f32 to vector<64x16xf32>
    %161 = arith.maximumf %159, %160 : vector<64x16xf32>
    %c0_148 = arith.constant 0 : index
    %c4_149 = arith.constant 4 : index
    %c0_150 = arith.constant 0 : index
    %c0_151 = arith.constant 0 : index
    %162 = vector.load %arg6[%c0_148, %c4_149, %c0_150, %c0_151] : memref<1x8x64x16xf32, #tpu.memory_space<vmem>>, vector<1x1x64x16xf32>
    %163 = vector.shape_cast %162 : vector<1x1x64x16xf32> to vector<64x16xf32>
    %164 = vector.shape_cast %161 : vector<64x16xf32> to vector<1x1x64x16xf32>
    tpu.vector_store %arg6[%c0_148, %c4_149, %c0_150, %c0_151], %164 {strides = array<i32>} : memref<1x8x64x16xf32, #tpu.memory_space<vmem>>, vector<1x1x64x16xf32>,
    %c0_152 = arith.constant 0 : index
    %c5_153 = arith.constant 5 : index
    %c0_154 = arith.constant 0 : index
    %c0_155 = arith.constant 0 : index
    %c0_156 = arith.constant 0 : index
    %165 = vector.load %arg2[%c0_152, %c5_153, %c0_154, %c0_155, %c0_156] : memref<1x8x10x10x8xf32, #tpu.memory_space<vmem>>, vector<1x1x10x10x8xf32>
    %166 = vector.shape_cast %165 : vector<1x1x10x10x8xf32> to vector<10x10x8xf32>
    %c0_157 = arith.constant 0 : index
    %c6_158 = arith.constant 6 : index
    %c0_159 = arith.constant 0 : index
    %c0_160 = arith.constant 0 : index
    %c0_161 = arith.constant 0 : index
    %167 = vector.load %arg2[%c0_157, %c6_158, %c0_159, %c0_160, %c0_161] : memref<1x8x10x10x8xf32, #tpu.memory_space<vmem>>, vector<1x1x10x10x8xf32>
    %168 = vector.shape_cast %167 : vector<1x1x10x10x8xf32> to vector<10x10x8xf32>
    %c0_162 = arith.constant 0 : index
    %c7 = arith.constant 7 : index
    %c0_163 = arith.constant 0 : index
    %c0_164 = arith.constant 0 : index
    %c0_165 = arith.constant 0 : index
    %169 = vector.load %arg2[%c0_162, %c7, %c0_163, %c0_164, %c0_165] : memref<1x8x10x10x8xf32, #tpu.memory_space<vmem>>, vector<1x1x10x10x8xf32>
    %170 = vector.shape_cast %169 : vector<1x1x10x10x8xf32> to vector<10x10x8xf32>
    %171 = tpu.concatenate %166, %168, %170 in 2 : vector<10x10x8xf32>, vector<10x10x8xf32>, vector<10x10x8xf32> -> vector<10x10x24xf32>
    %172 = vector.extract_strided_slice %171 {offsets = [0, 0, 0], sizes = [8, 10, 24], strides = [1, 1, 1]} : vector<10x10x24xf32> to vector<8x10x24xf32>
    %173 = vector.extract_strided_slice %171 {offsets = [1, 0, 0], sizes = [8, 10, 24], strides = [1, 1, 1]} : vector<10x10x24xf32> to vector<8x10x24xf32>
    %174 = vector.extract_strided_slice %171 {offsets = [2, 0, 0], sizes = [8, 10, 24], strides = [1, 1, 1]} : vector<10x10x24xf32> to vector<8x10x24xf32>
    %175 = tpu.concatenate %172, %173, %174 in 2 : vector<8x10x24xf32>, vector<8x10x24xf32>, vector<8x10x24xf32> -> vector<8x10x72xf32>
    %176 = vector.extract_strided_slice %175 {offsets = [0, 0, 0], sizes = [8, 8, 72], strides = [1, 1, 1]} : vector<8x10x72xf32> to vector<8x8x72xf32>
    %177 = vector.shape_cast %176 : vector<8x8x72xf32> to vector<64x72xf32>
    %c0_166 = arith.constant 0 : index
    %c0_167 = arith.constant 0 : index
    %c0_168 = arith.constant 0 : index
    %178 = vector.load %arg5[%c0_166, %c0_167, %c0_168] : memref<3x72x16xf32, #tpu.memory_space<vmem>>, vector<1x72x16xf32>
    %179 = vector.shape_cast %178 : vector<1x72x16xf32> to vector<72x16xf32>
    %cst_169 = arith.constant dense<0.000000e+00> : vector<64x16xf32>
    %180 = tpu.matmul %177, %179, %cst_169 {dimension_numbers = #tpu.dot_dimension_numbers<[1], [0], [0], [1], [0, 0, 1, 1], [], []>} : vector<64x72xf32>, vector<72x16xf32>, vector<64x16xf32> -> vector<64x16xf32>
    %181 = vector.extract_strided_slice %175 {offsets = [0, 1, 0], sizes = [8, 8, 72], strides = [1, 1, 1]} : vector<8x10x72xf32> to vector<8x8x72xf32>
    %182 = vector.shape_cast %181 : vector<8x8x72xf32> to vector<64x72xf32>
    %c1_170 = arith.constant 1 : index
    %c0_171 = arith.constant 0 : index
    %c0_172 = arith.constant 0 : index
    %183 = vector.load %arg5[%c1_170, %c0_171, %c0_172] : memref<3x72x16xf32, #tpu.memory_space<vmem>>, vector<1x72x16xf32>
    %184 = vector.shape_cast %183 : vector<1x72x16xf32> to vector<72x16xf32>
    %cst_173 = arith.constant dense<0.000000e+00> : vector<64x16xf32>
    %185 = tpu.matmul %182, %184, %cst_173 {dimension_numbers = #tpu.dot_dimension_numbers<[1], [0], [0], [1], [0, 0, 1, 1], [], []>} : vector<64x72xf32>, vector<72x16xf32>, vector<64x16xf32> -> vector<64x16xf32>
    %186 = arith.addf %180, %185 : vector<64x16xf32>
    %187 = vector.extract_strided_slice %175 {offsets = [0, 2, 0], sizes = [8, 8, 72], strides = [1, 1, 1]} : vector<8x10x72xf32> to vector<8x8x72xf32>
    %188 = vector.shape_cast %187 : vector<8x8x72xf32> to vector<64x72xf32>
    %c2_174 = arith.constant 2 : index
    %c0_175 = arith.constant 0 : index
    %c0_176 = arith.constant 0 : index
    %189 = vector.load %arg5[%c2_174, %c0_175, %c0_176] : memref<3x72x16xf32, #tpu.memory_space<vmem>>, vector<1x72x16xf32>
    %190 = vector.shape_cast %189 : vector<1x72x16xf32> to vector<72x16xf32>
    %cst_177 = arith.constant dense<0.000000e+00> : vector<64x16xf32>
    %191 = tpu.matmul %188, %190, %cst_177 {dimension_numbers = #tpu.dot_dimension_numbers<[1], [0], [0], [1], [0, 0, 1, 1], [], []>} : vector<64x72xf32>, vector<72x16xf32>, vector<64x16xf32> -> vector<64x16xf32>
    %192 = arith.addf %186, %191 : vector<64x16xf32>
    %cst_178 = arith.constant 0.000000e+00 : f32
    %193 = vector.broadcast %cst_178 : f32 to vector<64x16xf32>
    %194 = arith.maximumf %192, %193 : vector<64x16xf32>
    %c0_179 = arith.constant 0 : index
    %c5_180 = arith.constant 5 : index
    %c0_181 = arith.constant 0 : index
    %c0_182 = arith.constant 0 : index
    %195 = vector.load %arg6[%c0_179, %c5_180, %c0_181, %c0_182] : memref<1x8x64x16xf32, #tpu.memory_space<vmem>>, vector<1x1x64x16xf32>
    %196 = vector.shape_cast %195 : vector<1x1x64x16xf32> to vector<64x16xf32>
    %197 = vector.shape_cast %194 : vector<64x16xf32> to vector<1x1x64x16xf32>
    tpu.vector_store %arg6[%c0_179, %c5_180, %c0_181, %c0_182], %197 {strides = array<i32>} : memref<1x8x64x16xf32, #tpu.memory_space<vmem>>, vector<1x1x64x16xf32>,
    %c0_183 = arith.constant 0 : index
    %c6_184 = arith.constant 6 : index
    %c0_185 = arith.constant 0 : index
    %c0_186 = arith.constant 0 : index
    %c0_187 = arith.constant 0 : index
    %198 = vector.load %arg2[%c0_183, %c6_184, %c0_185, %c0_186, %c0_187] : memref<1x8x10x10x8xf32, #tpu.memory_space<vmem>>, vector<1x1x10x10x8xf32>
    %199 = vector.shape_cast %198 : vector<1x1x10x10x8xf32> to vector<10x10x8xf32>
    %c0_188 = arith.constant 0 : index
    %c7_189 = arith.constant 7 : index
    %c0_190 = arith.constant 0 : index
    %c0_191 = arith.constant 0 : index
    %c0_192 = arith.constant 0 : index
    %200 = vector.load %arg2[%c0_188, %c7_189, %c0_190, %c0_191, %c0_192] : memref<1x8x10x10x8xf32, #tpu.memory_space<vmem>>, vector<1x1x10x10x8xf32>
    %201 = vector.shape_cast %200 : vector<1x1x10x10x8xf32> to vector<10x10x8xf32>
    %c0_193 = arith.constant 0 : index
    %c0_194 = arith.constant 0 : index
    %c0_195 = arith.constant 0 : index
    %c0_196 = arith.constant 0 : index
    %c0_197 = arith.constant 0 : index
    %202 = vector.load %arg3[%c0_193, %c0_194, %c0_195, %c0_196, %c0_197] : memref<1x1x10x10x8xf32, #tpu.memory_space<vmem>>, vector<1x1x10x10x8xf32>
    %203 = vector.shape_cast %202 : vector<1x1x10x10x8xf32> to vector<10x10x8xf32>
    %204 = tpu.concatenate %199, %201, %203 in 2 : vector<10x10x8xf32>, vector<10x10x8xf32>, vector<10x10x8xf32> -> vector<10x10x24xf32>
    %205 = vector.extract_strided_slice %204 {offsets = [0, 0, 0], sizes = [8, 10, 24], strides = [1, 1, 1]} : vector<10x10x24xf32> to vector<8x10x24xf32>
    %206 = vector.extract_strided_slice %204 {offsets = [1, 0, 0], sizes = [8, 10, 24], strides = [1, 1, 1]} : vector<10x10x24xf32> to vector<8x10x24xf32>
    %207 = vector.extract_strided_slice %204 {offsets = [2, 0, 0], sizes = [8, 10, 24], strides = [1, 1, 1]} : vector<10x10x24xf32> to vector<8x10x24xf32>
    %208 = tpu.concatenate %205, %206, %207 in 2 : vector<8x10x24xf32>, vector<8x10x24xf32>, vector<8x10x24xf32> -> vector<8x10x72xf32>
    %209 = vector.extract_strided_slice %208 {offsets = [0, 0, 0], sizes = [8, 8, 72], strides = [1, 1, 1]} : vector<8x10x72xf32> to vector<8x8x72xf32>
    %210 = vector.shape_cast %209 : vector<8x8x72xf32> to vector<64x72xf32>
    %c0_198 = arith.constant 0 : index
    %c0_199 = arith.constant 0 : index
    %c0_200 = arith.constant 0 : index
    %211 = vector.load %arg5[%c0_198, %c0_199, %c0_200] : memref<3x72x16xf32, #tpu.memory_space<vmem>>, vector<1x72x16xf32>
    %212 = vector.shape_cast %211 : vector<1x72x16xf32> to vector<72x16xf32>
    %cst_201 = arith.constant dense<0.000000e+00> : vector<64x16xf32>
    %213 = tpu.matmul %210, %212, %cst_201 {dimension_numbers = #tpu.dot_dimension_numbers<[1], [0], [0], [1], [0, 0, 1, 1], [], []>} : vector<64x72xf32>, vector<72x16xf32>, vector<64x16xf32> -> vector<64x16xf32>
    %214 = vector.extract_strided_slice %208 {offsets = [0, 1, 0], sizes = [8, 8, 72], strides = [1, 1, 1]} : vector<8x10x72xf32> to vector<8x8x72xf32>
    %215 = vector.shape_cast %214 : vector<8x8x72xf32> to vector<64x72xf32>
    %c1_202 = arith.constant 1 : index
    %c0_203 = arith.constant 0 : index
    %c0_204 = arith.constant 0 : index
    %216 = vector.load %arg5[%c1_202, %c0_203, %c0_204] : memref<3x72x16xf32, #tpu.memory_space<vmem>>, vector<1x72x16xf32>
    %217 = vector.shape_cast %216 : vector<1x72x16xf32> to vector<72x16xf32>
    %cst_205 = arith.constant dense<0.000000e+00> : vector<64x16xf32>
    %218 = tpu.matmul %215, %217, %cst_205 {dimension_numbers = #tpu.dot_dimension_numbers<[1], [0], [0], [1], [0, 0, 1, 1], [], []>} : vector<64x72xf32>, vector<72x16xf32>, vector<64x16xf32> -> vector<64x16xf32>
    %219 = arith.addf %213, %218 : vector<64x16xf32>
    %220 = vector.extract_strided_slice %208 {offsets = [0, 2, 0], sizes = [8, 8, 72], strides = [1, 1, 1]} : vector<8x10x72xf32> to vector<8x8x72xf32>
    %221 = vector.shape_cast %220 : vector<8x8x72xf32> to vector<64x72xf32>
    %c2_206 = arith.constant 2 : index
    %c0_207 = arith.constant 0 : index
    %c0_208 = arith.constant 0 : index
    %222 = vector.load %arg5[%c2_206, %c0_207, %c0_208] : memref<3x72x16xf32, #tpu.memory_space<vmem>>, vector<1x72x16xf32>
    %223 = vector.shape_cast %222 : vector<1x72x16xf32> to vector<72x16xf32>
    %cst_209 = arith.constant dense<0.000000e+00> : vector<64x16xf32>
    %224 = tpu.matmul %221, %223, %cst_209 {dimension_numbers = #tpu.dot_dimension_numbers<[1], [0], [0], [1], [0, 0, 1, 1], [], []>} : vector<64x72xf32>, vector<72x16xf32>, vector<64x16xf32> -> vector<64x16xf32>
    %225 = arith.addf %219, %224 : vector<64x16xf32>
    %cst_210 = arith.constant 0.000000e+00 : f32
    %226 = vector.broadcast %cst_210 : f32 to vector<64x16xf32>
    %227 = arith.maximumf %225, %226 : vector<64x16xf32>
    %c0_211 = arith.constant 0 : index
    %c6_212 = arith.constant 6 : index
    %c0_213 = arith.constant 0 : index
    %c0_214 = arith.constant 0 : index
    %228 = vector.load %arg6[%c0_211, %c6_212, %c0_213, %c0_214] : memref<1x8x64x16xf32, #tpu.memory_space<vmem>>, vector<1x1x64x16xf32>
    %229 = vector.shape_cast %228 : vector<1x1x64x16xf32> to vector<64x16xf32>
    %230 = vector.shape_cast %227 : vector<64x16xf32> to vector<1x1x64x16xf32>
    tpu.vector_store %arg6[%c0_211, %c6_212, %c0_213, %c0_214], %230 {strides = array<i32>} : memref<1x8x64x16xf32, #tpu.memory_space<vmem>>, vector<1x1x64x16xf32>,
    %c0_215 = arith.constant 0 : index
    %c7_216 = arith.constant 7 : index
    %c0_217 = arith.constant 0 : index
    %c0_218 = arith.constant 0 : index
    %c0_219 = arith.constant 0 : index
    %231 = vector.load %arg2[%c0_215, %c7_216, %c0_217, %c0_218, %c0_219] : memref<1x8x10x10x8xf32, #tpu.memory_space<vmem>>, vector<1x1x10x10x8xf32>
    %232 = vector.shape_cast %231 : vector<1x1x10x10x8xf32> to vector<10x10x8xf32>
    %c0_220 = arith.constant 0 : index
    %c0_221 = arith.constant 0 : index
    %c0_222 = arith.constant 0 : index
    %c0_223 = arith.constant 0 : index
    %c0_224 = arith.constant 0 : index
    %233 = vector.load %arg3[%c0_220, %c0_221, %c0_222, %c0_223, %c0_224] : memref<1x1x10x10x8xf32, #tpu.memory_space<vmem>>, vector<1x1x10x10x8xf32>
    %234 = vector.shape_cast %233 : vector<1x1x10x10x8xf32> to vector<10x10x8xf32>
    %c0_225 = arith.constant 0 : index
    %c0_226 = arith.constant 0 : index
    %c0_227 = arith.constant 0 : index
    %c0_228 = arith.constant 0 : index
    %c0_229 = arith.constant 0 : index
    %235 = vector.load %arg4[%c0_225, %c0_226, %c0_227, %c0_228, %c0_229] : memref<1x1x10x10x8xf32, #tpu.memory_space<vmem>>, vector<1x1x10x10x8xf32>
    %236 = vector.shape_cast %235 : vector<1x1x10x10x8xf32> to vector<10x10x8xf32>
    %237 = tpu.concatenate %232, %234, %236 in 2 : vector<10x10x8xf32>, vector<10x10x8xf32>, vector<10x10x8xf32> -> vector<10x10x24xf32>
    %238 = vector.extract_strided_slice %237 {offsets = [0, 0, 0], sizes = [8, 10, 24], strides = [1, 1, 1]} : vector<10x10x24xf32> to vector<8x10x24xf32>
    %239 = vector.extract_strided_slice %237 {offsets = [1, 0, 0], sizes = [8, 10, 24], strides = [1, 1, 1]} : vector<10x10x24xf32> to vector<8x10x24xf32>
    %240 = vector.extract_strided_slice %237 {offsets = [2, 0, 0], sizes = [8, 10, 24], strides = [1, 1, 1]} : vector<10x10x24xf32> to vector<8x10x24xf32>
    %241 = tpu.concatenate %238, %239, %240 in 2 : vector<8x10x24xf32>, vector<8x10x24xf32>, vector<8x10x24xf32> -> vector<8x10x72xf32>
    %242 = vector.extract_strided_slice %241 {offsets = [0, 0, 0], sizes = [8, 8, 72], strides = [1, 1, 1]} : vector<8x10x72xf32> to vector<8x8x72xf32>
    %243 = vector.shape_cast %242 : vector<8x8x72xf32> to vector<64x72xf32>
    %c0_230 = arith.constant 0 : index
    %c0_231 = arith.constant 0 : index
    %c0_232 = arith.constant 0 : index
    %244 = vector.load %arg5[%c0_230, %c0_231, %c0_232] : memref<3x72x16xf32, #tpu.memory_space<vmem>>, vector<1x72x16xf32>
    %245 = vector.shape_cast %244 : vector<1x72x16xf32> to vector<72x16xf32>
    %cst_233 = arith.constant dense<0.000000e+00> : vector<64x16xf32>
    %246 = tpu.matmul %243, %245, %cst_233 {dimension_numbers = #tpu.dot_dimension_numbers<[1], [0], [0], [1], [0, 0, 1, 1], [], []>} : vector<64x72xf32>, vector<72x16xf32>, vector<64x16xf32> -> vector<64x16xf32>
    %247 = vector.extract_strided_slice %241 {offsets = [0, 1, 0], sizes = [8, 8, 72], strides = [1, 1, 1]} : vector<8x10x72xf32> to vector<8x8x72xf32>
    %248 = vector.shape_cast %247 : vector<8x8x72xf32> to vector<64x72xf32>
    %c1_234 = arith.constant 1 : index
    %c0_235 = arith.constant 0 : index
    %c0_236 = arith.constant 0 : index
    %249 = vector.load %arg5[%c1_234, %c0_235, %c0_236] : memref<3x72x16xf32, #tpu.memory_space<vmem>>, vector<1x72x16xf32>
    %250 = vector.shape_cast %249 : vector<1x72x16xf32> to vector<72x16xf32>
    %cst_237 = arith.constant dense<0.000000e+00> : vector<64x16xf32>
    %251 = tpu.matmul %248, %250, %cst_237 {dimension_numbers = #tpu.dot_dimension_numbers<[1], [0], [0], [1], [0, 0, 1, 1], [], []>} : vector<64x72xf32>, vector<72x16xf32>, vector<64x16xf32> -> vector<64x16xf32>
    %252 = arith.addf %246, %251 : vector<64x16xf32>
    %253 = vector.extract_strided_slice %241 {offsets = [0, 2, 0], sizes = [8, 8, 72], strides = [1, 1, 1]} : vector<8x10x72xf32> to vector<8x8x72xf32>
    %254 = vector.shape_cast %253 : vector<8x8x72xf32> to vector<64x72xf32>
    %c2_238 = arith.constant 2 : index
    %c0_239 = arith.constant 0 : index
    %c0_240 = arith.constant 0 : index
    %255 = vector.load %arg5[%c2_238, %c0_239, %c0_240] : memref<3x72x16xf32, #tpu.memory_space<vmem>>, vector<1x72x16xf32>
    %256 = vector.shape_cast %255 : vector<1x72x16xf32> to vector<72x16xf32>
    %cst_241 = arith.constant dense<0.000000e+00> : vector<64x16xf32>
    %257 = tpu.matmul %254, %256, %cst_241 {dimension_numbers = #tpu.dot_dimension_numbers<[1], [0], [0], [1], [0, 0, 1, 1], [], []>} : vector<64x72xf32>, vector<72x16xf32>, vector<64x16xf32> -> vector<64x16xf32>
    %258 = arith.addf %252, %257 : vector<64x16xf32>
    %cst_242 = arith.constant 0.000000e+00 : f32
    %259 = vector.broadcast %cst_242 : f32 to vector<64x16xf32>
    %260 = arith.maximumf %258, %259 : vector<64x16xf32>
    %c0_243 = arith.constant 0 : index
    %c7_244 = arith.constant 7 : index
    %c0_245 = arith.constant 0 : index
    %c0_246 = arith.constant 0 : index
    %261 = vector.load %arg6[%c0_243, %c7_244, %c0_245, %c0_246] : memref<1x8x64x16xf32, #tpu.memory_space<vmem>>, vector<1x1x64x16xf32>
    %262 = vector.shape_cast %261 : vector<1x1x64x16xf32> to vector<64x16xf32>
    %263 = vector.shape_cast %260 : vector<64x16xf32> to vector<1x1x64x16xf32>
    tpu.vector_store %arg6[%c0_243, %c7_244, %c0_245, %c0_246], %263 {strides = array<i32>} : memref<1x8x64x16xf32, #tpu.memory_space<vmem>>, vector<1x1x64x16xf32>,
    return
  }
  func.func @transform_0(%arg0: i32, %arg1: i32) -> (i32, i32, i32, i32, i32) {
    %c0_i32 = arith.constant 0 : i32
    %c0_i32_0 = arith.constant 0 : i32
    %c0_i32_1 = arith.constant 0 : i32
    %c0_i32_2 = arith.constant 0 : i32
    return %arg0, %arg1, %c0_i32, %c0_i32_0, %c0_i32_1 : i32, i32, i32, i32, i32
  }
  func.func @transform_1(%arg0: i32, %arg1: i32) -> (i32, i32, i32, i32, i32) {
    %c8_i32 = arith.constant 8 : i32
    %0 = arith.muli %arg1, %c8_i32 : i32
    %c8_i32_0 = arith.constant 8 : i32
    %1 = arith.addi %0, %c8_i32_0 : i32
    %c0_i32 = arith.constant 0 : i32
    %c0_i32_1 = arith.constant 0 : i32
    %c0_i32_2 = arith.constant 0 : i32
    %c0_i32_3 = arith.constant 0 : i32
    return %arg0, %1, %c0_i32, %c0_i32_1, %c0_i32_2 : i32, i32, i32, i32, i32
  }
  func.func @transform_2(%arg0: i32, %arg1: i32) -> (i32, i32, i32, i32, i32) {
    %c8_i32 = arith.constant 8 : i32
    %0 = arith.muli %arg1, %c8_i32 : i32
    %c8_i32_0 = arith.constant 8 : i32
    %1 = arith.addi %0, %c8_i32_0 : i32
    %c1_i32 = arith.constant 1 : i32
    %2 = arith.addi %1, %c1_i32 : i32
    %c0_i32 = arith.constant 0 : i32
    %c0_i32_1 = arith.constant 0 : i32
    %c0_i32_2 = arith.constant 0 : i32
    %c0_i32_3 = arith.constant 0 : i32
    return %arg0, %2, %c0_i32, %c0_i32_1, %c0_i32_2 : i32, i32, i32, i32, i32
  }
  func.func @transform_3(%arg0: i32, %arg1: i32) -> (i32, i32, i32) {
    %c0_i32 = arith.constant 0 : i32
    %c0_i32_0 = arith.constant 0 : i32
    %c0_i32_1 = arith.constant 0 : i32
    %c0_i32_2 = arith.constant 0 : i32
    return %c0_i32, %c0_i32_0, %c0_i32_1 : i32, i32, i32
  }
  func.func @transform_4(%arg0: i32, %arg1: i32) -> (i32, i32, i32, i32) {
    %c0_i32 = arith.constant 0 : i32
    %c0_i32_0 = arith.constant 0 : i32
    %c0_i32_1 = arith.constant 0 : i32
    return %arg0, %arg1, %c0_i32, %c0_i32_0 : i32, i32, i32, i32
  }
}

</mosaic_0001>

<llo_original>
// kernel: _lambda_.2
$region0: #{_lambda_.2}
  #allocation0 [shape = 'u32[]', space=smem, size = 0x4, offset = 0x4, fixed_abs, tag = 'smem constant byte address 0x4 - core index']
  #allocation1 [shape = 'u32[72,128]{1,0:T(1,128)}', space=vmem, size = 0x9000, scoped, tag = 'internal scratch']
  %s0 = inlined_call_operand.vmem [shape: f32[2,10,10,10,4], index: 0, kind: input, shape index: {}, may-alias: {0,1,2}]
  %s1 = inlined_call_operand.vmem [shape: f32[2,10,10,10,4], index: 1, kind: input, shape index: {}, may-alias: {0,1,2}]
  %s2 = inlined_call_operand.vmem [shape: f32[2,10,10,10,4], index: 2, kind: input, shape index: {}, may-alias: {0,1,2}]
  %s3 = inlined_call_operand.vmem [shape: f32[3,36,8], index: 3, kind: input, shape index: {}]
  %s4 = inlined_call_operand.vmem [shape: f32[2,8,64,8], index: 4, kind: output, shape index: {}]
  %s5 = sld [smem:[#allocation0]]
  $region49: #{_lambda_.2} parent=0
    _
  %s7 = ssub.s32 1, %s5
  %s8 = scalar_select 0, %s7, %s5
  loop: start=0, step=1, limit=4
  $region2: #{_lambda_.2} parent=0 // loop_pre_header
    _
  $region3: #{_lambda_.2} parent=0 // loop_header
    %s10 = sphi 0, %s14
    %p11 = scmp.ge.s32.totalorder %s10, 4
    %s17 = sphi 0, %s29
    %s18 = sphi 0, %s25
    %s19 = sphi 0, %s17
    %s20 = sphi 0, %s18
    %s21 = sphi 0, %s19
    %s22 = sphi 0, %s20
    %s34 = sphi 0, %s36
    %s37 = sphi 0, %s34
    %s38 = sphi 0, %s37
    %s54 = sphi 0, %s38
    %s66 = sphi 0, %s68
    %s69 = sphi 0, %s66
    %s70 = sphi 0, %s69
    %s86 = sphi 0, %s70
    %s98 = sphi 0, %s100
    %s101 = sphi 0, %s98
    %s102 = sphi 0, %s101
    %s118 = sphi 0, %s102
    %s122 = sphi 0, %s122
    %s124 = sphi 0, %s122
    %s125 = sphi 0, %s124
    %s139 = sphi 0, %s125
    %s147 = sphi 0, %s149
    %s150 = sphi 0, %s147
    %s151 = sphi 0, %s150
    %s167 = sphi 0, %s151
  $region4: #{_lambda_.2} parent=0 // loop_header_branch
    %13 = sbr.rel (%p11) target = $region8
  $region5: #{_lambda_.2} parent=0 // loop_body
    %s15 = ssub.s32 %s10, 1
    %s16 = ssub.s32 %s10, 2
    %s23 = sadd.s32 1, %s18
    %p24 = scmp.ge.s32.totalorder %s23, 1
    %s25 = scalar_select %p24, 0, %s23
    %s26 = sadd.s32 1, %s17
    %s27 = scalar_select %p24, %s26, %s17
    %p28 = scmp.ge.s32.totalorder %s27, 2
    %s29 = scalar_select %p28, 0, %s27
    %s30 = ssub.s32 %s17, %s29
    %s31 = ssub.s32 %s18, %s25
    %s32 = sor.u32 %s30, %s31
    %p33 = scmp.eq.s32.totalorder %s32, 0
    %s35 = sadd.s32 %s34, 1
    %s36 = scalar_select %p33, %s34, %s35
    %p39 = pneg %p33
    %p40 = scmp.eq.s32.totalorder %s10, 1
    %p41 = por %p39, %p40
    %p42 = scmp.ne.s32.totalorder %s34, %s37
    %p43 = scmp.eq.s32.totalorder %s10, 0
    %p44 = por %p42, %p43
    %p45 = scmp.ne.s32.totalorder %s34, %s37
    %p46 = scmp.eq.s32.totalorder %s15, 1
    %p47 = por %p45, %p46
    %p48 = scmp.ne.s32.totalorder %s37, %s38
    %p49 = scmp.eq.s32.totalorder %s15, 0
    %p50 = por %p48, %p49
    %p51 = scmp.ne.s32.totalorder %s37, %s38
    %p52 = scmp.eq.s32.totalorder %s16, 1
    %p53 = por %p51, %p52
    %p55 = scmp.ne.s32.totalorder %s38, %s54
    %p56 = scmp.eq.s32.totalorder %s16, 0
    %p57 = por %p55, %p56
    %s58 = smul.u32 %s18, 8
    %s59 = sadd.s32 %s58, 8
    %s60 = smul.u32 %s25, 8
    %s61 = sadd.s32 %s60, 8
    %s62 = ssub.s32 %s17, %s29
    %s63 = ssub.s32 %s59, %s61
    %s64 = sor.u32 %s62, %s63
    %p65 = scmp.eq.s32.totalorder %s64, 0
    %s67 = sadd.s32 %s66, 1
    %s68 = scalar_select %p65, %s66, %s67
    %p71 = pneg %p65
    %p72 = scmp.eq.s32.totalorder %s10, 1
    %p73 = por %p71, %p72
    %p74 = scmp.ne.s32.totalorder %s66, %s69
    %p75 = scmp.eq.s32.totalorder %s10, 0
    %p76 = por %p74, %p75
    %p77 = scmp.ne.s32.totalorder %s66, %s69
    %p78 = scmp.eq.s32.totalorder %s15, 1
    %p79 = por %p77, %p78
    %p80 = scmp.ne.s32.totalorder %s69, %s70
    %p81 = scmp.eq.s32.totalorder %s15, 0
    %p82 = por %p80, %p81
    %p83 = scmp.ne.s32.totalorder %s69, %s70
    %p84 = scmp.eq.s32.totalorder %s16, 1
    %p85 = por %p83, %p84
    %p87 = scmp.ne.s32.totalorder %s70, %s86
    %p88 = scmp.eq.s32.totalorder %s16, 0
    %p89 = por %p87, %p88
    %s90 = smul.u32 %s18, 8
    %s91 = sadd.s32 %s90, 9
    %s92 = smul.u32 %s25, 8
    %s93 = sadd.s32 %s92, 9
    %s94 = ssub.s32 %s17, %s29
    %s95 = ssub.s32 %s91, %s93
    %s96 = sor.u32 %s94, %s95
    %p97 = scmp.eq.s32.totalorder %s96, 0
    %s99 = sadd.s32 %s98, 1
    %s100 = scalar_select %p97, %s98, %s99
    %p103 = pneg %p97
    %p104 = scmp.eq.s32.totalorder %s10, 1
    %p105 = por %p103, %p104
    %p106 = scmp.ne.s32.totalorder %s98, %s101
    %p107 = scmp.eq.s32.totalorder %s10, 0
    %p108 = por %p106, %p107
    %p109 = scmp.ne.s32.totalorder %s98, %s101
    %p110 = scmp.eq.s32.totalorder %s15, 1
    %p111 = por %p109, %p110
    %p112 = scmp.ne.s32.totalorder %s101, %s102
    %p113 = scmp.eq.s32.totalorder %s15, 0
    %p114 = por %p112, %p113
    %p115 = scmp.ne.s32.totalorder %s101, %s102
    %p116 = scmp.eq.s32.totalorder %s16, 1
    %p117 = por %p115, %p116
    %p119 = scmp.ne.s32.totalorder %s102, %s118
    %p120 = scmp.eq.s32.totalorder %s16, 0
    %p121 = por %p119, %p120
    %s123 = sadd.s32 %s122, 1
    %p126 = scmp.eq.s32.totalorder %s10, 1
    %p127 = scmp.ne.s32.totalorder %s122, %s124
    %p128 = scmp.eq.s32.totalorder %s10, 0
    %p129 = por %p127, %p128
    %p130 = scmp.ne.s32.totalorder %s122, %s124
    %p131 = scmp.eq.s32.totalorder %s15, 1
    %p132 = por %p130, %p131
    %p133 = scmp.ne.s32.totalorder %s124, %s125
    %p134 = scmp.eq.s32.totalorder %s15, 0
    %p135 = por %p133, %p134
    %p136 = scmp.ne.s32.totalorder %s124, %s125
    %p137 = scmp.eq.s32.totalorder %s16, 1
    %p138 = por %p136, %p137
    %p140 = scmp.ne.s32.totalorder %s125, %s139
    %p141 = scmp.eq.s32.totalorder %s16, 0
    %p142 = por %p140, %p141
    %s143 = ssub.s32 %s17, %s29
    %s144 = ssub.s32 %s18, %s25
    %s145 = sor.u32 %s143, %s144
    %p146 = scmp.eq.s32.totalorder %s145, 0
    %s148 = sadd.s32 %s147, 1
    %s149 = scalar_select %p146, %s147, %s148
    %p152 = pneg %p146
    %p153 = scmp.eq.s32.totalorder %s10, 1
    %p154 = por %p152, %p153
    %p155 = scmp.ne.s32.totalorder %s147, %s150
    %p156 = scmp.eq.s32.totalorder %s10, 0
    %p157 = por %p155, %p156
    %p158 = scmp.ne.s32.totalorder %s147, %s150
    %p159 = scmp.eq.s32.totalorder %s15, 1
    %p160 = por %p158, %p159
    %p161 = scmp.ne.s32.totalorder %s150, %s151
    %p162 = scmp.eq.s32.totalorder %s15, 0
    %p163 = por %p161, %p162
    %p164 = scmp.ne.s32.totalorder %s150, %s151
    %p165 = scmp.eq.s32.totalorder %s16, 1
    %p166 = por %p164, %p165
    %p168 = scmp.ne.s32.totalorder %s151, %s167
    %p169 = scmp.eq.s32.totalorder %s16, 0
    %p170 = por %p168, %p169
    %p171 = scmp.le.s32.totalorder 1, %s10
    %p172 = scmp.lt.s32.totalorder %s10, 3
    %p173 = pnand %p171, %p172
    %p174 = pneg %p173
    // Predicated region
    $region9: #{_lambda_.2} parent=5 // pred_check
      _
    $region10: #{_lambda_.2} parent=5 // pred_check_branch
      %176 = sbr.rel (%p173) target = $region12
    $region11: #{_lambda_.2} parent=5 // pred_region
      %s177 = ssub.s32 %s10, 1
      // Predicated region
      $region13: #{_lambda_.2} parent=11 // pred_check
        %p178 = pneg %p135
      $region14: #{_lambda_.2} parent=11 // pred_check_branch
        %180 = sbr.rel (%p178) target = $region16
      $region15: #{_lambda_.2} parent=11 // pred_region
        _
      $region16: #{_lambda_.2} parent=11 // pred_fallthru
        _
    $region12: #{_lambda_.2} parent=5 // pred_fallthru
      _
    %p181 = scmp.lt.s32.totalorder %s10, 2
    // Predicated region
    $region17: #{_lambda_.2} parent=5 // pred_check
      %p182 = pneg %p181
    $region18: #{_lambda_.2} parent=5 // pred_check_branch
      %184 = sbr.rel (%p182) target = $region20
    $region19: #{_lambda_.2} parent=5 // pred_region
      // Predicated region
      $region21: #{_lambda_.2} parent=19 // pred_check
        %p185 = pneg %p44
      $region22: #{_lambda_.2} parent=19 // pred_check_branch
        %187 = sbr.rel (%p185) target = $region24
      $region23: #{_lambda_.2} parent=19 // pred_region
        %s188 = smul.u32 8, %s18
        %s189 = ssub.s32 10, %s188
        %p190 = scmp.lt.s32.totalorder %s189, 8
        %s191 = scalar_select %p190, %s189, 8
        %s192 = smul.u32 8, %s191
        %s193 = smul.u32 %s192, 10
        %s194 = smul.u32 %s193, 2
        %p195 = scmp.lt.s32.totalorder %s17, 1
        %s196 = scalar_select %p195, %s17, 1
        %p197 = scmp.lt.s32.totalorder %s188, 9
        %s198 = scalar_select %p197, %s188, 9
        %s199 = smul.addr %s198, 20
        %s200 = smul.addr %s196, 200
        %s201 = sadd.s32 %s199, %s200
        %s202 = smul.addr %s201, 8
        %s203 = scalar_lea.vmem %s0, %s202
        %s204 = smul.u32 8, %s18
        %s205 = ssub.s32 10, %s204
        %p206 = scmp.lt.s32.totalorder %s205, 8
        %s207 = scalar_select %p206, %s205, 8
        %s208 = smul.u32 8, %s207
        %s209 = smul.u32 %s208, 10
        %s210 = smul.u32 %s209, 2
      $region24: #{_lambda_.2} parent=19 // pred_fallthru
        _
      // Predicated region
      $region25: #{_lambda_.2} parent=19 // pred_check
        %p211 = pneg %p76
      $region26: #{_lambda_.2} parent=19 // pred_check_branch
        %213 = sbr.rel (%p211) target = $region28
      $region27: #{_lambda_.2} parent=19 // pred_region
        %s214 = smul.u32 %s18, 8
        %s215 = sadd.s32 %s214, 8
        %p216 = scmp.lt.s32.totalorder %s17, 1
        %s217 = scalar_select %p216, %s17, 1
        %p218 = scmp.lt.s32.totalorder %s215, 9
        %s219 = scalar_select %p218, %s215, 9
        %s220 = smul.addr %s219, 20
        %s221 = smul.addr %s217, 200
        %s222 = sadd.s32 %s220, %s221
        %s223 = smul.addr %s222, 8
        %s224 = scalar_lea.vmem %s1, %s223
        %s225 = smul.u32 %s18, 8
        %s226 = sadd.s32 %s225, 8
      $region28: #{_lambda_.2} parent=19 // pred_fallthru
        _
      // Predicated region
      $region29: #{_lambda_.2} parent=19 // pred_check
        %p227 = pneg %p108
      $region30: #{_lambda_.2} parent=19 // pred_check_branch
        %229 = sbr.rel (%p227) target = $region32
      $region31: #{_lambda_.2} parent=19 // pred_region
        %s230 = smul.u32 %s18, 8
        %s231 = sadd.s32 %s230, 9
        %p232 = scmp.lt.s32.totalorder %s17, 1
        %s233 = scalar_select %p232, %s17, 1
        %p234 = scmp.lt.s32.totalorder %s231, 9
        %s235 = scalar_select %p234, %s231, 9
        %s236 = smul.addr %s235, 20
        %s237 = smul.addr %s233, 200
        %s238 = sadd.s32 %s236, %s237
        %s239 = smul.addr %s238, 8
        %s240 = scalar_lea.vmem %s2, %s239
        %s241 = smul.u32 %s18, 8
        %s242 = sadd.s32 %s241, 9
      $region32: #{_lambda_.2} parent=19 // pred_fallthru
        _
    $region20: #{_lambda_.2} parent=5 // pred_fallthru
      _
    %p243 = scmp.le.s32.totalorder 1, %s10
    %p244 = scmp.lt.s32.totalorder %s10, 3
    %p245 = pnand %p243, %p244
    %p246 = pneg %p245
    // Predicated region
    $region33: #{_lambda_.2} parent=5 // pred_check
      _
    $region34: #{_lambda_.2} parent=5 // pred_check_branch
      %248 = sbr.rel (%p245) target = $region36
    $region35: #{_lambda_.2} parent=5 // pred_region
      %s249 = ssub.s32 %s10, 1
      %s250 = smul.u32 8, %s20
      %s251 = ssub.s32 10, %s250
      %p252 = scmp.lt.s32.totalorder %s251, 8
      %s253 = scalar_select %p252, %s251, 8
      %s254 = smul.u32 8, %s253
      %s255 = smul.u32 %s254, 10
      %s256 = smul.u32 %s255, 2
      %p257 = scmp.lt.s32.totalorder %s19, 1
      %s258 = scalar_select %p257, %s19, 1
      %p259 = scmp.lt.s32.totalorder %s250, 9
      %s260 = scalar_select %p259, %s250, 9
      %s261 = smul.addr %s260, 20
      %s262 = smul.addr %s258, 200
      %s263 = sadd.s32 %s261, %s262
      %s264 = smul.addr %s263, 8
      %s265 = scalar_lea.vmem %s0, %s264
      %p266 = pneg %p50
      %p267 = pneg %p47
      %s268 = smul.u32 %s20, 8
      %s269 = sadd.s32 %s268, 8
      %p270 = scmp.lt.s32.totalorder %s19, 1
      %s271 = scalar_select %p270, %s19, 1
      %p272 = scmp.lt.s32.totalorder %s269, 9
      %s273 = scalar_select %p272, %s269, 9
      %s274 = smul.addr %s273, 20
      %s275 = smul.addr %s271, 200
      %s276 = sadd.s32 %s274, %s275
      %s277 = smul.addr %s276, 8
      %s278 = scalar_lea.vmem %s1, %s277
      %p279 = pneg %p82
      %p280 = pneg %p79
      %s281 = smul.u32 %s20, 8
      %s282 = sadd.s32 %s281, 9
      %p283 = scmp.lt.s32.totalorder %s19, 1
      %s284 = scalar_select %p283, %s19, 1
      %p285 = scmp.lt.s32.totalorder %s282, 9
      %s286 = scalar_select %p285, %s282, 9
      %s287 = smul.addr %s286, 20
      %s288 = smul.addr %s284, 200
      %s289 = sadd.s32 %s287, %s288
      %s290 = smul.addr %s289, 8
      %s291 = scalar_lea.vmem %s2, %s290
      %p292 = pneg %p114
      %p293 = pneg %p111
      %p294 = pneg %p135
      %p295 = pneg %p132
      %p296 = pneg %p163
      %p297 = pneg %p160
      %s298 = smul.u32 8, %s20
      %p299 = scmp.lt.s32.totalorder %s19, 1
      %s300 = scalar_select %p299, %s19, 1
      %p301 = scmp.lt.s32.totalorder %s298, 7
      %s302 = scalar_select %p301, %s298, 7
      %s303 = smul.addr %s302, 8
      %s304 = smul.addr %s300, 64
      %s305 = sadd.s32 %s303, %s304
      %s306 = smul.addr %s305, 8
      %s307 = scalar_lea.vmem %s4, %s306
      %s308 = smul.u32 8, %s20
      %s309 = ssub.s32 10, %s308
      %p310 = scmp.lt.s32.totalorder %s309, 8
      %s311 = scalar_select %p310, %s309, 8
      %s312 = smul.u32 8, %s311
      %s313 = smul.u32 %s312, 10
      %s314 = smul.u32 %s313, 2
      %p315 = scmp.lt.s32.totalorder %s19, 1
      %s316 = scalar_select %p315, %s19, 1
      %p317 = scmp.lt.s32.totalorder %s308, 9
      %s318 = scalar_select %p317, %s308, 9
      %s319 = smul.addr %s318, 20
      %s320 = smul.addr %s316, 200
      %s321 = sadd.s32 %s319, %s320
      %s322 = smul.addr %s321, 8
      %s323 = scalar_lea.vmem %s0, %s322
      %s324 = smul.u32 8, %s20
      %s325 = ssub.s32 10, %s324
      %p326 = scmp.lt.s32.totalorder %s325, 8
      %s327 = scalar_select %p326, %s325, 8
      %s328 = smul.u32 8, %s327
      %s329 = smul.u32 %s328, 10
      %s330 = smul.u32 %s329, 2
      %s331 = smul.u32 %s20, 8
      %s332 = sadd.s32 %s331, 8
      %p333 = scmp.lt.s32.totalorder %s19, 1
      %s334 = scalar_select %p333, %s19, 1
      %p335 = scmp.lt.s32.totalorder %s332, 9
      %s336 = scalar_select %p335, %s332, 9
      %s337 = smul.addr %s336, 20
      %s338 = smul.addr %s334, 200
      %s339 = sadd.s32 %s337, %s338
      %s340 = smul.addr %s339, 8
      %s341 = scalar_lea.vmem %s1, %s340
      %s342 = smul.u32 %s20, 8
      %s343 = sadd.s32 %s342, 8
      %s344 = smul.u32 %s20, 8
      %s345 = sadd.s32 %s344, 9
      %p346 = scmp.lt.s32.totalorder %s19, 1
      %s347 = scalar_select %p346, %s19, 1
      %p348 = scmp.lt.s32.totalorder %s345, 9
      %s349 = scalar_select %p348, %s345, 9
      %s350 = smul.addr %s349, 20
      %s351 = smul.addr %s347, 200
      %s352 = sadd.s32 %s350, %s351
      %s353 = smul.addr %s352, 8
      %s354 = scalar_lea.vmem %s2, %s353
      %s355 = smul.u32 %s20, 8
      %s356 = sadd.s32 %s355, 9
      %s357 = smul.u32 8, %s20
      %p358 = scmp.lt.s32.totalorder %s19, 1
      %s359 = scalar_select %p358, %s19, 1
      %p360 = scmp.lt.s32.totalorder %s357, 7
      %s361 = scalar_select %p360, %s357, 7
      %s362 = smul.addr %s361, 8
      %s363 = smul.addr %s359, 64
      %s364 = sadd.s32 %s362, %s363
      %s365 = smul.addr %s364, 8
      %s366 = scalar_lea.vmem %s4, %s365
      %s367 = smul.u32 8, %s20
      %v368 = vld [vmem:[%s323] sm:$0xff]
      %v369 = vld [vmem:[%s323 + $0x8] sm:$0x3]
      %v370 = vld [vmem:[%s323 + $0x10] sm:$0xff]
      %v371 = vld [vmem:[%s323 + $0x18] sm:$0x3]
      %v372 = vld [vmem:[%s323 + $0x20] sm:$0xff]
      %v373 = vld [vmem:[%s323 + $0x28] sm:$0x3]
      %v374 = vld [vmem:[%s323 + $0x30] sm:$0xff]
      %v375 = vld [vmem:[%s323 + $0x38] sm:$0x3]
      %v376 = vld [vmem:[%s323 + $0x40] sm:$0xff]
      %v377 = vld [vmem:[%s323 + $0x48] sm:$0x3]
      %v378 = vld [vmem:[%s323 + $0x50] sm:$0xff]
      %v379 = vld [vmem:[%s323 + $0x58] sm:$0x3]
      %v380 = vld [vmem:[%s323 + $0x60] sm:$0xff]
      %v381 = vld [vmem:[%s323 + $0x68] sm:$0x3]
      %v382 = vld [vmem:[%s323 + $0x70] sm:$0xff]
      %v383 = vld [vmem:[%s323 + $0x78] sm:$0x3]
      %v384 = vld [vmem:[%s323 + $0x80] sm:$0xff]
      %v385 = vld [vmem:[%s323 + $0x88] sm:$0x3]
      %v386 = vld [vmem:[%s323 + $0x90] sm:$0xff]
      %v387 = vld [vmem:[%s323 + $0x98] sm:$0x3]
      %s388 = scalar_lea.vmem %s323, 160
      %v389 = vld [vmem:[%s388] sm:$0xff]
      %v390 = vld [vmem:[%s388 + $0x8] sm:$0x3]
      %v391 = vld [vmem:[%s388 + $0x10] sm:$0xff]
      %v392 = vld [vmem:[%s388 + $0x18] sm:$0x3]
      %v393 = vld [vmem:[%s388 + $0x20] sm:$0xff]
      %v394 = vld [vmem:[%s388 + $0x28] sm:$0x3]
      %v395 = vld [vmem:[%s388 + $0x30] sm:$0xff]
      %v396 = vld [vmem:[%s388 + $0x38] sm:$0x3]
      %v397 = vld [vmem:[%s388 + $0x40] sm:$0xff]
      %v398 = vld [vmem:[%s388 + $0x48] sm:$0x3]
      %v399 = vld [vmem:[%s388 + $0x50] sm:$0xff]
      %v400 = vld [vmem:[%s388 + $0x58] sm:$0x3]
      %v401 = vld [vmem:[%s388 + $0x60] sm:$0xff]
      %v402 = vld [vmem:[%s388 + $0x68] sm:$0x3]
      %v403 = vld [vmem:[%s388 + $0x70] sm:$0xff]
      %v404 = vld [vmem:[%s388 + $0x78] sm:$0x3]
      %v405 = vld [vmem:[%s388 + $0x80] sm:$0xff]
      %v406 = vld [vmem:[%s388 + $0x88] sm:$0x3]
      %v407 = vld [vmem:[%s388 + $0x90] sm:$0xff]
      %v408 = vld [vmem:[%s388 + $0x98] sm:$0x3]
      %s409 = scalar_lea.vmem %s323, 320
      %v410 = vld [vmem:[%s409] sm:$0xff]
      %v411 = vld [vmem:[%s409 + $0x8] sm:$0x3]
      %v412 = vld [vmem:[%s409 + $0x10] sm:$0xff]
      %v413 = vld [vmem:[%s409 + $0x18] sm:$0x3]
      %v414 = vld [vmem:[%s409 + $0x20] sm:$0xff]
      %v415 = vld [vmem:[%s409 + $0x28] sm:$0x3]
      %v416 = vld [vmem:[%s409 + $0x30] sm:$0xff]
      %v417 = vld [vmem:[%s409 + $0x38] sm:$0x3]
      %v418 = vld [vmem:[%s409 + $0x40] sm:$0xff]
      %v419 = vld [vmem:[%s409 + $0x48] sm:$0x3]
      %v420 = vld [vmem:[%s409 + $0x50] sm:$0xff]
      %v421 = vld [vmem:[%s409 + $0x58] sm:$0x3]
      %v422 = vld [vmem:[%s409 + $0x60] sm:$0xff]
      %v423 = vld [vmem:[%s409 + $0x68] sm:$0x3]
      %v424 = vld [vmem:[%s409 + $0x70] sm:$0xff]
      %v425 = vld [vmem:[%s409 + $0x78] sm:$0x3]
      %v426 = vld [vmem:[%s409 + $0x80] sm:$0xff]
      %v427 = vld [vmem:[%s409 + $0x88] sm:$0x3]
      %v428 = vld [vmem:[%s409 + $0x90] sm:$0xff]
      %v429 = vld [vmem:[%s409 + $0x98] sm:$0x3]
      %450 = vrot.lane.b32.xlu0 %v389, 4
      %v451 = vpop.permute.xlu0 %450
      %452 = vrot.lane.b32.xlu0 %v390, 4
      %v453 = vpop.permute.xlu0 %452
      %454 = vrot.lane.b32.xlu0 %v391, 4
      %v455 = vpop.permute.xlu0 %454
      %456 = vrot.lane.b32.xlu0 %v392, 4
      %v457 = vpop.permute.xlu0 %456
      %458 = vrot.lane.b32.xlu0 %v393, 4
      %v459 = vpop.permute.xlu0 %458
      %460 = vrot.lane.b32.xlu0 %v394, 4
      %v461 = vpop.permute.xlu0 %460
      %462 = vrot.lane.b32.xlu0 %v395, 4
      %v463 = vpop.permute.xlu0 %462
      %464 = vrot.lane.b32.xlu0 %v396, 4
      %v465 = vpop.permute.xlu0 %464
      %466 = vrot.lane.b32.xlu0 %v397, 4
      %v467 = vpop.permute.xlu0 %466
      %468 = vrot.lane.b32.xlu0 %v398, 4
      %v469 = vpop.permute.xlu0 %468
      %470 = vrot.lane.b32.xlu0 %v399, 4
      %v471 = vpop.permute.xlu0 %470
      %472 = vrot.lane.b32.xlu0 %v400, 4
      %v473 = vpop.permute.xlu0 %472
      %474 = vrot.lane.b32.xlu0 %v401, 4
      %v475 = vpop.permute.xlu0 %474
      %476 = vrot.lane.b32.xlu0 %v402, 4
      %v477 = vpop.permute.xlu0 %476
      %478 = vrot.lane.b32.xlu0 %v403, 4
      %v479 = vpop.permute.xlu0 %478
      %480 = vrot.lane.b32.xlu0 %v404, 4
      %v481 = vpop.permute.xlu0 %480
      %482 = vrot.lane.b32.xlu0 %v405, 4
      %v483 = vpop.permute.xlu0 %482
      %484 = vrot.lane.b32.xlu0 %v406, 4
      %v485 = vpop.permute.xlu0 %484
      %486 = vrot.lane.b32.xlu0 %v407, 4
      %v487 = vpop.permute.xlu0 %486
      %488 = vrot.lane.b32.xlu0 %v408, 4
      %v489 = vpop.permute.xlu0 %488
      %530 = vrot.lane.b32.xlu0 %v410, 8
      %v531 = vpop.permute.xlu0 %530
      %532 = vrot.lane.b32.xlu0 %v411, 8
      %v533 = vpop.permute.xlu0 %532
      %534 = vrot.lane.b32.xlu0 %v412, 8
      %v535 = vpop.permute.xlu0 %534
      %536 = vrot.lane.b32.xlu0 %v413, 8
      %v537 = vpop.permute.xlu0 %536
      %538 = vrot.lane.b32.xlu0 %v414, 8
      %v539 = vpop.permute.xlu0 %538
      %540 = vrot.lane.b32.xlu0 %v415, 8
      %v541 = vpop.permute.xlu0 %540
      %542 = vrot.lane.b32.xlu0 %v416, 8
      %v543 = vpop.permute.xlu0 %542
      %544 = vrot.lane.b32.xlu0 %v417, 8
      %v545 = vpop.permute.xlu0 %544
      %546 = vrot.lane.b32.xlu0 %v418, 8
      %v547 = vpop.permute.xlu0 %546
      %548 = vrot.lane.b32.xlu0 %v419, 8
      %v549 = vpop.permute.xlu0 %548
      %550 = vrot.lane.b32.xlu0 %v420, 8
      %v551 = vpop.permute.xlu0 %550
      %552 = vrot.lane.b32.xlu0 %v421, 8
      %v553 = vpop.permute.xlu0 %552
      %554 = vrot.lane.b32.xlu0 %v422, 8
      %v555 = vpop.permute.xlu0 %554
      %556 = vrot.lane.b32.xlu0 %v423, 8
      %v557 = vpop.permute.xlu0 %556
      %558 = vrot.lane.b32.xlu0 %v424, 8
      %v559 = vpop.permute.xlu0 %558
      %560 = vrot.lane.b32.xlu0 %v425, 8
      %v561 = vpop.permute.xlu0 %560
      %562 = vrot.lane.b32.xlu0 %v426, 8
      %v563 = vpop.permute.xlu0 %562
      %564 = vrot.lane.b32.xlu0 %v427, 8
      %v565 = vpop.permute.xlu0 %564
      %566 = vrot.lane.b32.xlu0 %v428, 8
      %v567 = vpop.permute.xlu0 %566
      %568 = vrot.lane.b32.xlu0 %v429, 8
      %v569 = vpop.permute.xlu0 %568
      %vm590 = vcmask 31744
      %v591 = vsel %vm590, %v368, %v451
      %v592 = vsel %vm590, %v369, %v453
      %v593 = vsel %vm590, %v370, %v455
      %v594 = vsel %vm590, %v371, %v457
      %v595 = vsel %vm590, %v372, %v459
      %v596 = vsel %vm590, %v373, %v461
      %v597 = vsel %vm590, %v374, %v463
      %v598 = vsel %vm590, %v375, %v465
      %v599 = vsel %vm590, %v376, %v467
      %v600 = vsel %vm590, %v377, %v469
      %v601 = vsel %vm590, %v378, %v471
      %v602 = vsel %vm590, %v379, %v473
      %v603 = vsel %vm590, %v380, %v475
      %v604 = vsel %vm590, %v381, %v477
      %v605 = vsel %vm590, %v382, %v479
      %v606 = vsel %vm590, %v383, %v481
      %v607 = vsel %vm590, %v384, %v483
      %v608 = vsel %vm590, %v385, %v485
      %v609 = vsel %vm590, %v386, %v487
      %v610 = vsel %vm590, %v387, %v489
      %vm611 = vcmask 64512
      %v612 = vsel %vm611, %v591, %v531
      %v613 = vsel %vm611, %v592, %v533
      %v614 = vsel %vm611, %v593, %v535
      %v615 = vsel %vm611, %v594, %v537
      %v616 = vsel %vm611, %v595, %v539
      %v617 = vsel %vm611, %v596, %v541
      %v618 = vsel %vm611, %v597, %v543
      %v619 = vsel %vm611, %v598, %v545
      %v620 = vsel %vm611, %v599, %v547
      %v621 = vsel %vm611, %v600, %v549
      %v622 = vsel %vm611, %v601, %v551
      %v623 = vsel %vm611, %v602, %v553
      %v624 = vsel %vm611, %v603, %v555
      %v625 = vsel %vm611, %v604, %v557
      %v626 = vsel %vm611, %v605, %v559
      %v627 = vsel %vm611, %v606, %v561
      %v628 = vsel %vm611, %v607, %v563
      %v629 = vsel %vm611, %v608, %v565
      %v630 = vsel %vm611, %v609, %v567
      %v631 = vsel %vm611, %v610, %v569
      %648 = vrot.lane.b32.xlu0 %v614, 12
      %v649 = vpop.permute.xlu0 %648
      %650 = vrot.lane.b32.xlu0 %v615, 12
      %v651 = vpop.permute.xlu0 %650
      %652 = vrot.lane.b32.xlu0 %v616, 12
      %v653 = vpop.permute.xlu0 %652
      %654 = vrot.lane.b32.xlu0 %v617, 12
      %v655 = vpop.permute.xlu0 %654
      %656 = vrot.lane.b32.xlu0 %v618, 12
      %v657 = vpop.permute.xlu0 %656
      %658 = vrot.lane.b32.xlu0 %v619, 12
      %v659 = vpop.permute.xlu0 %658
      %660 = vrot.lane.b32.xlu0 %v620, 12
      %v661 = vpop.permute.xlu0 %660
      %662 = vrot.lane.b32.xlu0 %v621, 12
      %v663 = vpop.permute.xlu0 %662
      %664 = vrot.lane.b32.xlu0 %v622, 12
      %v665 = vpop.permute.xlu0 %664
      %666 = vrot.lane.b32.xlu0 %v623, 12
      %v667 = vpop.permute.xlu0 %666
      %668 = vrot.lane.b32.xlu0 %v624, 12
      %v669 = vpop.permute.xlu0 %668
      %670 = vrot.lane.b32.xlu0 %v625, 12
      %v671 = vpop.permute.xlu0 %670
      %672 = vrot.lane.b32.xlu0 %v626, 12
      %v673 = vpop.permute.xlu0 %672
      %674 = vrot.lane.b32.xlu0 %v627, 12
      %v675 = vpop.permute.xlu0 %674
      %676 = vrot.lane.b32.xlu0 %v628, 12
      %v677 = vpop.permute.xlu0 %676
      %678 = vrot.lane.b32.xlu0 %v629, 12
      %v679 = vpop.permute.xlu0 %678
      %698 = vrot.lane.b32.xlu0 %v616, 24
      %v699 = vpop.permute.xlu0 %698
      %700 = vrot.lane.b32.xlu0 %v617, 24
      %v701 = vpop.permute.xlu0 %700
      %702 = vrot.lane.b32.xlu0 %v618, 24
      %v703 = vpop.permute.xlu0 %702
      %704 = vrot.lane.b32.xlu0 %v619, 24
      %v705 = vpop.permute.xlu0 %704
      %706 = vrot.lane.b32.xlu0 %v620, 24
      %v707 = vpop.permute.xlu0 %706
      %708 = vrot.lane.b32.xlu0 %v621, 24
      %v709 = vpop.permute.xlu0 %708
      %710 = vrot.lane.b32.xlu0 %v622, 24
      %v711 = vpop.permute.xlu0 %710
      %712 = vrot.lane.b32.xlu0 %v623, 24
      %v713 = vpop.permute.xlu0 %712
      %714 = vrot.lane.b32.xlu0 %v624, 24
      %v715 = vpop.permute.xlu0 %714
      %716 = vrot.lane.b32.xlu0 %v625, 24
      %v717 = vpop.permute.xlu0 %716
      %718 = vrot.lane.b32.xlu0 %v626, 24
      %v719 = vpop.permute.xlu0 %718
      %720 = vrot.lane.b32.xlu0 %v627, 24
      %v721 = vpop.permute.xlu0 %720
      %722 = vrot.lane.b32.xlu0 %v628, 24
      %v723 = vpop.permute.xlu0 %722
      %724 = vrot.lane.b32.xlu0 %v629, 24
      %v725 = vpop.permute.xlu0 %724
      %726 = vrot.lane.b32.xlu0 %v630, 24
      %v727 = vpop.permute.xlu0 %726
      %728 = vrot.lane.b32.xlu0 %v631, 24
      %v729 = vpop.permute.xlu0 %728
      %vm746 = vcmask 97280
      %v747 = vsel %vm746, %v612, %v649
      %v748 = vsel %vm746, %v613, %v651
      %v749 = vsel %vm746, %v614, %v653
      %v750 = vsel %vm746, %v615, %v655
      %v751 = vsel %vm746, %v616, %v657
      %v752 = vsel %vm746, %v617, %v659
      %v753 = vsel %vm746, %v618, %v661
      %v754 = vsel %vm746, %v619, %v663
      %v755 = vsel %vm746, %v620, %v665
      %v756 = vsel %vm746, %v621, %v667
      %v757 = vsel %vm746, %v622, %v669
      %v758 = vsel %vm746, %v623, %v671
      %v759 = vsel %vm746, %v624, %v673
      %v760 = vsel %vm746, %v625, %v675
      %v761 = vsel %vm746, %v626, %v677
      %v762 = vsel %vm746, %v627, %v679
      %vm763 = vcmask 195584
      %v764 = vsel %vm763, %v747, %v699
      %v765 = vsel %vm763, %v748, %v701
      %v766 = vsel %vm763, %v749, %v703
      %v767 = vsel %vm763, %v750, %v705
      %v768 = vsel %vm763, %v751, %v707
      %v769 = vsel %vm763, %v752, %v709
      %v770 = vsel %vm763, %v753, %v711
      %v771 = vsel %vm763, %v754, %v713
      %v772 = vsel %vm763, %v755, %v715
      %v773 = vsel %vm763, %v756, %v717
      %v774 = vsel %vm763, %v757, %v719
      %v775 = vsel %vm763, %v758, %v721
      %v776 = vsel %vm763, %v759, %v723
      %v777 = vsel %vm763, %v760, %v725
      %v778 = vsel %vm763, %v761, %v727
      %v779 = vsel %vm763, %v762, %v729
      %v780 = vld [vmem:[%s3] sm:$0xff]
      %v781 = vld [vmem:[%s3 + $0x8] sm:$0xff]
      %v782 = vld [vmem:[%s3 + $0x10] sm:$0xff]
      %v783 = vld [vmem:[%s3 + $0x18] sm:$0xff]
      %v784 = vld [vmem:[%s3 + $0x20] sm:$0xf]
      %vm801 = vcmask 1046528
      %v802 = vrot.slane %v764, 1
      %v803 = vrot.slane %v765, 1
      %v804 = vsel %vm801, %v802, %v803
      %v805 = vrot.slane %v766, 1
      %v806 = vrot.slane %v767, 1
      %v807 = vsel %vm801, %v805, %v806
      %v808 = vrot.slane %v768, 1
      %v809 = vrot.slane %v769, 1
      %v810 = vsel %vm801, %v808, %v809
      %v811 = vrot.slane %v770, 1
      %v812 = vrot.slane %v771, 1
      %v813 = vsel %vm801, %v811, %v812
      %v814 = vrot.slane %v772, 1
      %v815 = vrot.slane %v773, 1
      %v816 = vsel %vm801, %v814, %v815
      %v817 = vrot.slane %v774, 1
      %v818 = vrot.slane %v775, 1
      %v819 = vsel %vm801, %v817, %v818
      %v820 = vrot.slane %v776, 1
      %v821 = vrot.slane %v777, 1
      %v822 = vsel %vm801, %v820, %v821
      %v823 = vrot.slane %v778, 1
      %v824 = vrot.slane %v779, 1
      %v825 = vsel %vm801, %v823, %v824
      %s826 = scalar_lea.vmem %s3, 40
      %v827 = vld [vmem:[%s826] sm:$0xff]
      %v828 = vld [vmem:[%s826 + $0x8] sm:$0xff]
      %v829 = vld [vmem:[%s826 + $0x10] sm:$0xff]
      %v830 = vld [vmem:[%s826 + $0x18] sm:$0xff]
      %v831 = vld [vmem:[%s826 + $0x20] sm:$0xf]
      %vm832 = vcmask 293888
      %v833 = vsel %vm832, %v804, 0
      %v835 = vsel %vm832, %v807, 0
      %v837 = vsel %vm832, %v810, 0
      %v839 = vsel %vm832, %v813, 0
      %v841 = vsel %vm832, %v816, 0
      %v843 = vsel %vm832, %v819, 0
      %v845 = vsel %vm832, %v822, 0
      %v847 = vsel %vm832, %v825, 0
      %vm849 = vcmask 1043456
      %v851 = vsel %vm849, %v831, 0
      %853 = vmatpush.msra.mxu0 0.0
      %854 = vmatpush.msra.mxu0 0.0
      %855 = vmatpush.msra.mxu0 0.0
      %856 = vmatpush.msra.mxu0 0.0
      %857 = vmatpush.msra.mxu0 0.0
      %858 = vmatpush.msra.mxu0 0.0
      %859 = vmatpush.msra.mxu0 0.0
      %860 = vmatpush.msra.mxu0 0.0
      %861 = vmatpush.msra.mxu0 0.0
      %862 = vmatpush.msra.mxu0 0.0
      %863 = vmatpush.msra.mxu0 0.0
      %864 = vmatpush.msra.mxu0 %v851
      %865 = vmatpush.msra.mxu0 %v830
      %866 = vmatpush.msra.mxu0 %v829
      %867 = vmatpush.msra.mxu0 %v828
      %868 = vmatpush.msra.mxu0 %v827
      %869 = vmatmul.f32.gmra.mxu0 %v833
      %v870 = vpop.f32.mrf.mxu0
      %v871 = vadd.f32 0.0, %v870
      %872 = vmatmul.f32.gmra.mxu0 %v835
      %v873 = vpop.f32.mrf.mxu0
      %v874 = vadd.f32 0.0, %v873
      %875 = vmatmul.f32.gmra.mxu0 %v837
      %v876 = vpop.f32.mrf.mxu0
      %v877 = vadd.f32 0.0, %v876
      %878 = vmatmul.f32.gmra.mxu0 %v839
      %v879 = vpop.f32.mrf.mxu0
      %v880 = vadd.f32 0.0, %v879
      %881 = vmatmul.f32.gmra.mxu0 %v841
      %v882 = vpop.f32.mrf.mxu0
      %v883 = vadd.f32 0.0, %v882
      %884 = vmatmul.f32.gmra.mxu0 %v843
      %v885 = vpop.f32.mrf.mxu0
      %v886 = vadd.f32 0.0, %v885
      %887 = vmatmul.f32.gmra.mxu0 %v845
      %v888 = vpop.f32.mrf.mxu0
      %v889 = vadd.f32 0.0, %v888
      %890 = vmatmul.f32.gmra.mxu0 %v847
      %v891 = vpop.f32.mrf.mxu0
      %v892 = vadd.f32 0.0, %v891
      %893 = vdwg.mxu0
      %v894 = vsel %vm832, %v764, 0
      %v896 = vsel %vm832, %v766, 0
      %v898 = vsel %vm832, %v768, 0
      %v900 = vsel %vm832, %v770, 0
      %v902 = vsel %vm832, %v772, 0
      %v904 = vsel %vm832, %v774, 0
      %v906 = vsel %vm832, %v776, 0
      %v908 = vsel %vm832, %v778, 0
      %v911 = vsel %vm849, %v784, 0
      %913 = vmatpush.msra.mxu0 0.0
      %914 = vmatpush.msra.mxu0 0.0
      %915 = vmatpush.msra.mxu0 0.0
      %916 = vmatpush.msra.mxu0 0.0
      %917 = vmatpush.msra.mxu0 0.0
      %918 = vmatpush.msra.mxu0 0.0
      %919 = vmatpush.msra.mxu0 0.0
      %920 = vmatpush.msra.mxu0 0.0
      %921 = vmatpush.msra.mxu0 0.0
      %922 = vmatpush.msra.mxu0 0.0
      %923 = vmatpush.msra.mxu0 0.0
      %924 = vmatpush.msra.mxu0 %v911
      %925 = vmatpush.msra.mxu0 %v783
      %926 = vmatpush.msra.mxu0 %v782
      %927 = vmatpush.msra.mxu0 %v781
      %928 = vmatpush.msra.mxu0 %v780
      %929 = vmatmul.f32.gmra.mxu0 %v894
      %v930 = vpop.f32.mrf.mxu0
      %v931 = vadd.f32 %v871, %v930
      %932 = vmatmul.f32.gmra.mxu0 %v896
      %v933 = vpop.f32.mrf.mxu0
      %v934 = vadd.f32 %v874, %v933
      %935 = vmatmul.f32.gmra.mxu0 %v898
      %v936 = vpop.f32.mrf.mxu0
      %v937 = vadd.f32 %v877, %v936
      %938 = vmatmul.f32.gmra.mxu0 %v900
      %v939 = vpop.f32.mrf.mxu0
      %v940 = vadd.f32 %v880, %v939
      %941 = vmatmul.f32.gmra.mxu0 %v902
      %v942 = vpop.f32.mrf.mxu0
      %v943 = vadd.f32 %v883, %v942
      %944 = vmatmul.f32.gmra.mxu0 %v904
      %v945 = vpop.f32.mrf.mxu0
      %v946 = vadd.f32 %v886, %v945
      %947 = vmatmul.f32.gmra.mxu0 %v906
      %v948 = vpop.f32.mrf.mxu0
      %v949 = vadd.f32 %v889, %v948
      %950 = vmatmul.f32.gmra.mxu0 %v908
      %v951 = vpop.f32.mrf.mxu0
      %v952 = vadd.f32 %v892, %v951
      %953 = vdwg.mxu0
      %vm954 = vcmask 1045504
      %v955 = vrot.slane %v764, 2
      %v956 = vrot.slane %v765, 2
      %v957 = vsel %vm954, %v955, %v956
      %v958 = vrot.slane %v766, 2
      %v959 = vrot.slane %v767, 2
      %v960 = vsel %vm954, %v958, %v959
      %v961 = vrot.slane %v768, 2
      %v962 = vrot.slane %v769, 2
      %v963 = vsel %vm954, %v961, %v962
      %v964 = vrot.slane %v770, 2
      %v965 = vrot.slane %v771, 2
      %v966 = vsel %vm954, %v964, %v965
      %v967 = vrot.slane %v772, 2
      %v968 = vrot.slane %v773, 2
      %v969 = vsel %vm954, %v967, %v968
      %v970 = vrot.slane %v774, 2
      %v971 = vrot.slane %v775, 2
      %v972 = vsel %vm954, %v970, %v971
      %v973 = vrot.slane %v776, 2
      %v974 = vrot.slane %v777, 2
      %v975 = vsel %vm954, %v973, %v974
      %v976 = vrot.slane %v778, 2
      %v977 = vrot.slane %v779, 2
      %v978 = vsel %vm954, %v976, %v977
      %s979 = scalar_lea.vmem %s3, 80
      %v980 = vld [vmem:[%s979] sm:$0xff]
      %v981 = vld [vmem:[%s979 + $0x8] sm:$0xff]
      %v982 = vld [vmem:[%s979 + $0x10] sm:$0xff]
      %v983 = vld [vmem:[%s979 + $0x18] sm:$0xff]
      %v984 = vld [vmem:[%s979 + $0x20] sm:$0xf]
      %v985 = vsel %vm832, %v957, 0
      %v987 = vsel %vm832, %v960, 0
      %v989 = vsel %vm832, %v963, 0
      %v991 = vsel %vm832, %v966, 0
      %v993 = vsel %vm832, %v969, 0
      %v995 = vsel %vm832, %v972, 0
      %v997 = vsel %vm832, %v975, 0
      %v999 = vsel %vm832, %v978, 0
      %v1002 = vsel %vm849, %v984, 0
      %1004 = vmatpush.msra.mxu0 0.0
      %1005 = vmatpush.msra.mxu0 0.0
      %1006 = vmatpush.msra.mxu0 0.0
      %1007 = vmatpush.msra.mxu0 0.0
      %1008 = vmatpush.msra.mxu0 0.0
      %1009 = vmatpush.msra.mxu0 0.0
      %1010 = vmatpush.msra.mxu0 0.0
      %1011 = vmatpush.msra.mxu0 0.0
      %1012 = vmatpush.msra.mxu0 0.0
      %1013 = vmatpush.msra.mxu0 0.0
      %1014 = vmatpush.msra.mxu0 0.0
      %1015 = vmatpush.msra.mxu0 %v1002
      %1016 = vmatpush.msra.mxu0 %v983
      %1017 = vmatpush.msra.mxu0 %v982
      %1018 = vmatpush.msra.mxu0 %v981
      %1019 = vmatpush.msra.mxu0 %v980
      %1020 = vmatmul.f32.gmra.mxu0 %v985
      %v1021 = vpop.f32.mrf.mxu0
      %v1022 = vadd.f32 0.0, %v1021
      %1023 = vmatmul.f32.gmra.mxu0 %v987
      %v1024 = vpop.f32.mrf.mxu0
      %v1025 = vadd.f32 0.0, %v1024
      %1026 = vmatmul.f32.gmra.mxu0 %v989
      %v1027 = vpop.f32.mrf.mxu0
      %v1028 = vadd.f32 0.0, %v1027
      %1029 = vmatmul.f32.gmra.mxu0 %v991
      %v1030 = vpop.f32.mrf.mxu0
      %v1031 = vadd.f32 0.0, %v1030
      %1032 = vmatmul.f32.gmra.mxu0 %v993
      %v1033 = vpop.f32.mrf.mxu0
      %v1034 = vadd.f32 0.0, %v1033
      %1035 = vmatmul.f32.gmra.mxu0 %v995
      %v1036 = vpop.f32.mrf.mxu0
      %v1037 = vadd.f32 0.0, %v1036
      %1038 = vmatmul.f32.gmra.mxu0 %v997
      %v1039 = vpop.f32.mrf.mxu0
      %v1040 = vadd.f32 0.0, %v1039
      %1041 = vmatmul.f32.gmra.mxu0 %v999
      %v1042 = vpop.f32.mrf.mxu0
      %v1043 = vadd.f32 0.0, %v1042
      %1044 = vdwg.mxu0
      %v1045 = vadd.f32 %v931, %v1022
      %v1046 = vadd.f32 %v934, %v1025
      %v1047 = vadd.f32 %v937, %v1028
      %v1048 = vadd.f32 %v940, %v1031
      %v1049 = vadd.f32 %v943, %v1034
      %v1050 = vadd.f32 %v946, %v1037
      %v1051 = vadd.f32 %v949, %v1040
      %v1052 = vadd.f32 %v952, %v1043
      %v1053 = vmax.f32 %v1045, 0.0
      %v1054 = vmax.f32 %v1046, 0.0
      %v1055 = vmax.f32 %v1047, 0.0
      %v1056 = vmax.f32 %v1048, 0.0
      %v1057 = vmax.f32 %v1049, 0.0
      %v1058 = vmax.f32 %v1050, 0.0
      %v1059 = vmax.f32 %v1051, 0.0
      %v1060 = vmax.f32 %v1052, 0.0
      %1061 = vst.msk [vmem:[%s366] sm:$0xff] %vm611, %v1053
      %1062 = vst.msk [vmem:[%s366 + $0x8] sm:$0xff] %vm611, %v1054
      %1063 = vst.msk [vmem:[%s366 + $0x10] sm:$0xff] %vm611, %v1055
      %1064 = vst.msk [vmem:[%s366 + $0x18] sm:$0xff] %vm611, %v1056
      %1065 = vst.msk [vmem:[%s366 + $0x20] sm:$0xff] %vm611, %v1057
      %1066 = vst.msk [vmem:[%s366 + $0x28] sm:$0xff] %vm611, %v1058
      %1067 = vst.msk [vmem:[%s366 + $0x30] sm:$0xff] %vm611, %v1059
      %1068 = vst.msk [vmem:[%s366 + $0x38] sm:$0xff] %vm611, %v1060
      %v1069 = vld [vmem:[%s388] sm:$0xff]
      %v1070 = vld [vmem:[%s388 + $0x8] sm:$0x3]
      %v1071 = vld [vmem:[%s388 + $0x10] sm:$0xff]
      %v1072 = vld [vmem:[%s388 + $0x18] sm:$0x3]
      %v1073 = vld [vmem:[%s388 + $0x20] sm:$0xff]
      %v1074 = vld [vmem:[%s388 + $0x28] sm:$0x3]
      %v1075 = vld [vmem:[%s388 + $0x30] sm:$0xff]
      %v1076 = vld [vmem:[%s388 + $0x38] sm:$0x3]
      %v1077 = vld [vmem:[%s388 + $0x40] sm:$0xff]
      %v1078 = vld [vmem:[%s388 + $0x48] sm:$0x3]
      %v1079 = vld [vmem:[%s388 + $0x50] sm:$0xff]
      %v1080 = vld [vmem:[%s388 + $0x58] sm:$0x3]
      %v1081 = vld [vmem:[%s388 + $0x60] sm:$0xff]
      %v1082 = vld [vmem:[%s388 + $0x68] sm:$0x3]
      %v1083 = vld [vmem:[%s388 + $0x70] sm:$0xff]
      %v1084 = vld [vmem:[%s388 + $0x78] sm:$0x3]
      %v1085 = vld [vmem:[%s388 + $0x80] sm:$0xff]
      %v1086 = vld [vmem:[%s388 + $0x88] sm:$0x3]
      %v1087 = vld [vmem:[%s388 + $0x90] sm:$0xff]
      %v1088 = vld [vmem:[%s388 + $0x98] sm:$0x3]
      %v1089 = vld [vmem:[%s409] sm:$0xff]
      %v1090 = vld [vmem:[%s409 + $0x8] sm:$0x3]
      %v1091 = vld [vmem:[%s409 + $0x10] sm:$0xff]
      %v1092 = vld [vmem:[%s409 + $0x18] sm:$0x3]
      %v1093 = vld [vmem:[%s409 + $0x20] sm:$0xff]
      %v1094 = vld [vmem:[%s409 + $0x28] sm:$0x3]
      %v1095 = vld [vmem:[%s409 + $0x30] sm:$0xff]
      %v1096 = vld [vmem:[%s409 + $0x38] sm:$0x3]
      %v1097 = vld [vmem:[%s409 + $0x40] sm:$0xff]
      %v1098 = vld [vmem:[%s409 + $0x48] sm:$0x3]
      %v1099 = vld [vmem:[%s409 + $0x50] sm:$0xff]
      %v1100 = vld [vmem:[%s409 + $0x58] sm:$0x3]
      %v1101 = vld [vmem:[%s409 + $0x60] sm:$0xff]
      %v1102 = vld [vmem:[%s409 + $0x68] sm:$0x3]
      %v1103 = vld [vmem:[%s409 + $0x70] sm:$0xff]
      %v1104 = vld [vmem:[%s409 + $0x78] sm:$0x3]
      %v1105 = vld [vmem:[%s409 + $0x80] sm:$0xff]
      %v1106 = vld [vmem:[%s409 + $0x88] sm:$0x3]
      %v1107 = vld [vmem:[%s409 + $0x90] sm:$0xff]
      %v1108 = vld [vmem:[%s409 + $0x98] sm:$0x3]
      %s1109 = scalar_lea.vmem %s323, 480
      %v1110 = vld [vmem:[%s1109] sm:$0xff]
      %v1111 = vld [vmem:[%s1109 + $0x8] sm:$0x3]
      %v1112 = vld [vmem:[%s1109 + $0x10] sm:$0xff]
      %v1113 = vld [vmem:[%s1109 + $0x18] sm:$0x3]
      %v1114 = vld [vmem:[%s1109 + $0x20] sm:$0xff]
      %v1115 = vld [vmem:[%s1109 + $0x28] sm:$0x3]
      %v1116 = vld [vmem:[%s1109 + $0x30] sm:$0xff]
      %v1117 = vld [vmem:[%s1109 + $0x38] sm:$0x3]
      %v1118 = vld [vmem:[%s1109 + $0x40] sm:$0xff]
      %v1119 = vld [vmem:[%s1109 + $0x48] sm:$0x3]
      %v1120 = vld [vmem:[%s1109 + $0x50] sm:$0xff]
      %v1121 = vld [vmem:[%s1109 + $0x58] sm:$0x3]
      %v1122 = vld [vmem:[%s1109 + $0x60] sm:$0xff]
      %v1123 = vld [vmem:[%s1109 + $0x68] sm:$0x3]
      %v1124 = vld [vmem:[%s1109 + $0x70] sm:$0xff]
      %v1125 = vld [vmem:[%s1109 + $0x78] sm:$0x3]
      %v1126 = vld [vmem:[%s1109 + $0x80] sm:$0xff]
      %v1127 = vld [vmem:[%s1109 + $0x88] sm:$0x3]
      %v1128 = vld [vmem:[%s1109 + $0x90] sm:$0xff]
      %v1129 = vld [vmem:[%s1109 + $0x98] sm:$0x3]
      %1150 = vrot.lane.b32.xlu0 %v1089, 4
      %v1151 = vpop.permute.xlu0 %1150
      %1152 = vrot.lane.b32.xlu0 %v1090, 4
      %v1153 = vpop.permute.xlu0 %1152
      %1154 = vrot.lane.b32.xlu0 %v1091, 4
      %v1155 = vpop.permute.xlu0 %1154
      %1156 = vrot.lane.b32.xlu0 %v1092, 4
      %v1157 = vpop.permute.xlu0 %1156
      %1158 = vrot.lane.b32.xlu0 %v1093, 4
      %v1159 = vpop.permute.xlu0 %1158
      %1160 = vrot.lane.b32.xlu0 %v1094, 4
      %v1161 = vpop.permute.xlu0 %1160
      %1162 = vrot.lane.b32.xlu0 %v1095, 4
      %v1163 = vpop.permute.xlu0 %1162
      %1164 = vrot.lane.b32.xlu0 %v1096, 4
      %v1165 = vpop.permute.xlu0 %1164
      %1166 = vrot.lane.b32.xlu0 %v1097, 4
      %v1167 = vpop.permute.xlu0 %1166
      %1168 = vrot.lane.b32.xlu0 %v1098, 4
      %v1169 = vpop.permute.xlu0 %1168
      %1170 = vrot.lane.b32.xlu0 %v1099, 4
      %v1171 = vpop.permute.xlu0 %1170
      %1172 = vrot.lane.b32.xlu0 %v1100, 4
      %v1173 = vpop.permute.xlu0 %1172
      %1174 = vrot.lane.b32.xlu0 %v1101, 4
      %v1175 = vpop.permute.xlu0 %1174
      %1176 = vrot.lane.b32.xlu0 %v1102, 4
      %v1177 = vpop.permute.xlu0 %1176
      %1178 = vrot.lane.b32.xlu0 %v1103, 4
      %v1179 = vpop.permute.xlu0 %1178
      %1180 = vrot.lane.b32.xlu0 %v1104, 4
      %v1181 = vpop.permute.xlu0 %1180
      %1182 = vrot.lane.b32.xlu0 %v1105, 4
      %v1183 = vpop.permute.xlu0 %1182
      %1184 = vrot.lane.b32.xlu0 %v1106, 4
      %v1185 = vpop.permute.xlu0 %1184
      %1186 = vrot.lane.b32.xlu0 %v1107, 4
      %v1187 = vpop.permute.xlu0 %1186
      %1188 = vrot.lane.b32.xlu0 %v1108, 4
      %v1189 = vpop.permute.xlu0 %1188
      %1230 = vrot.lane.b32.xlu0 %v1110, 8
      %v1231 = vpop.permute.xlu0 %1230
      %1232 = vrot.lane.b32.xlu0 %v1111, 8
      %v1233 = vpop.permute.xlu0 %1232
      %1234 = vrot.lane.b32.xlu0 %v1112, 8
      %v1235 = vpop.permute.xlu0 %1234
      %1236 = vrot.lane.b32.xlu0 %v1113, 8
      %v1237 = vpop.permute.xlu0 %1236
      %1238 = vrot.lane.b32.xlu0 %v1114, 8
      %v1239 = vpop.permute.xlu0 %1238
      %1240 = vrot.lane.b32.xlu0 %v1115, 8
      %v1241 = vpop.permute.xlu0 %1240
      %1242 = vrot.lane.b32.xlu0 %v1116, 8
      %v1243 = vpop.permute.xlu0 %1242
      %1244 = vrot.lane.b32.xlu0 %v1117, 8
      %v1245 = vpop.permute.xlu0 %1244
      %1246 = vrot.lane.b32.xlu0 %v1118, 8
      %v1247 = vpop.permute.xlu0 %1246
      %1248 = vrot.lane.b32.xlu0 %v1119, 8
      %v1249 = vpop.permute.xlu0 %1248
      %1250 = vrot.lane.b32.xlu0 %v1120, 8
      %v1251 = vpop.permute.xlu0 %1250
      %1252 = vrot.lane.b32.xlu0 %v1121, 8
      %v1253 = vpop.permute.xlu0 %1252
      %1254 = vrot.lane.b32.xlu0 %v1122, 8
      %v1255 = vpop.permute.xlu0 %1254
      %1256 = vrot.lane.b32.xlu0 %v1123, 8
      %v1257 = vpop.permute.xlu0 %1256
      %1258 = vrot.lane.b32.xlu0 %v1124, 8
      %v1259 = vpop.permute.xlu0 %1258
      %1260 = vrot.lane.b32.xlu0 %v1125, 8
      %v1261 = vpop.permute.xlu0 %1260
      %1262 = vrot.lane.b32.xlu0 %v1126, 8
      %v1263 = vpop.permute.xlu0 %1262
      %1264 = vrot.lane.b32.xlu0 %v1127, 8
      %v1265 = vpop.permute.xlu0 %1264
      %1266 = vrot.lane.b32.xlu0 %v1128, 8
      %v1267 = vpop.permute.xlu0 %1266
      %1268 = vrot.lane.b32.xlu0 %v1129, 8
      %v1269 = vpop.permute.xlu0 %1268
      %v1290 = vsel %vm590, %v1069, %v1151
      %v1291 = vsel %vm590, %v1070, %v1153
      %v1292 = vsel %vm590, %v1071, %v1155
      %v1293 = vsel %vm590, %v1072, %v1157
      %v1294 = vsel %vm590, %v1073, %v1159
      %v1295 = vsel %vm590, %v1074, %v1161
      %v1296 = vsel %vm590, %v1075, %v1163
      %v1297 = vsel %vm590, %v1076, %v1165
      %v1298 = vsel %vm590, %v1077, %v1167
      %v1299 = vsel %vm590, %v1078, %v1169
      %v1300 = vsel %vm590, %v1079, %v1171
      %v1301 = vsel %vm590, %v1080, %v1173
      %v1302 = vsel %vm590, %v1081, %v1175
      %v1303 = vsel %vm590, %v1082, %v1177
      %v1304 = vsel %vm590, %v1083, %v1179
      %v1305 = vsel %vm590, %v1084, %v1181
      %v1306 = vsel %vm590, %v1085, %v1183
      %v1307 = vsel %vm590, %v1086, %v1185
      %v1308 = vsel %vm590, %v1087, %v1187
      %v1309 = vsel %vm590, %v1088, %v1189
      %v1310 = vsel %vm611, %v1290, %v1231
      %v1311 = vsel %vm611, %v1291, %v1233
      %v1312 = vsel %vm611, %v1292, %v1235
      %v1313 = vsel %vm611, %v1293, %v1237
      %v1314 = vsel %vm611, %v1294, %v1239
      %v1315 = vsel %vm611, %v1295, %v1241
      %v1316 = vsel %vm611, %v1296, %v1243
      %v1317 = vsel %vm611, %v1297, %v1245
      %v1318 = vsel %vm611, %v1298, %v1247
      %v1319 = vsel %vm611, %v1299, %v1249
      %v1320 = vsel %vm611, %v1300, %v1251
      %v1321 = vsel %vm611, %v1301, %v1253
      %v1322 = vsel %vm611, %v1302, %v1255
      %v1323 = vsel %vm611, %v1303, %v1257
      %v1324 = vsel %vm611, %v1304, %v1259
      %v1325 = vsel %vm611, %v1305, %v1261
      %v1326 = vsel %vm611, %v1306, %v1263
      %v1327 = vsel %vm611, %v1307, %v1265
      %v1328 = vsel %vm611, %v1308, %v1267
      %v1329 = vsel %vm611, %v1309, %v1269
      %1346 = vrot.lane.b32.xlu0 %v1312, 12
      %v1347 = vpop.permute.xlu0 %1346
      %1348 = vrot.lane.b32.xlu0 %v1313, 12
      %v1349 = vpop.permute.xlu0 %1348
      %1350 = vrot.lane.b32.xlu0 %v1314, 12
      %v1351 = vpop.permute.xlu0 %1350
      %1352 = vrot.lane.b32.xlu0 %v1315, 12
      %v1353 = vpop.permute.xlu0 %1352
      %1354 = vrot.lane.b32.xlu0 %v1316, 12
      %v1355 = vpop.permute.xlu0 %1354
      %1356 = vrot.lane.b32.xlu0 %v1317, 12
      %v1357 = vpop.permute.xlu0 %1356
      %1358 = vrot.lane.b32.xlu0 %v1318, 12
      %v1359 = vpop.permute.xlu0 %1358
      %1360 = vrot.lane.b32.xlu0 %v1319, 12
      %v1361 = vpop.permute.xlu0 %1360
      %1362 = vrot.lane.b32.xlu0 %v1320, 12
      %v1363 = vpop.permute.xlu0 %1362
      %1364 = vrot.lane.b32.xlu0 %v1321, 12
      %v1365 = vpop.permute.xlu0 %1364
      %1366 = vrot.lane.b32.xlu0 %v1322, 12
      %v1367 = vpop.permute.xlu0 %1366
      %1368 = vrot.lane.b32.xlu0 %v1323, 12
      %v1369 = vpop.permute.xlu0 %1368
      %1370 = vrot.lane.b32.xlu0 %v1324, 12
      %v1371 = vpop.permute.xlu0 %1370
      %1372 = vrot.lane.b32.xlu0 %v1325, 12
      %v1373 = vpop.permute.xlu0 %1372
      %1374 = vrot.lane.b32.xlu0 %v1326, 12
      %v1375 = vpop.permute.xlu0 %1374
      %1376 = vrot.lane.b32.xlu0 %v1327, 12
      %v1377 = vpop.permute.xlu0 %1376
      %1396 = vrot.lane.b32.xlu0 %v1314, 24
      %v1397 = vpop.permute.xlu0 %1396
      %1398 = vrot.lane.b32.xlu0 %v1315, 24
      %v1399 = vpop.permute.xlu0 %1398
      %1400 = vrot.lane.b32.xlu0 %v1316, 24
      %v1401 = vpop.permute.xlu0 %1400
      %1402 = vrot.lane.b32.xlu0 %v1317, 24
      %v1403 = vpop.permute.xlu0 %1402
      %1404 = vrot.lane.b32.xlu0 %v1318, 24
      %v1405 = vpop.permute.xlu0 %1404
      %1406 = vrot.lane.b32.xlu0 %v1319, 24
      %v1407 = vpop.permute.xlu0 %1406
      %1408 = vrot.lane.b32.xlu0 %v1320, 24
      %v1409 = vpop.permute.xlu0 %1408
      %1410 = vrot.lane.b32.xlu0 %v1321, 24
      %v1411 = vpop.permute.xlu0 %1410
      %1412 = vrot.lane.b32.xlu0 %v1322, 24
      %v1413 = vpop.permute.xlu0 %1412
      %1414 = vrot.lane.b32.xlu0 %v1323, 24
      %v1415 = vpop.permute.xlu0 %1414
      %1416 = vrot.lane.b32.xlu0 %v1324, 24
      %v1417 = vpop.permute.xlu0 %1416
      %1418 = vrot.lane.b32.xlu0 %v1325, 24
      %v1419 = vpop.permute.xlu0 %1418
      %1420 = vrot.lane.b32.xlu0 %v1326, 24
      %v1421 = vpop.permute.xlu0 %1420
      %1422 = vrot.lane.b32.xlu0 %v1327, 24
      %v1423 = vpop.permute.xlu0 %1422
      %1424 = vrot.lane.b32.xlu0 %v1328, 24
      %v1425 = vpop.permute.xlu0 %1424
      %1426 = vrot.lane.b32.xlu0 %v1329, 24
      %v1427 = vpop.permute.xlu0 %1426
      %v1444 = vsel %vm746, %v1310, %v1347
      %v1445 = vsel %vm746, %v1311, %v1349
      %v1446 = vsel %vm746, %v1312, %v1351
      %v1447 = vsel %vm746, %v1313, %v1353
      %v1448 = vsel %vm746, %v1314, %v1355
      %v1449 = vsel %vm746, %v1315, %v1357
      %v1450 = vsel %vm746, %v1316, %v1359
      %v1451 = vsel %vm746, %v1317, %v1361
      %v1452 = vsel %vm746, %v1318, %v1363
      %v1453 = vsel %vm746, %v1319, %v1365
      %v1454 = vsel %vm746, %v1320, %v1367
      %v1455 = vsel %vm746, %v1321, %v1369
      %v1456 = vsel %vm746, %v1322, %v1371
      %v1457 = vsel %vm746, %v1323, %v1373
      %v1458 = vsel %vm746, %v1324, %v1375
      %v1459 = vsel %vm746, %v1325, %v1377
      %v1460 = vsel %vm763, %v1444, %v1397
      %v1461 = vsel %vm763, %v1445, %v1399
      %v1462 = vsel %vm763, %v1446, %v1401
      %v1463 = vsel %vm763, %v1447, %v1403
      %v1464 = vsel %vm763, %v1448, %v1405
      %v1465 = vsel %vm763, %v1449, %v1407
      %v1466 = vsel %vm763, %v1450, %v1409
      %v1467 = vsel %vm763, %v1451, %v1411
      %v1468 = vsel %vm763, %v1452, %v1413
      %v1469 = vsel %vm763, %v1453, %v1415
      %v1470 = vsel %vm763, %v1454, %v1417
      %v1471 = vsel %vm763, %v1455, %v1419
      %v1472 = vsel %vm763, %v1456, %v1421
      %v1473 = vsel %vm763, %v1457, %v1423
      %v1474 = vsel %vm763, %v1458, %v1425
      %v1475 = vsel %vm763, %v1459, %v1427
      %v1476 = vld [vmem:[%s3] sm:$0xff]
      %v1477 = vld [vmem:[%s3 + $0x8] sm:$0xff]
      %v1478 = vld [vmem:[%s3 + $0x10] sm:$0xff]
      %v1479 = vld [vmem:[%s3 + $0x18] sm:$0xff]
      %v1480 = vld [vmem:[%s3 + $0x20] sm:$0xf]
      %v1497 = vrot.slane %v1460, 1
      %v1498 = vrot.slane %v1461, 1
      %v1499 = vsel %vm801, %v1497, %v1498
      %v1500 = vrot.slane %v1462, 1
      %v1501 = vrot.slane %v1463, 1
      %v1502 = vsel %vm801, %v1500, %v1501
      %v1503 = vrot.slane %v1464, 1
      %v1504 = vrot.slane %v1465, 1
      %v1505 = vsel %vm801, %v1503, %v1504
      %v1506 = vrot.slane %v1466, 1
      %v1507 = vrot.slane %v1467, 1
      %v1508 = vsel %vm801, %v1506, %v1507
      %v1509 = vrot.slane %v1468, 1
      %v1510 = vrot.slane %v1469, 1
      %v1511 = vsel %vm801, %v1509, %v1510
      %v1512 = vrot.slane %v1470, 1
      %v1513 = vrot.slane %v1471, 1
      %v1514 = vsel %vm801, %v1512, %v1513
      %v1515 = vrot.slane %v1472, 1
      %v1516 = vrot.slane %v1473, 1
      %v1517 = vsel %vm801, %v1515, %v1516
      %v1518 = vrot.slane %v1474, 1
      %v1519 = vrot.slane %v1475, 1
      %v1520 = vsel %vm801, %v1518, %v1519
      %v1521 = vld [vmem:[%s826] sm:$0xff]
      %v1522 = vld [vmem:[%s826 + $0x8] sm:$0xff]
      %v1523 = vld [vmem:[%s826 + $0x10] sm:$0xff]
      %v1524 = vld [vmem:[%s826 + $0x18] sm:$0xff]
      %v1525 = vld [vmem:[%s826 + $0x20] sm:$0xf]
      %v1526 = vsel %vm832, %v1499, 0
      %v1528 = vsel %vm832, %v1502, 0
      %v1530 = vsel %vm832, %v1505, 0
      %v1532 = vsel %vm832, %v1508, 0
      %v1534 = vsel %vm832, %v1511, 0
      %v1536 = vsel %vm832, %v1514, 0
      %v1538 = vsel %vm832, %v1517, 0
      %v1540 = vsel %vm832, %v1520, 0
      %v1543 = vsel %vm849, %v1525, 0
      %1545 = vmatpush.msra.mxu0 0.0
      %1546 = vmatpush.msra.mxu0 0.0
      %1547 = vmatpush.msra.mxu0 0.0
      %1548 = vmatpush.msra.mxu0 0.0
      %1549 = vmatpush.msra.mxu0 0.0
      %1550 = vmatpush.msra.mxu0 0.0
      %1551 = vmatpush.msra.mxu0 0.0
      %1552 = vmatpush.msra.mxu0 0.0
      %1553 = vmatpush.msra.mxu0 0.0
      %1554 = vmatpush.msra.mxu0 0.0
      %1555 = vmatpush.msra.mxu0 0.0
      %1556 = vmatpush.msra.mxu0 %v1543
      %1557 = vmatpush.msra.mxu0 %v1524
      %1558 = vmatpush.msra.mxu0 %v1523
      %1559 = vmatpush.msra.mxu0 %v1522
      %1560 = vmatpush.msra.mxu0 %v1521
      %1561 = vmatmul.f32.gmra.mxu0 %v1526
      %v1562 = vpop.f32.mrf.mxu0
      %v1563 = vadd.f32 0.0, %v1562
      %1564 = vmatmul.f32.gmra.mxu0 %v1528
      %v1565 = vpop.f32.mrf.mxu0
      %v1566 = vadd.f32 0.0, %v1565
      %1567 = vmatmul.f32.gmra.mxu0 %v1530
      %v1568 = vpop.f32.mrf.mxu0
      %v1569 = vadd.f32 0.0, %v1568
      %1570 = vmatmul.f32.gmra.mxu0 %v1532
      %v1571 = vpop.f32.mrf.mxu0
      %v1572 = vadd.f32 0.0, %v1571
      %1573 = vmatmul.f32.gmra.mxu0 %v1534
      %v1574 = vpop.f32.mrf.mxu0
      %v1575 = vadd.f32 0.0, %v1574
      %1576 = vmatmul.f32.gmra.mxu0 %v1536
      %v1577 = vpop.f32.mrf.mxu0
      %v1578 = vadd.f32 0.0, %v1577
      %1579 = vmatmul.f32.gmra.mxu0 %v1538
      %v1580 = vpop.f32.mrf.mxu0
      %v1581 = vadd.f32 0.0, %v1580
      %1582 = vmatmul.f32.gmra.mxu0 %v1540
      %v1583 = vpop.f32.mrf.mxu0
      %v1584 = vadd.f32 0.0, %v1583
      %1585 = vdwg.mxu0
      %v1586 = vsel %vm832, %v1460, 0
      %v1588 = vsel %vm832, %v1462, 0
      %v1590 = vsel %vm832, %v1464, 0
      %v1592 = vsel %vm832, %v1466, 0
      %v1594 = vsel %vm832, %v1468, 0
      %v1596 = vsel %vm832, %v1470, 0
      %v1598 = vsel %vm832, %v1472, 0
      %v1600 = vsel %vm832, %v1474, 0
      %v1603 = vsel %vm849, %v1480, 0
      %1605 = vmatpush.msra.mxu0 0.0
      %1606 = vmatpush.msra.mxu0 0.0
      %1607 = vmatpush.msra.mxu0 0.0
      %1608 = vmatpush.msra.mxu0 0.0
      %1609 = vmatpush.msra.mxu0 0.0
      %1610 = vmatpush.msra.mxu0 0.0
      %1611 = vmatpush.msra.mxu0 0.0
      %1612 = vmatpush.msra.mxu0 0.0
      %1613 = vmatpush.msra.mxu0 0.0
      %1614 = vmatpush.msra.mxu0 0.0
      %1615 = vmatpush.msra.mxu0 0.0
      %1616 = vmatpush.msra.mxu0 %v1603
      %1617 = vmatpush.msra.mxu0 %v1479
      %1618 = vmatpush.msra.mxu0 %v1478
      %1619 = vmatpush.msra.mxu0 %v1477
      %1620 = vmatpush.msra.mxu0 %v1476
      %1621 = vmatmul.f32.gmra.mxu0 %v1586
      %v1622 = vpop.f32.mrf.mxu0
      %v1623 = vadd.f32 %v1563, %v1622
      %1624 = vmatmul.f32.gmra.mxu0 %v1588
      %v1625 = vpop.f32.mrf.mxu0
      %v1626 = vadd.f32 %v1566, %v1625
      %1627 = vmatmul.f32.gmra.mxu0 %v1590
      %v1628 = vpop.f32.mrf.mxu0
      %v1629 = vadd.f32 %v1569, %v1628
      %1630 = vmatmul.f32.gmra.mxu0 %v1592
      %v1631 = vpop.f32.mrf.mxu0
      %v1632 = vadd.f32 %v1572, %v1631
      %1633 = vmatmul.f32.gmra.mxu0 %v1594
      %v1634 = vpop.f32.mrf.mxu0
      %v1635 = vadd.f32 %v1575, %v1634
      %1636 = vmatmul.f32.gmra.mxu0 %v1596
      %v1637 = vpop.f32.mrf.mxu0
      %v1638 = vadd.f32 %v1578, %v1637
      %1639 = vmatmul.f32.gmra.mxu0 %v1598
      %v1640 = vpop.f32.mrf.mxu0
      %v1641 = vadd.f32 %v1581, %v1640
      %1642 = vmatmul.f32.gmra.mxu0 %v1600
      %v1643 = vpop.f32.mrf.mxu0
      %v1644 = vadd.f32 %v1584, %v1643
      %1645 = vdwg.mxu0
      %v1646 = vrot.slane %v1460, 2
      %v1647 = vrot.slane %v1461, 2
      %v1648 = vsel %vm954, %v1646, %v1647
      %v1649 = vrot.slane %v1462, 2
      %v1650 = vrot.slane %v1463, 2
      %v1651 = vsel %vm954, %v1649, %v1650
      %v1652 = vrot.slane %v1464, 2
      %v1653 = vrot.slane %v1465, 2
      %v1654 = vsel %vm954, %v1652, %v1653
      %v1655 = vrot.slane %v1466, 2
      %v1656 = vrot.slane %v1467, 2
      %v1657 = vsel %vm954, %v1655, %v1656
      %v1658 = vrot.slane %v1468, 2
      %v1659 = vrot.slane %v1469, 2
      %v1660 = vsel %vm954, %v1658, %v1659
      %v1661 = vrot.slane %v1470, 2
      %v1662 = vrot.slane %v1471, 2
      %v1663 = vsel %vm954, %v1661, %v1662
      %v1664 = vrot.slane %v1472, 2
      %v1665 = vrot.slane %v1473, 2
      %v1666 = vsel %vm954, %v1664, %v1665
      %v1667 = vrot.slane %v1474, 2
      %v1668 = vrot.slane %v1475, 2
      %v1669 = vsel %vm954, %v1667, %v1668
      %v1670 = vld [vmem:[%s979] sm:$0xff]
      %v1671 = vld [vmem:[%s979 + $0x8] sm:$0xff]
      %v1672 = vld [vmem:[%s979 + $0x10] sm:$0xff]
      %v1673 = vld [vmem:[%s979 + $0x18] sm:$0xff]
      %v1674 = vld [vmem:[%s979 + $0x20] sm:$0xf]
      %v1675 = vsel %vm832, %v1648, 0
      %v1677 = vsel %vm832, %v1651, 0
      %v1679 = vsel %vm832, %v1654, 0
      %v1681 = vsel %vm832, %v1657, 0
      %v1683 = vsel %vm832, %v1660, 0
      %v1685 = vsel %vm832, %v1663, 0
      %v1687 = vsel %vm832, %v1666, 0
      %v1689 = vsel %vm832, %v1669, 0
      %v1692 = vsel %vm849, %v1674, 0
      %1694 = vmatpush.msra.mxu0 0.0
      %1695 = vmatpush.msra.mxu0 0.0
      %1696 = vmatpush.msra.mxu0 0.0
      %1697 = vmatpush.msra.mxu0 0.0
      %1698 = vmatpush.msra.mxu0 0.0
      %1699 = vmatpush.msra.mxu0 0.0
      %1700 = vmatpush.msra.mxu0 0.0
      %1701 = vmatpush.msra.mxu0 0.0
      %1702 = vmatpush.msra.mxu0 0.0
      %1703 = vmatpush.msra.mxu0 0.0
      %1704 = vmatpush.msra.mxu0 0.0
      %1705 = vmatpush.msra.mxu0 %v1692
      %1706 = vmatpush.msra.mxu0 %v1673
      %1707 = vmatpush.msra.mxu0 %v1672
      %1708 = vmatpush.msra.mxu0 %v1671
      %1709 = vmatpush.msra.mxu0 %v1670
      %1710 = vmatmul.f32.gmra.mxu0 %v1675
      %v1711 = vpop.f32.mrf.mxu0
      %v1712 = vadd.f32 0.0, %v1711
      %1713 = vmatmul.f32.gmra.mxu0 %v1677
      %v1714 = vpop.f32.mrf.mxu0
      %v1715 = vadd.f32 0.0, %v1714
      %1716 = vmatmul.f32.gmra.mxu0 %v1679
      %v1717 = vpop.f32.mrf.mxu0
      %v1718 = vadd.f32 0.0, %v1717
      %1719 = vmatmul.f32.gmra.mxu0 %v1681
      %v1720 = vpop.f32.mrf.mxu0
      %v1721 = vadd.f32 0.0, %v1720
      %1722 = vmatmul.f32.gmra.mxu0 %v1683
      %v1723 = vpop.f32.mrf.mxu0
      %v1724 = vadd.f32 0.0, %v1723
      %1725 = vmatmul.f32.gmra.mxu0 %v1685
      %v1726 = vpop.f32.mrf.mxu0
      %v1727 = vadd.f32 0.0, %v1726
      %1728 = vmatmul.f32.gmra.mxu0 %v1687
      %v1729 = vpop.f32.mrf.mxu0
      %v1730 = vadd.f32 0.0, %v1729
      %1731 = vmatmul.f32.gmra.mxu0 %v1689
      %v1732 = vpop.f32.mrf.mxu0
      %v1733 = vadd.f32 0.0, %v1732
      %1734 = vdwg.mxu0
      %v1735 = vadd.f32 %v1623, %v1712
      %v1736 = vadd.f32 %v1626, %v1715
      %v1737 = vadd.f32 %v1629, %v1718
      %v1738 = vadd.f32 %v1632, %v1721
      %v1739 = vadd.f32 %v1635, %v1724
      %v1740 = vadd.f32 %v1638, %v1727
      %v1741 = vadd.f32 %v1641, %v1730
      %v1742 = vadd.f32 %v1644, %v1733
      %v1743 = vmax.f32 %v1735, 0.0
      %v1744 = vmax.f32 %v1736, 0.0
      %v1745 = vmax.f32 %v1737, 0.0
      %v1746 = vmax.f32 %v1738, 0.0
      %v1747 = vmax.f32 %v1739, 0.0
      %v1748 = vmax.f32 %v1740, 0.0
      %v1749 = vmax.f32 %v1741, 0.0
      %v1750 = vmax.f32 %v1742, 0.0
      %s1751 = scalar_lea.vmem %s366, 64
      %1752 = vst.msk [vmem:[%s1751] sm:$0xff] %vm611, %v1743
      %1753 = vst.msk [vmem:[%s1751 + $0x8] sm:$0xff] %vm611, %v1744
      %1754 = vst.msk [vmem:[%s1751 + $0x10] sm:$0xff] %vm611, %v1745
      %1755 = vst.msk [vmem:[%s1751 + $0x18] sm:$0xff] %vm611, %v1746
      %1756 = vst.msk [vmem:[%s1751 + $0x20] sm:$0xff] %vm611, %v1747
      %1757 = vst.msk [vmem:[%s1751 + $0x28] sm:$0xff] %vm611, %v1748
      %1758 = vst.msk [vmem:[%s1751 + $0x30] sm:$0xff] %vm611, %v1749
      %1759 = vst.msk [vmem:[%s1751 + $0x38] sm:$0xff] %vm611, %v1750
      %v1760 = vld [vmem:[%s409] sm:$0xff]
      %v1761 = vld [vmem:[%s409 + $0x8] sm:$0x3]
      %v1762 = vld [vmem:[%s409 + $0x10] sm:$0xff]
      %v1763 = vld [vmem:[%s409 + $0x18] sm:$0x3]
      %v1764 = vld [vmem:[%s409 + $0x20] sm:$0xff]
      %v1765 = vld [vmem:[%s409 + $0x28] sm:$0x3]
      %v1766 = vld [vmem:[%s409 + $0x30] sm:$0xff]
      %v1767 = vld [vmem:[%s409 + $0x38] sm:$0x3]
      %v1768 = vld [vmem:[%s409 + $0x40] sm:$0xff]
      %v1769 = vld [vmem:[%s409 + $0x48] sm:$0x3]
      %v1770 = vld [vmem:[%s409 + $0x50] sm:$0xff]
      %v1771 = vld [vmem:[%s409 + $0x58] sm:$0x3]
      %v1772 = vld [vmem:[%s409 + $0x60] sm:$0xff]
      %v1773 = vld [vmem:[%s409 + $0x68] sm:$0x3]
      %v1774 = vld [vmem:[%s409 + $0x70] sm:$0xff]
      %v1775 = vld [vmem:[%s409 + $0x78] sm:$0x3]
      %v1776 = vld [vmem:[%s409 + $0x80] sm:$0xff]
      %v1777 = vld [vmem:[%s409 + $0x88] sm:$0x3]
      %v1778 = vld [vmem:[%s409 + $0x90] sm:$0xff]
      %v1779 = vld [vmem:[%s409 + $0x98] sm:$0x3]
      %v1780 = vld [vmem:[%s1109] sm:$0xff]
      %v1781 = vld [vmem:[%s1109 + $0x8] sm:$0x3]
      %v1782 = vld [vmem:[%s1109 + $0x10] sm:$0xff]
      %v1783 = vld [vmem:[%s1109 + $0x18] sm:$0x3]
      %v1784 = vld [vmem:[%s1109 + $0x20] sm:$0xff]
      %v1785 = vld [vmem:[%s1109 + $0x28] sm:$0x3]
      %v1786 = vld [vmem:[%s1109 + $0x30] sm:$0xff]
      %v1787 = vld [vmem:[%s1109 + $0x38] sm:$0x3]
      %v1788 = vld [vmem:[%s1109 + $0x40] sm:$0xff]
      %v1789 = vld [vmem:[%s1109 + $0x48] sm:$0x3]
      %v1790 = vld [vmem:[%s1109 + $0x50] sm:$0xff]
      %v1791 = vld [vmem:[%s1109 + $0x58] sm:$0x3]
      %v1792 = vld [vmem:[%s1109 + $0x60] sm:$0xff]
      %v1793 = vld [vmem:[%s1109 + $0x68] sm:$0x3]
      %v1794 = vld [vmem:[%s1109 + $0x70] sm:$0xff]
      %v1795 = vld [vmem:[%s1109 + $0x78] sm:$0x3]
      %v1796 = vld [vmem:[%s1109 + $0x80] sm:$0xff]
      %v1797 = vld [vmem:[%s1109 + $0x88] sm:$0x3]
      %v1798 = vld [vmem:[%s1109 + $0x90] sm:$0xff]
      %v1799 = vld [vmem:[%s1109 + $0x98] sm:$0x3]
      %s1800 = scalar_lea.vmem %s323, 640
      %v1801 = vld [vmem:[%s1800] sm:$0xff]
      %v1802 = vld [vmem:[%s1800 + $0x8] sm:$0x3]
      %v1803 = vld [vmem:[%s1800 + $0x10] sm:$0xff]
      %v1804 = vld [vmem:[%s1800 + $0x18] sm:$0x3]
      %v1805 = vld [vmem:[%s1800 + $0x20] sm:$0xff]
      %v1806 = vld [vmem:[%s1800 + $0x28] sm:$0x3]
      %v1807 = vld [vmem:[%s1800 + $0x30] sm:$0xff]
      %v1808 = vld [vmem:[%s1800 + $0x38] sm:$0x3]
      %v1809 = vld [vmem:[%s1800 + $0x40] sm:$0xff]
      %v1810 = vld [vmem:[%s1800 + $0x48] sm:$0x3]
      %v1811 = vld [vmem:[%s1800 + $0x50] sm:$0xff]
      %v1812 = vld [vmem:[%s1800 + $0x58] sm:$0x3]
      %v1813 = vld [vmem:[%s1800 + $0x60] sm:$0xff]
      %v1814 = vld [vmem:[%s1800 + $0x68] sm:$0x3]
      %v1815 = vld [vmem:[%s1800 + $0x70] sm:$0xff]
      %v1816 = vld [vmem:[%s1800 + $0x78] sm:$0x3]
      %v1817 = vld [vmem:[%s1800 + $0x80] sm:$0xff]
      %v1818 = vld [vmem:[%s1800 + $0x88] sm:$0x3]
      %v1819 = vld [vmem:[%s1800 + $0x90] sm:$0xff]
      %v1820 = vld [vmem:[%s1800 + $0x98] sm:$0x3]
      %1841 = vrot.lane.b32.xlu0 %v1780, 4
      %v1842 = vpop.permute.xlu0 %1841
      %1843 = vrot.lane.b32.xlu0 %v1781, 4
      %v1844 = vpop.permute.xlu0 %1843
      %1845 = vrot.lane.b32.xlu0 %v1782, 4
      %v1846 = vpop.permute.xlu0 %1845
      %1847 = vrot.lane.b32.xlu0 %v1783, 4
      %v1848 = vpop.permute.xlu0 %1847
      %1849 = vrot.lane.b32.xlu0 %v1784, 4
      %v1850 = vpop.permute.xlu0 %1849
      %1851 = vrot.lane.b32.xlu0 %v1785, 4
      %v1852 = vpop.permute.xlu0 %1851
      %1853 = vrot.lane.b32.xlu0 %v1786, 4
      %v1854 = vpop.permute.xlu0 %1853
      %1855 = vrot.lane.b32.xlu0 %v1787, 4
      %v1856 = vpop.permute.xlu0 %1855
      %1857 = vrot.lane.b32.xlu0 %v1788, 4
      %v1858 = vpop.permute.xlu0 %1857
      %1859 = vrot.lane.b32.xlu0 %v1789, 4
      %v1860 = vpop.permute.xlu0 %1859
      %1861 = vrot.lane.b32.xlu0 %v1790, 4
      %v1862 = vpop.permute.xlu0 %1861
      %1863 = vrot.lane.b32.xlu0 %v1791, 4
      %v1864 = vpop.permute.xlu0 %1863
      %1865 = vrot.lane.b32.xlu0 %v1792, 4
      %v1866 = vpop.permute.xlu0 %1865
      %1867 = vrot.lane.b32.xlu0 %v1793, 4
      %v1868 = vpop.permute.xlu0 %1867
      %1869 = vrot.lane.b32.xlu0 %v1794, 4
      %v1870 = vpop.permute.xlu0 %1869
      %1871 = vrot.lane.b32.xlu0 %v1795, 4
      %v1872 = vpop.permute.xlu0 %1871
      %1873 = vrot.lane.b32.xlu0 %v1796, 4
      %v1874 = vpop.permute.xlu0 %1873
      %1875 = vrot.lane.b32.xlu0 %v1797, 4
      %v1876 = vpop.permute.xlu0 %1875
      %1877 = vrot.lane.b32.xlu0 %v1798, 4
      %v1878 = vpop.permute.xlu0 %1877
      %1879 = vrot.lane.b32.xlu0 %v1799, 4
      %v1880 = vpop.permute.xlu0 %1879
      %1921 = vrot.lane.b32.xlu0 %v1801, 8
      %v1922 = vpop.permute.xlu0 %1921
      %1923 = vrot.lane.b32.xlu0 %v1802, 8
      %v1924 = vpop.permute.xlu0 %1923
      %1925 = vrot.lane.b32.xlu0 %v1803, 8
      %v1926 = vpop.permute.xlu0 %1925
      %1927 = vrot.lane.b32.xlu0 %v1804, 8
      %v1928 = vpop.permute.xlu0 %1927
      %1929 = vrot.lane.b32.xlu0 %v1805, 8
      %v1930 = vpop.permute.xlu0 %1929
      %1931 = vrot.lane.b32.xlu0 %v1806, 8
      %v1932 = vpop.permute.xlu0 %1931
      %1933 = vrot.lane.b32.xlu0 %v1807, 8
      %v1934 = vpop.permute.xlu0 %1933
      %1935 = vrot.lane.b32.xlu0 %v1808, 8
      %v1936 = vpop.permute.xlu0 %1935
      %1937 = vrot.lane.b32.xlu0 %v1809, 8
      %v1938 = vpop.permute.xlu0 %1937
      %1939 = vrot.lane.b32.xlu0 %v1810, 8
      %v1940 = vpop.permute.xlu0 %1939
      %1941 = vrot.lane.b32.xlu0 %v1811, 8
      %v1942 = vpop.permute.xlu0 %1941
      %1943 = vrot.lane.b32.xlu0 %v1812, 8
      %v1944 = vpop.permute.xlu0 %1943
      %1945 = vrot.lane.b32.xlu0 %v1813, 8
      %v1946 = vpop.permute.xlu0 %1945
      %1947 = vrot.lane.b32.xlu0 %v1814, 8
      %v1948 = vpop.permute.xlu0 %1947
      %1949 = vrot.lane.b32.xlu0 %v1815, 8
      %v1950 = vpop.permute.xlu0 %1949
      %1951 = vrot.lane.b32.xlu0 %v1816, 8
      %v1952 = vpop.permute.xlu0 %1951
      %1953 = vrot.lane.b32.xlu0 %v1817, 8
      %v1954 = vpop.permute.xlu0 %1953
      %1955 = vrot.lane.b32.xlu0 %v1818, 8
      %v1956 = vpop.permute.xlu0 %1955
      %1957 = vrot.lane.b32.xlu0 %v1819, 8
      %v1958 = vpop.permute.xlu0 %1957
      %1959 = vrot.lane.b32.xlu0 %v1820, 8
      %v1960 = vpop.permute.xlu0 %1959
      %v1981 = vsel %vm590, %v1760, %v1842
      %v1982 = vsel %vm590, %v1761, %v1844
      %v1983 = vsel %vm590, %v1762, %v1846
      %v1984 = vsel %vm590, %v1763, %v1848
      %v1985 = vsel %vm590, %v1764, %v1850
      %v1986 = vsel %vm590, %v1765, %v1852
      %v1987 = vsel %vm590, %v1766, %v1854
      %v1988 = vsel %vm590, %v1767, %v1856
      %v1989 = vsel %vm590, %v1768, %v1858
      %v1990 = vsel %vm590, %v1769, %v1860
      %v1991 = vsel %vm590, %v1770, %v1862
      %v1992 = vsel %vm590, %v1771, %v1864
      %v1993 = vsel %vm590, %v1772, %v1866
      %v1994 = vsel %vm590, %v1773, %v1868
      %v1995 = vsel %vm590, %v1774, %v1870
      %v1996 = vsel %vm590, %v1775, %v1872
      %v1997 = vsel %vm590, %v1776, %v1874
      %v1998 = vsel %vm590, %v1777, %v1876
      %v1999 = vsel %vm590, %v1778, %v1878
      %v2000 = vsel %vm590, %v1779, %v1880
      %v2001 = vsel %vm611, %v1981, %v1922
      %v2002 = vsel %vm611, %v1982, %v1924
      %v2003 = vsel %vm611, %v1983, %v1926
      %v2004 = vsel %vm611, %v1984, %v1928
      %v2005 = vsel %vm611, %v1985, %v1930
      %v2006 = vsel %vm611, %v1986, %v1932
      %v2007 = vsel %vm611, %v1987, %v1934
      %v2008 = vsel %vm611, %v1988, %v1936
      %v2009 = vsel %vm611, %v1989, %v1938
      %v2010 = vsel %vm611, %v1990, %v1940
      %v2011 = vsel %vm611, %v1991, %v1942
      %v2012 = vsel %vm611, %v1992, %v1944
      %v2013 = vsel %vm611, %v1993, %v1946
      %v2014 = vsel %vm611, %v1994, %v1948
      %v2015 = vsel %vm611, %v1995, %v1950
      %v2016 = vsel %vm611, %v1996, %v1952
      %v2017 = vsel %vm611, %v1997, %v1954
      %v2018 = vsel %vm611, %v1998, %v1956
      %v2019 = vsel %vm611, %v1999, %v1958
      %v2020 = vsel %vm611, %v2000, %v1960
      %2037 = vrot.lane.b32.xlu0 %v2003, 12
      %v2038 = vpop.permute.xlu0 %2037
      %2039 = vrot.lane.b32.xlu0 %v2004, 12
      %v2040 = vpop.permute.xlu0 %2039
      %2041 = vrot.lane.b32.xlu0 %v2005, 12
      %v2042 = vpop.permute.xlu0 %2041
      %2043 = vrot.lane.b32.xlu0 %v2006, 12
      %v2044 = vpop.permute.xlu0 %2043
      %2045 = vrot.lane.b32.xlu0 %v2007, 12
      %v2046 = vpop.permute.xlu0 %2045
      %2047 = vrot.lane.b32.xlu0 %v2008, 12
      %v2048 = vpop.permute.xlu0 %2047
      %2049 = vrot.lane.b32.xlu0 %v2009, 12
      %v2050 = vpop.permute.xlu0 %2049
      %2051 = vrot.lane.b32.xlu0 %v2010, 12
      %v2052 = vpop.permute.xlu0 %2051
      %2053 = vrot.lane.b32.xlu0 %v2011, 12
      %v2054 = vpop.permute.xlu0 %2053
      %2055 = vrot.lane.b32.xlu0 %v2012, 12
      %v2056 = vpop.permute.xlu0 %2055
      %2057 = vrot.lane.b32.xlu0 %v2013, 12
      %v2058 = vpop.permute.xlu0 %2057
      %2059 = vrot.lane.b32.xlu0 %v2014, 12
      %v2060 = vpop.permute.xlu0 %2059
      %2061 = vrot.lane.b32.xlu0 %v2015, 12
      %v2062 = vpop.permute.xlu0 %2061
      %2063 = vrot.lane.b32.xlu0 %v2016, 12
      %v2064 = vpop.permute.xlu0 %2063
      %2065 = vrot.lane.b32.xlu0 %v2017, 12
      %v2066 = vpop.permute.xlu0 %2065
      %2067 = vrot.lane.b32.xlu0 %v2018, 12
      %v2068 = vpop.permute.xlu0 %2067
      %2087 = vrot.lane.b32.xlu0 %v2005, 24
      %v2088 = vpop.permute.xlu0 %2087
      %2089 = vrot.lane.b32.xlu0 %v2006, 24
      %v2090 = vpop.permute.xlu0 %2089
      %2091 = vrot.lane.b32.xlu0 %v2007, 24
      %v2092 = vpop.permute.xlu0 %2091
      %2093 = vrot.lane.b32.xlu0 %v2008, 24
      %v2094 = vpop.permute.xlu0 %2093
      %2095 = vrot.lane.b32.xlu0 %v2009, 24
      %v2096 = vpop.permute.xlu0 %2095
      %2097 = vrot.lane.b32.xlu0 %v2010, 24
      %v2098 = vpop.permute.xlu0 %2097
      %2099 = vrot.lane.b32.xlu0 %v2011, 24
      %v2100 = vpop.permute.xlu0 %2099
      %2101 = vrot.lane.b32.xlu0 %v2012, 24
      %v2102 = vpop.permute.xlu0 %2101
      %2103 = vrot.lane.b32.xlu0 %v2013, 24
      %v2104 = vpop.permute.xlu0 %2103
      %2105 = vrot.lane.b32.xlu0 %v2014, 24
      %v2106 = vpop.permute.xlu0 %2105
      %2107 = vrot.lane.b32.xlu0 %v2015, 24
      %v2108 = vpop.permute.xlu0 %2107
      %2109 = vrot.lane.b32.xlu0 %v2016, 24
      %v2110 = vpop.permute.xlu0 %2109
      %2111 = vrot.lane.b32.xlu0 %v2017, 24
      %v2112 = vpop.permute.xlu0 %2111
      %2113 = vrot.lane.b32.xlu0 %v2018, 24
      %v2114 = vpop.permute.xlu0 %2113
      %2115 = vrot.lane.b32.xlu0 %v2019, 24
      %v2116 = vpop.permute.xlu0 %2115
      %2117 = vrot.lane.b32.xlu0 %v2020, 24
      %v2118 = vpop.permute.xlu0 %2117
      %v2135 = vsel %vm746, %v2001, %v2038
      %v2136 = vsel %vm746, %v2002, %v2040
      %v2137 = vsel %vm746, %v2003, %v2042
      %v2138 = vsel %vm746, %v2004, %v2044
      %v2139 = vsel %vm746, %v2005, %v2046
      %v2140 = vsel %vm746, %v2006, %v2048
      %v2141 = vsel %vm746, %v2007, %v2050
      %v2142 = vsel %vm746, %v2008, %v2052
      %v2143 = vsel %vm746, %v2009, %v2054
      %v2144 = vsel %vm746, %v2010, %v2056
      %v2145 = vsel %vm746, %v2011, %v2058
      %v2146 = vsel %vm746, %v2012, %v2060
      %v2147 = vsel %vm746, %v2013, %v2062
      %v2148 = vsel %vm746, %v2014, %v2064
      %v2149 = vsel %vm746, %v2015, %v2066
      %v2150 = vsel %vm746, %v2016, %v2068
      %v2151 = vsel %vm763, %v2135, %v2088
      %v2152 = vsel %vm763, %v2136, %v2090
      %v2153 = vsel %vm763, %v2137, %v2092
      %v2154 = vsel %vm763, %v2138, %v2094
      %v2155 = vsel %vm763, %v2139, %v2096
      %v2156 = vsel %vm763, %v2140, %v2098
      %v2157 = vsel %vm763, %v2141, %v2100
      %v2158 = vsel %vm763, %v2142, %v2102
      %v2159 = vsel %vm763, %v2143, %v2104
      %v2160 = vsel %vm763, %v2144, %v2106
      %v2161 = vsel %vm763, %v2145, %v2108
      %v2162 = vsel %vm763, %v2146, %v2110
      %v2163 = vsel %vm763, %v2147, %v2112
      %v2164 = vsel %vm763, %v2148, %v2114
      %v2165 = vsel %vm763, %v2149, %v2116
      %v2166 = vsel %vm763, %v2150, %v2118
      %v2167 = vld [vmem:[%s3] sm:$0xff]
      %v2168 = vld [vmem:[%s3 + $0x8] sm:$0xff]
      %v2169 = vld [vmem:[%s3 + $0x10] sm:$0xff]
      %v2170 = vld [vmem:[%s3 + $0x18] sm:$0xff]
      %v2171 = vld [vmem:[%s3 + $0x20] sm:$0xf]
      %v2188 = vrot.slane %v2151, 1
      %v2189 = vrot.slane %v2152, 1
      %v2190 = vsel %vm801, %v2188, %v2189
      %v2191 = vrot.slane %v2153, 1
      %v2192 = vrot.slane %v2154, 1
      %v2193 = vsel %vm801, %v2191, %v2192
      %v2194 = vrot.slane %v2155, 1
      %v2195 = vrot.slane %v2156, 1
      %v2196 = vsel %vm801, %v2194, %v2195
      %v2197 = vrot.slane %v2157, 1
      %v2198 = vrot.slane %v2158, 1
      %v2199 = vsel %vm801, %v2197, %v2198
      %v2200 = vrot.slane %v2159, 1
      %v2201 = vrot.slane %v2160, 1
      %v2202 = vsel %vm801, %v2200, %v2201
      %v2203 = vrot.slane %v2161, 1
      %v2204 = vrot.slane %v2162, 1
      %v2205 = vsel %vm801, %v2203, %v2204
      %v2206 = vrot.slane %v2163, 1
      %v2207 = vrot.slane %v2164, 1
      %v2208 = vsel %vm801, %v2206, %v2207
      %v2209 = vrot.slane %v2165, 1
      %v2210 = vrot.slane %v2166, 1
      %v2211 = vsel %vm801, %v2209, %v2210
      %v2212 = vld [vmem:[%s826] sm:$0xff]
      %v2213 = vld [vmem:[%s826 + $0x8] sm:$0xff]
      %v2214 = vld [vmem:[%s826 + $0x10] sm:$0xff]
      %v2215 = vld [vmem:[%s826 + $0x18] sm:$0xff]
      %v2216 = vld [vmem:[%s826 + $0x20] sm:$0xf]
      %v2217 = vsel %vm832, %v2190, 0
      %v2219 = vsel %vm832, %v2193, 0
      %v2221 = vsel %vm832, %v2196, 0
      %v2223 = vsel %vm832, %v2199, 0
      %v2225 = vsel %vm832, %v2202, 0
      %v2227 = vsel %vm832, %v2205, 0
      %v2229 = vsel %vm832, %v2208, 0
      %v2231 = vsel %vm832, %v2211, 0
      %v2234 = vsel %vm849, %v2216, 0
      %2236 = vmatpush.msra.mxu0 0.0
      %2237 = vmatpush.msra.mxu0 0.0
      %2238 = vmatpush.msra.mxu0 0.0
      %2239 = vmatpush.msra.mxu0 0.0
      %2240 = vmatpush.msra.mxu0 0.0
      %2241 = vmatpush.msra.mxu0 0.0
      %2242 = vmatpush.msra.mxu0 0.0
      %2243 = vmatpush.msra.mxu0 0.0
      %2244 = vmatpush.msra.mxu0 0.0
      %2245 = vmatpush.msra.mxu0 0.0
      %2246 = vmatpush.msra.mxu0 0.0
      %2247 = vmatpush.msra.mxu0 %v2234
      %2248 = vmatpush.msra.mxu0 %v2215
      %2249 = vmatpush.msra.mxu0 %v2214
      %2250 = vmatpush.msra.mxu0 %v2213
      %2251 = vmatpush.msra.mxu0 %v2212
      %2252 = vmatmul.f32.gmra.mxu0 %v2217
      %v2253 = vpop.f32.mrf.mxu0
      %v2254 = vadd.f32 0.0, %v2253
      %2255 = vmatmul.f32.gmra.mxu0 %v2219
      %v2256 = vpop.f32.mrf.mxu0
      %v2257 = vadd.f32 0.0, %v2256
      %2258 = vmatmul.f32.gmra.mxu0 %v2221
      %v2259 = vpop.f32.mrf.mxu0
      %v2260 = vadd.f32 0.0, %v2259
      %2261 = vmatmul.f32.gmra.mxu0 %v2223
      %v2262 = vpop.f32.mrf.mxu0
      %v2263 = vadd.f32 0.0, %v2262
      %2264 = vmatmul.f32.gmra.mxu0 %v2225
      %v2265 = vpop.f32.mrf.mxu0
      %v2266 = vadd.f32 0.0, %v2265
      %2267 = vmatmul.f32.gmra.mxu0 %v2227
      %v2268 = vpop.f32.mrf.mxu0
      %v2269 = vadd.f32 0.0, %v2268
      %2270 = vmatmul.f32.gmra.mxu0 %v2229
      %v2271 = vpop.f32.mrf.mxu0
      %v2272 = vadd.f32 0.0, %v2271
      %2273 = vmatmul.f32.gmra.mxu0 %v2231
      %v2274 = vpop.f32.mrf.mxu0
      %v2275 = vadd.f32 0.0, %v2274
      %2276 = vdwg.mxu0
      %v2277 = vsel %vm832, %v2151, 0
      %v2279 = vsel %vm832, %v2153, 0
      %v2281 = vsel %vm832, %v2155, 0
      %v2283 = vsel %vm832, %v2157, 0
      %v2285 = vsel %vm832, %v2159, 0
      %v2287 = vsel %vm832, %v2161, 0
      %v2289 = vsel %vm832, %v2163, 0
      %v2291 = vsel %vm832, %v2165, 0
      %v2294 = vsel %vm849, %v2171, 0
      %2296 = vmatpush.msra.mxu0 0.0
      %2297 = vmatpush.msra.mxu0 0.0
      %2298 = vmatpush.msra.mxu0 0.0
      %2299 = vmatpush.msra.mxu0 0.0
      %2300 = vmatpush.msra.mxu0 0.0
      %2301 = vmatpush.msra.mxu0 0.0
      %2302 = vmatpush.msra.mxu0 0.0
      %2303 = vmatpush.msra.mxu0 0.0
      %2304 = vmatpush.msra.mxu0 0.0
      %2305 = vmatpush.msra.mxu0 0.0
      %2306 = vmatpush.msra.mxu0 0.0
      %2307 = vmatpush.msra.mxu0 %v2294
      %2308 = vmatpush.msra.mxu0 %v2170
      %2309 = vmatpush.msra.mxu0 %v2169
      %2310 = vmatpush.msra.mxu0 %v2168
      %2311 = vmatpush.msra.mxu0 %v2167
      %2312 = vmatmul.f32.gmra.mxu0 %v2277
      %v2313 = vpop.f32.mrf.mxu0
      %v2314 = vadd.f32 %v2254, %v2313
      %2315 = vmatmul.f32.gmra.mxu0 %v2279
      %v2316 = vpop.f32.mrf.mxu0
      %v2317 = vadd.f32 %v2257, %v2316
      %2318 = vmatmul.f32.gmra.mxu0 %v2281
      %v2319 = vpop.f32.mrf.mxu0
      %v2320 = vadd.f32 %v2260, %v2319
      %2321 = vmatmul.f32.gmra.mxu0 %v2283
      %v2322 = vpop.f32.mrf.mxu0
      %v2323 = vadd.f32 %v2263, %v2322
      %2324 = vmatmul.f32.gmra.mxu0 %v2285
      %v2325 = vpop.f32.mrf.mxu0
      %v2326 = vadd.f32 %v2266, %v2325
      %2327 = vmatmul.f32.gmra.mxu0 %v2287
      %v2328 = vpop.f32.mrf.mxu0
      %v2329 = vadd.f32 %v2269, %v2328
      %2330 = vmatmul.f32.gmra.mxu0 %v2289
      %v2331 = vpop.f32.mrf.mxu0
      %v2332 = vadd.f32 %v2272, %v2331
      %2333 = vmatmul.f32.gmra.mxu0 %v2291
      %v2334 = vpop.f32.mrf.mxu0
      %v2335 = vadd.f32 %v2275, %v2334
      %2336 = vdwg.mxu0
      %v2337 = vrot.slane %v2151, 2
      %v2338 = vrot.slane %v2152, 2
      %v2339 = vsel %vm954, %v2337, %v2338
      %v2340 = vrot.slane %v2153, 2
      %v2341 = vrot.slane %v2154, 2
      %v2342 = vsel %vm954, %v2340, %v2341
      %v2343 = vrot.slane %v2155, 2
      %v2344 = vrot.slane %v2156, 2
      %v2345 = vsel %vm954, %v2343, %v2344
      %v2346 = vrot.slane %v2157, 2
      %v2347 = vrot.slane %v2158, 2
      %v2348 = vsel %vm954, %v2346, %v2347
      %v2349 = vrot.slane %v2159, 2
      %v2350 = vrot.slane %v2160, 2
      %v2351 = vsel %vm954, %v2349, %v2350
      %v2352 = vrot.slane %v2161, 2
      %v2353 = vrot.slane %v2162, 2
      %v2354 = vsel %vm954, %v2352, %v2353
      %v2355 = vrot.slane %v2163, 2
      %v2356 = vrot.slane %v2164, 2
      %v2357 = vsel %vm954, %v2355, %v2356
      %v2358 = vrot.slane %v2165, 2
      %v2359 = vrot.slane %v2166, 2
      %v2360 = vsel %vm954, %v2358, %v2359
      %v2361 = vld [vmem:[%s979] sm:$0xff]
      %v2362 = vld [vmem:[%s979 + $0x8] sm:$0xff]
      %v2363 = vld [vmem:[%s979 + $0x10] sm:$0xff]
      %v2364 = vld [vmem:[%s979 + $0x18] sm:$0xff]
      %v2365 = vld [vmem:[%s979 + $0x20] sm:$0xf]
      %v2366 = vsel %vm832, %v2339, 0
      %v2368 = vsel %vm832, %v2342, 0
      %v2370 = vsel %vm832, %v2345, 0
      %v2372 = vsel %vm832, %v2348, 0
      %v2374 = vsel %vm832, %v2351, 0
      %v2376 = vsel %vm832, %v2354, 0
      %v2378 = vsel %vm832, %v2357, 0
      %v2380 = vsel %vm832, %v2360, 0
      %v2383 = vsel %vm849, %v2365, 0
      %2385 = vmatpush.msra.mxu0 0.0
      %2386 = vmatpush.msra.mxu0 0.0
      %2387 = vmatpush.msra.mxu0 0.0
      %2388 = vmatpush.msra.mxu0 0.0
      %2389 = vmatpush.msra.mxu0 0.0
      %2390 = vmatpush.msra.mxu0 0.0
      %2391 = vmatpush.msra.mxu0 0.0
      %2392 = vmatpush.msra.mxu0 0.0
      %2393 = vmatpush.msra.mxu0 0.0
      %2394 = vmatpush.msra.mxu0 0.0
      %2395 = vmatpush.msra.mxu0 0.0
      %2396 = vmatpush.msra.mxu0 %v2383
      %2397 = vmatpush.msra.mxu0 %v2364
      %2398 = vmatpush.msra.mxu0 %v2363
      %2399 = vmatpush.msra.mxu0 %v2362
      %2400 = vmatpush.msra.mxu0 %v2361
      %2401 = vmatmul.f32.gmra.mxu0 %v2366
      %v2402 = vpop.f32.mrf.mxu0
      %v2403 = vadd.f32 0.0, %v2402
      %2404 = vmatmul.f32.gmra.mxu0 %v2368
      %v2405 = vpop.f32.mrf.mxu0
      %v2406 = vadd.f32 0.0, %v2405
      %2407 = vmatmul.f32.gmra.mxu0 %v2370
      %v2408 = vpop.f32.mrf.mxu0
      %v2409 = vadd.f32 0.0, %v2408
      %2410 = vmatmul.f32.gmra.mxu0 %v2372
      %v2411 = vpop.f32.mrf.mxu0
      %v2412 = vadd.f32 0.0, %v2411
      %2413 = vmatmul.f32.gmra.mxu0 %v2374
      %v2414 = vpop.f32.mrf.mxu0
      %v2415 = vadd.f32 0.0, %v2414
      %2416 = vmatmul.f32.gmra.mxu0 %v2376
      %v2417 = vpop.f32.mrf.mxu0
      %v2418 = vadd.f32 0.0, %v2417
      %2419 = vmatmul.f32.gmra.mxu0 %v2378
      %v2420 = vpop.f32.mrf.mxu0
      %v2421 = vadd.f32 0.0, %v2420
      %2422 = vmatmul.f32.gmra.mxu0 %v2380
      %v2423 = vpop.f32.mrf.mxu0
      %v2424 = vadd.f32 0.0, %v2423
      %2425 = vdwg.mxu0
      %v2426 = vadd.f32 %v2314, %v2403
      %v2427 = vadd.f32 %v2317, %v2406
      %v2428 = vadd.f32 %v2320, %v2409
      %v2429 = vadd.f32 %v2323, %v2412
      %v2430 = vadd.f32 %v2326, %v2415
      %v2431 = vadd.f32 %v2329, %v2418
      %v2432 = vadd.f32 %v2332, %v2421
      %v2433 = vadd.f32 %v2335, %v2424
      %v2434 = vmax.f32 %v2426, 0.0
      %v2435 = vmax.f32 %v2427, 0.0
      %v2436 = vmax.f32 %v2428, 0.0
      %v2437 = vmax.f32 %v2429, 0.0
      %v2438 = vmax.f32 %v2430, 0.0
      %v2439 = vmax.f32 %v2431, 0.0
      %v2440 = vmax.f32 %v2432, 0.0
      %v2441 = vmax.f32 %v2433, 0.0
      %s2442 = scalar_lea.vmem %s366, 128
      %2443 = vst.msk [vmem:[%s2442] sm:$0xff] %vm611, %v2434
      %2444 = vst.msk [vmem:[%s2442 + $0x8] sm:$0xff] %vm611, %v2435
      %2445 = vst.msk [vmem:[%s2442 + $0x10] sm:$0xff] %vm611, %v2436
      %2446 = vst.msk [vmem:[%s2442 + $0x18] sm:$0xff] %vm611, %v2437
      %2447 = vst.msk [vmem:[%s2442 + $0x20] sm:$0xff] %vm611, %v2438
      %2448 = vst.msk [vmem:[%s2442 + $0x28] sm:$0xff] %vm611, %v2439
      %2449 = vst.msk [vmem:[%s2442 + $0x30] sm:$0xff] %vm611, %v2440
      %2450 = vst.msk [vmem:[%s2442 + $0x38] sm:$0xff] %vm611, %v2441
      %v2451 = vld [vmem:[%s1109] sm:$0xff]
      %v2452 = vld [vmem:[%s1109 + $0x8] sm:$0x3]
      %v2453 = vld [vmem:[%s1109 + $0x10] sm:$0xff]
      %v2454 = vld [vmem:[%s1109 + $0x18] sm:$0x3]
      %v2455 = vld [vmem:[%s1109 + $0x20] sm:$0xff]
      %v2456 = vld [vmem:[%s1109 + $0x28] sm:$0x3]
      %v2457 = vld [vmem:[%s1109 + $0x30] sm:$0xff]
      %v2458 = vld [vmem:[%s1109 + $0x38] sm:$0x3]
      %v2459 = vld [vmem:[%s1109 + $0x40] sm:$0xff]
      %v2460 = vld [vmem:[%s1109 + $0x48] sm:$0x3]
      %v2461 = vld [vmem:[%s1109 + $0x50] sm:$0xff]
      %v2462 = vld [vmem:[%s1109 + $0x58] sm:$0x3]
      %v2463 = vld [vmem:[%s1109 + $0x60] sm:$0xff]
      %v2464 = vld [vmem:[%s1109 + $0x68] sm:$0x3]
      %v2465 = vld [vmem:[%s1109 + $0x70] sm:$0xff]
      %v2466 = vld [vmem:[%s1109 + $0x78] sm:$0x3]
      %v2467 = vld [vmem:[%s1109 + $0x80] sm:$0xff]
      %v2468 = vld [vmem:[%s1109 + $0x88] sm:$0x3]
      %v2469 = vld [vmem:[%s1109 + $0x90] sm:$0xff]
      %v2470 = vld [vmem:[%s1109 + $0x98] sm:$0x3]
      %v2471 = vld [vmem:[%s1800] sm:$0xff]
      %v2472 = vld [vmem:[%s1800 + $0x8] sm:$0x3]
      %v2473 = vld [vmem:[%s1800 + $0x10] sm:$0xff]
      %v2474 = vld [vmem:[%s1800 + $0x18] sm:$0x3]
      %v2475 = vld [vmem:[%s1800 + $0x20] sm:$0xff]
      %v2476 = vld [vmem:[%s1800 + $0x28] sm:$0x3]
      %v2477 = vld [vmem:[%s1800 + $0x30] sm:$0xff]
      %v2478 = vld [vmem:[%s1800 + $0x38] sm:$0x3]
      %v2479 = vld [vmem:[%s1800 + $0x40] sm:$0xff]
      %v2480 = vld [vmem:[%s1800 + $0x48] sm:$0x3]
      %v2481 = vld [vmem:[%s1800 + $0x50] sm:$0xff]
      %v2482 = vld [vmem:[%s1800 + $0x58] sm:$0x3]
      %v2483 = vld [vmem:[%s1800 + $0x60] sm:$0xff]
      %v2484 = vld [vmem:[%s1800 + $0x68] sm:$0x3]
      %v2485 = vld [vmem:[%s1800 + $0x70] sm:$0xff]
      %v2486 = vld [vmem:[%s1800 + $0x78] sm:$0x3]
      %v2487 = vld [vmem:[%s1800 + $0x80] sm:$0xff]
      %v2488 = vld [vmem:[%s1800 + $0x88] sm:$0x3]
      %v2489 = vld [vmem:[%s1800 + $0x90] sm:$0xff]
      %v2490 = vld [vmem:[%s1800 + $0x98] sm:$0x3]
      %s2491 = scalar_lea.vmem %s323, 800
      %v2492 = vld [vmem:[%s2491] sm:$0xff]
      %v2493 = vld [vmem:[%s2491 + $0x8] sm:$0x3]
      %v2494 = vld [vmem:[%s2491 + $0x10] sm:$0xff]
      %v2495 = vld [vmem:[%s2491 + $0x18] sm:$0x3]
      %v2496 = vld [vmem:[%s2491 + $0x20] sm:$0xff]
      %v2497 = vld [vmem:[%s2491 + $0x28] sm:$0x3]
      %v2498 = vld [vmem:[%s2491 + $0x30] sm:$0xff]
      %v2499 = vld [vmem:[%s2491 + $0x38] sm:$0x3]
      %v2500 = vld [vmem:[%s2491 + $0x40] sm:$0xff]
      %v2501 = vld [vmem:[%s2491 + $0x48] sm:$0x3]
      %v2502 = vld [vmem:[%s2491 + $0x50] sm:$0xff]
      %v2503 = vld [vmem:[%s2491 + $0x58] sm:$0x3]
      %v2504 = vld [vmem:[%s2491 + $0x60] sm:$0xff]
      %v2505 = vld [vmem:[%s2491 + $0x68] sm:$0x3]
      %v2506 = vld [vmem:[%s2491 + $0x70] sm:$0xff]
      %v2507 = vld [vmem:[%s2491 + $0x78] sm:$0x3]
      %v2508 = vld [vmem:[%s2491 + $0x80] sm:$0xff]
      %v2509 = vld [vmem:[%s2491 + $0x88] sm:$0x3]
      %v2510 = vld [vmem:[%s2491 + $0x90] sm:$0xff]
      %v2511 = vld [vmem:[%s2491 + $0x98] sm:$0x3]
      %2532 = vrot.lane.b32.xlu0 %v2471, 4
      %v2533 = vpop.permute.xlu0 %2532
      %2534 = vrot.lane.b32.xlu0 %v2472, 4
      %v2535 = vpop.permute.xlu0 %2534
      %2536 = vrot.lane.b32.xlu0 %v2473, 4
      %v2537 = vpop.permute.xlu0 %2536
      %2538 = vrot.lane.b32.xlu0 %v2474, 4
      %v2539 = vpop.permute.xlu0 %2538
      %2540 = vrot.lane.b32.xlu0 %v2475, 4
      %v2541 = vpop.permute.xlu0 %2540
      %2542 = vrot.lane.b32.xlu0 %v2476, 4
      %v2543 = vpop.permute.xlu0 %2542
      %2544 = vrot.lane.b32.xlu0 %v2477, 4
      %v2545 = vpop.permute.xlu0 %2544
      %2546 = vrot.lane.b32.xlu0 %v2478, 4
      %v2547 = vpop.permute.xlu0 %2546
      %2548 = vrot.lane.b32.xlu0 %v2479, 4
      %v2549 = vpop.permute.xlu0 %2548
      %2550 = vrot.lane.b32.xlu0 %v2480, 4
      %v2551 = vpop.permute.xlu0 %2550
      %2552 = vrot.lane.b32.xlu0 %v2481, 4
      %v2553 = vpop.permute.xlu0 %2552
      %2554 = vrot.lane.b32.xlu0 %v2482, 4
      %v2555 = vpop.permute.xlu0 %2554
      %2556 = vrot.lane.b32.xlu0 %v2483, 4
      %v2557 = vpop.permute.xlu0 %2556
      %2558 = vrot.lane.b32.xlu0 %v2484, 4
      %v2559 = vpop.permute.xlu0 %2558
      %2560 = vrot.lane.b32.xlu0 %v2485, 4
      %v2561 = vpop.permute.xlu0 %2560
      %2562 = vrot.lane.b32.xlu0 %v2486, 4
      %v2563 = vpop.permute.xlu0 %2562
      %2564 = vrot.lane.b32.xlu0 %v2487, 4
      %v2565 = vpop.permute.xlu0 %2564
      %2566 = vrot.lane.b32.xlu0 %v2488, 4
      %v2567 = vpop.permute.xlu0 %2566
      %2568 = vrot.lane.b32.xlu0 %v2489, 4
      %v2569 = vpop.permute.xlu0 %2568
      %2570 = vrot.lane.b32.xlu0 %v2490, 4
      %v2571 = vpop.permute.xlu0 %2570
      %2612 = vrot.lane.b32.xlu0 %v2492, 8
      %v2613 = vpop.permute.xlu0 %2612
      %2614 = vrot.lane.b32.xlu0 %v2493, 8
      %v2615 = vpop.permute.xlu0 %2614
      %2616 = vrot.lane.b32.xlu0 %v2494, 8
      %v2617 = vpop.permute.xlu0 %2616
      %2618 = vrot.lane.b32.xlu0 %v2495, 8
      %v2619 = vpop.permute.xlu0 %2618
      %2620 = vrot.lane.b32.xlu0 %v2496, 8
      %v2621 = vpop.permute.xlu0 %2620
      %2622 = vrot.lane.b32.xlu0 %v2497, 8
      %v2623 = vpop.permute.xlu0 %2622
      %2624 = vrot.lane.b32.xlu0 %v2498, 8
      %v2625 = vpop.permute.xlu0 %2624
      %2626 = vrot.lane.b32.xlu0 %v2499, 8
      %v2627 = vpop.permute.xlu0 %2626
      %2628 = vrot.lane.b32.xlu0 %v2500, 8
      %v2629 = vpop.permute.xlu0 %2628
      %2630 = vrot.lane.b32.xlu0 %v2501, 8
      %v2631 = vpop.permute.xlu0 %2630
      %2632 = vrot.lane.b32.xlu0 %v2502, 8
      %v2633 = vpop.permute.xlu0 %2632
      %2634 = vrot.lane.b32.xlu0 %v2503, 8
      %v2635 = vpop.permute.xlu0 %2634
      %2636 = vrot.lane.b32.xlu0 %v2504, 8
      %v2637 = vpop.permute.xlu0 %2636
      %2638 = vrot.lane.b32.xlu0 %v2505, 8
      %v2639 = vpop.permute.xlu0 %2638
      %2640 = vrot.lane.b32.xlu0 %v2506, 8
      %v2641 = vpop.permute.xlu0 %2640
      %2642 = vrot.lane.b32.xlu0 %v2507, 8
      %v2643 = vpop.permute.xlu0 %2642
      %2644 = vrot.lane.b32.xlu0 %v2508, 8
      %v2645 = vpop.permute.xlu0 %2644
      %2646 = vrot.lane.b32.xlu0 %v2509, 8
      %v2647 = vpop.permute.xlu0 %2646
      %2648 = vrot.lane.b32.xlu0 %v2510, 8
      %v2649 = vpop.permute.xlu0 %2648
      %2650 = vrot.lane.b32.xlu0 %v2511, 8
      %v2651 = vpop.permute.xlu0 %2650
      %v2672 = vsel %vm590, %v2451, %v2533
      %v2673 = vsel %vm590, %v2452, %v2535
      %v2674 = vsel %vm590, %v2453, %v2537
      %v2675 = vsel %vm590, %v2454, %v2539
      %v2676 = vsel %vm590, %v2455, %v2541
      %v2677 = vsel %vm590, %v2456, %v2543
      %v2678 = vsel %vm590, %v2457, %v2545
      %v2679 = vsel %vm590, %v2458, %v2547
      %v2680 = vsel %vm590, %v2459, %v2549
      %v2681 = vsel %vm590, %v2460, %v2551
      %v2682 = vsel %vm590, %v2461, %v2553
      %v2683 = vsel %vm590, %v2462, %v2555
      %v2684 = vsel %vm590, %v2463, %v2557
      %v2685 = vsel %vm590, %v2464, %v2559
      %v2686 = vsel %vm590, %v2465, %v2561
      %v2687 = vsel %vm590, %v2466, %v2563
      %v2688 = vsel %vm590, %v2467, %v2565
      %v2689 = vsel %vm590, %v2468, %v2567
      %v2690 = vsel %vm590, %v2469, %v2569
      %v2691 = vsel %vm590, %v2470, %v2571
      %v2692 = vsel %vm611, %v2672, %v2613
      %v2693 = vsel %vm611, %v2673, %v2615
      %v2694 = vsel %vm611, %v2674, %v2617
      %v2695 = vsel %vm611, %v2675, %v2619
      %v2696 = vsel %vm611, %v2676, %v2621
      %v2697 = vsel %vm611, %v2677, %v2623
      %v2698 = vsel %vm611, %v2678, %v2625
      %v2699 = vsel %vm611, %v2679, %v2627
      %v2700 = vsel %vm611, %v2680, %v2629
      %v2701 = vsel %vm611, %v2681, %v2631
      %v2702 = vsel %vm611, %v2682, %v2633
      %v2703 = vsel %vm611, %v2683, %v2635
      %v2704 = vsel %vm611, %v2684, %v2637
      %v2705 = vsel %vm611, %v2685, %v2639
      %v2706 = vsel %vm611, %v2686, %v2641
      %v2707 = vsel %vm611, %v2687, %v2643
      %v2708 = vsel %vm611, %v2688, %v2645
      %v2709 = vsel %vm611, %v2689, %v2647
      %v2710 = vsel %vm611, %v2690, %v2649
      %v2711 = vsel %vm611, %v2691, %v2651
      %2728 = vrot.lane.b32.xlu0 %v2694, 12
      %v2729 = vpop.permute.xlu0 %2728
      %2730 = vrot.lane.b32.xlu0 %v2695, 12
      %v2731 = vpop.permute.xlu0 %2730
      %2732 = vrot.lane.b32.xlu0 %v2696, 12
      %v2733 = vpop.permute.xlu0 %2732
      %2734 = vrot.lane.b32.xlu0 %v2697, 12
      %v2735 = vpop.permute.xlu0 %2734
      %2736 = vrot.lane.b32.xlu0 %v2698, 12
      %v2737 = vpop.permute.xlu0 %2736
      %2738 = vrot.lane.b32.xlu0 %v2699, 12
      %v2739 = vpop.permute.xlu0 %2738
      %2740 = vrot.lane.b32.xlu0 %v2700, 12
      %v2741 = vpop.permute.xlu0 %2740
      %2742 = vrot.lane.b32.xlu0 %v2701, 12
      %v2743 = vpop.permute.xlu0 %2742
      %2744 = vrot.lane.b32.xlu0 %v2702, 12
      %v2745 = vpop.permute.xlu0 %2744
      %2746 = vrot.lane.b32.xlu0 %v2703, 12
      %v2747 = vpop.permute.xlu0 %2746
      %2748 = vrot.lane.b32.xlu0 %v2704, 12
      %v2749 = vpop.permute.xlu0 %2748
      %2750 = vrot.lane.b32.xlu0 %v2705, 12
      %v2751 = vpop.permute.xlu0 %2750
      %2752 = vrot.lane.b32.xlu0 %v2706, 12
      %v2753 = vpop.permute.xlu0 %2752
      %2754 = vrot.lane.b32.xlu0 %v2707, 12
      %v2755 = vpop.permute.xlu0 %2754
      %2756 = vrot.lane.b32.xlu0 %v2708, 12
      %v2757 = vpop.permute.xlu0 %2756
      %2758 = vrot.lane.b32.xlu0 %v2709, 12
      %v2759 = vpop.permute.xlu0 %2758
      %2778 = vrot.lane.b32.xlu0 %v2696, 24
      %v2779 = vpop.permute.xlu0 %2778
      %2780 = vrot.lane.b32.xlu0 %v2697, 24
      %v2781 = vpop.permute.xlu0 %2780
      %2782 = vrot.lane.b32.xlu0 %v2698, 24
      %v2783 = vpop.permute.xlu0 %2782
      %2784 = vrot.lane.b32.xlu0 %v2699, 24
      %v2785 = vpop.permute.xlu0 %2784
      %2786 = vrot.lane.b32.xlu0 %v2700, 24
      %v2787 = vpop.permute.xlu0 %2786
      %2788 = vrot.lane.b32.xlu0 %v2701, 24
      %v2789 = vpop.permute.xlu0 %2788
      %2790 = vrot.lane.b32.xlu0 %v2702, 24
      %v2791 = vpop.permute.xlu0 %2790
      %2792 = vrot.lane.b32.xlu0 %v2703, 24
      %v2793 = vpop.permute.xlu0 %2792
      %2794 = vrot.lane.b32.xlu0 %v2704, 24
      %v2795 = vpop.permute.xlu0 %2794
      %2796 = vrot.lane.b32.xlu0 %v2705, 24
      %v2797 = vpop.permute.xlu0 %2796
      %2798 = vrot.lane.b32.xlu0 %v2706, 24
      %v2799 = vpop.permute.xlu0 %2798
      %2800 = vrot.lane.b32.xlu0 %v2707, 24
      %v2801 = vpop.permute.xlu0 %2800
      %2802 = vrot.lane.b32.xlu0 %v2708, 24
      %v2803 = vpop.permute.xlu0 %2802
      %2804 = vrot.lane.b32.xlu0 %v2709, 24
      %v2805 = vpop.permute.xlu0 %2804
      %2806 = vrot.lane.b32.xlu0 %v2710, 24
      %v2807 = vpop.permute.xlu0 %2806
      %2808 = vrot.lane.b32.xlu0 %v2711, 24
      %v2809 = vpop.permute.xlu0 %2808
      %v2826 = vsel %vm746, %v2692, %v2729
      %v2827 = vsel %vm746, %v2693, %v2731
      %v2828 = vsel %vm746, %v2694, %v2733
      %v2829 = vsel %vm746, %v2695, %v2735
      %v2830 = vsel %vm746, %v2696, %v2737
      %v2831 = vsel %vm746, %v2697, %v2739
      %v2832 = vsel %vm746, %v2698, %v2741
      %v2833 = vsel %vm746, %v2699, %v2743
      %v2834 = vsel %vm746, %v2700, %v2745
      %v2835 = vsel %vm746, %v2701, %v2747
      %v2836 = vsel %vm746, %v2702, %v2749
      %v2837 = vsel %vm746, %v2703, %v2751
      %v2838 = vsel %vm746, %v2704, %v2753
      %v2839 = vsel %vm746, %v2705, %v2755
      %v2840 = vsel %vm746, %v2706, %v2757
      %v2841 = vsel %vm746, %v2707, %v2759
      %v2842 = vsel %vm763, %v2826, %v2779
      %v2843 = vsel %vm763, %v2827, %v2781
      %v2844 = vsel %vm763, %v2828, %v2783
      %v2845 = vsel %vm763, %v2829, %v2785
      %v2846 = vsel %vm763, %v2830, %v2787
      %v2847 = vsel %vm763, %v2831, %v2789
      %v2848 = vsel %vm763, %v2832, %v2791
      %v2849 = vsel %vm763, %v2833, %v2793
      %v2850 = vsel %vm763, %v2834, %v2795
      %v2851 = vsel %vm763, %v2835, %v2797
      %v2852 = vsel %vm763, %v2836, %v2799
      %v2853 = vsel %vm763, %v2837, %v2801
      %v2854 = vsel %vm763, %v2838, %v2803
      %v2855 = vsel %vm763, %v2839, %v2805
      %v2856 = vsel %vm763, %v2840, %v2807
      %v2857 = vsel %vm763, %v2841, %v2809
      %v2858 = vld [vmem:[%s3] sm:$0xff]
      %v2859 = vld [vmem:[%s3 + $0x8] sm:$0xff]
      %v2860 = vld [vmem:[%s3 + $0x10] sm:$0xff]
      %v2861 = vld [vmem:[%s3 + $0x18] sm:$0xff]
      %v2862 = vld [vmem:[%s3 + $0x20] sm:$0xf]
      %v2879 = vrot.slane %v2842, 1
      %v2880 = vrot.slane %v2843, 1
      %v2881 = vsel %vm801, %v2879, %v2880
      %v2882 = vrot.slane %v2844, 1
      %v2883 = vrot.slane %v2845, 1
      %v2884 = vsel %vm801, %v2882, %v2883
      %v2885 = vrot.slane %v2846, 1
      %v2886 = vrot.slane %v2847, 1
      %v2887 = vsel %vm801, %v2885, %v2886
      %v2888 = vrot.slane %v2848, 1
      %v2889 = vrot.slane %v2849, 1
      %v2890 = vsel %vm801, %v2888, %v2889
      %v2891 = vrot.slane %v2850, 1
      %v2892 = vrot.slane %v2851, 1
      %v2893 = vsel %vm801, %v2891, %v2892
      %v2894 = vrot.slane %v2852, 1
      %v2895 = vrot.slane %v2853, 1
      %v2896 = vsel %vm801, %v2894, %v2895
      %v2897 = vrot.slane %v2854, 1
      %v2898 = vrot.slane %v2855, 1
      %v2899 = vsel %vm801, %v2897, %v2898
      %v2900 = vrot.slane %v2856, 1
      %v2901 = vrot.slane %v2857, 1
      %v2902 = vsel %vm801, %v2900, %v2901
      %v2903 = vld [vmem:[%s826] sm:$0xff]
      %v2904 = vld [vmem:[%s826 + $0x8] sm:$0xff]
      %v2905 = vld [vmem:[%s826 + $0x10] sm:$0xff]
      %v2906 = vld [vmem:[%s826 + $0x18] sm:$0xff]
      %v2907 = vld [vmem:[%s826 + $0x20] sm:$0xf]
      %v2908 = vsel %vm832, %v2881, 0
      %v2910 = vsel %vm832, %v2884, 0
      %v2912 = vsel %vm832, %v2887, 0
      %v2914 = vsel %vm832, %v2890, 0
      %v2916 = vsel %vm832, %v2893, 0
      %v2918 = vsel %vm832, %v2896, 0
      %v2920 = vsel %vm832, %v2899, 0
      %v2922 = vsel %vm832, %v2902, 0
      %v2925 = vsel %vm849, %v2907, 0
      %2927 = vmatpush.msra.mxu0 0.0
      %2928 = vmatpush.msra.mxu0 0.0
      %2929 = vmatpush.msra.mxu0 0.0
      %2930 = vmatpush.msra.mxu0 0.0
      %2931 = vmatpush.msra.mxu0 0.0
      %2932 = vmatpush.msra.mxu0 0.0
      %2933 = vmatpush.msra.mxu0 0.0
      %2934 = vmatpush.msra.mxu0 0.0
      %2935 = vmatpush.msra.mxu0 0.0
      %2936 = vmatpush.msra.mxu0 0.0
      %2937 = vmatpush.msra.mxu0 0.0
      %2938 = vmatpush.msra.mxu0 %v2925
      %2939 = vmatpush.msra.mxu0 %v2906
      %2940 = vmatpush.msra.mxu0 %v2905
      %2941 = vmatpush.msra.mxu0 %v2904
      %2942 = vmatpush.msra.mxu0 %v2903
      %2943 = vmatmul.f32.gmra.mxu0 %v2908
      %v2944 = vpop.f32.mrf.mxu0
      %v2945 = vadd.f32 0.0, %v2944
      %2946 = vmatmul.f32.gmra.mxu0 %v2910
      %v2947 = vpop.f32.mrf.mxu0
      %v2948 = vadd.f32 0.0, %v2947
      %2949 = vmatmul.f32.gmra.mxu0 %v2912
      %v2950 = vpop.f32.mrf.mxu0
      %v2951 = vadd.f32 0.0, %v2950
      %2952 = vmatmul.f32.gmra.mxu0 %v2914
      %v2953 = vpop.f32.mrf.mxu0
      %v2954 = vadd.f32 0.0, %v2953
      %2955 = vmatmul.f32.gmra.mxu0 %v2916
      %v2956 = vpop.f32.mrf.mxu0
      %v2957 = vadd.f32 0.0, %v2956
      %2958 = vmatmul.f32.gmra.mxu0 %v2918
      %v2959 = vpop.f32.mrf.mxu0
      %v2960 = vadd.f32 0.0, %v2959
      %2961 = vmatmul.f32.gmra.mxu0 %v2920
      %v2962 = vpop.f32.mrf.mxu0
      %v2963 = vadd.f32 0.0, %v2962
      %2964 = vmatmul.f32.gmra.mxu0 %v2922
      %v2965 = vpop.f32.mrf.mxu0
      %v2966 = vadd.f32 0.0, %v2965
      %2967 = vdwg.mxu0
      %v2968 = vsel %vm832, %v2842, 0
      %v2970 = vsel %vm832, %v2844, 0
      %v2972 = vsel %vm832, %v2846, 0
      %v2974 = vsel %vm832, %v2848, 0
      %v2976 = vsel %vm832, %v2850, 0
      %v2978 = vsel %vm832, %v2852, 0
      %v2980 = vsel %vm832, %v2854, 0
      %v2982 = vsel %vm832, %v2856, 0
      %v2985 = vsel %vm849, %v2862, 0
      %2987 = vmatpush.msra.mxu0 0.0
      %2988 = vmatpush.msra.mxu0 0.0
      %2989 = vmatpush.msra.mxu0 0.0
      %2990 = vmatpush.msra.mxu0 0.0
      %2991 = vmatpush.msra.mxu0 0.0
      %2992 = vmatpush.msra.mxu0 0.0
      %2993 = vmatpush.msra.mxu0 0.0
      %2994 = vmatpush.msra.mxu0 0.0
      %2995 = vmatpush.msra.mxu0 0.0
      %2996 = vmatpush.msra.mxu0 0.0
      %2997 = vmatpush.msra.mxu0 0.0
      %2998 = vmatpush.msra.mxu0 %v2985
      %2999 = vmatpush.msra.mxu0 %v2861
      %3000 = vmatpush.msra.mxu0 %v2860
      %3001 = vmatpush.msra.mxu0 %v2859
      %3002 = vmatpush.msra.mxu0 %v2858
      %3003 = vmatmul.f32.gmra.mxu0 %v2968
      %v3004 = vpop.f32.mrf.mxu0
      %v3005 = vadd.f32 %v2945, %v3004
      %3006 = vmatmul.f32.gmra.mxu0 %v2970
      %v3007 = vpop.f32.mrf.mxu0
      %v3008 = vadd.f32 %v2948, %v3007
      %3009 = vmatmul.f32.gmra.mxu0 %v2972
      %v3010 = vpop.f32.mrf.mxu0
      %v3011 = vadd.f32 %v2951, %v3010
      %3012 = vmatmul.f32.gmra.mxu0 %v2974
      %v3013 = vpop.f32.mrf.mxu0
      %v3014 = vadd.f32 %v2954, %v3013
      %3015 = vmatmul.f32.gmra.mxu0 %v2976
      %v3016 = vpop.f32.mrf.mxu0
      %v3017 = vadd.f32 %v2957, %v3016
      %3018 = vmatmul.f32.gmra.mxu0 %v2978
      %v3019 = vpop.f32.mrf.mxu0
      %v3020 = vadd.f32 %v2960, %v3019
      %3021 = vmatmul.f32.gmra.mxu0 %v2980
      %v3022 = vpop.f32.mrf.mxu0
      %v3023 = vadd.f32 %v2963, %v3022
      %3024 = vmatmul.f32.gmra.mxu0 %v2982
      %v3025 = vpop.f32.mrf.mxu0
      %v3026 = vadd.f32 %v2966, %v3025
      %3027 = vdwg.mxu0
      %v3028 = vrot.slane %v2842, 2
      %v3029 = vrot.slane %v2843, 2
      %v3030 = vsel %vm954, %v3028, %v3029
      %v3031 = vrot.slane %v2844, 2
      %v3032 = vrot.slane %v2845, 2
      %v3033 = vsel %vm954, %v3031, %v3032
      %v3034 = vrot.slane %v2846, 2
      %v3035 = vrot.slane %v2847, 2
      %v3036 = vsel %vm954, %v3034, %v3035
      %v3037 = vrot.slane %v2848, 2
      %v3038 = vrot.slane %v2849, 2
      %v3039 = vsel %vm954, %v3037, %v3038
      %v3040 = vrot.slane %v2850, 2
      %v3041 = vrot.slane %v2851, 2
      %v3042 = vsel %vm954, %v3040, %v3041
      %v3043 = vrot.slane %v2852, 2
      %v3044 = vrot.slane %v2853, 2
      %v3045 = vsel %vm954, %v3043, %v3044
      %v3046 = vrot.slane %v2854, 2
      %v3047 = vrot.slane %v2855, 2
      %v3048 = vsel %vm954, %v3046, %v3047
      %v3049 = vrot.slane %v2856, 2
      %v3050 = vrot.slane %v2857, 2
      %v3051 = vsel %vm954, %v3049, %v3050
      %v3052 = vld [vmem:[%s979] sm:$0xff]
      %v3053 = vld [vmem:[%s979 + $0x8] sm:$0xff]
      %v3054 = vld [vmem:[%s979 + $0x10] sm:$0xff]
      %v3055 = vld [vmem:[%s979 + $0x18] sm:$0xff]
      %v3056 = vld [vmem:[%s979 + $0x20] sm:$0xf]
      %v3057 = vsel %vm832, %v3030, 0
      %v3059 = vsel %vm832, %v3033, 0
      %v3061 = vsel %vm832, %v3036, 0
      %v3063 = vsel %vm832, %v3039, 0
      %v3065 = vsel %vm832, %v3042, 0
      %v3067 = vsel %vm832, %v3045, 0
      %v3069 = vsel %vm832, %v3048, 0
      %v3071 = vsel %vm832, %v3051, 0
      %v3074 = vsel %vm849, %v3056, 0
      %3076 = vmatpush.msra.mxu0 0.0
      %3077 = vmatpush.msra.mxu0 0.0
      %3078 = vmatpush.msra.mxu0 0.0
      %3079 = vmatpush.msra.mxu0 0.0
      %3080 = vmatpush.msra.mxu0 0.0
      %3081 = vmatpush.msra.mxu0 0.0
      %3082 = vmatpush.msra.mxu0 0.0
      %3083 = vmatpush.msra.mxu0 0.0
      %3084 = vmatpush.msra.mxu0 0.0
      %3085 = vmatpush.msra.mxu0 0.0
      %3086 = vmatpush.msra.mxu0 0.0
      %3087 = vmatpush.msra.mxu0 %v3074
      %3088 = vmatpush.msra.mxu0 %v3055
      %3089 = vmatpush.msra.mxu0 %v3054
      %3090 = vmatpush.msra.mxu0 %v3053
      %3091 = vmatpush.msra.mxu0 %v3052
      %3092 = vmatmul.f32.gmra.mxu0 %v3057
      %v3093 = vpop.f32.mrf.mxu0
      %v3094 = vadd.f32 0.0, %v3093
      %3095 = vmatmul.f32.gmra.mxu0 %v3059
      %v3096 = vpop.f32.mrf.mxu0
      %v3097 = vadd.f32 0.0, %v3096
      %3098 = vmatmul.f32.gmra.mxu0 %v3061
      %v3099 = vpop.f32.mrf.mxu0
      %v3100 = vadd.f32 0.0, %v3099
      %3101 = vmatmul.f32.gmra.mxu0 %v3063
      %v3102 = vpop.f32.mrf.mxu0
      %v3103 = vadd.f32 0.0, %v3102
      %3104 = vmatmul.f32.gmra.mxu0 %v3065
      %v3105 = vpop.f32.mrf.mxu0
      %v3106 = vadd.f32 0.0, %v3105
      %3107 = vmatmul.f32.gmra.mxu0 %v3067
      %v3108 = vpop.f32.mrf.mxu0
      %v3109 = vadd.f32 0.0, %v3108
      %3110 = vmatmul.f32.gmra.mxu0 %v3069
      %v3111 = vpop.f32.mrf.mxu0
      %v3112 = vadd.f32 0.0, %v3111
      %3113 = vmatmul.f32.gmra.mxu0 %v3071
      %v3114 = vpop.f32.mrf.mxu0
      %v3115 = vadd.f32 0.0, %v3114
      %3116 = vdwg.mxu0
      %v3117 = vadd.f32 %v3005, %v3094
      %v3118 = vadd.f32 %v3008, %v3097
      %v3119 = vadd.f32 %v3011, %v3100
      %v3120 = vadd.f32 %v3014, %v3103
      %v3121 = vadd.f32 %v3017, %v3106
      %v3122 = vadd.f32 %v3020, %v3109
      %v3123 = vadd.f32 %v3023, %v3112
      %v3124 = vadd.f32 %v3026, %v3115
      %v3125 = vmax.f32 %v3117, 0.0
      %v3126 = vmax.f32 %v3118, 0.0
      %v3127 = vmax.f32 %v3119, 0.0
      %v3128 = vmax.f32 %v3120, 0.0
      %v3129 = vmax.f32 %v3121, 0.0
      %v3130 = vmax.f32 %v3122, 0.0
      %v3131 = vmax.f32 %v3123, 0.0
      %v3132 = vmax.f32 %v3124, 0.0
      %s3133 = scalar_lea.vmem %s366, 192
      %3134 = vst.msk [vmem:[%s3133] sm:$0xff] %vm611, %v3125
      %3135 = vst.msk [vmem:[%s3133 + $0x8] sm:$0xff] %vm611, %v3126
      %3136 = vst.msk [vmem:[%s3133 + $0x10] sm:$0xff] %vm611, %v3127
      %3137 = vst.msk [vmem:[%s3133 + $0x18] sm:$0xff] %vm611, %v3128
      %3138 = vst.msk [vmem:[%s3133 + $0x20] sm:$0xff] %vm611, %v3129
      %3139 = vst.msk [vmem:[%s3133 + $0x28] sm:$0xff] %vm611, %v3130
      %3140 = vst.msk [vmem:[%s3133 + $0x30] sm:$0xff] %vm611, %v3131
      %3141 = vst.msk [vmem:[%s3133 + $0x38] sm:$0xff] %vm611, %v3132
      %v3142 = vld [vmem:[%s1800] sm:$0xff]
      %v3143 = vld [vmem:[%s1800 + $0x8] sm:$0x3]
      %v3144 = vld [vmem:[%s1800 + $0x10] sm:$0xff]
      %v3145 = vld [vmem:[%s1800 + $0x18] sm:$0x3]
      %v3146 = vld [vmem:[%s1800 + $0x20] sm:$0xff]
      %v3147 = vld [vmem:[%s1800 + $0x28] sm:$0x3]
      %v3148 = vld [vmem:[%s1800 + $0x30] sm:$0xff]
      %v3149 = vld [vmem:[%s1800 + $0x38] sm:$0x3]
      %v3150 = vld [vmem:[%s1800 + $0x40] sm:$0xff]
      %v3151 = vld [vmem:[%s1800 + $0x48] sm:$0x3]
      %v3152 = vld [vmem:[%s1800 + $0x50] sm:$0xff]
      %v3153 = vld [vmem:[%s1800 + $0x58] sm:$0x3]
      %v3154 = vld [vmem:[%s1800 + $0x60] sm:$0xff]
      %v3155 = vld [vmem:[%s1800 + $0x68] sm:$0x3]
      %v3156 = vld [vmem:[%s1800 + $0x70] sm:$0xff]
      %v3157 = vld [vmem:[%s1800 + $0x78] sm:$0x3]
      %v3158 = vld [vmem:[%s1800 + $0x80] sm:$0xff]
      %v3159 = vld [vmem:[%s1800 + $0x88] sm:$0x3]
      %v3160 = vld [vmem:[%s1800 + $0x90] sm:$0xff]
      %v3161 = vld [vmem:[%s1800 + $0x98] sm:$0x3]
      %v3162 = vld [vmem:[%s2491] sm:$0xff]
      %v3163 = vld [vmem:[%s2491 + $0x8] sm:$0x3]
      %v3164 = vld [vmem:[%s2491 + $0x10] sm:$0xff]
      %v3165 = vld [vmem:[%s2491 + $0x18] sm:$0x3]
      %v3166 = vld [vmem:[%s2491 + $0x20] sm:$0xff]
      %v3167 = vld [vmem:[%s2491 + $0x28] sm:$0x3]
      %v3168 = vld [vmem:[%s2491 + $0x30] sm:$0xff]
      %v3169 = vld [vmem:[%s2491 + $0x38] sm:$0x3]
      %v3170 = vld [vmem:[%s2491 + $0x40] sm:$0xff]
      %v3171 = vld [vmem:[%s2491 + $0x48] sm:$0x3]
      %v3172 = vld [vmem:[%s2491 + $0x50] sm:$0xff]
      %v3173 = vld [vmem:[%s2491 + $0x58] sm:$0x3]
      %v3174 = vld [vmem:[%s2491 + $0x60] sm:$0xff]
      %v3175 = vld [vmem:[%s2491 + $0x68] sm:$0x3]
      %v3176 = vld [vmem:[%s2491 + $0x70] sm:$0xff]
      %v3177 = vld [vmem:[%s2491 + $0x78] sm:$0x3]
      %v3178 = vld [vmem:[%s2491 + $0x80] sm:$0xff]
      %v3179 = vld [vmem:[%s2491 + $0x88] sm:$0x3]
      %v3180 = vld [vmem:[%s2491 + $0x90] sm:$0xff]
      %v3181 = vld [vmem:[%s2491 + $0x98] sm:$0x3]
      %s3182 = scalar_lea.vmem %s323, 960
      %v3183 = vld [vmem:[%s3182] sm:$0xff]
      %v3184 = vld [vmem:[%s3182 + $0x8] sm:$0x3]
      %v3185 = vld [vmem:[%s3182 + $0x10] sm:$0xff]
      %v3186 = vld [vmem:[%s3182 + $0x18] sm:$0x3]
      %v3187 = vld [vmem:[%s3182 + $0x20] sm:$0xff]
      %v3188 = vld [vmem:[%s3182 + $0x28] sm:$0x3]
      %v3189 = vld [vmem:[%s3182 + $0x30] sm:$0xff]
      %v3190 = vld [vmem:[%s3182 + $0x38] sm:$0x3]
      %v3191 = vld [vmem:[%s3182 + $0x40] sm:$0xff]
      %v3192 = vld [vmem:[%s3182 + $0x48] sm:$0x3]
      %v3193 = vld [vmem:[%s3182 + $0x50] sm:$0xff]
      %v3194 = vld [vmem:[%s3182 + $0x58] sm:$0x3]
      %v3195 = vld [vmem:[%s3182 + $0x60] sm:$0xff]
      %v3196 = vld [vmem:[%s3182 + $0x68] sm:$0x3]
      %v3197 = vld [vmem:[%s3182 + $0x70] sm:$0xff]
      %v3198 = vld [vmem:[%s3182 + $0x78] sm:$0x3]
      %v3199 = vld [vmem:[%s3182 + $0x80] sm:$0xff]
      %v3200 = vld [vmem:[%s3182 + $0x88] sm:$0x3]
      %v3201 = vld [vmem:[%s3182 + $0x90] sm:$0xff]
      %v3202 = vld [vmem:[%s3182 + $0x98] sm:$0x3]
      %3223 = vrot.lane.b32.xlu0 %v3162, 4
      %v3224 = vpop.permute.xlu0 %3223
      %3225 = vrot.lane.b32.xlu0 %v3163, 4
      %v3226 = vpop.permute.xlu0 %3225
      %3227 = vrot.lane.b32.xlu0 %v3164, 4
      %v3228 = vpop.permute.xlu0 %3227
      %3229 = vrot.lane.b32.xlu0 %v3165, 4
      %v3230 = vpop.permute.xlu0 %3229
      %3231 = vrot.lane.b32.xlu0 %v3166, 4
      %v3232 = vpop.permute.xlu0 %3231
      %3233 = vrot.lane.b32.xlu0 %v3167, 4
      %v3234 = vpop.permute.xlu0 %3233
      %3235 = vrot.lane.b32.xlu0 %v3168, 4
      %v3236 = vpop.permute.xlu0 %3235
      %3237 = vrot.lane.b32.xlu0 %v3169, 4
      %v3238 = vpop.permute.xlu0 %3237
      %3239 = vrot.lane.b32.xlu0 %v3170, 4
      %v3240 = vpop.permute.xlu0 %3239
      %3241 = vrot.lane.b32.xlu0 %v3171, 4
      %v3242 = vpop.permute.xlu0 %3241
      %3243 = vrot.lane.b32.xlu0 %v3172, 4
      %v3244 = vpop.permute.xlu0 %3243
      %3245 = vrot.lane.b32.xlu0 %v3173, 4
      %v3246 = vpop.permute.xlu0 %3245
      %3247 = vrot.lane.b32.xlu0 %v3174, 4
      %v3248 = vpop.permute.xlu0 %3247
      %3249 = vrot.lane.b32.xlu0 %v3175, 4
      %v3250 = vpop.permute.xlu0 %3249
      %3251 = vrot.lane.b32.xlu0 %v3176, 4
      %v3252 = vpop.permute.xlu0 %3251
      %3253 = vrot.lane.b32.xlu0 %v3177, 4
      %v3254 = vpop.permute.xlu0 %3253
      %3255 = vrot.lane.b32.xlu0 %v3178, 4
      %v3256 = vpop.permute.xlu0 %3255
      %3257 = vrot.lane.b32.xlu0 %v3179, 4
      %v3258 = vpop.permute.xlu0 %3257
      %3259 = vrot.lane.b32.xlu0 %v3180, 4
      %v3260 = vpop.permute.xlu0 %3259
      %3261 = vrot.lane.b32.xlu0 %v3181, 4
      %v3262 = vpop.permute.xlu0 %3261
      %3303 = vrot.lane.b32.xlu0 %v3183, 8
      %v3304 = vpop.permute.xlu0 %3303
      %3305 = vrot.lane.b32.xlu0 %v3184, 8
      %v3306 = vpop.permute.xlu0 %3305
      %3307 = vrot.lane.b32.xlu0 %v3185, 8
      %v3308 = vpop.permute.xlu0 %3307
      %3309 = vrot.lane.b32.xlu0 %v3186, 8
      %v3310 = vpop.permute.xlu0 %3309
      %3311 = vrot.lane.b32.xlu0 %v3187, 8
      %v3312 = vpop.permute.xlu0 %3311
      %3313 = vrot.lane.b32.xlu0 %v3188, 8
      %v3314 = vpop.permute.xlu0 %3313
      %3315 = vrot.lane.b32.xlu0 %v3189, 8
      %v3316 = vpop.permute.xlu0 %3315
      %3317 = vrot.lane.b32.xlu0 %v3190, 8
      %v3318 = vpop.permute.xlu0 %3317
      %3319 = vrot.lane.b32.xlu0 %v3191, 8
      %v3320 = vpop.permute.xlu0 %3319
      %3321 = vrot.lane.b32.xlu0 %v3192, 8
      %v3322 = vpop.permute.xlu0 %3321
      %3323 = vrot.lane.b32.xlu0 %v3193, 8
      %v3324 = vpop.permute.xlu0 %3323
      %3325 = vrot.lane.b32.xlu0 %v3194, 8
      %v3326 = vpop.permute.xlu0 %3325
      %3327 = vrot.lane.b32.xlu0 %v3195, 8
      %v3328 = vpop.permute.xlu0 %3327
      %3329 = vrot.lane.b32.xlu0 %v3196, 8
      %v3330 = vpop.permute.xlu0 %3329
      %3331 = vrot.lane.b32.xlu0 %v3197, 8
      %v3332 = vpop.permute.xlu0 %3331
      %3333 = vrot.lane.b32.xlu0 %v3198, 8
      %v3334 = vpop.permute.xlu0 %3333
      %3335 = vrot.lane.b32.xlu0 %v3199, 8
      %v3336 = vpop.permute.xlu0 %3335
      %3337 = vrot.lane.b32.xlu0 %v3200, 8
      %v3338 = vpop.permute.xlu0 %3337
      %3339 = vrot.lane.b32.xlu0 %v3201, 8
      %v3340 = vpop.permute.xlu0 %3339
      %3341 = vrot.lane.b32.xlu0 %v3202, 8
      %v3342 = vpop.permute.xlu0 %3341
      %v3363 = vsel %vm590, %v3142, %v3224
      %v3364 = vsel %vm590, %v3143, %v3226
      %v3365 = vsel %vm590, %v3144, %v3228
      %v3366 = vsel %vm590, %v3145, %v3230
      %v3367 = vsel %vm590, %v3146, %v3232
      %v3368 = vsel %vm590, %v3147, %v3234
      %v3369 = vsel %vm590, %v3148, %v3236
      %v3370 = vsel %vm590, %v3149, %v3238
      %v3371 = vsel %vm590, %v3150, %v3240
      %v3372 = vsel %vm590, %v3151, %v3242
      %v3373 = vsel %vm590, %v3152, %v3244
      %v3374 = vsel %vm590, %v3153, %v3246
      %v3375 = vsel %vm590, %v3154, %v3248
      %v3376 = vsel %vm590, %v3155, %v3250
      %v3377 = vsel %vm590, %v3156, %v3252
      %v3378 = vsel %vm590, %v3157, %v3254
      %v3379 = vsel %vm590, %v3158, %v3256
      %v3380 = vsel %vm590, %v3159, %v3258
      %v3381 = vsel %vm590, %v3160, %v3260
      %v3382 = vsel %vm590, %v3161, %v3262
      %v3383 = vsel %vm611, %v3363, %v3304
      %v3384 = vsel %vm611, %v3364, %v3306
      %v3385 = vsel %vm611, %v3365, %v3308
      %v3386 = vsel %vm611, %v3366, %v3310
      %v3387 = vsel %vm611, %v3367, %v3312
      %v3388 = vsel %vm611, %v3368, %v3314
      %v3389 = vsel %vm611, %v3369, %v3316
      %v3390 = vsel %vm611, %v3370, %v3318
      %v3391 = vsel %vm611, %v3371, %v3320
      %v3392 = vsel %vm611, %v3372, %v3322
      %v3393 = vsel %vm611, %v3373, %v3324
      %v3394 = vsel %vm611, %v3374, %v3326
      %v3395 = vsel %vm611, %v3375, %v3328
      %v3396 = vsel %vm611, %v3376, %v3330
      %v3397 = vsel %vm611, %v3377, %v3332
      %v3398 = vsel %vm611, %v3378, %v3334
      %v3399 = vsel %vm611, %v3379, %v3336
      %v3400 = vsel %vm611, %v3380, %v3338
      %v3401 = vsel %vm611, %v3381, %v3340
      %v3402 = vsel %vm611, %v3382, %v3342
      %3419 = vrot.lane.b32.xlu0 %v3385, 12
      %v3420 = vpop.permute.xlu0 %3419
      %3421 = vrot.lane.b32.xlu0 %v3386, 12
      %v3422 = vpop.permute.xlu0 %3421
      %3423 = vrot.lane.b32.xlu0 %v3387, 12
      %v3424 = vpop.permute.xlu0 %3423
      %3425 = vrot.lane.b32.xlu0 %v3388, 12
      %v3426 = vpop.permute.xlu0 %3425
      %3427 = vrot.lane.b32.xlu0 %v3389, 12
      %v3428 = vpop.permute.xlu0 %3427
      %3429 = vrot.lane.b32.xlu0 %v3390, 12
      %v3430 = vpop.permute.xlu0 %3429
      %3431 = vrot.lane.b32.xlu0 %v3391, 12
      %v3432 = vpop.permute.xlu0 %3431
      %3433 = vrot.lane.b32.xlu0 %v3392, 12
      %v3434 = vpop.permute.xlu0 %3433
      %3435 = vrot.lane.b32.xlu0 %v3393, 12
      %v3436 = vpop.permute.xlu0 %3435
      %3437 = vrot.lane.b32.xlu0 %v3394, 12
      %v3438 = vpop.permute.xlu0 %3437
      %3439 = vrot.lane.b32.xlu0 %v3395, 12
      %v3440 = vpop.permute.xlu0 %3439
      %3441 = vrot.lane.b32.xlu0 %v3396, 12
      %v3442 = vpop.permute.xlu0 %3441
      %3443 = vrot.lane.b32.xlu0 %v3397, 12
      %v3444 = vpop.permute.xlu0 %3443
      %3445 = vrot.lane.b32.xlu0 %v3398, 12
      %v3446 = vpop.permute.xlu0 %3445
      %3447 = vrot.lane.b32.xlu0 %v3399, 12
      %v3448 = vpop.permute.xlu0 %3447
      %3449 = vrot.lane.b32.xlu0 %v3400, 12
      %v3450 = vpop.permute.xlu0 %3449
      %3469 = vrot.lane.b32.xlu0 %v3387, 24
      %v3470 = vpop.permute.xlu0 %3469
      %3471 = vrot.lane.b32.xlu0 %v3388, 24
      %v3472 = vpop.permute.xlu0 %3471
      %3473 = vrot.lane.b32.xlu0 %v3389, 24
      %v3474 = vpop.permute.xlu0 %3473
      %3475 = vrot.lane.b32.xlu0 %v3390, 24
      %v3476 = vpop.permute.xlu0 %3475
      %3477 = vrot.lane.b32.xlu0 %v3391, 24
      %v3478 = vpop.permute.xlu0 %3477
      %3479 = vrot.lane.b32.xlu0 %v3392, 24
      %v3480 = vpop.permute.xlu0 %3479
      %3481 = vrot.lane.b32.xlu0 %v3393, 24
      %v3482 = vpop.permute.xlu0 %3481
      %3483 = vrot.lane.b32.xlu0 %v3394, 24
      %v3484 = vpop.permute.xlu0 %3483
      %3485 = vrot.lane.b32.xlu0 %v3395, 24
      %v3486 = vpop.permute.xlu0 %3485
      %3487 = vrot.lane.b32.xlu0 %v3396, 24
      %v3488 = vpop.permute.xlu0 %3487
      %3489 = vrot.lane.b32.xlu0 %v3397, 24
      %v3490 = vpop.permute.xlu0 %3489
      %3491 = vrot.lane.b32.xlu0 %v3398, 24
      %v3492 = vpop.permute.xlu0 %3491
      %3493 = vrot.lane.b32.xlu0 %v3399, 24
      %v3494 = vpop.permute.xlu0 %3493
      %3495 = vrot.lane.b32.xlu0 %v3400, 24
      %v3496 = vpop.permute.xlu0 %3495
      %3497 = vrot.lane.b32.xlu0 %v3401, 24
      %v3498 = vpop.permute.xlu0 %3497
      %3499 = vrot.lane.b32.xlu0 %v3402, 24
      %v3500 = vpop.permute.xlu0 %3499
      %v3517 = vsel %vm746, %v3383, %v3420
      %v3518 = vsel %vm746, %v3384, %v3422
      %v3519 = vsel %vm746, %v3385, %v3424
      %v3520 = vsel %vm746, %v3386, %v3426
      %v3521 = vsel %vm746, %v3387, %v3428
      %v3522 = vsel %vm746, %v3388, %v3430
      %v3523 = vsel %vm746, %v3389, %v3432
      %v3524 = vsel %vm746, %v3390, %v3434
      %v3525 = vsel %vm746, %v3391, %v3436
      %v3526 = vsel %vm746, %v3392, %v3438
      %v3527 = vsel %vm746, %v3393, %v3440
      %v3528 = vsel %vm746, %v3394, %v3442
      %v3529 = vsel %vm746, %v3395, %v3444
      %v3530 = vsel %vm746, %v3396, %v3446
      %v3531 = vsel %vm746, %v3397, %v3448
      %v3532 = vsel %vm746, %v3398, %v3450
      %v3533 = vsel %vm763, %v3517, %v3470
      %v3534 = vsel %vm763, %v3518, %v3472
      %v3535 = vsel %vm763, %v3519, %v3474
      %v3536 = vsel %vm763, %v3520, %v3476
      %v3537 = vsel %vm763, %v3521, %v3478
      %v3538 = vsel %vm763, %v3522, %v3480
      %v3539 = vsel %vm763, %v3523, %v3482
      %v3540 = vsel %vm763, %v3524, %v3484
      %v3541 = vsel %vm763, %v3525, %v3486
      %v3542 = vsel %vm763, %v3526, %v3488
      %v3543 = vsel %vm763, %v3527, %v3490
      %v3544 = vsel %vm763, %v3528, %v3492
      %v3545 = vsel %vm763, %v3529, %v3494
      %v3546 = vsel %vm763, %v3530, %v3496
      %v3547 = vsel %vm763, %v3531, %v3498
      %v3548 = vsel %vm763, %v3532, %v3500
      %v3549 = vld [vmem:[%s3] sm:$0xff]
      %v3550 = vld [vmem:[%s3 + $0x8] sm:$0xff]
      %v3551 = vld [vmem:[%s3 + $0x10] sm:$0xff]
      %v3552 = vld [vmem:[%s3 + $0x18] sm:$0xff]
      %v3553 = vld [vmem:[%s3 + $0x20] sm:$0xf]
      %v3570 = vrot.slane %v3533, 1
      %v3571 = vrot.slane %v3534, 1
      %v3572 = vsel %vm801, %v3570, %v3571
      %v3573 = vrot.slane %v3535, 1
      %v3574 = vrot.slane %v3536, 1
      %v3575 = vsel %vm801, %v3573, %v3574
      %v3576 = vrot.slane %v3537, 1
      %v3577 = vrot.slane %v3538, 1
      %v3578 = vsel %vm801, %v3576, %v3577
      %v3579 = vrot.slane %v3539, 1
      %v3580 = vrot.slane %v3540, 1
      %v3581 = vsel %vm801, %v3579, %v3580
      %v3582 = vrot.slane %v3541, 1
      %v3583 = vrot.slane %v3542, 1
      %v3584 = vsel %vm801, %v3582, %v3583
      %v3585 = vrot.slane %v3543, 1
      %v3586 = vrot.slane %v3544, 1
      %v3587 = vsel %vm801, %v3585, %v3586
      %v3588 = vrot.slane %v3545, 1
      %v3589 = vrot.slane %v3546, 1
      %v3590 = vsel %vm801, %v3588, %v3589
      %v3591 = vrot.slane %v3547, 1
      %v3592 = vrot.slane %v3548, 1
      %v3593 = vsel %vm801, %v3591, %v3592
      %v3594 = vld [vmem:[%s826] sm:$0xff]
      %v3595 = vld [vmem:[%s826 + $0x8] sm:$0xff]
      %v3596 = vld [vmem:[%s826 + $0x10] sm:$0xff]
      %v3597 = vld [vmem:[%s826 + $0x18] sm:$0xff]
      %v3598 = vld [vmem:[%s826 + $0x20] sm:$0xf]
      %v3599 = vsel %vm832, %v3572, 0
      %v3601 = vsel %vm832, %v3575, 0
      %v3603 = vsel %vm832, %v3578, 0
      %v3605 = vsel %vm832, %v3581, 0
      %v3607 = vsel %vm832, %v3584, 0
      %v3609 = vsel %vm832, %v3587, 0
      %v3611 = vsel %vm832, %v3590, 0
      %v3613 = vsel %vm832, %v3593, 0
      %v3616 = vsel %vm849, %v3598, 0
      %3618 = vmatpush.msra.mxu0 0.0
      %3619 = vmatpush.msra.mxu0 0.0
      %3620 = vmatpush.msra.mxu0 0.0
      %3621 = vmatpush.msra.mxu0 0.0
      %3622 = vmatpush.msra.mxu0 0.0
      %3623 = vmatpush.msra.mxu0 0.0
      %3624 = vmatpush.msra.mxu0 0.0
      %3625 = vmatpush.msra.mxu0 0.0
      %3626 = vmatpush.msra.mxu0 0.0
      %3627 = vmatpush.msra.mxu0 0.0
      %3628 = vmatpush.msra.mxu0 0.0
      %3629 = vmatpush.msra.mxu0 %v3616
      %3630 = vmatpush.msra.mxu0 %v3597
      %3631 = vmatpush.msra.mxu0 %v3596
      %3632 = vmatpush.msra.mxu0 %v3595
      %3633 = vmatpush.msra.mxu0 %v3594
      %3634 = vmatmul.f32.gmra.mxu0 %v3599
      %v3635 = vpop.f32.mrf.mxu0
      %v3636 = vadd.f32 0.0, %v3635
      %3637 = vmatmul.f32.gmra.mxu0 %v3601
      %v3638 = vpop.f32.mrf.mxu0
      %v3639 = vadd.f32 0.0, %v3638
      %3640 = vmatmul.f32.gmra.mxu0 %v3603
      %v3641 = vpop.f32.mrf.mxu0
      %v3642 = vadd.f32 0.0, %v3641
      %3643 = vmatmul.f32.gmra.mxu0 %v3605
      %v3644 = vpop.f32.mrf.mxu0
      %v3645 = vadd.f32 0.0, %v3644
      %3646 = vmatmul.f32.gmra.mxu0 %v3607
      %v3647 = vpop.f32.mrf.mxu0
      %v3648 = vadd.f32 0.0, %v3647
      %3649 = vmatmul.f32.gmra.mxu0 %v3609
      %v3650 = vpop.f32.mrf.mxu0
      %v3651 = vadd.f32 0.0, %v3650
      %3652 = vmatmul.f32.gmra.mxu0 %v3611
      %v3653 = vpop.f32.mrf.mxu0
      %v3654 = vadd.f32 0.0, %v3653
      %3655 = vmatmul.f32.gmra.mxu0 %v3613
      %v3656 = vpop.f32.mrf.mxu0
      %v3657 = vadd.f32 0.0, %v3656
      %3658 = vdwg.mxu0
      %v3659 = vsel %vm832, %v3533, 0
      %v3661 = vsel %vm832, %v3535, 0
      %v3663 = vsel %vm832, %v3537, 0
      %v3665 = vsel %vm832, %v3539, 0
      %v3667 = vsel %vm832, %v3541, 0
      %v3669 = vsel %vm832, %v3543, 0
      %v3671 = vsel %vm832, %v3545, 0
      %v3673 = vsel %vm832, %v3547, 0
      %v3676 = vsel %vm849, %v3553, 0
      %3678 = vmatpush.msra.mxu0 0.0
      %3679 = vmatpush.msra.mxu0 0.0
      %3680 = vmatpush.msra.mxu0 0.0
      %3681 = vmatpush.msra.mxu0 0.0
      %3682 = vmatpush.msra.mxu0 0.0
      %3683 = vmatpush.msra.mxu0 0.0
      %3684 = vmatpush.msra.mxu0 0.0
      %3685 = vmatpush.msra.mxu0 0.0
      %3686 = vmatpush.msra.mxu0 0.0
      %3687 = vmatpush.msra.mxu0 0.0
      %3688 = vmatpush.msra.mxu0 0.0
      %3689 = vmatpush.msra.mxu0 %v3676
      %3690 = vmatpush.msra.mxu0 %v3552
      %3691 = vmatpush.msra.mxu0 %v3551
      %3692 = vmatpush.msra.mxu0 %v3550
      %3693 = vmatpush.msra.mxu0 %v3549
      %3694 = vmatmul.f32.gmra.mxu0 %v3659
      %v3695 = vpop.f32.mrf.mxu0
      %v3696 = vadd.f32 %v3636, %v3695
      %3697 = vmatmul.f32.gmra.mxu0 %v3661
      %v3698 = vpop.f32.mrf.mxu0
      %v3699 = vadd.f32 %v3639, %v3698
      %3700 = vmatmul.f32.gmra.mxu0 %v3663
      %v3701 = vpop.f32.mrf.mxu0
      %v3702 = vadd.f32 %v3642, %v3701
      %3703 = vmatmul.f32.gmra.mxu0 %v3665
      %v3704 = vpop.f32.mrf.mxu0
      %v3705 = vadd.f32 %v3645, %v3704
      %3706 = vmatmul.f32.gmra.mxu0 %v3667
      %v3707 = vpop.f32.mrf.mxu0
      %v3708 = vadd.f32 %v3648, %v3707
      %3709 = vmatmul.f32.gmra.mxu0 %v3669
      %v3710 = vpop.f32.mrf.mxu0
      %v3711 = vadd.f32 %v3651, %v3710
      %3712 = vmatmul.f32.gmra.mxu0 %v3671
      %v3713 = vpop.f32.mrf.mxu0
      %v3714 = vadd.f32 %v3654, %v3713
      %3715 = vmatmul.f32.gmra.mxu0 %v3673
      %v3716 = vpop.f32.mrf.mxu0
      %v3717 = vadd.f32 %v3657, %v3716
      %3718 = vdwg.mxu0
      %v3719 = vrot.slane %v3533, 2
      %v3720 = vrot.slane %v3534, 2
      %v3721 = vsel %vm954, %v3719, %v3720
      %v3722 = vrot.slane %v3535, 2
      %v3723 = vrot.slane %v3536, 2
      %v3724 = vsel %vm954, %v3722, %v3723
      %v3725 = vrot.slane %v3537, 2
      %v3726 = vrot.slane %v3538, 2
      %v3727 = vsel %vm954, %v3725, %v3726
      %v3728 = vrot.slane %v3539, 2
      %v3729 = vrot.slane %v3540, 2
      %v3730 = vsel %vm954, %v3728, %v3729
      %v3731 = vrot.slane %v3541, 2
      %v3732 = vrot.slane %v3542, 2
      %v3733 = vsel %vm954, %v3731, %v3732
      %v3734 = vrot.slane %v3543, 2
      %v3735 = vrot.slane %v3544, 2
      %v3736 = vsel %vm954, %v3734, %v3735
      %v3737 = vrot.slane %v3545, 2
      %v3738 = vrot.slane %v3546, 2
      %v3739 = vsel %vm954, %v3737, %v3738
      %v3740 = vrot.slane %v3547, 2
      %v3741 = vrot.slane %v3548, 2
      %v3742 = vsel %vm954, %v3740, %v3741
      %v3743 = vld [vmem:[%s979] sm:$0xff]
      %v3744 = vld [vmem:[%s979 + $0x8] sm:$0xff]
      %v3745 = vld [vmem:[%s979 + $0x10] sm:$0xff]
      %v3746 = vld [vmem:[%s979 + $0x18] sm:$0xff]
      %v3747 = vld [vmem:[%s979 + $0x20] sm:$0xf]
      %v3748 = vsel %vm832, %v3721, 0
      %v3750 = vsel %vm832, %v3724, 0
      %v3752 = vsel %vm832, %v3727, 0
      %v3754 = vsel %vm832, %v3730, 0
      %v3756 = vsel %vm832, %v3733, 0
      %v3758 = vsel %vm832, %v3736, 0
      %v3760 = vsel %vm832, %v3739, 0
      %v3762 = vsel %vm832, %v3742, 0
      %v3765 = vsel %vm849, %v3747, 0
      %3767 = vmatpush.msra.mxu0 0.0
      %3768 = vmatpush.msra.mxu0 0.0
      %3769 = vmatpush.msra.mxu0 0.0
      %3770 = vmatpush.msra.mxu0 0.0
      %3771 = vmatpush.msra.mxu0 0.0
      %3772 = vmatpush.msra.mxu0 0.0
      %3773 = vmatpush.msra.mxu0 0.0
      %3774 = vmatpush.msra.mxu0 0.0
      %3775 = vmatpush.msra.mxu0 0.0
      %3776 = vmatpush.msra.mxu0 0.0
      %3777 = vmatpush.msra.mxu0 0.0
      %3778 = vmatpush.msra.mxu0 %v3765
      %3779 = vmatpush.msra.mxu0 %v3746
      %3780 = vmatpush.msra.mxu0 %v3745
      %3781 = vmatpush.msra.mxu0 %v3744
      %3782 = vmatpush.msra.mxu0 %v3743
      %3783 = vmatmul.f32.gmra.mxu0 %v3748
      %v3784 = vpop.f32.mrf.mxu0
      %v3785 = vadd.f32 0.0, %v3784
      %3786 = vmatmul.f32.gmra.mxu0 %v3750
      %v3787 = vpop.f32.mrf.mxu0
      %v3788 = vadd.f32 0.0, %v3787
      %3789 = vmatmul.f32.gmra.mxu0 %v3752
      %v3790 = vpop.f32.mrf.mxu0
      %v3791 = vadd.f32 0.0, %v3790
      %3792 = vmatmul.f32.gmra.mxu0 %v3754
      %v3793 = vpop.f32.mrf.mxu0
      %v3794 = vadd.f32 0.0, %v3793
      %3795 = vmatmul.f32.gmra.mxu0 %v3756
      %v3796 = vpop.f32.mrf.mxu0
      %v3797 = vadd.f32 0.0, %v3796
      %3798 = vmatmul.f32.gmra.mxu0 %v3758
      %v3799 = vpop.f32.mrf.mxu0
      %v3800 = vadd.f32 0.0, %v3799
      %3801 = vmatmul.f32.gmra.mxu0 %v3760
      %v3802 = vpop.f32.mrf.mxu0
      %v3803 = vadd.f32 0.0, %v3802
      %3804 = vmatmul.f32.gmra.mxu0 %v3762
      %v3805 = vpop.f32.mrf.mxu0
      %v3806 = vadd.f32 0.0, %v3805
      %3807 = vdwg.mxu0
      %v3808 = vadd.f32 %v3696, %v3785
      %v3809 = vadd.f32 %v3699, %v3788
      %v3810 = vadd.f32 %v3702, %v3791
      %v3811 = vadd.f32 %v3705, %v3794
      %v3812 = vadd.f32 %v3708, %v3797
      %v3813 = vadd.f32 %v3711, %v3800
      %v3814 = vadd.f32 %v3714, %v3803
      %v3815 = vadd.f32 %v3717, %v3806
      %v3816 = vmax.f32 %v3808, 0.0
      %v3817 = vmax.f32 %v3809, 0.0
      %v3818 = vmax.f32 %v3810, 0.0
      %v3819 = vmax.f32 %v3811, 0.0
      %v3820 = vmax.f32 %v3812, 0.0
      %v3821 = vmax.f32 %v3813, 0.0
      %v3822 = vmax.f32 %v3814, 0.0
      %v3823 = vmax.f32 %v3815, 0.0
      %s3824 = scalar_lea.vmem %s366, 256
      %3825 = vst.msk [vmem:[%s3824] sm:$0xff] %vm611, %v3816
      %3826 = vst.msk [vmem:[%s3824 + $0x8] sm:$0xff] %vm611, %v3817
      %3827 = vst.msk [vmem:[%s3824 + $0x10] sm:$0xff] %vm611, %v3818
      %3828 = vst.msk [vmem:[%s3824 + $0x18] sm:$0xff] %vm611, %v3819
      %3829 = vst.msk [vmem:[%s3824 + $0x20] sm:$0xff] %vm611, %v3820
      %3830 = vst.msk [vmem:[%s3824 + $0x28] sm:$0xff] %vm611, %v3821
      %3831 = vst.msk [vmem:[%s3824 + $0x30] sm:$0xff] %vm611, %v3822
      %3832 = vst.msk [vmem:[%s3824 + $0x38] sm:$0xff] %vm611, %v3823
      %v3833 = vld [vmem:[%s2491] sm:$0xff]
      %v3834 = vld [vmem:[%s2491 + $0x8] sm:$0x3]
      %v3835 = vld [vmem:[%s2491 + $0x10] sm:$0xff]
      %v3836 = vld [vmem:[%s2491 + $0x18] sm:$0x3]
      %v3837 = vld [vmem:[%s2491 + $0x20] sm:$0xff]
      %v3838 = vld [vmem:[%s2491 + $0x28] sm:$0x3]
      %v3839 = vld [vmem:[%s2491 + $0x30] sm:$0xff]
      %v3840 = vld [vmem:[%s2491 + $0x38] sm:$0x3]
      %v3841 = vld [vmem:[%s2491 + $0x40] sm:$0xff]
      %v3842 = vld [vmem:[%s2491 + $0x48] sm:$0x3]
      %v3843 = vld [vmem:[%s2491 + $0x50] sm:$0xff]
      %v3844 = vld [vmem:[%s2491 + $0x58] sm:$0x3]
      %v3845 = vld [vmem:[%s2491 + $0x60] sm:$0xff]
      %v3846 = vld [vmem:[%s2491 + $0x68] sm:$0x3]
      %v3847 = vld [vmem:[%s2491 + $0x70] sm:$0xff]
      %v3848 = vld [vmem:[%s2491 + $0x78] sm:$0x3]
      %v3849 = vld [vmem:[%s2491 + $0x80] sm:$0xff]
      %v3850 = vld [vmem:[%s2491 + $0x88] sm:$0x3]
      %v3851 = vld [vmem:[%s2491 + $0x90] sm:$0xff]
      %v3852 = vld [vmem:[%s2491 + $0x98] sm:$0x3]
      %v3853 = vld [vmem:[%s3182] sm:$0xff]
      %v3854 = vld [vmem:[%s3182 + $0x8] sm:$0x3]
      %v3855 = vld [vmem:[%s3182 + $0x10] sm:$0xff]
      %v3856 = vld [vmem:[%s3182 + $0x18] sm:$0x3]
      %v3857 = vld [vmem:[%s3182 + $0x20] sm:$0xff]
      %v3858 = vld [vmem:[%s3182 + $0x28] sm:$0x3]
      %v3859 = vld [vmem:[%s3182 + $0x30] sm:$0xff]
      %v3860 = vld [vmem:[%s3182 + $0x38] sm:$0x3]
      %v3861 = vld [vmem:[%s3182 + $0x40] sm:$0xff]
      %v3862 = vld [vmem:[%s3182 + $0x48] sm:$0x3]
      %v3863 = vld [vmem:[%s3182 + $0x50] sm:$0xff]
      %v3864 = vld [vmem:[%s3182 + $0x58] sm:$0x3]
      %v3865 = vld [vmem:[%s3182 + $0x60] sm:$0xff]
      %v3866 = vld [vmem:[%s3182 + $0x68] sm:$0x3]
      %v3867 = vld [vmem:[%s3182 + $0x70] sm:$0xff]
      %v3868 = vld [vmem:[%s3182 + $0x78] sm:$0x3]
      %v3869 = vld [vmem:[%s3182 + $0x80] sm:$0xff]
      %v3870 = vld [vmem:[%s3182 + $0x88] sm:$0x3]
      %v3871 = vld [vmem:[%s3182 + $0x90] sm:$0xff]
      %v3872 = vld [vmem:[%s3182 + $0x98] sm:$0x3]
      %s3873 = scalar_lea.vmem %s323, 1120
      %v3874 = vld [vmem:[%s3873] sm:$0xff]
      %v3875 = vld [vmem:[%s3873 + $0x8] sm:$0x3]
      %v3876 = vld [vmem:[%s3873 + $0x10] sm:$0xff]
      %v3877 = vld [vmem:[%s3873 + $0x18] sm:$0x3]
      %v3878 = vld [vmem:[%s3873 + $0x20] sm:$0xff]
      %v3879 = vld [vmem:[%s3873 + $0x28] sm:$0x3]
      %v3880 = vld [vmem:[%s3873 + $0x30] sm:$0xff]
      %v3881 = vld [vmem:[%s3873 + $0x38] sm:$0x3]
      %v3882 = vld [vmem:[%s3873 + $0x40] sm:$0xff]
      %v3883 = vld [vmem:[%s3873 + $0x48] sm:$0x3]
      %v3884 = vld [vmem:[%s3873 + $0x50] sm:$0xff]
      %v3885 = vld [vmem:[%s3873 + $0x58] sm:$0x3]
      %v3886 = vld [vmem:[%s3873 + $0x60] sm:$0xff]
      %v3887 = vld [vmem:[%s3873 + $0x68] sm:$0x3]
      %v3888 = vld [vmem:[%s3873 + $0x70] sm:$0xff]
      %v3889 = vld [vmem:[%s3873 + $0x78] sm:$0x3]
      %v3890 = vld [vmem:[%s3873 + $0x80] sm:$0xff]
      %v3891 = vld [vmem:[%s3873 + $0x88] sm:$0x3]
      %v3892 = vld [vmem:[%s3873 + $0x90] sm:$0xff]
      %v3893 = vld [vmem:[%s3873 + $0x98] sm:$0x3]
      %3914 = vrot.lane.b32.xlu0 %v3853, 4
      %v3915 = vpop.permute.xlu0 %3914
      %3916 = vrot.lane.b32.xlu0 %v3854, 4
      %v3917 = vpop.permute.xlu0 %3916
      %3918 = vrot.lane.b32.xlu0 %v3855, 4
      %v3919 = vpop.permute.xlu0 %3918
      %3920 = vrot.lane.b32.xlu0 %v3856, 4
      %v3921 = vpop.permute.xlu0 %3920
      %3922 = vrot.lane.b32.xlu0 %v3857, 4
      %v3923 = vpop.permute.xlu0 %3922
      %3924 = vrot.lane.b32.xlu0 %v3858, 4
      %v3925 = vpop.permute.xlu0 %3924
      %3926 = vrot.lane.b32.xlu0 %v3859, 4
      %v3927 = vpop.permute.xlu0 %3926
      %3928 = vrot.lane.b32.xlu0 %v3860, 4
      %v3929 = vpop.permute.xlu0 %3928
      %3930 = vrot.lane.b32.xlu0 %v3861, 4
      %v3931 = vpop.permute.xlu0 %3930
      %3932 = vrot.lane.b32.xlu0 %v3862, 4
      %v3933 = vpop.permute.xlu0 %3932
      %3934 = vrot.lane.b32.xlu0 %v3863, 4
      %v3935 = vpop.permute.xlu0 %3934
      %3936 = vrot.lane.b32.xlu0 %v3864, 4
      %v3937 = vpop.permute.xlu0 %3936
      %3938 = vrot.lane.b32.xlu0 %v3865, 4
      %v3939 = vpop.permute.xlu0 %3938
      %3940 = vrot.lane.b32.xlu0 %v3866, 4
      %v3941 = vpop.permute.xlu0 %3940
      %3942 = vrot.lane.b32.xlu0 %v3867, 4
      %v3943 = vpop.permute.xlu0 %3942
      %3944 = vrot.lane.b32.xlu0 %v3868, 4
      %v3945 = vpop.permute.xlu0 %3944
      %3946 = vrot.lane.b32.xlu0 %v3869, 4
      %v3947 = vpop.permute.xlu0 %3946
      %3948 = vrot.lane.b32.xlu0 %v3870, 4
      %v3949 = vpop.permute.xlu0 %3948
      %3950 = vrot.lane.b32.xlu0 %v3871, 4
      %v3951 = vpop.permute.xlu0 %3950
      %3952 = vrot.lane.b32.xlu0 %v3872, 4
      %v3953 = vpop.permute.xlu0 %3952
      %3994 = vrot.lane.b32.xlu0 %v3874, 8
      %v3995 = vpop.permute.xlu0 %3994
      %3996 = vrot.lane.b32.xlu0 %v3875, 8
      %v3997 = vpop.permute.xlu0 %3996
      %3998 = vrot.lane.b32.xlu0 %v3876, 8
      %v3999 = vpop.permute.xlu0 %3998
      %4000 = vrot.lane.b32.xlu0 %v3877, 8
      %v4001 = vpop.permute.xlu0 %4000
      %4002 = vrot.lane.b32.xlu0 %v3878, 8
      %v4003 = vpop.permute.xlu0 %4002
      %4004 = vrot.lane.b32.xlu0 %v3879, 8
      %v4005 = vpop.permute.xlu0 %4004
      %4006 = vrot.lane.b32.xlu0 %v3880, 8
      %v4007 = vpop.permute.xlu0 %4006
      %4008 = vrot.lane.b32.xlu0 %v3881, 8
      %v4009 = vpop.permute.xlu0 %4008
      %4010 = vrot.lane.b32.xlu0 %v3882, 8
      %v4011 = vpop.permute.xlu0 %4010
      %4012 = vrot.lane.b32.xlu0 %v3883, 8
      %v4013 = vpop.permute.xlu0 %4012
      %4014 = vrot.lane.b32.xlu0 %v3884, 8
      %v4015 = vpop.permute.xlu0 %4014
      %4016 = vrot.lane.b32.xlu0 %v3885, 8
      %v4017 = vpop.permute.xlu0 %4016
      %4018 = vrot.lane.b32.xlu0 %v3886, 8
      %v4019 = vpop.permute.xlu0 %4018
      %4020 = vrot.lane.b32.xlu0 %v3887, 8
      %v4021 = vpop.permute.xlu0 %4020
      %4022 = vrot.lane.b32.xlu0 %v3888, 8
      %v4023 = vpop.permute.xlu0 %4022
      %4024 = vrot.lane.b32.xlu0 %v3889, 8
      %v4025 = vpop.permute.xlu0 %4024
      %4026 = vrot.lane.b32.xlu0 %v3890, 8
      %v4027 = vpop.permute.xlu0 %4026
      %4028 = vrot.lane.b32.xlu0 %v3891, 8
      %v4029 = vpop.permute.xlu0 %4028
      %4030 = vrot.lane.b32.xlu0 %v3892, 8
      %v4031 = vpop.permute.xlu0 %4030
      %4032 = vrot.lane.b32.xlu0 %v3893, 8
      %v4033 = vpop.permute.xlu0 %4032
      %v4054 = vsel %vm590, %v3833, %v3915
      %v4055 = vsel %vm590, %v3834, %v3917
      %v4056 = vsel %vm590, %v3835, %v3919
      %v4057 = vsel %vm590, %v3836, %v3921
      %v4058 = vsel %vm590, %v3837, %v3923
      %v4059 = vsel %vm590, %v3838, %v3925
      %v4060 = vsel %vm590, %v3839, %v3927
      %v4061 = vsel %vm590, %v3840, %v3929
      %v4062 = vsel %vm590, %v3841, %v3931
      %v4063 = vsel %vm590, %v3842, %v3933
      %v4064 = vsel %vm590, %v3843, %v3935
      %v4065 = vsel %vm590, %v3844, %v3937
      %v4066 = vsel %vm590, %v3845, %v3939
      %v4067 = vsel %vm590, %v3846, %v3941
      %v4068 = vsel %vm590, %v3847, %v3943
      %v4069 = vsel %vm590, %v3848, %v3945
      %v4070 = vsel %vm590, %v3849, %v3947
      %v4071 = vsel %vm590, %v3850, %v3949
      %v4072 = vsel %vm590, %v3851, %v3951
      %v4073 = vsel %vm590, %v3852, %v3953
      %v4074 = vsel %vm611, %v4054, %v3995
      %v4075 = vsel %vm611, %v4055, %v3997
      %v4076 = vsel %vm611, %v4056, %v3999
      %v4077 = vsel %vm611, %v4057, %v4001
      %v4078 = vsel %vm611, %v4058, %v4003
      %v4079 = vsel %vm611, %v4059, %v4005
      %v4080 = vsel %vm611, %v4060, %v4007
      %v4081 = vsel %vm611, %v4061, %v4009
      %v4082 = vsel %vm611, %v4062, %v4011
      %v4083 = vsel %vm611, %v4063, %v4013
      %v4084 = vsel %vm611, %v4064, %v4015
      %v4085 = vsel %vm611, %v4065, %v4017
      %v4086 = vsel %vm611, %v4066, %v4019
      %v4087 = vsel %vm611, %v4067, %v4021
      %v4088 = vsel %vm611, %v4068, %v4023
      %v4089 = vsel %vm611, %v4069, %v4025
      %v4090 = vsel %vm611, %v4070, %v4027
      %v4091 = vsel %vm611, %v4071, %v4029
      %v4092 = vsel %vm611, %v4072, %v4031
      %v4093 = vsel %vm611, %v4073, %v4033
      %4110 = vrot.lane.b32.xlu0 %v4076, 12
      %v4111 = vpop.permute.xlu0 %4110
      %4112 = vrot.lane.b32.xlu0 %v4077, 12
      %v4113 = vpop.permute.xlu0 %4112
      %4114 = vrot.lane.b32.xlu0 %v4078, 12
      %v4115 = vpop.permute.xlu0 %4114
      %4116 = vrot.lane.b32.xlu0 %v4079, 12
      %v4117 = vpop.permute.xlu0 %4116
      %4118 = vrot.lane.b32.xlu0 %v4080, 12
      %v4119 = vpop.permute.xlu0 %4118
      %4120 = vrot.lane.b32.xlu0 %v4081, 12
      %v4121 = vpop.permute.xlu0 %4120
      %4122 = vrot.lane.b32.xlu0 %v4082, 12
      %v4123 = vpop.permute.xlu0 %4122
      %4124 = vrot.lane.b32.xlu0 %v4083, 12
      %v4125 = vpop.permute.xlu0 %4124
      %4126 = vrot.lane.b32.xlu0 %v4084, 12
      %v4127 = vpop.permute.xlu0 %4126
      %4128 = vrot.lane.b32.xlu0 %v4085, 12
      %v4129 = vpop.permute.xlu0 %4128
      %4130 = vrot.lane.b32.xlu0 %v4086, 12
      %v4131 = vpop.permute.xlu0 %4130
      %4132 = vrot.lane.b32.xlu0 %v4087, 12
      %v4133 = vpop.permute.xlu0 %4132
      %4134 = vrot.lane.b32.xlu0 %v4088, 12
      %v4135 = vpop.permute.xlu0 %4134
      %4136 = vrot.lane.b32.xlu0 %v4089, 12
      %v4137 = vpop.permute.xlu0 %4136
      %4138 = vrot.lane.b32.xlu0 %v4090, 12
      %v4139 = vpop.permute.xlu0 %4138
      %4140 = vrot.lane.b32.xlu0 %v4091, 12
      %v4141 = vpop.permute.xlu0 %4140
      %4160 = vrot.lane.b32.xlu0 %v4078, 24
      %v4161 = vpop.permute.xlu0 %4160
      %4162 = vrot.lane.b32.xlu0 %v4079, 24
      %v4163 = vpop.permute.xlu0 %4162
      %4164 = vrot.lane.b32.xlu0 %v4080, 24
      %v4165 = vpop.permute.xlu0 %4164
      %4166 = vrot.lane.b32.xlu0 %v4081, 24
      %v4167 = vpop.permute.xlu0 %4166
      %4168 = vrot.lane.b32.xlu0 %v4082, 24
      %v4169 = vpop.permute.xlu0 %4168
      %4170 = vrot.lane.b32.xlu0 %v4083, 24
      %v4171 = vpop.permute.xlu0 %4170
      %4172 = vrot.lane.b32.xlu0 %v4084, 24
      %v4173 = vpop.permute.xlu0 %4172
      %4174 = vrot.lane.b32.xlu0 %v4085, 24
      %v4175 = vpop.permute.xlu0 %4174
      %4176 = vrot.lane.b32.xlu0 %v4086, 24
      %v4177 = vpop.permute.xlu0 %4176
      %4178 = vrot.lane.b32.xlu0 %v4087, 24
      %v4179 = vpop.permute.xlu0 %4178
      %4180 = vrot.lane.b32.xlu0 %v4088, 24
      %v4181 = vpop.permute.xlu0 %4180
      %4182 = vrot.lane.b32.xlu0 %v4089, 24
      %v4183 = vpop.permute.xlu0 %4182
      %4184 = vrot.lane.b32.xlu0 %v4090, 24
      %v4185 = vpop.permute.xlu0 %4184
      %4186 = vrot.lane.b32.xlu0 %v4091, 24
      %v4187 = vpop.permute.xlu0 %4186
      %4188 = vrot.lane.b32.xlu0 %v4092, 24
      %v4189 = vpop.permute.xlu0 %4188
      %4190 = vrot.lane.b32.xlu0 %v4093, 24
      %v4191 = vpop.permute.xlu0 %4190
      %v4208 = vsel %vm746, %v4074, %v4111
      %v4209 = vsel %vm746, %v4075, %v4113
      %v4210 = vsel %vm746, %v4076, %v4115
      %v4211 = vsel %vm746, %v4077, %v4117
      %v4212 = vsel %vm746, %v4078, %v4119
      %v4213 = vsel %vm746, %v4079, %v4121
      %v4214 = vsel %vm746, %v4080, %v4123
      %v4215 = vsel %vm746, %v4081, %v4125
      %v4216 = vsel %vm746, %v4082, %v4127
      %v4217 = vsel %vm746, %v4083, %v4129
      %v4218 = vsel %vm746, %v4084, %v4131
      %v4219 = vsel %vm746, %v4085, %v4133
      %v4220 = vsel %vm746, %v4086, %v4135
      %v4221 = vsel %vm746, %v4087, %v4137
      %v4222 = vsel %vm746, %v4088, %v4139
      %v4223 = vsel %vm746, %v4089, %v4141
      %v4224 = vsel %vm763, %v4208, %v4161
      %v4225 = vsel %vm763, %v4209, %v4163
      %v4226 = vsel %vm763, %v4210, %v4165
      %v4227 = vsel %vm763, %v4211, %v4167
      %v4228 = vsel %vm763, %v4212, %v4169
      %v4229 = vsel %vm763, %v4213, %v4171
      %v4230 = vsel %vm763, %v4214, %v4173
      %v4231 = vsel %vm763, %v4215, %v4175
      %v4232 = vsel %vm763, %v4216, %v4177
      %v4233 = vsel %vm763, %v4217, %v4179
      %v4234 = vsel %vm763, %v4218, %v4181
      %v4235 = vsel %vm763, %v4219, %v4183
      %v4236 = vsel %vm763, %v4220, %v4185
      %v4237 = vsel %vm763, %v4221, %v4187
      %v4238 = vsel %vm763, %v4222, %v4189
      %v4239 = vsel %vm763, %v4223, %v4191
      %v4240 = vld [vmem:[%s3] sm:$0xff]
      %v4241 = vld [vmem:[%s3 + $0x8] sm:$0xff]
      %v4242 = vld [vmem:[%s3 + $0x10] sm:$0xff]
      %v4243 = vld [vmem:[%s3 + $0x18] sm:$0xff]
      %v4244 = vld [vmem:[%s3 + $0x20] sm:$0xf]
      %v4261 = vrot.slane %v4224, 1
      %v4262 = vrot.slane %v4225, 1
      %v4263 = vsel %vm801, %v4261, %v4262
      %v4264 = vrot.slane %v4226, 1
      %v4265 = vrot.slane %v4227, 1
      %v4266 = vsel %vm801, %v4264, %v4265
      %v4267 = vrot.slane %v4228, 1
      %v4268 = vrot.slane %v4229, 1
      %v4269 = vsel %vm801, %v4267, %v4268
      %v4270 = vrot.slane %v4230, 1
      %v4271 = vrot.slane %v4231, 1
      %v4272 = vsel %vm801, %v4270, %v4271
      %v4273 = vrot.slane %v4232, 1
      %v4274 = vrot.slane %v4233, 1
      %v4275 = vsel %vm801, %v4273, %v4274
      %v4276 = vrot.slane %v4234, 1
      %v4277 = vrot.slane %v4235, 1
      %v4278 = vsel %vm801, %v4276, %v4277
      %v4279 = vrot.slane %v4236, 1
      %v4280 = vrot.slane %v4237, 1
      %v4281 = vsel %vm801, %v4279, %v4280
      %v4282 = vrot.slane %v4238, 1
      %v4283 = vrot.slane %v4239, 1
      %v4284 = vsel %vm801, %v4282, %v4283
      %v4285 = vld [vmem:[%s826] sm:$0xff]
      %v4286 = vld [vmem:[%s826 + $0x8] sm:$0xff]
      %v4287 = vld [vmem:[%s826 + $0x10] sm:$0xff]
      %v4288 = vld [vmem:[%s826 + $0x18] sm:$0xff]
      %v4289 = vld [vmem:[%s826 + $0x20] sm:$0xf]
      %v4290 = vsel %vm832, %v4263, 0
      %v4292 = vsel %vm832, %v4266, 0
      %v4294 = vsel %vm832, %v4269, 0
      %v4296 = vsel %vm832, %v4272, 0
      %v4298 = vsel %vm832, %v4275, 0
      %v4300 = vsel %vm832, %v4278, 0
      %v4302 = vsel %vm832, %v4281, 0
      %v4304 = vsel %vm832, %v4284, 0
      %v4307 = vsel %vm849, %v4289, 0
      %4309 = vmatpush.msra.mxu0 0.0
      %4310 = vmatpush.msra.mxu0 0.0
      %4311 = vmatpush.msra.mxu0 0.0
      %4312 = vmatpush.msra.mxu0 0.0
      %4313 = vmatpush.msra.mxu0 0.0
      %4314 = vmatpush.msra.mxu0 0.0
      %4315 = vmatpush.msra.mxu0 0.0
      %4316 = vmatpush.msra.mxu0 0.0
      %4317 = vmatpush.msra.mxu0 0.0
      %4318 = vmatpush.msra.mxu0 0.0
      %4319 = vmatpush.msra.mxu0 0.0
      %4320 = vmatpush.msra.mxu0 %v4307
      %4321 = vmatpush.msra.mxu0 %v4288
      %4322 = vmatpush.msra.mxu0 %v4287
      %4323 = vmatpush.msra.mxu0 %v4286
      %4324 = vmatpush.msra.mxu0 %v4285
      %4325 = vmatmul.f32.gmra.mxu0 %v4290
      %v4326 = vpop.f32.mrf.mxu0
      %v4327 = vadd.f32 0.0, %v4326
      %4328 = vmatmul.f32.gmra.mxu0 %v4292
      %v4329 = vpop.f32.mrf.mxu0
      %v4330 = vadd.f32 0.0, %v4329
      %4331 = vmatmul.f32.gmra.mxu0 %v4294
      %v4332 = vpop.f32.mrf.mxu0
      %v4333 = vadd.f32 0.0, %v4332
      %4334 = vmatmul.f32.gmra.mxu0 %v4296
      %v4335 = vpop.f32.mrf.mxu0
      %v4336 = vadd.f32 0.0, %v4335
      %4337 = vmatmul.f32.gmra.mxu0 %v4298
      %v4338 = vpop.f32.mrf.mxu0
      %v4339 = vadd.f32 0.0, %v4338
      %4340 = vmatmul.f32.gmra.mxu0 %v4300
      %v4341 = vpop.f32.mrf.mxu0
      %v4342 = vadd.f32 0.0, %v4341
      %4343 = vmatmul.f32.gmra.mxu0 %v4302
      %v4344 = vpop.f32.mrf.mxu0
      %v4345 = vadd.f32 0.0, %v4344
      %4346 = vmatmul.f32.gmra.mxu0 %v4304
      %v4347 = vpop.f32.mrf.mxu0
      %v4348 = vadd.f32 0.0, %v4347
      %4349 = vdwg.mxu0
      %v4350 = vsel %vm832, %v4224, 0
      %v4352 = vsel %vm832, %v4226, 0
      %v4354 = vsel %vm832, %v4228, 0
      %v4356 = vsel %vm832, %v4230, 0
      %v4358 = vsel %vm832, %v4232, 0
      %v4360 = vsel %vm832, %v4234, 0
      %v4362 = vsel %vm832, %v4236, 0
      %v4364 = vsel %vm832, %v4238, 0
      %v4367 = vsel %vm849, %v4244, 0
      %4369 = vmatpush.msra.mxu0 0.0
      %4370 = vmatpush.msra.mxu0 0.0
      %4371 = vmatpush.msra.mxu0 0.0
      %4372 = vmatpush.msra.mxu0 0.0
      %4373 = vmatpush.msra.mxu0 0.0
      %4374 = vmatpush.msra.mxu0 0.0
      %4375 = vmatpush.msra.mxu0 0.0
      %4376 = vmatpush.msra.mxu0 0.0
      %4377 = vmatpush.msra.mxu0 0.0
      %4378 = vmatpush.msra.mxu0 0.0
      %4379 = vmatpush.msra.mxu0 0.0
      %4380 = vmatpush.msra.mxu0 %v4367
      %4381 = vmatpush.msra.mxu0 %v4243
      %4382 = vmatpush.msra.mxu0 %v4242
      %4383 = vmatpush.msra.mxu0 %v4241
      %4384 = vmatpush.msra.mxu0 %v4240
      %4385 = vmatmul.f32.gmra.mxu0 %v4350
      %v4386 = vpop.f32.mrf.mxu0
      %v4387 = vadd.f32 %v4327, %v4386
      %4388 = vmatmul.f32.gmra.mxu0 %v4352
      %v4389 = vpop.f32.mrf.mxu0
      %v4390 = vadd.f32 %v4330, %v4389
      %4391 = vmatmul.f32.gmra.mxu0 %v4354
      %v4392 = vpop.f32.mrf.mxu0
      %v4393 = vadd.f32 %v4333, %v4392
      %4394 = vmatmul.f32.gmra.mxu0 %v4356
      %v4395 = vpop.f32.mrf.mxu0
      %v4396 = vadd.f32 %v4336, %v4395
      %4397 = vmatmul.f32.gmra.mxu0 %v4358
      %v4398 = vpop.f32.mrf.mxu0
      %v4399 = vadd.f32 %v4339, %v4398
      %4400 = vmatmul.f32.gmra.mxu0 %v4360
      %v4401 = vpop.f32.mrf.mxu0
      %v4402 = vadd.f32 %v4342, %v4401
      %4403 = vmatmul.f32.gmra.mxu0 %v4362
      %v4404 = vpop.f32.mrf.mxu0
      %v4405 = vadd.f32 %v4345, %v4404
      %4406 = vmatmul.f32.gmra.mxu0 %v4364
      %v4407 = vpop.f32.mrf.mxu0
      %v4408 = vadd.f32 %v4348, %v4407
      %4409 = vdwg.mxu0
      %v4410 = vrot.slane %v4224, 2
      %v4411 = vrot.slane %v4225, 2
      %v4412 = vsel %vm954, %v4410, %v4411
      %v4413 = vrot.slane %v4226, 2
      %v4414 = vrot.slane %v4227, 2
      %v4415 = vsel %vm954, %v4413, %v4414
      %v4416 = vrot.slane %v4228, 2
      %v4417 = vrot.slane %v4229, 2
      %v4418 = vsel %vm954, %v4416, %v4417
      %v4419 = vrot.slane %v4230, 2
      %v4420 = vrot.slane %v4231, 2
      %v4421 = vsel %vm954, %v4419, %v4420
      %v4422 = vrot.slane %v4232, 2
      %v4423 = vrot.slane %v4233, 2
      %v4424 = vsel %vm954, %v4422, %v4423
      %v4425 = vrot.slane %v4234, 2
      %v4426 = vrot.slane %v4235, 2
      %v4427 = vsel %vm954, %v4425, %v4426
      %v4428 = vrot.slane %v4236, 2
      %v4429 = vrot.slane %v4237, 2
      %v4430 = vsel %vm954, %v4428, %v4429
      %v4431 = vrot.slane %v4238, 2
      %v4432 = vrot.slane %v4239, 2
      %v4433 = vsel %vm954, %v4431, %v4432
      %v4434 = vld [vmem:[%s979] sm:$0xff]
      %v4435 = vld [vmem:[%s979 + $0x8] sm:$0xff]
      %v4436 = vld [vmem:[%s979 + $0x10] sm:$0xff]
      %v4437 = vld [vmem:[%s979 + $0x18] sm:$0xff]
      %v4438 = vld [vmem:[%s979 + $0x20] sm:$0xf]
      %v4439 = vsel %vm832, %v4412, 0
      %v4441 = vsel %vm832, %v4415, 0
      %v4443 = vsel %vm832, %v4418, 0
      %v4445 = vsel %vm832, %v4421, 0
      %v4447 = vsel %vm832, %v4424, 0
      %v4449 = vsel %vm832, %v4427, 0
      %v4451 = vsel %vm832, %v4430, 0
      %v4453 = vsel %vm832, %v4433, 0
      %v4456 = vsel %vm849, %v4438, 0
      %4458 = vmatpush.msra.mxu0 0.0
      %4459 = vmatpush.msra.mxu0 0.0
      %4460 = vmatpush.msra.mxu0 0.0
      %4461 = vmatpush.msra.mxu0 0.0
      %4462 = vmatpush.msra.mxu0 0.0
      %4463 = vmatpush.msra.mxu0 0.0
      %4464 = vmatpush.msra.mxu0 0.0
      %4465 = vmatpush.msra.mxu0 0.0
      %4466 = vmatpush.msra.mxu0 0.0
      %4467 = vmatpush.msra.mxu0 0.0
      %4468 = vmatpush.msra.mxu0 0.0
      %4469 = vmatpush.msra.mxu0 %v4456
      %4470 = vmatpush.msra.mxu0 %v4437
      %4471 = vmatpush.msra.mxu0 %v4436
      %4472 = vmatpush.msra.mxu0 %v4435
      %4473 = vmatpush.msra.mxu0 %v4434
      %4474 = vmatmul.f32.gmra.mxu0 %v4439
      %v4475 = vpop.f32.mrf.mxu0
      %v4476 = vadd.f32 0.0, %v4475
      %4477 = vmatmul.f32.gmra.mxu0 %v4441
      %v4478 = vpop.f32.mrf.mxu0
      %v4479 = vadd.f32 0.0, %v4478
      %4480 = vmatmul.f32.gmra.mxu0 %v4443
      %v4481 = vpop.f32.mrf.mxu0
      %v4482 = vadd.f32 0.0, %v4481
      %4483 = vmatmul.f32.gmra.mxu0 %v4445
      %v4484 = vpop.f32.mrf.mxu0
      %v4485 = vadd.f32 0.0, %v4484
      %4486 = vmatmul.f32.gmra.mxu0 %v4447
      %v4487 = vpop.f32.mrf.mxu0
      %v4488 = vadd.f32 0.0, %v4487
      %4489 = vmatmul.f32.gmra.mxu0 %v4449
      %v4490 = vpop.f32.mrf.mxu0
      %v4491 = vadd.f32 0.0, %v4490
      %4492 = vmatmul.f32.gmra.mxu0 %v4451
      %v4493 = vpop.f32.mrf.mxu0
      %v4494 = vadd.f32 0.0, %v4493
      %4495 = vmatmul.f32.gmra.mxu0 %v4453
      %v4496 = vpop.f32.mrf.mxu0
      %v4497 = vadd.f32 0.0, %v4496
      %4498 = vdwg.mxu0
      %v4499 = vadd.f32 %v4387, %v4476
      %v4500 = vadd.f32 %v4390, %v4479
      %v4501 = vadd.f32 %v4393, %v4482
      %v4502 = vadd.f32 %v4396, %v4485
      %v4503 = vadd.f32 %v4399, %v4488
      %v4504 = vadd.f32 %v4402, %v4491
      %v4505 = vadd.f32 %v4405, %v4494
      %v4506 = vadd.f32 %v4408, %v4497
      %v4507 = vmax.f32 %v4499, 0.0
      %v4508 = vmax.f32 %v4500, 0.0
      %v4509 = vmax.f32 %v4501, 0.0
      %v4510 = vmax.f32 %v4502, 0.0
      %v4511 = vmax.f32 %v4503, 0.0
      %v4512 = vmax.f32 %v4504, 0.0
      %v4513 = vmax.f32 %v4505, 0.0
      %v4514 = vmax.f32 %v4506, 0.0
      %s4515 = scalar_lea.vmem %s366, 320
      %4516 = vst.msk [vmem:[%s4515] sm:$0xff] %vm611, %v4507
      %4517 = vst.msk [vmem:[%s4515 + $0x8] sm:$0xff] %vm611, %v4508
      %4518 = vst.msk [vmem:[%s4515 + $0x10] sm:$0xff] %vm611, %v4509
      %4519 = vst.msk [vmem:[%s4515 + $0x18] sm:$0xff] %vm611, %v4510
      %4520 = vst.msk [vmem:[%s4515 + $0x20] sm:$0xff] %vm611, %v4511
      %4521 = vst.msk [vmem:[%s4515 + $0x28] sm:$0xff] %vm611, %v4512
      %4522 = vst.msk [vmem:[%s4515 + $0x30] sm:$0xff] %vm611, %v4513
      %4523 = vst.msk [vmem:[%s4515 + $0x38] sm:$0xff] %vm611, %v4514
      %v4524 = vld [vmem:[%s3182] sm:$0xff]
      %v4525 = vld [vmem:[%s3182 + $0x8] sm:$0x3]
      %v4526 = vld [vmem:[%s3182 + $0x10] sm:$0xff]
      %v4527 = vld [vmem:[%s3182 + $0x18] sm:$0x3]
      %v4528 = vld [vmem:[%s3182 + $0x20] sm:$0xff]
      %v4529 = vld [vmem:[%s3182 + $0x28] sm:$0x3]
      %v4530 = vld [vmem:[%s3182 + $0x30] sm:$0xff]
      %v4531 = vld [vmem:[%s3182 + $0x38] sm:$0x3]
      %v4532 = vld [vmem:[%s3182 + $0x40] sm:$0xff]
      %v4533 = vld [vmem:[%s3182 + $0x48] sm:$0x3]
      %v4534 = vld [vmem:[%s3182 + $0x50] sm:$0xff]
      %v4535 = vld [vmem:[%s3182 + $0x58] sm:$0x3]
      %v4536 = vld [vmem:[%s3182 + $0x60] sm:$0xff]
      %v4537 = vld [vmem:[%s3182 + $0x68] sm:$0x3]
      %v4538 = vld [vmem:[%s3182 + $0x70] sm:$0xff]
      %v4539 = vld [vmem:[%s3182 + $0x78] sm:$0x3]
      %v4540 = vld [vmem:[%s3182 + $0x80] sm:$0xff]
      %v4541 = vld [vmem:[%s3182 + $0x88] sm:$0x3]
      %v4542 = vld [vmem:[%s3182 + $0x90] sm:$0xff]
      %v4543 = vld [vmem:[%s3182 + $0x98] sm:$0x3]
      %v4544 = vld [vmem:[%s3873] sm:$0xff]
      %v4545 = vld [vmem:[%s3873 + $0x8] sm:$0x3]
      %v4546 = vld [vmem:[%s3873 + $0x10] sm:$0xff]
      %v4547 = vld [vmem:[%s3873 + $0x18] sm:$0x3]
      %v4548 = vld [vmem:[%s3873 + $0x20] sm:$0xff]
      %v4549 = vld [vmem:[%s3873 + $0x28] sm:$0x3]
      %v4550 = vld [vmem:[%s3873 + $0x30] sm:$0xff]
      %v4551 = vld [vmem:[%s3873 + $0x38] sm:$0x3]
      %v4552 = vld [vmem:[%s3873 + $0x40] sm:$0xff]
      %v4553 = vld [vmem:[%s3873 + $0x48] sm:$0x3]
      %v4554 = vld [vmem:[%s3873 + $0x50] sm:$0xff]
      %v4555 = vld [vmem:[%s3873 + $0x58] sm:$0x3]
      %v4556 = vld [vmem:[%s3873 + $0x60] sm:$0xff]
      %v4557 = vld [vmem:[%s3873 + $0x68] sm:$0x3]
      %v4558 = vld [vmem:[%s3873 + $0x70] sm:$0xff]
      %v4559 = vld [vmem:[%s3873 + $0x78] sm:$0x3]
      %v4560 = vld [vmem:[%s3873 + $0x80] sm:$0xff]
      %v4561 = vld [vmem:[%s3873 + $0x88] sm:$0x3]
      %v4562 = vld [vmem:[%s3873 + $0x90] sm:$0xff]
      %v4563 = vld [vmem:[%s3873 + $0x98] sm:$0x3]
      %v4564 = vld [vmem:[%s341] sm:$0xff]
      %v4565 = vld [vmem:[%s341 + $0x8] sm:$0x3]
      %v4566 = vld [vmem:[%s341 + $0x10] sm:$0xff]
      %v4567 = vld [vmem:[%s341 + $0x18] sm:$0x3]
      %v4568 = vld [vmem:[%s341 + $0x20] sm:$0xff]
      %v4569 = vld [vmem:[%s341 + $0x28] sm:$0x3]
      %v4570 = vld [vmem:[%s341 + $0x30] sm:$0xff]
      %v4571 = vld [vmem:[%s341 + $0x38] sm:$0x3]
      %v4572 = vld [vmem:[%s341 + $0x40] sm:$0xff]
      %v4573 = vld [vmem:[%s341 + $0x48] sm:$0x3]
      %v4574 = vld [vmem:[%s341 + $0x50] sm:$0xff]
      %v4575 = vld [vmem:[%s341 + $0x58] sm:$0x3]
      %v4576 = vld [vmem:[%s341 + $0x60] sm:$0xff]
      %v4577 = vld [vmem:[%s341 + $0x68] sm:$0x3]
      %v4578 = vld [vmem:[%s341 + $0x70] sm:$0xff]
      %v4579 = vld [vmem:[%s341 + $0x78] sm:$0x3]
      %v4580 = vld [vmem:[%s341 + $0x80] sm:$0xff]
      %v4581 = vld [vmem:[%s341 + $0x88] sm:$0x3]
      %v4582 = vld [vmem:[%s341 + $0x90] sm:$0xff]
      %v4583 = vld [vmem:[%s341 + $0x98] sm:$0x3]
      %4604 = vrot.lane.b32.xlu0 %v4544, 4
      %v4605 = vpop.permute.xlu0 %4604
      %4606 = vrot.lane.b32.xlu0 %v4545, 4
      %v4607 = vpop.permute.xlu0 %4606
      %4608 = vrot.lane.b32.xlu0 %v4546, 4
      %v4609 = vpop.permute.xlu0 %4608
      %4610 = vrot.lane.b32.xlu0 %v4547, 4
      %v4611 = vpop.permute.xlu0 %4610
      %4612 = vrot.lane.b32.xlu0 %v4548, 4
      %v4613 = vpop.permute.xlu0 %4612
      %4614 = vrot.lane.b32.xlu0 %v4549, 4
      %v4615 = vpop.permute.xlu0 %4614
      %4616 = vrot.lane.b32.xlu0 %v4550, 4
      %v4617 = vpop.permute.xlu0 %4616
      %4618 = vrot.lane.b32.xlu0 %v4551, 4
      %v4619 = vpop.permute.xlu0 %4618
      %4620 = vrot.lane.b32.xlu0 %v4552, 4
      %v4621 = vpop.permute.xlu0 %4620
      %4622 = vrot.lane.b32.xlu0 %v4553, 4
      %v4623 = vpop.permute.xlu0 %4622
      %4624 = vrot.lane.b32.xlu0 %v4554, 4
      %v4625 = vpop.permute.xlu0 %4624
      %4626 = vrot.lane.b32.xlu0 %v4555, 4
      %v4627 = vpop.permute.xlu0 %4626
      %4628 = vrot.lane.b32.xlu0 %v4556, 4
      %v4629 = vpop.permute.xlu0 %4628
      %4630 = vrot.lane.b32.xlu0 %v4557, 4
      %v4631 = vpop.permute.xlu0 %4630
      %4632 = vrot.lane.b32.xlu0 %v4558, 4
      %v4633 = vpop.permute.xlu0 %4632
      %4634 = vrot.lane.b32.xlu0 %v4559, 4
      %v4635 = vpop.permute.xlu0 %4634
      %4636 = vrot.lane.b32.xlu0 %v4560, 4
      %v4637 = vpop.permute.xlu0 %4636
      %4638 = vrot.lane.b32.xlu0 %v4561, 4
      %v4639 = vpop.permute.xlu0 %4638
      %4640 = vrot.lane.b32.xlu0 %v4562, 4
      %v4641 = vpop.permute.xlu0 %4640
      %4642 = vrot.lane.b32.xlu0 %v4563, 4
      %v4643 = vpop.permute.xlu0 %4642
      %4684 = vrot.lane.b32.xlu0 %v4564, 8
      %v4685 = vpop.permute.xlu0 %4684
      %4686 = vrot.lane.b32.xlu0 %v4565, 8
      %v4687 = vpop.permute.xlu0 %4686
      %4688 = vrot.lane.b32.xlu0 %v4566, 8
      %v4689 = vpop.permute.xlu0 %4688
      %4690 = vrot.lane.b32.xlu0 %v4567, 8
      %v4691 = vpop.permute.xlu0 %4690
      %4692 = vrot.lane.b32.xlu0 %v4568, 8
      %v4693 = vpop.permute.xlu0 %4692
      %4694 = vrot.lane.b32.xlu0 %v4569, 8
      %v4695 = vpop.permute.xlu0 %4694
      %4696 = vrot.lane.b32.xlu0 %v4570, 8
      %v4697 = vpop.permute.xlu0 %4696
      %4698 = vrot.lane.b32.xlu0 %v4571, 8
      %v4699 = vpop.permute.xlu0 %4698
      %4700 = vrot.lane.b32.xlu0 %v4572, 8
      %v4701 = vpop.permute.xlu0 %4700
      %4702 = vrot.lane.b32.xlu0 %v4573, 8
      %v4703 = vpop.permute.xlu0 %4702
      %4704 = vrot.lane.b32.xlu0 %v4574, 8
      %v4705 = vpop.permute.xlu0 %4704
      %4706 = vrot.lane.b32.xlu0 %v4575, 8
      %v4707 = vpop.permute.xlu0 %4706
      %4708 = vrot.lane.b32.xlu0 %v4576, 8
      %v4709 = vpop.permute.xlu0 %4708
      %4710 = vrot.lane.b32.xlu0 %v4577, 8
      %v4711 = vpop.permute.xlu0 %4710
      %4712 = vrot.lane.b32.xlu0 %v4578, 8
      %v4713 = vpop.permute.xlu0 %4712
      %4714 = vrot.lane.b32.xlu0 %v4579, 8
      %v4715 = vpop.permute.xlu0 %4714
      %4716 = vrot.lane.b32.xlu0 %v4580, 8
      %v4717 = vpop.permute.xlu0 %4716
      %4718 = vrot.lane.b32.xlu0 %v4581, 8
      %v4719 = vpop.permute.xlu0 %4718
      %4720 = vrot.lane.b32.xlu0 %v4582, 8
      %v4721 = vpop.permute.xlu0 %4720
      %4722 = vrot.lane.b32.xlu0 %v4583, 8
      %v4723 = vpop.permute.xlu0 %4722
      %v4744 = vsel %vm590, %v4524, %v4605
      %v4745 = vsel %vm590, %v4525, %v4607
      %v4746 = vsel %vm590, %v4526, %v4609
      %v4747 = vsel %vm590, %v4527, %v4611
      %v4748 = vsel %vm590, %v4528, %v4613
      %v4749 = vsel %vm590, %v4529, %v4615
      %v4750 = vsel %vm590, %v4530, %v4617
      %v4751 = vsel %vm590, %v4531, %v4619
      %v4752 = vsel %vm590, %v4532, %v4621
      %v4753 = vsel %vm590, %v4533, %v4623
      %v4754 = vsel %vm590, %v4534, %v4625
      %v4755 = vsel %vm590, %v4535, %v4627
      %v4756 = vsel %vm590, %v4536, %v4629
      %v4757 = vsel %vm590, %v4537, %v4631
      %v4758 = vsel %vm590, %v4538, %v4633
      %v4759 = vsel %vm590, %v4539, %v4635
      %v4760 = vsel %vm590, %v4540, %v4637
      %v4761 = vsel %vm590, %v4541, %v4639
      %v4762 = vsel %vm590, %v4542, %v4641
      %v4763 = vsel %vm590, %v4543, %v4643
      %v4764 = vsel %vm611, %v4744, %v4685
      %v4765 = vsel %vm611, %v4745, %v4687
      %v4766 = vsel %vm611, %v4746, %v4689
      %v4767 = vsel %vm611, %v4747, %v4691
      %v4768 = vsel %vm611, %v4748, %v4693
      %v4769 = vsel %vm611, %v4749, %v4695
      %v4770 = vsel %vm611, %v4750, %v4697
      %v4771 = vsel %vm611, %v4751, %v4699
      %v4772 = vsel %vm611, %v4752, %v4701
      %v4773 = vsel %vm611, %v4753, %v4703
      %v4774 = vsel %vm611, %v4754, %v4705
      %v4775 = vsel %vm611, %v4755, %v4707
      %v4776 = vsel %vm611, %v4756, %v4709
      %v4777 = vsel %vm611, %v4757, %v4711
      %v4778 = vsel %vm611, %v4758, %v4713
      %v4779 = vsel %vm611, %v4759, %v4715
      %v4780 = vsel %vm611, %v4760, %v4717
      %v4781 = vsel %vm611, %v4761, %v4719
      %v4782 = vsel %vm611, %v4762, %v4721
      %v4783 = vsel %vm611, %v4763, %v4723
      %4800 = vrot.lane.b32.xlu0 %v4766, 12
      %v4801 = vpop.permute.xlu0 %4800
      %4802 = vrot.lane.b32.xlu0 %v4767, 12
      %v4803 = vpop.permute.xlu0 %4802
      %4804 = vrot.lane.b32.xlu0 %v4768, 12
      %v4805 = vpop.permute.xlu0 %4804
      %4806 = vrot.lane.b32.xlu0 %v4769, 12
      %v4807 = vpop.permute.xlu0 %4806
      %4808 = vrot.lane.b32.xlu0 %v4770, 12
      %v4809 = vpop.permute.xlu0 %4808
      %4810 = vrot.lane.b32.xlu0 %v4771, 12
      %v4811 = vpop.permute.xlu0 %4810
      %4812 = vrot.lane.b32.xlu0 %v4772, 12
      %v4813 = vpop.permute.xlu0 %4812
      %4814 = vrot.lane.b32.xlu0 %v4773, 12
      %v4815 = vpop.permute.xlu0 %4814
      %4816 = vrot.lane.b32.xlu0 %v4774, 12
      %v4817 = vpop.permute.xlu0 %4816
      %4818 = vrot.lane.b32.xlu0 %v4775, 12
      %v4819 = vpop.permute.xlu0 %4818
      %4820 = vrot.lane.b32.xlu0 %v4776, 12
      %v4821 = vpop.permute.xlu0 %4820
      %4822 = vrot.lane.b32.xlu0 %v4777, 12
      %v4823 = vpop.permute.xlu0 %4822
      %4824 = vrot.lane.b32.xlu0 %v4778, 12
      %v4825 = vpop.permute.xlu0 %4824
      %4826 = vrot.lane.b32.xlu0 %v4779, 12
      %v4827 = vpop.permute.xlu0 %4826
      %4828 = vrot.lane.b32.xlu0 %v4780, 12
      %v4829 = vpop.permute.xlu0 %4828
      %4830 = vrot.lane.b32.xlu0 %v4781, 12
      %v4831 = vpop.permute.xlu0 %4830
      %4850 = vrot.lane.b32.xlu0 %v4768, 24
      %v4851 = vpop.permute.xlu0 %4850
      %4852 = vrot.lane.b32.xlu0 %v4769, 24
      %v4853 = vpop.permute.xlu0 %4852
      %4854 = vrot.lane.b32.xlu0 %v4770, 24
      %v4855 = vpop.permute.xlu0 %4854
      %4856 = vrot.lane.b32.xlu0 %v4771, 24
      %v4857 = vpop.permute.xlu0 %4856
      %4858 = vrot.lane.b32.xlu0 %v4772, 24
      %v4859 = vpop.permute.xlu0 %4858
      %4860 = vrot.lane.b32.xlu0 %v4773, 24
      %v4861 = vpop.permute.xlu0 %4860
      %4862 = vrot.lane.b32.xlu0 %v4774, 24
      %v4863 = vpop.permute.xlu0 %4862
      %4864 = vrot.lane.b32.xlu0 %v4775, 24
      %v4865 = vpop.permute.xlu0 %4864
      %4866 = vrot.lane.b32.xlu0 %v4776, 24
      %v4867 = vpop.permute.xlu0 %4866
      %4868 = vrot.lane.b32.xlu0 %v4777, 24
      %v4869 = vpop.permute.xlu0 %4868
      %4870 = vrot.lane.b32.xlu0 %v4778, 24
      %v4871 = vpop.permute.xlu0 %4870
      %4872 = vrot.lane.b32.xlu0 %v4779, 24
      %v4873 = vpop.permute.xlu0 %4872
      %4874 = vrot.lane.b32.xlu0 %v4780, 24
      %v4875 = vpop.permute.xlu0 %4874
      %4876 = vrot.lane.b32.xlu0 %v4781, 24
      %v4877 = vpop.permute.xlu0 %4876
      %4878 = vrot.lane.b32.xlu0 %v4782, 24
      %v4879 = vpop.permute.xlu0 %4878
      %4880 = vrot.lane.b32.xlu0 %v4783, 24
      %v4881 = vpop.permute.xlu0 %4880
      %v4898 = vsel %vm746, %v4764, %v4801
      %v4899 = vsel %vm746, %v4765, %v4803
      %v4900 = vsel %vm746, %v4766, %v4805
      %v4901 = vsel %vm746, %v4767, %v4807
      %v4902 = vsel %vm746, %v4768, %v4809
      %v4903 = vsel %vm746, %v4769, %v4811
      %v4904 = vsel %vm746, %v4770, %v4813
      %v4905 = vsel %vm746, %v4771, %v4815
      %v4906 = vsel %vm746, %v4772, %v4817
      %v4907 = vsel %vm746, %v4773, %v4819
      %v4908 = vsel %vm746, %v4774, %v4821
      %v4909 = vsel %vm746, %v4775, %v4823
      %v4910 = vsel %vm746, %v4776, %v4825
      %v4911 = vsel %vm746, %v4777, %v4827
      %v4912 = vsel %vm746, %v4778, %v4829
      %v4913 = vsel %vm746, %v4779, %v4831
      %v4914 = vsel %vm763, %v4898, %v4851
      %v4915 = vsel %vm763, %v4899, %v4853
      %v4916 = vsel %vm763, %v4900, %v4855
      %v4917 = vsel %vm763, %v4901, %v4857
      %v4918 = vsel %vm763, %v4902, %v4859
      %v4919 = vsel %vm763, %v4903, %v4861
      %v4920 = vsel %vm763, %v4904, %v4863
      %v4921 = vsel %vm763, %v4905, %v4865
      %v4922 = vsel %vm763, %v4906, %v4867
      %v4923 = vsel %vm763, %v4907, %v4869
      %v4924 = vsel %vm763, %v4908, %v4871
      %v4925 = vsel %vm763, %v4909, %v4873
      %v4926 = vsel %vm763, %v4910, %v4875
      %v4927 = vsel %vm763, %v4911, %v4877
      %v4928 = vsel %vm763, %v4912, %v4879
      %v4929 = vsel %vm763, %v4913, %v4881
      %v4930 = vld [vmem:[%s3] sm:$0xff]
      %v4931 = vld [vmem:[%s3 + $0x8] sm:$0xff]
      %v4932 = vld [vmem:[%s3 + $0x10] sm:$0xff]
      %v4933 = vld [vmem:[%s3 + $0x18] sm:$0xff]
      %v4934 = vld [vmem:[%s3 + $0x20] sm:$0xf]
      %v4951 = vrot.slane %v4914, 1
      %v4952 = vrot.slane %v4915, 1
      %v4953 = vsel %vm801, %v4951, %v4952
      %v4954 = vrot.slane %v4916, 1
      %v4955 = vrot.slane %v4917, 1
      %v4956 = vsel %vm801, %v4954, %v4955
      %v4957 = vrot.slane %v4918, 1
      %v4958 = vrot.slane %v4919, 1
      %v4959 = vsel %vm801, %v4957, %v4958
      %v4960 = vrot.slane %v4920, 1
      %v4961 = vrot.slane %v4921, 1
      %v4962 = vsel %vm801, %v4960, %v4961
      %v4963 = vrot.slane %v4922, 1
      %v4964 = vrot.slane %v4923, 1
      %v4965 = vsel %vm801, %v4963, %v4964
      %v4966 = vrot.slane %v4924, 1
      %v4967 = vrot.slane %v4925, 1
      %v4968 = vsel %vm801, %v4966, %v4967
      %v4969 = vrot.slane %v4926, 1
      %v4970 = vrot.slane %v4927, 1
      %v4971 = vsel %vm801, %v4969, %v4970
      %v4972 = vrot.slane %v4928, 1
      %v4973 = vrot.slane %v4929, 1
      %v4974 = vsel %vm801, %v4972, %v4973
      %v4975 = vld [vmem:[%s826] sm:$0xff]
      %v4976 = vld [vmem:[%s826 + $0x8] sm:$0xff]
      %v4977 = vld [vmem:[%s826 + $0x10] sm:$0xff]
      %v4978 = vld [vmem:[%s826 + $0x18] sm:$0xff]
      %v4979 = vld [vmem:[%s826 + $0x20] sm:$0xf]
      %v4980 = vsel %vm832, %v4953, 0
      %v4982 = vsel %vm832, %v4956, 0
      %v4984 = vsel %vm832, %v4959, 0
      %v4986 = vsel %vm832, %v4962, 0
      %v4988 = vsel %vm832, %v4965, 0
      %v4990 = vsel %vm832, %v4968, 0
      %v4992 = vsel %vm832, %v4971, 0
      %v4994 = vsel %vm832, %v4974, 0
      %v4997 = vsel %vm849, %v4979, 0
      %4999 = vmatpush.msra.mxu0 0.0
      %5000 = vmatpush.msra.mxu0 0.0
      %5001 = vmatpush.msra.mxu0 0.0
      %5002 = vmatpush.msra.mxu0 0.0
      %5003 = vmatpush.msra.mxu0 0.0
      %5004 = vmatpush.msra.mxu0 0.0
      %5005 = vmatpush.msra.mxu0 0.0
      %5006 = vmatpush.msra.mxu0 0.0
      %5007 = vmatpush.msra.mxu0 0.0
      %5008 = vmatpush.msra.mxu0 0.0
      %5009 = vmatpush.msra.mxu0 0.0
      %5010 = vmatpush.msra.mxu0 %v4997
      %5011 = vmatpush.msra.mxu0 %v4978
      %5012 = vmatpush.msra.mxu0 %v4977
      %5013 = vmatpush.msra.mxu0 %v4976
      %5014 = vmatpush.msra.mxu0 %v4975
      %5015 = vmatmul.f32.gmra.mxu0 %v4980
      %v5016 = vpop.f32.mrf.mxu0
      %v5017 = vadd.f32 0.0, %v5016
      %5018 = vmatmul.f32.gmra.mxu0 %v4982
      %v5019 = vpop.f32.mrf.mxu0
      %v5020 = vadd.f32 0.0, %v5019
      %5021 = vmatmul.f32.gmra.mxu0 %v4984
      %v5022 = vpop.f32.mrf.mxu0
      %v5023 = vadd.f32 0.0, %v5022
      %5024 = vmatmul.f32.gmra.mxu0 %v4986
      %v5025 = vpop.f32.mrf.mxu0
      %v5026 = vadd.f32 0.0, %v5025
      %5027 = vmatmul.f32.gmra.mxu0 %v4988
      %v5028 = vpop.f32.mrf.mxu0
      %v5029 = vadd.f32 0.0, %v5028
      %5030 = vmatmul.f32.gmra.mxu0 %v4990
      %v5031 = vpop.f32.mrf.mxu0
      %v5032 = vadd.f32 0.0, %v5031
      %5033 = vmatmul.f32.gmra.mxu0 %v4992
      %v5034 = vpop.f32.mrf.mxu0
      %v5035 = vadd.f32 0.0, %v5034
      %5036 = vmatmul.f32.gmra.mxu0 %v4994
      %v5037 = vpop.f32.mrf.mxu0
      %v5038 = vadd.f32 0.0, %v5037
      %5039 = vdwg.mxu0
      %v5040 = vsel %vm832, %v4914, 0
      %v5042 = vsel %vm832, %v4916, 0
      %v5044 = vsel %vm832, %v4918, 0
      %v5046 = vsel %vm832, %v4920, 0
      %v5048 = vsel %vm832, %v4922, 0
      %v5050 = vsel %vm832, %v4924, 0
      %v5052 = vsel %vm832, %v4926, 0
      %v5054 = vsel %vm832, %v4928, 0
      %v5057 = vsel %vm849, %v4934, 0
      %5059 = vmatpush.msra.mxu0 0.0
      %5060 = vmatpush.msra.mxu0 0.0
      %5061 = vmatpush.msra.mxu0 0.0
      %5062 = vmatpush.msra.mxu0 0.0
      %5063 = vmatpush.msra.mxu0 0.0
      %5064 = vmatpush.msra.mxu0 0.0
      %5065 = vmatpush.msra.mxu0 0.0
      %5066 = vmatpush.msra.mxu0 0.0
      %5067 = vmatpush.msra.mxu0 0.0
      %5068 = vmatpush.msra.mxu0 0.0
      %5069 = vmatpush.msra.mxu0 0.0
      %5070 = vmatpush.msra.mxu0 %v5057
      %5071 = vmatpush.msra.mxu0 %v4933
      %5072 = vmatpush.msra.mxu0 %v4932
      %5073 = vmatpush.msra.mxu0 %v4931
      %5074 = vmatpush.msra.mxu0 %v4930
      %5075 = vmatmul.f32.gmra.mxu0 %v5040
      %v5076 = vpop.f32.mrf.mxu0
      %v5077 = vadd.f32 %v5017, %v5076
      %5078 = vmatmul.f32.gmra.mxu0 %v5042
      %v5079 = vpop.f32.mrf.mxu0
      %v5080 = vadd.f32 %v5020, %v5079
      %5081 = vmatmul.f32.gmra.mxu0 %v5044
      %v5082 = vpop.f32.mrf.mxu0
      %v5083 = vadd.f32 %v5023, %v5082
      %5084 = vmatmul.f32.gmra.mxu0 %v5046
      %v5085 = vpop.f32.mrf.mxu0
      %v5086 = vadd.f32 %v5026, %v5085
      %5087 = vmatmul.f32.gmra.mxu0 %v5048
      %v5088 = vpop.f32.mrf.mxu0
      %v5089 = vadd.f32 %v5029, %v5088
      %5090 = vmatmul.f32.gmra.mxu0 %v5050
      %v5091 = vpop.f32.mrf.mxu0
      %v5092 = vadd.f32 %v5032, %v5091
      %5093 = vmatmul.f32.gmra.mxu0 %v5052
      %v5094 = vpop.f32.mrf.mxu0
      %v5095 = vadd.f32 %v5035, %v5094
      %5096 = vmatmul.f32.gmra.mxu0 %v5054
      %v5097 = vpop.f32.mrf.mxu0
      %v5098 = vadd.f32 %v5038, %v5097
      %5099 = vdwg.mxu0
      %v5100 = vrot.slane %v4914, 2
      %v5101 = vrot.slane %v4915, 2
      %v5102 = vsel %vm954, %v5100, %v5101
      %v5103 = vrot.slane %v4916, 2
      %v5104 = vrot.slane %v4917, 2
      %v5105 = vsel %vm954, %v5103, %v5104
      %v5106 = vrot.slane %v4918, 2
      %v5107 = vrot.slane %v4919, 2
      %v5108 = vsel %vm954, %v5106, %v5107
      %v5109 = vrot.slane %v4920, 2
      %v5110 = vrot.slane %v4921, 2
      %v5111 = vsel %vm954, %v5109, %v5110
      %v5112 = vrot.slane %v4922, 2
      %v5113 = vrot.slane %v4923, 2
      %v5114 = vsel %vm954, %v5112, %v5113
      %v5115 = vrot.slane %v4924, 2
      %v5116 = vrot.slane %v4925, 2
      %v5117 = vsel %vm954, %v5115, %v5116
      %v5118 = vrot.slane %v4926, 2
      %v5119 = vrot.slane %v4927, 2
      %v5120 = vsel %vm954, %v5118, %v5119
      %v5121 = vrot.slane %v4928, 2
      %v5122 = vrot.slane %v4929, 2
      %v5123 = vsel %vm954, %v5121, %v5122
      %v5124 = vld [vmem:[%s979] sm:$0xff]
      %v5125 = vld [vmem:[%s979 + $0x8] sm:$0xff]
      %v5126 = vld [vmem:[%s979 + $0x10] sm:$0xff]
      %v5127 = vld [vmem:[%s979 + $0x18] sm:$0xff]
      %v5128 = vld [vmem:[%s979 + $0x20] sm:$0xf]
      %v5129 = vsel %vm832, %v5102, 0
      %v5131 = vsel %vm832, %v5105, 0
      %v5133 = vsel %vm832, %v5108, 0
      %v5135 = vsel %vm832, %v5111, 0
      %v5137 = vsel %vm832, %v5114, 0
      %v5139 = vsel %vm832, %v5117, 0
      %v5141 = vsel %vm832, %v5120, 0
      %v5143 = vsel %vm832, %v5123, 0
      %v5146 = vsel %vm849, %v5128, 0
      %5148 = vmatpush.msra.mxu0 0.0
      %5149 = vmatpush.msra.mxu0 0.0
      %5150 = vmatpush.msra.mxu0 0.0
      %5151 = vmatpush.msra.mxu0 0.0
      %5152 = vmatpush.msra.mxu0 0.0
      %5153 = vmatpush.msra.mxu0 0.0
      %5154 = vmatpush.msra.mxu0 0.0
      %5155 = vmatpush.msra.mxu0 0.0
      %5156 = vmatpush.msra.mxu0 0.0
      %5157 = vmatpush.msra.mxu0 0.0
      %5158 = vmatpush.msra.mxu0 0.0
      %5159 = vmatpush.msra.mxu0 %v5146
      %5160 = vmatpush.msra.mxu0 %v5127
      %5161 = vmatpush.msra.mxu0 %v5126
      %5162 = vmatpush.msra.mxu0 %v5125
      %5163 = vmatpush.msra.mxu0 %v5124
      %5164 = vmatmul.f32.gmra.mxu0 %v5129
      %v5165 = vpop.f32.mrf.mxu0
      %v5166 = vadd.f32 0.0, %v5165
      %5167 = vmatmul.f32.gmra.mxu0 %v5131
      %v5168 = vpop.f32.mrf.mxu0
      %v5169 = vadd.f32 0.0, %v5168
      %5170 = vmatmul.f32.gmra.mxu0 %v5133
      %v5171 = vpop.f32.mrf.mxu0
      %v5172 = vadd.f32 0.0, %v5171
      %5173 = vmatmul.f32.gmra.mxu0 %v5135
      %v5174 = vpop.f32.mrf.mxu0
      %v5175 = vadd.f32 0.0, %v5174
      %5176 = vmatmul.f32.gmra.mxu0 %v5137
      %v5177 = vpop.f32.mrf.mxu0
      %v5178 = vadd.f32 0.0, %v5177
      %5179 = vmatmul.f32.gmra.mxu0 %v5139
      %v5180 = vpop.f32.mrf.mxu0
      %v5181 = vadd.f32 0.0, %v5180
      %5182 = vmatmul.f32.gmra.mxu0 %v5141
      %v5183 = vpop.f32.mrf.mxu0
      %v5184 = vadd.f32 0.0, %v5183
      %5185 = vmatmul.f32.gmra.mxu0 %v5143
      %v5186 = vpop.f32.mrf.mxu0
      %v5187 = vadd.f32 0.0, %v5186
      %5188 = vdwg.mxu0
      %v5189 = vadd.f32 %v5077, %v5166
      %v5190 = vadd.f32 %v5080, %v5169
      %v5191 = vadd.f32 %v5083, %v5172
      %v5192 = vadd.f32 %v5086, %v5175
      %v5193 = vadd.f32 %v5089, %v5178
      %v5194 = vadd.f32 %v5092, %v5181
      %v5195 = vadd.f32 %v5095, %v5184
      %v5196 = vadd.f32 %v5098, %v5187
      %v5197 = vmax.f32 %v5189, 0.0
      %v5198 = vmax.f32 %v5190, 0.0
      %v5199 = vmax.f32 %v5191, 0.0
      %v5200 = vmax.f32 %v5192, 0.0
      %v5201 = vmax.f32 %v5193, 0.0
      %v5202 = vmax.f32 %v5194, 0.0
      %v5203 = vmax.f32 %v5195, 0.0
      %v5204 = vmax.f32 %v5196, 0.0
      %s5205 = scalar_lea.vmem %s366, 384
      %5206 = vst.msk [vmem:[%s5205] sm:$0xff] %vm611, %v5197
      %5207 = vst.msk [vmem:[%s5205 + $0x8] sm:$0xff] %vm611, %v5198
      %5208 = vst.msk [vmem:[%s5205 + $0x10] sm:$0xff] %vm611, %v5199
      %5209 = vst.msk [vmem:[%s5205 + $0x18] sm:$0xff] %vm611, %v5200
      %5210 = vst.msk [vmem:[%s5205 + $0x20] sm:$0xff] %vm611, %v5201
      %5211 = vst.msk [vmem:[%s5205 + $0x28] sm:$0xff] %vm611, %v5202
      %5212 = vst.msk [vmem:[%s5205 + $0x30] sm:$0xff] %vm611, %v5203
      %5213 = vst.msk [vmem:[%s5205 + $0x38] sm:$0xff] %vm611, %v5204
      %v5214 = vld [vmem:[%s3873] sm:$0xff]
      %v5215 = vld [vmem:[%s3873 + $0x8] sm:$0x3]
      %v5216 = vld [vmem:[%s3873 + $0x10] sm:$0xff]
      %v5217 = vld [vmem:[%s3873 + $0x18] sm:$0x3]
      %v5218 = vld [vmem:[%s3873 + $0x20] sm:$0xff]
      %v5219 = vld [vmem:[%s3873 + $0x28] sm:$0x3]
      %v5220 = vld [vmem:[%s3873 + $0x30] sm:$0xff]
      %v5221 = vld [vmem:[%s3873 + $0x38] sm:$0x3]
      %v5222 = vld [vmem:[%s3873 + $0x40] sm:$0xff]
      %v5223 = vld [vmem:[%s3873 + $0x48] sm:$0x3]
      %v5224 = vld [vmem:[%s3873 + $0x50] sm:$0xff]
      %v5225 = vld [vmem:[%s3873 + $0x58] sm:$0x3]
      %v5226 = vld [vmem:[%s3873 + $0x60] sm:$0xff]
      %v5227 = vld [vmem:[%s3873 + $0x68] sm:$0x3]
      %v5228 = vld [vmem:[%s3873 + $0x70] sm:$0xff]
      %v5229 = vld [vmem:[%s3873 + $0x78] sm:$0x3]
      %v5230 = vld [vmem:[%s3873 + $0x80] sm:$0xff]
      %v5231 = vld [vmem:[%s3873 + $0x88] sm:$0x3]
      %v5232 = vld [vmem:[%s3873 + $0x90] sm:$0xff]
      %v5233 = vld [vmem:[%s3873 + $0x98] sm:$0x3]
      %v5234 = vld [vmem:[%s341] sm:$0xff]
      %v5235 = vld [vmem:[%s341 + $0x8] sm:$0x3]
      %v5236 = vld [vmem:[%s341 + $0x10] sm:$0xff]
      %v5237 = vld [vmem:[%s341 + $0x18] sm:$0x3]
      %v5238 = vld [vmem:[%s341 + $0x20] sm:$0xff]
      %v5239 = vld [vmem:[%s341 + $0x28] sm:$0x3]
      %v5240 = vld [vmem:[%s341 + $0x30] sm:$0xff]
      %v5241 = vld [vmem:[%s341 + $0x38] sm:$0x3]
      %v5242 = vld [vmem:[%s341 + $0x40] sm:$0xff]
      %v5243 = vld [vmem:[%s341 + $0x48] sm:$0x3]
      %v5244 = vld [vmem:[%s341 + $0x50] sm:$0xff]
      %v5245 = vld [vmem:[%s341 + $0x58] sm:$0x3]
      %v5246 = vld [vmem:[%s341 + $0x60] sm:$0xff]
      %v5247 = vld [vmem:[%s341 + $0x68] sm:$0x3]
      %v5248 = vld [vmem:[%s341 + $0x70] sm:$0xff]
      %v5249 = vld [vmem:[%s341 + $0x78] sm:$0x3]
      %v5250 = vld [vmem:[%s341 + $0x80] sm:$0xff]
      %v5251 = vld [vmem:[%s341 + $0x88] sm:$0x3]
      %v5252 = vld [vmem:[%s341 + $0x90] sm:$0xff]
      %v5253 = vld [vmem:[%s341 + $0x98] sm:$0x3]
      %v5254 = vld [vmem:[%s354] sm:$0xff]
      %v5255 = vld [vmem:[%s354 + $0x8] sm:$0x3]
      %v5256 = vld [vmem:[%s354 + $0x10] sm:$0xff]
      %v5257 = vld [vmem:[%s354 + $0x18] sm:$0x3]
      %v5258 = vld [vmem:[%s354 + $0x20] sm:$0xff]
      %v5259 = vld [vmem:[%s354 + $0x28] sm:$0x3]
      %v5260 = vld [vmem:[%s354 + $0x30] sm:$0xff]
      %v5261 = vld [vmem:[%s354 + $0x38] sm:$0x3]
      %v5262 = vld [vmem:[%s354 + $0x40] sm:$0xff]
      %v5263 = vld [vmem:[%s354 + $0x48] sm:$0x3]
      %v5264 = vld [vmem:[%s354 + $0x50] sm:$0xff]
      %v5265 = vld [vmem:[%s354 + $0x58] sm:$0x3]
      %v5266 = vld [vmem:[%s354 + $0x60] sm:$0xff]
      %v5267 = vld [vmem:[%s354 + $0x68] sm:$0x3]
      %v5268 = vld [vmem:[%s354 + $0x70] sm:$0xff]
      %v5269 = vld [vmem:[%s354 + $0x78] sm:$0x3]
      %v5270 = vld [vmem:[%s354 + $0x80] sm:$0xff]
      %v5271 = vld [vmem:[%s354 + $0x88] sm:$0x3]
      %v5272 = vld [vmem:[%s354 + $0x90] sm:$0xff]
      %v5273 = vld [vmem:[%s354 + $0x98] sm:$0x3]
      %5294 = vrot.lane.b32.xlu0 %v5234, 4
      %v5295 = vpop.permute.xlu0 %5294
      %5296 = vrot.lane.b32.xlu0 %v5235, 4
      %v5297 = vpop.permute.xlu0 %5296
      %5298 = vrot.lane.b32.xlu0 %v5236, 4
      %v5299 = vpop.permute.xlu0 %5298
      %5300 = vrot.lane.b32.xlu0 %v5237, 4
      %v5301 = vpop.permute.xlu0 %5300
      %5302 = vrot.lane.b32.xlu0 %v5238, 4
      %v5303 = vpop.permute.xlu0 %5302
      %5304 = vrot.lane.b32.xlu0 %v5239, 4
      %v5305 = vpop.permute.xlu0 %5304
      %5306 = vrot.lane.b32.xlu0 %v5240, 4
      %v5307 = vpop.permute.xlu0 %5306
      %5308 = vrot.lane.b32.xlu0 %v5241, 4
      %v5309 = vpop.permute.xlu0 %5308
      %5310 = vrot.lane.b32.xlu0 %v5242, 4
      %v5311 = vpop.permute.xlu0 %5310
      %5312 = vrot.lane.b32.xlu0 %v5243, 4
      %v5313 = vpop.permute.xlu0 %5312
      %5314 = vrot.lane.b32.xlu0 %v5244, 4
      %v5315 = vpop.permute.xlu0 %5314
      %5316 = vrot.lane.b32.xlu0 %v5245, 4
      %v5317 = vpop.permute.xlu0 %5316
      %5318 = vrot.lane.b32.xlu0 %v5246, 4
      %v5319 = vpop.permute.xlu0 %5318
      %5320 = vrot.lane.b32.xlu0 %v5247, 4
      %v5321 = vpop.permute.xlu0 %5320
      %5322 = vrot.lane.b32.xlu0 %v5248, 4
      %v5323 = vpop.permute.xlu0 %5322
      %5324 = vrot.lane.b32.xlu0 %v5249, 4
      %v5325 = vpop.permute.xlu0 %5324
      %5326 = vrot.lane.b32.xlu0 %v5250, 4
      %v5327 = vpop.permute.xlu0 %5326
      %5328 = vrot.lane.b32.xlu0 %v5251, 4
      %v5329 = vpop.permute.xlu0 %5328
      %5330 = vrot.lane.b32.xlu0 %v5252, 4
      %v5331 = vpop.permute.xlu0 %5330
      %5332 = vrot.lane.b32.xlu0 %v5253, 4
      %v5333 = vpop.permute.xlu0 %5332
      %5374 = vrot.lane.b32.xlu0 %v5254, 8
      %v5375 = vpop.permute.xlu0 %5374
      %5376 = vrot.lane.b32.xlu0 %v5255, 8
      %v5377 = vpop.permute.xlu0 %5376
      %5378 = vrot.lane.b32.xlu0 %v5256, 8
      %v5379 = vpop.permute.xlu0 %5378
      %5380 = vrot.lane.b32.xlu0 %v5257, 8
      %v5381 = vpop.permute.xlu0 %5380
      %5382 = vrot.lane.b32.xlu0 %v5258, 8
      %v5383 = vpop.permute.xlu0 %5382
      %5384 = vrot.lane.b32.xlu0 %v5259, 8
      %v5385 = vpop.permute.xlu0 %5384
      %5386 = vrot.lane.b32.xlu0 %v5260, 8
      %v5387 = vpop.permute.xlu0 %5386
      %5388 = vrot.lane.b32.xlu0 %v5261, 8
      %v5389 = vpop.permute.xlu0 %5388
      %5390 = vrot.lane.b32.xlu0 %v5262, 8
      %v5391 = vpop.permute.xlu0 %5390
      %5392 = vrot.lane.b32.xlu0 %v5263, 8
      %v5393 = vpop.permute.xlu0 %5392
      %5394 = vrot.lane.b32.xlu0 %v5264, 8
      %v5395 = vpop.permute.xlu0 %5394
      %5396 = vrot.lane.b32.xlu0 %v5265, 8
      %v5397 = vpop.permute.xlu0 %5396
      %5398 = vrot.lane.b32.xlu0 %v5266, 8
      %v5399 = vpop.permute.xlu0 %5398
      %5400 = vrot.lane.b32.xlu0 %v5267, 8
      %v5401 = vpop.permute.xlu0 %5400
      %5402 = vrot.lane.b32.xlu0 %v5268, 8
      %v5403 = vpop.permute.xlu0 %5402
      %5404 = vrot.lane.b32.xlu0 %v5269, 8
      %v5405 = vpop.permute.xlu0 %5404
      %5406 = vrot.lane.b32.xlu0 %v5270, 8
      %v5407 = vpop.permute.xlu0 %5406
      %5408 = vrot.lane.b32.xlu0 %v5271, 8
      %v5409 = vpop.permute.xlu0 %5408
      %5410 = vrot.lane.b32.xlu0 %v5272, 8
      %v5411 = vpop.permute.xlu0 %5410
      %5412 = vrot.lane.b32.xlu0 %v5273, 8
      %v5413 = vpop.permute.xlu0 %5412
      %v5434 = vsel %vm590, %v5214, %v5295
      %v5435 = vsel %vm590, %v5215, %v5297
      %v5436 = vsel %vm590, %v5216, %v5299
      %v5437 = vsel %vm590, %v5217, %v5301
      %v5438 = vsel %vm590, %v5218, %v5303
      %v5439 = vsel %vm590, %v5219, %v5305
      %v5440 = vsel %vm590, %v5220, %v5307
      %v5441 = vsel %vm590, %v5221, %v5309
      %v5442 = vsel %vm590, %v5222, %v5311
      %v5443 = vsel %vm590, %v5223, %v5313
      %v5444 = vsel %vm590, %v5224, %v5315
      %v5445 = vsel %vm590, %v5225, %v5317
      %v5446 = vsel %vm590, %v5226, %v5319
      %v5447 = vsel %vm590, %v5227, %v5321
      %v5448 = vsel %vm590, %v5228, %v5323
      %v5449 = vsel %vm590, %v5229, %v5325
      %v5450 = vsel %vm590, %v5230, %v5327
      %v5451 = vsel %vm590, %v5231, %v5329
      %v5452 = vsel %vm590, %v5232, %v5331
      %v5453 = vsel %vm590, %v5233, %v5333
      %v5454 = vsel %vm611, %v5434, %v5375
      %v5455 = vsel %vm611, %v5435, %v5377
      %v5456 = vsel %vm611, %v5436, %v5379
      %v5457 = vsel %vm611, %v5437, %v5381
      %v5458 = vsel %vm611, %v5438, %v5383
      %v5459 = vsel %vm611, %v5439, %v5385
      %v5460 = vsel %vm611, %v5440, %v5387
      %v5461 = vsel %vm611, %v5441, %v5389
      %v5462 = vsel %vm611, %v5442, %v5391
      %v5463 = vsel %vm611, %v5443, %v5393
      %v5464 = vsel %vm611, %v5444, %v5395
      %v5465 = vsel %vm611, %v5445, %v5397
      %v5466 = vsel %vm611, %v5446, %v5399
      %v5467 = vsel %vm611, %v5447, %v5401
      %v5468 = vsel %vm611, %v5448, %v5403
      %v5469 = vsel %vm611, %v5449, %v5405
      %v5470 = vsel %vm611, %v5450, %v5407
      %v5471 = vsel %vm611, %v5451, %v5409
      %v5472 = vsel %vm611, %v5452, %v5411
      %v5473 = vsel %vm611, %v5453, %v5413
      %5490 = vrot.lane.b32.xlu0 %v5456, 12
      %v5491 = vpop.permute.xlu0 %5490
      %5492 = vrot.lane.b32.xlu0 %v5457, 12
      %v5493 = vpop.permute.xlu0 %5492
      %5494 = vrot.lane.b32.xlu0 %v5458, 12
      %v5495 = vpop.permute.xlu0 %5494
      %5496 = vrot.lane.b32.xlu0 %v5459, 12
      %v5497 = vpop.permute.xlu0 %5496
      %5498 = vrot.lane.b32.xlu0 %v5460, 12
      %v5499 = vpop.permute.xlu0 %5498
      %5500 = vrot.lane.b32.xlu0 %v5461, 12
      %v5501 = vpop.permute.xlu0 %5500
      %5502 = vrot.lane.b32.xlu0 %v5462, 12
      %v5503 = vpop.permute.xlu0 %5502
      %5504 = vrot.lane.b32.xlu0 %v5463, 12
      %v5505 = vpop.permute.xlu0 %5504
      %5506 = vrot.lane.b32.xlu0 %v5464, 12
      %v5507 = vpop.permute.xlu0 %5506
      %5508 = vrot.lane.b32.xlu0 %v5465, 12
      %v5509 = vpop.permute.xlu0 %5508
      %5510 = vrot.lane.b32.xlu0 %v5466, 12
      %v5511 = vpop.permute.xlu0 %5510
      %5512 = vrot.lane.b32.xlu0 %v5467, 12
      %v5513 = vpop.permute.xlu0 %5512
      %5514 = vrot.lane.b32.xlu0 %v5468, 12
      %v5515 = vpop.permute.xlu0 %5514
      %5516 = vrot.lane.b32.xlu0 %v5469, 12
      %v5517 = vpop.permute.xlu0 %5516
      %5518 = vrot.lane.b32.xlu0 %v5470, 12
      %v5519 = vpop.permute.xlu0 %5518
      %5520 = vrot.lane.b32.xlu0 %v5471, 12
      %v5521 = vpop.permute.xlu0 %5520
      %5540 = vrot.lane.b32.xlu0 %v5458, 24
      %v5541 = vpop.permute.xlu0 %5540
      %5542 = vrot.lane.b32.xlu0 %v5459, 24
      %v5543 = vpop.permute.xlu0 %5542
      %5544 = vrot.lane.b32.xlu0 %v5460, 24
      %v5545 = vpop.permute.xlu0 %5544
      %5546 = vrot.lane.b32.xlu0 %v5461, 24
      %v5547 = vpop.permute.xlu0 %5546
      %5548 = vrot.lane.b32.xlu0 %v5462, 24
      %v5549 = vpop.permute.xlu0 %5548
      %5550 = vrot.lane.b32.xlu0 %v5463, 24
      %v5551 = vpop.permute.xlu0 %5550
      %5552 = vrot.lane.b32.xlu0 %v5464, 24
      %v5553 = vpop.permute.xlu0 %5552
      %5554 = vrot.lane.b32.xlu0 %v5465, 24
      %v5555 = vpop.permute.xlu0 %5554
      %5556 = vrot.lane.b32.xlu0 %v5466, 24
      %v5557 = vpop.permute.xlu0 %5556
      %5558 = vrot.lane.b32.xlu0 %v5467, 24
      %v5559 = vpop.permute.xlu0 %5558
      %5560 = vrot.lane.b32.xlu0 %v5468, 24
      %v5561 = vpop.permute.xlu0 %5560
      %5562 = vrot.lane.b32.xlu0 %v5469, 24
      %v5563 = vpop.permute.xlu0 %5562
      %5564 = vrot.lane.b32.xlu0 %v5470, 24
      %v5565 = vpop.permute.xlu0 %5564
      %5566 = vrot.lane.b32.xlu0 %v5471, 24
      %v5567 = vpop.permute.xlu0 %5566
      %5568 = vrot.lane.b32.xlu0 %v5472, 24
      %v5569 = vpop.permute.xlu0 %5568
      %5570 = vrot.lane.b32.xlu0 %v5473, 24
      %v5571 = vpop.permute.xlu0 %5570
      %v5588 = vsel %vm746, %v5454, %v5491
      %v5589 = vsel %vm746, %v5455, %v5493
      %v5590 = vsel %vm746, %v5456, %v5495
      %v5591 = vsel %vm746, %v5457, %v5497
      %v5592 = vsel %vm746, %v5458, %v5499
      %v5593 = vsel %vm746, %v5459, %v5501
      %v5594 = vsel %vm746, %v5460, %v5503
      %v5595 = vsel %vm746, %v5461, %v5505
      %v5596 = vsel %vm746, %v5462, %v5507
      %v5597 = vsel %vm746, %v5463, %v5509
      %v5598 = vsel %vm746, %v5464, %v5511
      %v5599 = vsel %vm746, %v5465, %v5513
      %v5600 = vsel %vm746, %v5466, %v5515
      %v5601 = vsel %vm746, %v5467, %v5517
      %v5602 = vsel %vm746, %v5468, %v5519
      %v5603 = vsel %vm746, %v5469, %v5521
      %v5604 = vsel %vm763, %v5588, %v5541
      %v5605 = vsel %vm763, %v5589, %v5543
      %v5606 = vsel %vm763, %v5590, %v5545
      %v5607 = vsel %vm763, %v5591, %v5547
      %v5608 = vsel %vm763, %v5592, %v5549
      %v5609 = vsel %vm763, %v5593, %v5551
      %v5610 = vsel %vm763, %v5594, %v5553
      %v5611 = vsel %vm763, %v5595, %v5555
      %v5612 = vsel %vm763, %v5596, %v5557
      %v5613 = vsel %vm763, %v5597, %v5559
      %v5614 = vsel %vm763, %v5598, %v5561
      %v5615 = vsel %vm763, %v5599, %v5563
      %v5616 = vsel %vm763, %v5600, %v5565
      %v5617 = vsel %vm763, %v5601, %v5567
      %v5618 = vsel %vm763, %v5602, %v5569
      %v5619 = vsel %vm763, %v5603, %v5571
      %v5620 = vld [vmem:[%s3] sm:$0xff]
      %v5621 = vld [vmem:[%s3 + $0x8] sm:$0xff]
      %v5622 = vld [vmem:[%s3 + $0x10] sm:$0xff]
      %v5623 = vld [vmem:[%s3 + $0x18] sm:$0xff]
      %v5624 = vld [vmem:[%s3 + $0x20] sm:$0xf]
      %v5641 = vrot.slane %v5604, 1
      %v5642 = vrot.slane %v5605, 1
      %v5643 = vsel %vm801, %v5641, %v5642
      %v5644 = vrot.slane %v5606, 1
      %v5645 = vrot.slane %v5607, 1
      %v5646 = vsel %vm801, %v5644, %v5645
      %v5647 = vrot.slane %v5608, 1
      %v5648 = vrot.slane %v5609, 1
      %v5649 = vsel %vm801, %v5647, %v5648
      %v5650 = vrot.slane %v5610, 1
      %v5651 = vrot.slane %v5611, 1
      %v5652 = vsel %vm801, %v5650, %v5651
      %v5653 = vrot.slane %v5612, 1
      %v5654 = vrot.slane %v5613, 1
      %v5655 = vsel %vm801, %v5653, %v5654
      %v5656 = vrot.slane %v5614, 1
      %v5657 = vrot.slane %v5615, 1
      %v5658 = vsel %vm801, %v5656, %v5657
      %v5659 = vrot.slane %v5616, 1
      %v5660 = vrot.slane %v5617, 1
      %v5661 = vsel %vm801, %v5659, %v5660
      %v5662 = vrot.slane %v5618, 1
      %v5663 = vrot.slane %v5619, 1
      %v5664 = vsel %vm801, %v5662, %v5663
      %v5665 = vld [vmem:[%s826] sm:$0xff]
      %v5666 = vld [vmem:[%s826 + $0x8] sm:$0xff]
      %v5667 = vld [vmem:[%s826 + $0x10] sm:$0xff]
      %v5668 = vld [vmem:[%s826 + $0x18] sm:$0xff]
      %v5669 = vld [vmem:[%s826 + $0x20] sm:$0xf]
      %v5670 = vsel %vm832, %v5643, 0
      %v5672 = vsel %vm832, %v5646, 0
      %v5674 = vsel %vm832, %v5649, 0
      %v5676 = vsel %vm832, %v5652, 0
      %v5678 = vsel %vm832, %v5655, 0
      %v5680 = vsel %vm832, %v5658, 0
      %v5682 = vsel %vm832, %v5661, 0
      %v5684 = vsel %vm832, %v5664, 0
      %v5687 = vsel %vm849, %v5669, 0
      %5689 = vmatpush.msra.mxu0 0.0
      %5690 = vmatpush.msra.mxu0 0.0
      %5691 = vmatpush.msra.mxu0 0.0
      %5692 = vmatpush.msra.mxu0 0.0
      %5693 = vmatpush.msra.mxu0 0.0
      %5694 = vmatpush.msra.mxu0 0.0
      %5695 = vmatpush.msra.mxu0 0.0
      %5696 = vmatpush.msra.mxu0 0.0
      %5697 = vmatpush.msra.mxu0 0.0
      %5698 = vmatpush.msra.mxu0 0.0
      %5699 = vmatpush.msra.mxu0 0.0
      %5700 = vmatpush.msra.mxu0 %v5687
      %5701 = vmatpush.msra.mxu0 %v5668
      %5702 = vmatpush.msra.mxu0 %v5667
      %5703 = vmatpush.msra.mxu0 %v5666
      %5704 = vmatpush.msra.mxu0 %v5665
      %5705 = vmatmul.f32.gmra.mxu0 %v5670
      %v5706 = vpop.f32.mrf.mxu0
      %v5707 = vadd.f32 0.0, %v5706
      %5708 = vmatmul.f32.gmra.mxu0 %v5672
      %v5709 = vpop.f32.mrf.mxu0
      %v5710 = vadd.f32 0.0, %v5709
      %5711 = vmatmul.f32.gmra.mxu0 %v5674
      %v5712 = vpop.f32.mrf.mxu0
      %v5713 = vadd.f32 0.0, %v5712
      %5714 = vmatmul.f32.gmra.mxu0 %v5676
      %v5715 = vpop.f32.mrf.mxu0
      %v5716 = vadd.f32 0.0, %v5715
      %5717 = vmatmul.f32.gmra.mxu0 %v5678
      %v5718 = vpop.f32.mrf.mxu0
      %v5719 = vadd.f32 0.0, %v5718
      %5720 = vmatmul.f32.gmra.mxu0 %v5680
      %v5721 = vpop.f32.mrf.mxu0
      %v5722 = vadd.f32 0.0, %v5721
      %5723 = vmatmul.f32.gmra.mxu0 %v5682
      %v5724 = vpop.f32.mrf.mxu0
      %v5725 = vadd.f32 0.0, %v5724
      %5726 = vmatmul.f32.gmra.mxu0 %v5684
      %v5727 = vpop.f32.mrf.mxu0
      %v5728 = vadd.f32 0.0, %v5727
      %5729 = vdwg.mxu0
      %v5730 = vsel %vm832, %v5604, 0
      %v5732 = vsel %vm832, %v5606, 0
      %v5734 = vsel %vm832, %v5608, 0
      %v5736 = vsel %vm832, %v5610, 0
      %v5738 = vsel %vm832, %v5612, 0
      %v5740 = vsel %vm832, %v5614, 0
      %v5742 = vsel %vm832, %v5616, 0
      %v5744 = vsel %vm832, %v5618, 0
      %v5747 = vsel %vm849, %v5624, 0
      %5749 = vmatpush.msra.mxu0 0.0
      %5750 = vmatpush.msra.mxu0 0.0
      %5751 = vmatpush.msra.mxu0 0.0
      %5752 = vmatpush.msra.mxu0 0.0
      %5753 = vmatpush.msra.mxu0 0.0
      %5754 = vmatpush.msra.mxu0 0.0
      %5755 = vmatpush.msra.mxu0 0.0
      %5756 = vmatpush.msra.mxu0 0.0
      %5757 = vmatpush.msra.mxu0 0.0
      %5758 = vmatpush.msra.mxu0 0.0
      %5759 = vmatpush.msra.mxu0 0.0
      %5760 = vmatpush.msra.mxu0 %v5747
      %5761 = vmatpush.msra.mxu0 %v5623
      %5762 = vmatpush.msra.mxu0 %v5622
      %5763 = vmatpush.msra.mxu0 %v5621
      %5764 = vmatpush.msra.mxu0 %v5620
      %5765 = vmatmul.f32.gmra.mxu0 %v5730
      %v5766 = vpop.f32.mrf.mxu0
      %v5767 = vadd.f32 %v5707, %v5766
      %5768 = vmatmul.f32.gmra.mxu0 %v5732
      %v5769 = vpop.f32.mrf.mxu0
      %v5770 = vadd.f32 %v5710, %v5769
      %5771 = vmatmul.f32.gmra.mxu0 %v5734
      %v5772 = vpop.f32.mrf.mxu0
      %v5773 = vadd.f32 %v5713, %v5772
      %5774 = vmatmul.f32.gmra.mxu0 %v5736
      %v5775 = vpop.f32.mrf.mxu0
      %v5776 = vadd.f32 %v5716, %v5775
      %5777 = vmatmul.f32.gmra.mxu0 %v5738
      %v5778 = vpop.f32.mrf.mxu0
      %v5779 = vadd.f32 %v5719, %v5778
      %5780 = vmatmul.f32.gmra.mxu0 %v5740
      %v5781 = vpop.f32.mrf.mxu0
      %v5782 = vadd.f32 %v5722, %v5781
      %5783 = vmatmul.f32.gmra.mxu0 %v5742
      %v5784 = vpop.f32.mrf.mxu0
      %v5785 = vadd.f32 %v5725, %v5784
      %5786 = vmatmul.f32.gmra.mxu0 %v5744
      %v5787 = vpop.f32.mrf.mxu0
      %v5788 = vadd.f32 %v5728, %v5787
      %5789 = vdwg.mxu0
      %v5790 = vrot.slane %v5604, 2
      %v5791 = vrot.slane %v5605, 2
      %v5792 = vsel %vm954, %v5790, %v5791
      %v5793 = vrot.slane %v5606, 2
      %v5794 = vrot.slane %v5607, 2
      %v5795 = vsel %vm954, %v5793, %v5794
      %v5796 = vrot.slane %v5608, 2
      %v5797 = vrot.slane %v5609, 2
      %v5798 = vsel %vm954, %v5796, %v5797
      %v5799 = vrot.slane %v5610, 2
      %v5800 = vrot.slane %v5611, 2
      %v5801 = vsel %vm954, %v5799, %v5800
      %v5802 = vrot.slane %v5612, 2
      %v5803 = vrot.slane %v5613, 2
      %v5804 = vsel %vm954, %v5802, %v5803
      %v5805 = vrot.slane %v5614, 2
      %v5806 = vrot.slane %v5615, 2
      %v5807 = vsel %vm954, %v5805, %v5806
      %v5808 = vrot.slane %v5616, 2
      %v5809 = vrot.slane %v5617, 2
      %v5810 = vsel %vm954, %v5808, %v5809
      %v5811 = vrot.slane %v5618, 2
      %v5812 = vrot.slane %v5619, 2
      %v5813 = vsel %vm954, %v5811, %v5812
      %v5814 = vld [vmem:[%s979] sm:$0xff]
      %v5815 = vld [vmem:[%s979 + $0x8] sm:$0xff]
      %v5816 = vld [vmem:[%s979 + $0x10] sm:$0xff]
      %v5817 = vld [vmem:[%s979 + $0x18] sm:$0xff]
      %v5818 = vld [vmem:[%s979 + $0x20] sm:$0xf]
      %v5819 = vsel %vm832, %v5792, 0
      %v5821 = vsel %vm832, %v5795, 0
      %v5823 = vsel %vm832, %v5798, 0
      %v5825 = vsel %vm832, %v5801, 0
      %v5827 = vsel %vm832, %v5804, 0
      %v5829 = vsel %vm832, %v5807, 0
      %v5831 = vsel %vm832, %v5810, 0
      %v5833 = vsel %vm832, %v5813, 0
      %v5836 = vsel %vm849, %v5818, 0
      %5838 = vmatpush.msra.mxu0 0.0
      %5839 = vmatpush.msra.mxu0 0.0
      %5840 = vmatpush.msra.mxu0 0.0
      %5841 = vmatpush.msra.mxu0 0.0
      %5842 = vmatpush.msra.mxu0 0.0
      %5843 = vmatpush.msra.mxu0 0.0
      %5844 = vmatpush.msra.mxu0 0.0
      %5845 = vmatpush.msra.mxu0 0.0
      %5846 = vmatpush.msra.mxu0 0.0
      %5847 = vmatpush.msra.mxu0 0.0
      %5848 = vmatpush.msra.mxu0 0.0
      %5849 = vmatpush.msra.mxu0 %v5836
      %5850 = vmatpush.msra.mxu0 %v5817
      %5851 = vmatpush.msra.mxu0 %v5816
      %5852 = vmatpush.msra.mxu0 %v5815
      %5853 = vmatpush.msra.mxu0 %v5814
      %5854 = vmatmul.f32.gmra.mxu0 %v5819
      %v5855 = vpop.f32.mrf.mxu0
      %v5856 = vadd.f32 0.0, %v5855
      %5857 = vmatmul.f32.gmra.mxu0 %v5821
      %v5858 = vpop.f32.mrf.mxu0
      %v5859 = vadd.f32 0.0, %v5858
      %5860 = vmatmul.f32.gmra.mxu0 %v5823
      %v5861 = vpop.f32.mrf.mxu0
      %v5862 = vadd.f32 0.0, %v5861
      %5863 = vmatmul.f32.gmra.mxu0 %v5825
      %v5864 = vpop.f32.mrf.mxu0
      %v5865 = vadd.f32 0.0, %v5864
      %5866 = vmatmul.f32.gmra.mxu0 %v5827
      %v5867 = vpop.f32.mrf.mxu0
      %v5868 = vadd.f32 0.0, %v5867
      %5869 = vmatmul.f32.gmra.mxu0 %v5829
      %v5870 = vpop.f32.mrf.mxu0
      %v5871 = vadd.f32 0.0, %v5870
      %5872 = vmatmul.f32.gmra.mxu0 %v5831
      %v5873 = vpop.f32.mrf.mxu0
      %v5874 = vadd.f32 0.0, %v5873
      %5875 = vmatmul.f32.gmra.mxu0 %v5833
      %v5876 = vpop.f32.mrf.mxu0
      %v5877 = vadd.f32 0.0, %v5876
      %5878 = vdwg.mxu0
      %v5879 = vadd.f32 %v5767, %v5856
      %v5880 = vadd.f32 %v5770, %v5859
      %v5881 = vadd.f32 %v5773, %v5862
      %v5882 = vadd.f32 %v5776, %v5865
      %v5883 = vadd.f32 %v5779, %v5868
      %v5884 = vadd.f32 %v5782, %v5871
      %v5885 = vadd.f32 %v5785, %v5874
      %v5886 = vadd.f32 %v5788, %v5877
      %v5887 = vmax.f32 %v5879, 0.0
      %v5888 = vmax.f32 %v5880, 0.0
      %v5889 = vmax.f32 %v5881, 0.0
      %v5890 = vmax.f32 %v5882, 0.0
      %v5891 = vmax.f32 %v5883, 0.0
      %v5892 = vmax.f32 %v5884, 0.0
      %v5893 = vmax.f32 %v5885, 0.0
      %v5894 = vmax.f32 %v5886, 0.0
      %s5895 = scalar_lea.vmem %s366, 448
      %5896 = vst.msk [vmem:[%s5895] sm:$0xff] %vm611, %v5887
      %5897 = vst.msk [vmem:[%s5895 + $0x8] sm:$0xff] %vm611, %v5888
      %5898 = vst.msk [vmem:[%s5895 + $0x10] sm:$0xff] %vm611, %v5889
      %5899 = vst.msk [vmem:[%s5895 + $0x18] sm:$0xff] %vm611, %v5890
      %5900 = vst.msk [vmem:[%s5895 + $0x20] sm:$0xff] %vm611, %v5891
      %5901 = vst.msk [vmem:[%s5895 + $0x28] sm:$0xff] %vm611, %v5892
      %5902 = vst.msk [vmem:[%s5895 + $0x30] sm:$0xff] %vm611, %v5893
      %5903 = vst.msk [vmem:[%s5895 + $0x38] sm:$0xff] %vm611, %v5894
      %s5904 = smul.u32 8, %s20
      %p5905 = scmp.lt.s32.totalorder %s19, 1
      %s5906 = scalar_select %p5905, %s19, 1
      %p5907 = scmp.lt.s32.totalorder %s5904, 7
      %s5908 = scalar_select %p5907, %s5904, 7
      %s5909 = smul.addr %s5908, 8
      %s5910 = smul.addr %s5906, 64
      %s5911 = sadd.s32 %s5909, %s5910
      %s5912 = smul.addr %s5911, 8
      %s5913 = scalar_lea.vmem %s4, %s5912
      // Predicated region
      $region37: #{_lambda_.2} parent=35 // pred_check
        %p5914 = pneg %p160
      $region38: #{_lambda_.2} parent=35 // pred_check_branch
        %5916 = sbr.rel (%p5914) target = $region40
      $region39: #{_lambda_.2} parent=35 // pred_region
        %s5917 = smul.u32 8, %s20
      $region40: #{_lambda_.2} parent=35 // pred_fallthru
        _
    $region36: #{_lambda_.2} parent=5 // pred_fallthru
      _
    %p5918 = scmp.le.s32.totalorder 2, %s10
    // Predicated region
    $region41: #{_lambda_.2} parent=5 // pred_check
      %p5919 = pneg %p5918
    $region42: #{_lambda_.2} parent=5 // pred_check_branch
      %5921 = sbr.rel (%p5919) target = $region44
    $region43: #{_lambda_.2} parent=5 // pred_region
      %s5922 = ssub.s32 %s10, 2
      // Predicated region
      $region45: #{_lambda_.2} parent=43 // pred_check
        %p5923 = pneg %p166
      $region46: #{_lambda_.2} parent=43 // pred_check_branch
        %5925 = sbr.rel (%p5923) target = $region48
      $region47: #{_lambda_.2} parent=43 // pred_region
        %s5926 = smul.u32 8, %s22
        %p5927 = scmp.lt.s32.totalorder %s21, 1
        %s5928 = scalar_select %p5927, %s21, 1
        %p5929 = scmp.lt.s32.totalorder %s5926, 7
        %s5930 = scalar_select %p5929, %s5926, 7
        %s5931 = smul.addr %s5930, 8
        %s5932 = smul.addr %s5928, 64
        %s5933 = sadd.s32 %s5931, %s5932
        %s5934 = smul.addr %s5933, 8
        %s5935 = scalar_lea.vmem %s4, %s5934
      $region48: #{_lambda_.2} parent=43 // pred_fallthru
        _
    $region44: #{_lambda_.2} parent=5 // pred_fallthru
      _
  $region6: #{_lambda_.2} parent=0 // loop_footer
    %s14 = sadd.s32 1, %s10
  $region7: #{_lambda_.2} parent=0 // loop_footer_branch
    %9 = sbr.rel target = $region3
  $region8: #{_lambda_.2} parent=0 // loop_exit
    _

// kernel: _lambda_.3
$region0: #{_lambda_.3}
  #allocation0 [shape = 'u32[]', space=smem, size = 0x4, offset = 0x4, fixed_abs, tag = 'smem constant byte address 0x4 - core index']
  #allocation1 [shape = 'u32[72,128]{1,0:T(1,128)}', space=vmem, size = 0x9000, scoped, tag = 'internal scratch']
  %s0 = inlined_call_operand.vmem [shape: f32[2,10,10,10,8], index: 0, kind: input, shape index: {}, may-alias: {0,1,2}]
  %s1 = inlined_call_operand.vmem [shape: f32[2,10,10,10,8], index: 1, kind: input, shape index: {}, may-alias: {0,1,2}]
  %s2 = inlined_call_operand.vmem [shape: f32[2,10,10,10,8], index: 2, kind: input, shape index: {}, may-alias: {0,1,2}]
  %s3 = inlined_call_operand.vmem [shape: f32[3,72,16], index: 3, kind: input, shape index: {}]
  %s4 = inlined_call_operand.hbm [shape: f32[2,8,64,16], index: 4, kind: output, shape index: {}]
  %s5 = sld [smem:[#allocation0]]
  $region49: #{_lambda_.3} parent=0
    _
  %s7 = ssub.s32 1, %s5
  %s8 = scalar_select 0, %s7, %s5
  $region1: #{_lambda_.3} parent=0
    #allocation2 [shape = 'u8[524288]{0}', space=vmem, size = 0x80000, scoped, tag = 'output window, operand 0']
    #allocation3 [shape = 's32[2]{0}', space=sflag, size = 0x8, scoped, tag = 'scoped memory for _lambda_.3']
    %9 = vsyncpa [#allocation3], 0
    %s10 = scalar_lea.sflag [#allocation3], 1
    %11 = vsyncpa %s10, 0
    loop: start=0, step=1, limit=4
    $region2: #{_lambda_.3} parent=1 // loop_pre_header
      _
    $region3: #{_lambda_.3} parent=1 // loop_header
      %s13 = sphi 0, %s17
      %p14 = scmp.ge.s32.totalorder %s13, 4
      %s20 = sphi 0, %s32
      %s21 = sphi 0, %s28
      %s22 = sphi 0, %s20
      %s23 = sphi 0, %s21
      %s24 = sphi 0, %s22
      %s25 = sphi 0, %s23
      %s37 = sphi 0, %s39
      %s40 = sphi 0, %s37
      %s41 = sphi 0, %s40
      %s57 = sphi 0, %s41
      %s69 = sphi 0, %s71
      %s72 = sphi 0, %s69
      %s73 = sphi 0, %s72
      %s89 = sphi 0, %s73
      %s101 = sphi 0, %s103
      %s104 = sphi 0, %s101
      %s105 = sphi 0, %s104
      %s121 = sphi 0, %s105
      %s125 = sphi 0, %s125
      %s127 = sphi 0, %s125
      %s128 = sphi 0, %s127
      %s142 = sphi 0, %s128
      %s150 = sphi 0, %s152
      %s153 = sphi 0, %s150
      %s154 = sphi 0, %s153
      %s170 = sphi 0, %s154
    $region4: #{_lambda_.3} parent=1 // loop_header_branch
      %16 = sbr.rel (%p14) target = $region8
    $region5: #{_lambda_.3} parent=1 // loop_body
      %s18 = ssub.s32 %s13, 1
      %s19 = ssub.s32 %s13, 2
      %s26 = sadd.s32 1, %s21
      %p27 = scmp.ge.s32.totalorder %s26, 1
      %s28 = scalar_select %p27, 0, %s26
      %s29 = sadd.s32 1, %s20
      %s30 = scalar_select %p27, %s29, %s20
      %p31 = scmp.ge.s32.totalorder %s30, 2
      %s32 = scalar_select %p31, 0, %s30
      %s33 = ssub.s32 %s20, %s32
      %s34 = ssub.s32 %s21, %s28
      %s35 = sor.u32 %s33, %s34
      %p36 = scmp.eq.s32.totalorder %s35, 0
      %s38 = sadd.s32 %s37, 1
      %s39 = scalar_select %p36, %s37, %s38
      %p42 = pneg %p36
      %p43 = scmp.eq.s32.totalorder %s13, 1
      %p44 = por %p42, %p43
      %p45 = scmp.ne.s32.totalorder %s37, %s40
      %p46 = scmp.eq.s32.totalorder %s13, 0
      %p47 = por %p45, %p46
      %p48 = scmp.ne.s32.totalorder %s37, %s40
      %p49 = scmp.eq.s32.totalorder %s18, 1
      %p50 = por %p48, %p49
      %p51 = scmp.ne.s32.totalorder %s40, %s41
      %p52 = scmp.eq.s32.totalorder %s18, 0
      %p53 = por %p51, %p52
      %p54 = scmp.ne.s32.totalorder %s40, %s41
      %p55 = scmp.eq.s32.totalorder %s19, 1
      %p56 = por %p54, %p55
      %p58 = scmp.ne.s32.totalorder %s41, %s57
      %p59 = scmp.eq.s32.totalorder %s19, 0
      %p60 = por %p58, %p59
      %s61 = smul.u32 %s21, 8
      %s62 = sadd.s32 %s61, 8
      %s63 = smul.u32 %s28, 8
      %s64 = sadd.s32 %s63, 8
      %s65 = ssub.s32 %s20, %s32
      %s66 = ssub.s32 %s62, %s64
      %s67 = sor.u32 %s65, %s66
      %p68 = scmp.eq.s32.totalorder %s67, 0
      %s70 = sadd.s32 %s69, 1
      %s71 = scalar_select %p68, %s69, %s70
      %p74 = pneg %p68
      %p75 = scmp.eq.s32.totalorder %s13, 1
      %p76 = por %p74, %p75
      %p77 = scmp.ne.s32.totalorder %s69, %s72
      %p78 = scmp.eq.s32.totalorder %s13, 0
      %p79 = por %p77, %p78
      %p80 = scmp.ne.s32.totalorder %s69, %s72
      %p81 = scmp.eq.s32.totalorder %s18, 1
      %p82 = por %p80, %p81
      %p83 = scmp.ne.s32.totalorder %s72, %s73
      %p84 = scmp.eq.s32.totalorder %s18, 0
      %p85 = por %p83, %p84
      %p86 = scmp.ne.s32.totalorder %s72, %s73
      %p87 = scmp.eq.s32.totalorder %s19, 1
      %p88 = por %p86, %p87
      %p90 = scmp.ne.s32.totalorder %s73, %s89
      %p91 = scmp.eq.s32.totalorder %s19, 0
      %p92 = por %p90, %p91
      %s93 = smul.u32 %s21, 8
      %s94 = sadd.s32 %s93, 9
      %s95 = smul.u32 %s28, 8
      %s96 = sadd.s32 %s95, 9
      %s97 = ssub.s32 %s20, %s32
      %s98 = ssub.s32 %s94, %s96
      %s99 = sor.u32 %s97, %s98
      %p100 = scmp.eq.s32.totalorder %s99, 0
      %s102 = sadd.s32 %s101, 1
      %s103 = scalar_select %p100, %s101, %s102
      %p106 = pneg %p100
      %p107 = scmp.eq.s32.totalorder %s13, 1
      %p108 = por %p106, %p107
      %p109 = scmp.ne.s32.totalorder %s101, %s104
      %p110 = scmp.eq.s32.totalorder %s13, 0
      %p111 = por %p109, %p110
      %p112 = scmp.ne.s32.totalorder %s101, %s104
      %p113 = scmp.eq.s32.totalorder %s18, 1
      %p114 = por %p112, %p113
      %p115 = scmp.ne.s32.totalorder %s104, %s105
      %p116 = scmp.eq.s32.totalorder %s18, 0
      %p117 = por %p115, %p116
      %p118 = scmp.ne.s32.totalorder %s104, %s105
      %p119 = scmp.eq.s32.totalorder %s19, 1
      %p120 = por %p118, %p119
      %p122 = scmp.ne.s32.totalorder %s105, %s121
      %p123 = scmp.eq.s32.totalorder %s19, 0
      %p124 = por %p122, %p123
      %s126 = sadd.s32 %s125, 1
      %p129 = scmp.eq.s32.totalorder %s13, 1
      %p130 = scmp.ne.s32.totalorder %s125, %s127
      %p131 = scmp.eq.s32.totalorder %s13, 0
      %p132 = por %p130, %p131
      %p133 = scmp.ne.s32.totalorder %s125, %s127
      %p134 = scmp.eq.s32.totalorder %s18, 1
      %p135 = por %p133, %p134
      %p136 = scmp.ne.s32.totalorder %s127, %s128
      %p137 = scmp.eq.s32.totalorder %s18, 0
      %p138 = por %p136, %p137
      %p139 = scmp.ne.s32.totalorder %s127, %s128
      %p140 = scmp.eq.s32.totalorder %s19, 1
      %p141 = por %p139, %p140
      %p143 = scmp.ne.s32.totalorder %s128, %s142
      %p144 = scmp.eq.s32.totalorder %s19, 0
      %p145 = por %p143, %p144
      %s146 = ssub.s32 %s20, %s32
      %s147 = ssub.s32 %s21, %s28
      %s148 = sor.u32 %s146, %s147
      %p149 = scmp.eq.s32.totalorder %s148, 0
      %s151 = sadd.s32 %s150, 1
      %s152 = scalar_select %p149, %s150, %s151
      %p155 = pneg %p149
      %p156 = scmp.eq.s32.totalorder %s13, 1
      %p157 = por %p155, %p156
      %p158 = scmp.ne.s32.totalorder %s150, %s153
      %p159 = scmp.eq.s32.totalorder %s13, 0
      %p160 = por %p158, %p159
      %p161 = scmp.ne.s32.totalorder %s150, %s153
      %p162 = scmp.eq.s32.totalorder %s18, 1
      %p163 = por %p161, %p162
      %p164 = scmp.ne.s32.totalorder %s153, %s154
      %p165 = scmp.eq.s32.totalorder %s18, 0
      %p166 = por %p164, %p165
      %p167 = scmp.ne.s32.totalorder %s153, %s154
      %p168 = scmp.eq.s32.totalorder %s19, 1
      %p169 = por %p167, %p168
      %p171 = scmp.ne.s32.totalorder %s154, %s170
      %p172 = scmp.eq.s32.totalorder %s19, 0
      %p173 = por %p171, %p172
      %p174 = scmp.le.s32.totalorder 1, %s13
      %p175 = scmp.lt.s32.totalorder %s13, 3
      %p176 = pnand %p174, %p175
      %p177 = pneg %p176
      // Predicated region
      $region9: #{_lambda_.3} parent=5 // pred_check
        _
      $region10: #{_lambda_.3} parent=5 // pred_check_branch
        %179 = sbr.rel (%p176) target = $region12
      $region11: #{_lambda_.3} parent=5 // pred_region
        %s180 = ssub.s32 %s13, 1
        // Predicated region
        $region13: #{_lambda_.3} parent=11 // pred_check
          %p181 = pneg %p138
        $region14: #{_lambda_.3} parent=11 // pred_check_branch
          %183 = sbr.rel (%p181) target = $region16
        $region15: #{_lambda_.3} parent=11 // pred_region
          _
        $region16: #{_lambda_.3} parent=11 // pred_fallthru
          _
      $region12: #{_lambda_.3} parent=5 // pred_fallthru
        _
      %p184 = scmp.lt.s32.totalorder %s13, 2
      // Predicated region
      $region17: #{_lambda_.3} parent=5 // pred_check
        %p185 = pneg %p184
      $region18: #{_lambda_.3} parent=5 // pred_check_branch
        %187 = sbr.rel (%p185) target = $region20
      $region19: #{_lambda_.3} parent=5 // pred_region
        // Predicated region
        $region21: #{_lambda_.3} parent=19 // pred_check
          %p188 = pneg %p47
        $region22: #{_lambda_.3} parent=19 // pred_check_branch
          %190 = sbr.rel (%p188) target = $region24
        $region23: #{_lambda_.3} parent=19 // pred_region
          %s191 = smul.u32 8, %s21
          %s192 = ssub.s32 10, %s191
          %p193 = scmp.lt.s32.totalorder %s192, 8
          %s194 = scalar_select %p193, %s192, 8
          %s195 = smul.u32 8, %s194
          %s196 = smul.u32 %s195, 10
          %s197 = smul.u32 %s196, 2
          %p198 = scmp.lt.s32.totalorder %s20, 1
          %s199 = scalar_select %p198, %s20, 1
          %p200 = scmp.lt.s32.totalorder %s191, 9
          %s201 = scalar_select %p200, %s191, 9
          %s202 = smul.addr %s201, 20
          %s203 = smul.addr %s199, 200
          %s204 = sadd.s32 %s202, %s203
          %s205 = smul.addr %s204, 8
          %s206 = scalar_lea.vmem %s0, %s205
          %s207 = smul.u32 8, %s21
          %s208 = ssub.s32 10, %s207
          %p209 = scmp.lt.s32.totalorder %s208, 8
          %s210 = scalar_select %p209, %s208, 8
          %s211 = smul.u32 8, %s210
          %s212 = smul.u32 %s211, 10
          %s213 = smul.u32 %s212, 2
        $region24: #{_lambda_.3} parent=19 // pred_fallthru
          _
        // Predicated region
        $region25: #{_lambda_.3} parent=19 // pred_check
          %p214 = pneg %p79
        $region26: #{_lambda_.3} parent=19 // pred_check_branch
          %216 = sbr.rel (%p214) target = $region28
        $region27: #{_lambda_.3} parent=19 // pred_region
          %s217 = smul.u32 %s21, 8
          %s218 = sadd.s32 %s217, 8
          %p219 = scmp.lt.s32.totalorder %s20, 1
          %s220 = scalar_select %p219, %s20, 1
          %p221 = scmp.lt.s32.totalorder %s218, 9
          %s222 = scalar_select %p221, %s218, 9
          %s223 = smul.addr %s222, 20
          %s224 = smul.addr %s220, 200
          %s225 = sadd.s32 %s223, %s224
          %s226 = smul.addr %s225, 8
          %s227 = scalar_lea.vmem %s1, %s226
          %s228 = smul.u32 %s21, 8
          %s229 = sadd.s32 %s228, 8
        $region28: #{_lambda_.3} parent=19 // pred_fallthru
          _
        // Predicated region
        $region29: #{_lambda_.3} parent=19 // pred_check
          %p230 = pneg %p111
        $region30: #{_lambda_.3} parent=19 // pred_check_branch
          %232 = sbr.rel (%p230) target = $region32
        $region31: #{_lambda_.3} parent=19 // pred_region
          %s233 = smul.u32 %s21, 8
          %s234 = sadd.s32 %s233, 9
          %p235 = scmp.lt.s32.totalorder %s20, 1
          %s236 = scalar_select %p235, %s20, 1
          %p237 = scmp.lt.s32.totalorder %s234, 9
          %s238 = scalar_select %p237, %s234, 9
          %s239 = smul.addr %s238, 20
          %s240 = smul.addr %s236, 200
          %s241 = sadd.s32 %s239, %s240
          %s242 = smul.addr %s241, 8
          %s243 = scalar_lea.vmem %s2, %s242
          %s244 = smul.u32 %s21, 8
          %s245 = sadd.s32 %s244, 9
        $region32: #{_lambda_.3} parent=19 // pred_fallthru
          _
      $region20: #{_lambda_.3} parent=5 // pred_fallthru
        _
      %p246 = scmp.le.s32.totalorder 1, %s13
      %p247 = scmp.lt.s32.totalorder %s13, 3
      %p248 = pnand %p246, %p247
      %p249 = pneg %p248
      // Predicated region
      $region33: #{_lambda_.3} parent=5 // pred_check
        _
      $region34: #{_lambda_.3} parent=5 // pred_check_branch
        %251 = sbr.rel (%p248) target = $region36
      $region35: #{_lambda_.3} parent=5 // pred_region
        %s252 = ssub.s32 %s13, 1
        %s253 = smul.u32 8, %s23
        %s254 = ssub.s32 10, %s253
        %p255 = scmp.lt.s32.totalorder %s254, 8
        %s256 = scalar_select %p255, %s254, 8
        %s257 = smul.u32 8, %s256
        %s258 = smul.u32 %s257, 10
        %s259 = smul.u32 %s258, 2
        %p260 = scmp.lt.s32.totalorder %s22, 1
        %s261 = scalar_select %p260, %s22, 1
        %p262 = scmp.lt.s32.totalorder %s253, 9
        %s263 = scalar_select %p262, %s253, 9
        %s264 = smul.addr %s263, 20
        %s265 = smul.addr %s261, 200
        %s266 = sadd.s32 %s264, %s265
        %s267 = smul.addr %s266, 8
        %s268 = scalar_lea.vmem %s0, %s267
        %p269 = pneg %p53
        %p270 = pneg %p50
        %s271 = smul.u32 %s23, 8
        %s272 = sadd.s32 %s271, 8
        %p273 = scmp.lt.s32.totalorder %s22, 1
        %s274 = scalar_select %p273, %s22, 1
        %p275 = scmp.lt.s32.totalorder %s272, 9
        %s276 = scalar_select %p275, %s272, 9
        %s277 = smul.addr %s276, 20
        %s278 = smul.addr %s274, 200
        %s279 = sadd.s32 %s277, %s278
        %s280 = smul.addr %s279, 8
        %s281 = scalar_lea.vmem %s1, %s280
        %p282 = pneg %p85
        %p283 = pneg %p82
        %s284 = smul.u32 %s23, 8
        %s285 = sadd.s32 %s284, 9
        %p286 = scmp.lt.s32.totalorder %s22, 1
        %s287 = scalar_select %p286, %s22, 1
        %p288 = scmp.lt.s32.totalorder %s285, 9
        %s289 = scalar_select %p288, %s285, 9
        %s290 = smul.addr %s289, 20
        %s291 = smul.addr %s287, 200
        %s292 = sadd.s32 %s290, %s291
        %s293 = smul.addr %s292, 8
        %s294 = scalar_lea.vmem %s2, %s293
        %p295 = pneg %p117
        %p296 = pneg %p114
        %p297 = pneg %p138
        %p298 = pneg %p135
        %p299 = pneg %p166
        %p300 = pneg %p163
        %s301 = sand.u32 %s153, 1
        %s302 = scalar_lea.sflag [#allocation3], %s301
        %s303 = sand.u32 %s153, 1
        %s304 = smul.addr %s303, 512
        %s305 = scalar_lea.vmem [#allocation2], %s304
        %s306 = smul.u32 8, %s23
        %s307 = ssub.s32 10, %s306
        %p308 = scmp.lt.s32.totalorder %s307, 8
        %s309 = scalar_select %p308, %s307, 8
        %s310 = smul.u32 8, %s309
        %s311 = smul.u32 %s310, 10
        %s312 = smul.u32 %s311, 2
        %p313 = scmp.lt.s32.totalorder %s22, 1
        %s314 = scalar_select %p313, %s22, 1
        %p315 = scmp.lt.s32.totalorder %s306, 9
        %s316 = scalar_select %p315, %s306, 9
        %s317 = smul.addr %s316, 20
        %s318 = smul.addr %s314, 200
        %s319 = sadd.s32 %s317, %s318
        %s320 = smul.addr %s319, 8
        %s321 = scalar_lea.vmem %s0, %s320
        %s322 = smul.u32 8, %s23
        %s323 = ssub.s32 10, %s322
        %p324 = scmp.lt.s32.totalorder %s323, 8
        %s325 = scalar_select %p324, %s323, 8
        %s326 = smul.u32 8, %s325
        %s327 = smul.u32 %s326, 10
        %s328 = smul.u32 %s327, 2
        %s329 = smul.u32 %s23, 8
        %s330 = sadd.s32 %s329, 8
        %p331 = scmp.lt.s32.totalorder %s22, 1
        %s332 = scalar_select %p331, %s22, 1
        %p333 = scmp.lt.s32.totalorder %s330, 9
        %s334 = scalar_select %p333, %s330, 9
        %s335 = smul.addr %s334, 20
        %s336 = smul.addr %s332, 200
        %s337 = sadd.s32 %s335, %s336
        %s338 = smul.addr %s337, 8
        %s339 = scalar_lea.vmem %s1, %s338
        %s340 = smul.u32 %s23, 8
        %s341 = sadd.s32 %s340, 8
        %s342 = smul.u32 %s23, 8
        %s343 = sadd.s32 %s342, 9
        %p344 = scmp.lt.s32.totalorder %s22, 1
        %s345 = scalar_select %p344, %s22, 1
        %p346 = scmp.lt.s32.totalorder %s343, 9
        %s347 = scalar_select %p346, %s343, 9
        %s348 = smul.addr %s347, 20
        %s349 = smul.addr %s345, 200
        %s350 = sadd.s32 %s348, %s349
        %s351 = smul.addr %s350, 8
        %s352 = scalar_lea.vmem %s2, %s351
        %s353 = smul.u32 %s23, 8
        %s354 = sadd.s32 %s353, 9
        %s355 = smul.u32 8, %s23
        %v356 = vld [vmem:[%s321] sm:$0xff]
        %v357 = vld [vmem:[%s321 + $0x8] sm:$0x3]
        %v358 = vld [vmem:[%s321 + $0x10] sm:$0xff]
        %v359 = vld [vmem:[%s321 + $0x18] sm:$0x3]
        %v360 = vld [vmem:[%s321 + $0x20] sm:$0xff]
        %v361 = vld [vmem:[%s321 + $0x28] sm:$0x3]
        %v362 = vld [vmem:[%s321 + $0x30] sm:$0xff]
        %v363 = vld [vmem:[%s321 + $0x38] sm:$0x3]
        %v364 = vld [vmem:[%s321 + $0x40] sm:$0xff]
        %v365 = vld [vmem:[%s321 + $0x48] sm:$0x3]
        %v366 = vld [vmem:[%s321 + $0x50] sm:$0xff]
        %v367 = vld [vmem:[%s321 + $0x58] sm:$0x3]
        %v368 = vld [vmem:[%s321 + $0x60] sm:$0xff]
        %v369 = vld [vmem:[%s321 + $0x68] sm:$0x3]
        %v370 = vld [vmem:[%s321 + $0x70] sm:$0xff]
        %v371 = vld [vmem:[%s321 + $0x78] sm:$0x3]
        %v372 = vld [vmem:[%s321 + $0x80] sm:$0xff]
        %v373 = vld [vmem:[%s321 + $0x88] sm:$0x3]
        %v374 = vld [vmem:[%s321 + $0x90] sm:$0xff]
        %v375 = vld [vmem:[%s321 + $0x98] sm:$0x3]
        %s376 = scalar_lea.vmem %s321, 160
        %v377 = vld [vmem:[%s376] sm:$0xff]
        %v378 = vld [vmem:[%s376 + $0x8] sm:$0x3]
        %v379 = vld [vmem:[%s376 + $0x10] sm:$0xff]
        %v380 = vld [vmem:[%s376 + $0x18] sm:$0x3]
        %v381 = vld [vmem:[%s376 + $0x20] sm:$0xff]
        %v382 = vld [vmem:[%s376 + $0x28] sm:$0x3]
        %v383 = vld [vmem:[%s376 + $0x30] sm:$0xff]
        %v384 = vld [vmem:[%s376 + $0x38] sm:$0x3]
        %v385 = vld [vmem:[%s376 + $0x40] sm:$0xff]
        %v386 = vld [vmem:[%s376 + $0x48] sm:$0x3]
        %v387 = vld [vmem:[%s376 + $0x50] sm:$0xff]
        %v388 = vld [vmem:[%s376 + $0x58] sm:$0x3]
        %v389 = vld [vmem:[%s376 + $0x60] sm:$0xff]
        %v390 = vld [vmem:[%s376 + $0x68] sm:$0x3]
        %v391 = vld [vmem:[%s376 + $0x70] sm:$0xff]
        %v392 = vld [vmem:[%s376 + $0x78] sm:$0x3]
        %v393 = vld [vmem:[%s376 + $0x80] sm:$0xff]
        %v394 = vld [vmem:[%s376 + $0x88] sm:$0x3]
        %v395 = vld [vmem:[%s376 + $0x90] sm:$0xff]
        %v396 = vld [vmem:[%s376 + $0x98] sm:$0x3]
        %s397 = scalar_lea.vmem %s321, 320
        %v398 = vld [vmem:[%s397] sm:$0xff]
        %v399 = vld [vmem:[%s397 + $0x8] sm:$0x3]
        %v400 = vld [vmem:[%s397 + $0x10] sm:$0xff]
        %v401 = vld [vmem:[%s397 + $0x18] sm:$0x3]
        %v402 = vld [vmem:[%s397 + $0x20] sm:$0xff]
        %v403 = vld [vmem:[%s397 + $0x28] sm:$0x3]
        %v404 = vld [vmem:[%s397 + $0x30] sm:$0xff]
        %v405 = vld [vmem:[%s397 + $0x38] sm:$0x3]
        %v406 = vld [vmem:[%s397 + $0x40] sm:$0xff]
        %v407 = vld [vmem:[%s397 + $0x48] sm:$0x3]
        %v408 = vld [vmem:[%s397 + $0x50] sm:$0xff]
        %v409 = vld [vmem:[%s397 + $0x58] sm:$0x3]
        %v410 = vld [vmem:[%s397 + $0x60] sm:$0xff]
        %v411 = vld [vmem:[%s397 + $0x68] sm:$0x3]
        %v412 = vld [vmem:[%s397 + $0x70] sm:$0xff]
        %v413 = vld [vmem:[%s397 + $0x78] sm:$0x3]
        %v414 = vld [vmem:[%s397 + $0x80] sm:$0xff]
        %v415 = vld [vmem:[%s397 + $0x88] sm:$0x3]
        %v416 = vld [vmem:[%s397 + $0x90] sm:$0xff]
        %v417 = vld [vmem:[%s397 + $0x98] sm:$0x3]
        %438 = vrot.lane.b32.xlu0 %v377, 8
        %v439 = vpop.permute.xlu0 %438
        %440 = vrot.lane.b32.xlu0 %v378, 8
        %v441 = vpop.permute.xlu0 %440
        %442 = vrot.lane.b32.xlu0 %v379, 8
        %v443 = vpop.permute.xlu0 %442
        %444 = vrot.lane.b32.xlu0 %v380, 8
        %v445 = vpop.permute.xlu0 %444
        %446 = vrot.lane.b32.xlu0 %v381, 8
        %v447 = vpop.permute.xlu0 %446
        %448 = vrot.lane.b32.xlu0 %v382, 8
        %v449 = vpop.permute.xlu0 %448
        %450 = vrot.lane.b32.xlu0 %v383, 8
        %v451 = vpop.permute.xlu0 %450
        %452 = vrot.lane.b32.xlu0 %v384, 8
        %v453 = vpop.permute.xlu0 %452
        %454 = vrot.lane.b32.xlu0 %v385, 8
        %v455 = vpop.permute.xlu0 %454
        %456 = vrot.lane.b32.xlu0 %v386, 8
        %v457 = vpop.permute.xlu0 %456
        %458 = vrot.lane.b32.xlu0 %v387, 8
        %v459 = vpop.permute.xlu0 %458
        %460 = vrot.lane.b32.xlu0 %v388, 8
        %v461 = vpop.permute.xlu0 %460
        %462 = vrot.lane.b32.xlu0 %v389, 8
        %v463 = vpop.permute.xlu0 %462
        %464 = vrot.lane.b32.xlu0 %v390, 8
        %v465 = vpop.permute.xlu0 %464
        %466 = vrot.lane.b32.xlu0 %v391, 8
        %v467 = vpop.permute.xlu0 %466
        %468 = vrot.lane.b32.xlu0 %v392, 8
        %v469 = vpop.permute.xlu0 %468
        %470 = vrot.lane.b32.xlu0 %v393, 8
        %v471 = vpop.permute.xlu0 %470
        %472 = vrot.lane.b32.xlu0 %v394, 8
        %v473 = vpop.permute.xlu0 %472
        %474 = vrot.lane.b32.xlu0 %v395, 8
        %v475 = vpop.permute.xlu0 %474
        %476 = vrot.lane.b32.xlu0 %v396, 8
        %v477 = vpop.permute.xlu0 %476
        %518 = vrot.lane.b32.xlu0 %v398, 16
        %v519 = vpop.permute.xlu0 %518
        %520 = vrot.lane.b32.xlu0 %v399, 16
        %v521 = vpop.permute.xlu0 %520
        %522 = vrot.lane.b32.xlu0 %v400, 16
        %v523 = vpop.permute.xlu0 %522
        %524 = vrot.lane.b32.xlu0 %v401, 16
        %v525 = vpop.permute.xlu0 %524
        %526 = vrot.lane.b32.xlu0 %v402, 16
        %v527 = vpop.permute.xlu0 %526
        %528 = vrot.lane.b32.xlu0 %v403, 16
        %v529 = vpop.permute.xlu0 %528
        %530 = vrot.lane.b32.xlu0 %v404, 16
        %v531 = vpop.permute.xlu0 %530
        %532 = vrot.lane.b32.xlu0 %v405, 16
        %v533 = vpop.permute.xlu0 %532
        %534 = vrot.lane.b32.xlu0 %v406, 16
        %v535 = vpop.permute.xlu0 %534
        %536 = vrot.lane.b32.xlu0 %v407, 16
        %v537 = vpop.permute.xlu0 %536
        %538 = vrot.lane.b32.xlu0 %v408, 16
        %v539 = vpop.permute.xlu0 %538
        %540 = vrot.lane.b32.xlu0 %v409, 16
        %v541 = vpop.permute.xlu0 %540
        %542 = vrot.lane.b32.xlu0 %v410, 16
        %v543 = vpop.permute.xlu0 %542
        %544 = vrot.lane.b32.xlu0 %v411, 16
        %v545 = vpop.permute.xlu0 %544
        %546 = vrot.lane.b32.xlu0 %v412, 16
        %v547 = vpop.permute.xlu0 %546
        %548 = vrot.lane.b32.xlu0 %v413, 16
        %v549 = vpop.permute.xlu0 %548
        %550 = vrot.lane.b32.xlu0 %v414, 16
        %v551 = vpop.permute.xlu0 %550
        %552 = vrot.lane.b32.xlu0 %v415, 16
        %v553 = vpop.permute.xlu0 %552
        %554 = vrot.lane.b32.xlu0 %v416, 16
        %v555 = vpop.permute.xlu0 %554
        %556 = vrot.lane.b32.xlu0 %v417, 16
        %v557 = vpop.permute.xlu0 %556
        %vm578 = vcmask 64512
        %v579 = vsel %vm578, %v356, %v439
        %v580 = vsel %vm578, %v357, %v441
        %v581 = vsel %vm578, %v358, %v443
        %v582 = vsel %vm578, %v359, %v445
        %v583 = vsel %vm578, %v360, %v447
        %v584 = vsel %vm578, %v361, %v449
        %v585 = vsel %vm578, %v362, %v451
        %v586 = vsel %vm578, %v363, %v453
        %v587 = vsel %vm578, %v364, %v455
        %v588 = vsel %vm578, %v365, %v457
        %v589 = vsel %vm578, %v366, %v459
        %v590 = vsel %vm578, %v367, %v461
        %v591 = vsel %vm578, %v368, %v463
        %v592 = vsel %vm578, %v369, %v465
        %v593 = vsel %vm578, %v370, %v467
        %v594 = vsel %vm578, %v371, %v469
        %v595 = vsel %vm578, %v372, %v471
        %v596 = vsel %vm578, %v373, %v473
        %v597 = vsel %vm578, %v374, %v475
        %v598 = vsel %vm578, %v375, %v477
        %vm599 = vcmask 130048
        %v600 = vsel %vm599, %v579, %v519
        %v601 = vsel %vm599, %v580, %v521
        %v602 = vsel %vm599, %v581, %v523
        %v603 = vsel %vm599, %v582, %v525
        %v604 = vsel %vm599, %v583, %v527
        %v605 = vsel %vm599, %v584, %v529
        %v606 = vsel %vm599, %v585, %v531
        %v607 = vsel %vm599, %v586, %v533
        %v608 = vsel %vm599, %v587, %v535
        %v609 = vsel %vm599, %v588, %v537
        %v610 = vsel %vm599, %v589, %v539
        %v611 = vsel %vm599, %v590, %v541
        %v612 = vsel %vm599, %v591, %v543
        %v613 = vsel %vm599, %v592, %v545
        %v614 = vsel %vm599, %v593, %v547
        %v615 = vsel %vm599, %v594, %v549
        %v616 = vsel %vm599, %v595, %v551
        %v617 = vsel %vm599, %v596, %v553
        %v618 = vsel %vm599, %v597, %v555
        %v619 = vsel %vm599, %v598, %v557
        %636 = vrot.lane.b32.xlu0 %v602, 24
        %v637 = vpop.permute.xlu0 %636
        %638 = vrot.lane.b32.xlu0 %v603, 24
        %v639 = vpop.permute.xlu0 %638
        %640 = vrot.lane.b32.xlu0 %v604, 24
        %v641 = vpop.permute.xlu0 %640
        %642 = vrot.lane.b32.xlu0 %v605, 24
        %v643 = vpop.permute.xlu0 %642
        %644 = vrot.lane.b32.xlu0 %v606, 24
        %v645 = vpop.permute.xlu0 %644
        %646 = vrot.lane.b32.xlu0 %v607, 24
        %v647 = vpop.permute.xlu0 %646
        %648 = vrot.lane.b32.xlu0 %v608, 24
        %v649 = vpop.permute.xlu0 %648
        %650 = vrot.lane.b32.xlu0 %v609, 24
        %v651 = vpop.permute.xlu0 %650
        %652 = vrot.lane.b32.xlu0 %v610, 24
        %v653 = vpop.permute.xlu0 %652
        %654 = vrot.lane.b32.xlu0 %v611, 24
        %v655 = vpop.permute.xlu0 %654
        %656 = vrot.lane.b32.xlu0 %v612, 24
        %v657 = vpop.permute.xlu0 %656
        %658 = vrot.lane.b32.xlu0 %v613, 24
        %v659 = vpop.permute.xlu0 %658
        %660 = vrot.lane.b32.xlu0 %v614, 24
        %v661 = vpop.permute.xlu0 %660
        %662 = vrot.lane.b32.xlu0 %v615, 24
        %v663 = vpop.permute.xlu0 %662
        %664 = vrot.lane.b32.xlu0 %v616, 24
        %v665 = vpop.permute.xlu0 %664
        %666 = vrot.lane.b32.xlu0 %v617, 24
        %v667 = vpop.permute.xlu0 %666
        %686 = vrot.lane.b32.xlu0 %v604, 48
        %v687 = vpop.permute.xlu0 %686
        %688 = vrot.lane.b32.xlu0 %v605, 48
        %v689 = vpop.permute.xlu0 %688
        %690 = vrot.lane.b32.xlu0 %v606, 48
        %v691 = vpop.permute.xlu0 %690
        %692 = vrot.lane.b32.xlu0 %v607, 48
        %v693 = vpop.permute.xlu0 %692
        %694 = vrot.lane.b32.xlu0 %v608, 48
        %v695 = vpop.permute.xlu0 %694
        %696 = vrot.lane.b32.xlu0 %v609, 48
        %v697 = vpop.permute.xlu0 %696
        %698 = vrot.lane.b32.xlu0 %v610, 48
        %v699 = vpop.permute.xlu0 %698
        %700 = vrot.lane.b32.xlu0 %v611, 48
        %v701 = vpop.permute.xlu0 %700
        %702 = vrot.lane.b32.xlu0 %v612, 48
        %v703 = vpop.permute.xlu0 %702
        %704 = vrot.lane.b32.xlu0 %v613, 48
        %v705 = vpop.permute.xlu0 %704
        %706 = vrot.lane.b32.xlu0 %v614, 48
        %v707 = vpop.permute.xlu0 %706
        %708 = vrot.lane.b32.xlu0 %v615, 48
        %v709 = vpop.permute.xlu0 %708
        %710 = vrot.lane.b32.xlu0 %v616, 48
        %v711 = vpop.permute.xlu0 %710
        %712 = vrot.lane.b32.xlu0 %v617, 48
        %v713 = vpop.permute.xlu0 %712
        %714 = vrot.lane.b32.xlu0 %v618, 48
        %v715 = vpop.permute.xlu0 %714
        %716 = vrot.lane.b32.xlu0 %v619, 48
        %v717 = vpop.permute.xlu0 %716
        %vm734 = vcmask 195584
        %v735 = vsel %vm734, %v600, %v637
        %v736 = vsel %vm734, %v601, %v639
        %v737 = vsel %vm734, %v602, %v641
        %v738 = vsel %vm734, %v603, %v643
        %v739 = vsel %vm734, %v604, %v645
        %v740 = vsel %vm734, %v605, %v647
        %v741 = vsel %vm734, %v606, %v649
        %v742 = vsel %vm734, %v607, %v651
        %v743 = vsel %vm734, %v608, %v653
        %v744 = vsel %vm734, %v609, %v655
        %v745 = vsel %vm734, %v610, %v657
        %v746 = vsel %vm734, %v611, %v659
        %v747 = vsel %vm734, %v612, %v661
        %v748 = vsel %vm734, %v613, %v663
        %v749 = vsel %vm734, %v614, %v665
        %v750 = vsel %vm734, %v615, %v667
        %vm751 = vcmask 392192
        %v752 = vsel %vm751, %v735, %v687
        %v753 = vsel %vm751, %v736, %v689
        %v754 = vsel %vm751, %v737, %v691
        %v755 = vsel %vm751, %v738, %v693
        %v756 = vsel %vm751, %v739, %v695
        %v757 = vsel %vm751, %v740, %v697
        %v758 = vsel %vm751, %v741, %v699
        %v759 = vsel %vm751, %v742, %v701
        %v760 = vsel %vm751, %v743, %v703
        %v761 = vsel %vm751, %v744, %v705
        %v762 = vsel %vm751, %v745, %v707
        %v763 = vsel %vm751, %v746, %v709
        %v764 = vsel %vm751, %v747, %v711
        %v765 = vsel %vm751, %v748, %v713
        %v766 = vsel %vm751, %v749, %v715
        %v767 = vsel %vm751, %v750, %v717
        %v768 = vld [vmem:[%s3] sm:$0xff]
        %v769 = vld [vmem:[%s3 + $0x8] sm:$0xff]
        %v770 = vld [vmem:[%s3 + $0x10] sm:$0xff]
        %v771 = vld [vmem:[%s3 + $0x18] sm:$0xff]
        %v772 = vld [vmem:[%s3 + $0x20] sm:$0xff]
        %v773 = vld [vmem:[%s3 + $0x28] sm:$0xff]
        %v774 = vld [vmem:[%s3 + $0x30] sm:$0xff]
        %v775 = vld [vmem:[%s3 + $0x38] sm:$0xff]
        %v776 = vld [vmem:[%s3 + $0x40] sm:$0xff]
        %vm793 = vcmask 1046528
        %v794 = vrot.slane %v752, 1
        %v795 = vrot.slane %v753, 1
        %v796 = vsel %vm793, %v794, %v795
        %v797 = vrot.slane %v754, 1
        %v798 = vrot.slane %v755, 1
        %v799 = vsel %vm793, %v797, %v798
        %v800 = vrot.slane %v756, 1
        %v801 = vrot.slane %v757, 1
        %v802 = vsel %vm793, %v800, %v801
        %v803 = vrot.slane %v758, 1
        %v804 = vrot.slane %v759, 1
        %v805 = vsel %vm793, %v803, %v804
        %v806 = vrot.slane %v760, 1
        %v807 = vrot.slane %v761, 1
        %v808 = vsel %vm793, %v806, %v807
        %v809 = vrot.slane %v762, 1
        %v810 = vrot.slane %v763, 1
        %v811 = vsel %vm793, %v809, %v810
        %v812 = vrot.slane %v764, 1
        %v813 = vrot.slane %v765, 1
        %v814 = vsel %vm793, %v812, %v813
        %v815 = vrot.slane %v766, 1
        %v816 = vrot.slane %v767, 1
        %v817 = vsel %vm793, %v815, %v816
        %s818 = scalar_lea.vmem %s3, 72
        %v819 = vld [vmem:[%s818] sm:$0xff]
        %v820 = vld [vmem:[%s818 + $0x8] sm:$0xff]
        %v821 = vld [vmem:[%s818 + $0x10] sm:$0xff]
        %v822 = vld [vmem:[%s818 + $0x18] sm:$0xff]
        %v823 = vld [vmem:[%s818 + $0x20] sm:$0xff]
        %v824 = vld [vmem:[%s818 + $0x28] sm:$0xff]
        %v825 = vld [vmem:[%s818 + $0x30] sm:$0xff]
        %v826 = vld [vmem:[%s818 + $0x38] sm:$0xff]
        %v827 = vld [vmem:[%s818 + $0x40] sm:$0xff]
        %vm828 = vcmask 588800
        %v829 = vsel %vm828, %v796, 0
        %v831 = vsel %vm828, %v799, 0
        %v833 = vsel %vm828, %v802, 0
        %v835 = vsel %vm828, %v805, 0
        %v837 = vsel %vm828, %v808, 0
        %v839 = vsel %vm828, %v811, 0
        %v841 = vsel %vm828, %v814, 0
        %v843 = vsel %vm828, %v817, 0
        %845 = vmatpush.msra.mxu0 0.0
        %846 = vmatpush.msra.mxu0 0.0
        %847 = vmatpush.msra.mxu0 0.0
        %848 = vmatpush.msra.mxu0 0.0
        %849 = vmatpush.msra.mxu0 0.0
        %850 = vmatpush.msra.mxu0 0.0
        %851 = vmatpush.msra.mxu0 0.0
        %852 = vmatpush.msra.mxu0 %v827
        %853 = vmatpush.msra.mxu0 %v826
        %854 = vmatpush.msra.mxu0 %v825
        %855 = vmatpush.msra.mxu0 %v824
        %856 = vmatpush.msra.mxu0 %v823
        %857 = vmatpush.msra.mxu0 %v822
        %858 = vmatpush.msra.mxu0 %v821
        %859 = vmatpush.msra.mxu0 %v820
        %860 = vmatpush.msra.mxu0 %v819
        %861 = vmatmul.f32.gmra.mxu0 %v829
        %v862 = vpop.f32.mrf.mxu0
        %v863 = vadd.f32 0.0, %v862
        %864 = vmatmul.f32.gmra.mxu0 %v831
        %v865 = vpop.f32.mrf.mxu0
        %v866 = vadd.f32 0.0, %v865
        %867 = vmatmul.f32.gmra.mxu0 %v833
        %v868 = vpop.f32.mrf.mxu0
        %v869 = vadd.f32 0.0, %v868
        %870 = vmatmul.f32.gmra.mxu0 %v835
        %v871 = vpop.f32.mrf.mxu0
        %v872 = vadd.f32 0.0, %v871
        %873 = vmatmul.f32.gmra.mxu0 %v837
        %v874 = vpop.f32.mrf.mxu0
        %v875 = vadd.f32 0.0, %v874
        %876 = vmatmul.f32.gmra.mxu0 %v839
        %v877 = vpop.f32.mrf.mxu0
        %v878 = vadd.f32 0.0, %v877
        %879 = vmatmul.f32.gmra.mxu0 %v841
        %v880 = vpop.f32.mrf.mxu0
        %v881 = vadd.f32 0.0, %v880
        %882 = vmatmul.f32.gmra.mxu0 %v843
        %v883 = vpop.f32.mrf.mxu0
        %v884 = vadd.f32 0.0, %v883
        %885 = vdwg.mxu0
        %v886 = vsel %vm828, %v752, 0
        %v888 = vsel %vm828, %v754, 0
        %v890 = vsel %vm828, %v756, 0
        %v892 = vsel %vm828, %v758, 0
        %v894 = vsel %vm828, %v760, 0
        %v896 = vsel %vm828, %v762, 0
        %v898 = vsel %vm828, %v764, 0
        %v900 = vsel %vm828, %v766, 0
        %902 = vmatpush.msra.mxu0 0.0
        %903 = vmatpush.msra.mxu0 0.0
        %904 = vmatpush.msra.mxu0 0.0
        %905 = vmatpush.msra.mxu0 0.0
        %906 = vmatpush.msra.mxu0 0.0
        %907 = vmatpush.msra.mxu0 0.0
        %908 = vmatpush.msra.mxu0 0.0
        %909 = vmatpush.msra.mxu0 %v776
        %910 = vmatpush.msra.mxu0 %v775
        %911 = vmatpush.msra.mxu0 %v774
        %912 = vmatpush.msra.mxu0 %v773
        %913 = vmatpush.msra.mxu0 %v772
        %914 = vmatpush.msra.mxu0 %v771
        %915 = vmatpush.msra.mxu0 %v770
        %916 = vmatpush.msra.mxu0 %v769
        %917 = vmatpush.msra.mxu0 %v768
        %918 = vmatmul.f32.gmra.mxu0 %v886
        %v919 = vpop.f32.mrf.mxu0
        %v920 = vadd.f32 %v863, %v919
        %921 = vmatmul.f32.gmra.mxu0 %v888
        %v922 = vpop.f32.mrf.mxu0
        %v923 = vadd.f32 %v866, %v922
        %924 = vmatmul.f32.gmra.mxu0 %v890
        %v925 = vpop.f32.mrf.mxu0
        %v926 = vadd.f32 %v869, %v925
        %927 = vmatmul.f32.gmra.mxu0 %v892
        %v928 = vpop.f32.mrf.mxu0
        %v929 = vadd.f32 %v872, %v928
        %930 = vmatmul.f32.gmra.mxu0 %v894
        %v931 = vpop.f32.mrf.mxu0
        %v932 = vadd.f32 %v875, %v931
        %933 = vmatmul.f32.gmra.mxu0 %v896
        %v934 = vpop.f32.mrf.mxu0
        %v935 = vadd.f32 %v878, %v934
        %936 = vmatmul.f32.gmra.mxu0 %v898
        %v937 = vpop.f32.mrf.mxu0
        %v938 = vadd.f32 %v881, %v937
        %939 = vmatmul.f32.gmra.mxu0 %v900
        %v940 = vpop.f32.mrf.mxu0
        %v941 = vadd.f32 %v884, %v940
        %942 = vdwg.mxu0
        %vm943 = vcmask 1045504
        %v944 = vrot.slane %v752, 2
        %v945 = vrot.slane %v753, 2
        %v946 = vsel %vm943, %v944, %v945
        %v947 = vrot.slane %v754, 2
        %v948 = vrot.slane %v755, 2
        %v949 = vsel %vm943, %v947, %v948
        %v950 = vrot.slane %v756, 2
        %v951 = vrot.slane %v757, 2
        %v952 = vsel %vm943, %v950, %v951
        %v953 = vrot.slane %v758, 2
        %v954 = vrot.slane %v759, 2
        %v955 = vsel %vm943, %v953, %v954
        %v956 = vrot.slane %v760, 2
        %v957 = vrot.slane %v761, 2
        %v958 = vsel %vm943, %v956, %v957
        %v959 = vrot.slane %v762, 2
        %v960 = vrot.slane %v763, 2
        %v961 = vsel %vm943, %v959, %v960
        %v962 = vrot.slane %v764, 2
        %v963 = vrot.slane %v765, 2
        %v964 = vsel %vm943, %v962, %v963
        %v965 = vrot.slane %v766, 2
        %v966 = vrot.slane %v767, 2
        %v967 = vsel %vm943, %v965, %v966
        %s968 = scalar_lea.vmem %s3, 144
        %v969 = vld [vmem:[%s968] sm:$0xff]
        %v970 = vld [vmem:[%s968 + $0x8] sm:$0xff]
        %v971 = vld [vmem:[%s968 + $0x10] sm:$0xff]
        %v972 = vld [vmem:[%s968 + $0x18] sm:$0xff]
        %v973 = vld [vmem:[%s968 + $0x20] sm:$0xff]
        %v974 = vld [vmem:[%s968 + $0x28] sm:$0xff]
        %v975 = vld [vmem:[%s968 + $0x30] sm:$0xff]
        %v976 = vld [vmem:[%s968 + $0x38] sm:$0xff]
        %v977 = vld [vmem:[%s968 + $0x40] sm:$0xff]
        %v978 = vsel %vm828, %v946, 0
        %v980 = vsel %vm828, %v949, 0
        %v982 = vsel %vm828, %v952, 0
        %v984 = vsel %vm828, %v955, 0
        %v986 = vsel %vm828, %v958, 0
        %v988 = vsel %vm828, %v961, 0
        %v990 = vsel %vm828, %v964, 0
        %v992 = vsel %vm828, %v967, 0
        %994 = vmatpush.msra.mxu0 0.0
        %995 = vmatpush.msra.mxu0 0.0
        %996 = vmatpush.msra.mxu0 0.0
        %997 = vmatpush.msra.mxu0 0.0
        %998 = vmatpush.msra.mxu0 0.0
        %999 = vmatpush.msra.mxu0 0.0
        %1000 = vmatpush.msra.mxu0 0.0
        %1001 = vmatpush.msra.mxu0 %v977
        %1002 = vmatpush.msra.mxu0 %v976
        %1003 = vmatpush.msra.mxu0 %v975
        %1004 = vmatpush.msra.mxu0 %v974
        %1005 = vmatpush.msra.mxu0 %v973
        %1006 = vmatpush.msra.mxu0 %v972
        %1007 = vmatpush.msra.mxu0 %v971
        %1008 = vmatpush.msra.mxu0 %v970
        %1009 = vmatpush.msra.mxu0 %v969
        %1010 = vmatmul.f32.gmra.mxu0 %v978
        %v1011 = vpop.f32.mrf.mxu0
        %v1012 = vadd.f32 0.0, %v1011
        %1013 = vmatmul.f32.gmra.mxu0 %v980
        %v1014 = vpop.f32.mrf.mxu0
        %v1015 = vadd.f32 0.0, %v1014
        %1016 = vmatmul.f32.gmra.mxu0 %v982
        %v1017 = vpop.f32.mrf.mxu0
        %v1018 = vadd.f32 0.0, %v1017
        %1019 = vmatmul.f32.gmra.mxu0 %v984
        %v1020 = vpop.f32.mrf.mxu0
        %v1021 = vadd.f32 0.0, %v1020
        %1022 = vmatmul.f32.gmra.mxu0 %v986
        %v1023 = vpop.f32.mrf.mxu0
        %v1024 = vadd.f32 0.0, %v1023
        %1025 = vmatmul.f32.gmra.mxu0 %v988
        %v1026 = vpop.f32.mrf.mxu0
        %v1027 = vadd.f32 0.0, %v1026
        %1028 = vmatmul.f32.gmra.mxu0 %v990
        %v1029 = vpop.f32.mrf.mxu0
        %v1030 = vadd.f32 0.0, %v1029
        %1031 = vmatmul.f32.gmra.mxu0 %v992
        %v1032 = vpop.f32.mrf.mxu0
        %v1033 = vadd.f32 0.0, %v1032
        %1034 = vdwg.mxu0
        %v1035 = vadd.f32 %v920, %v1012
        %v1036 = vadd.f32 %v923, %v1015
        %v1037 = vadd.f32 %v926, %v1018
        %v1038 = vadd.f32 %v929, %v1021
        %v1039 = vadd.f32 %v932, %v1024
        %v1040 = vadd.f32 %v935, %v1027
        %v1041 = vadd.f32 %v938, %v1030
        %v1042 = vadd.f32 %v941, %v1033
        %v1043 = vmax.f32 %v1035, 0.0
        %v1044 = vmax.f32 %v1036, 0.0
        %v1045 = vmax.f32 %v1037, 0.0
        %v1046 = vmax.f32 %v1038, 0.0
        %v1047 = vmax.f32 %v1039, 0.0
        %v1048 = vmax.f32 %v1040, 0.0
        %v1049 = vmax.f32 %v1041, 0.0
        %v1050 = vmax.f32 %v1042, 0.0
        %1051 = vst.msk [vmem:[%s305] sm:$0xff] %vm599, %v1043
        %1052 = vst.msk [vmem:[%s305 + $0x8] sm:$0xff] %vm599, %v1044
        %1053 = vst.msk [vmem:[%s305 + $0x10] sm:$0xff] %vm599, %v1045
        %1054 = vst.msk [vmem:[%s305 + $0x18] sm:$0xff] %vm599, %v1046
        %1055 = vst.msk [vmem:[%s305 + $0x20] sm:$0xff] %vm599, %v1047
        %1056 = vst.msk [vmem:[%s305 + $0x28] sm:$0xff] %vm599, %v1048
        %1057 = vst.msk [vmem:[%s305 + $0x30] sm:$0xff] %vm599, %v1049
        %1058 = vst.msk [vmem:[%s305 + $0x38] sm:$0xff] %vm599, %v1050
        %v1059 = vld [vmem:[%s376] sm:$0xff]
        %v1060 = vld [vmem:[%s376 + $0x8] sm:$0x3]
        %v1061 = vld [vmem:[%s376 + $0x10] sm:$0xff]
        %v1062 = vld [vmem:[%s376 + $0x18] sm:$0x3]
        %v1063 = vld [vmem:[%s376 + $0x20] sm:$0xff]
        %v1064 = vld [vmem:[%s376 + $0x28] sm:$0x3]
        %v1065 = vld [vmem:[%s376 + $0x30] sm:$0xff]
        %v1066 = vld [vmem:[%s376 + $0x38] sm:$0x3]
        %v1067 = vld [vmem:[%s376 + $0x40] sm:$0xff]
        %v1068 = vld [vmem:[%s376 + $0x48] sm:$0x3]
        %v1069 = vld [vmem:[%s376 + $0x50] sm:$0xff]
        %v1070 = vld [vmem:[%s376 + $0x58] sm:$0x3]
        %v1071 = vld [vmem:[%s376 + $0x60] sm:$0xff]
        %v1072 = vld [vmem:[%s376 + $0x68] sm:$0x3]
        %v1073 = vld [vmem:[%s376 + $0x70] sm:$0xff]
        %v1074 = vld [vmem:[%s376 + $0x78] sm:$0x3]
        %v1075 = vld [vmem:[%s376 + $0x80] sm:$0xff]
        %v1076 = vld [vmem:[%s376 + $0x88] sm:$0x3]
        %v1077 = vld [vmem:[%s376 + $0x90] sm:$0xff]
        %v1078 = vld [vmem:[%s376 + $0x98] sm:$0x3]
        %v1079 = vld [vmem:[%s397] sm:$0xff]
        %v1080 = vld [vmem:[%s397 + $0x8] sm:$0x3]
        %v1081 = vld [vmem:[%s397 + $0x10] sm:$0xff]
        %v1082 = vld [vmem:[%s397 + $0x18] sm:$0x3]
        %v1083 = vld [vmem:[%s397 + $0x20] sm:$0xff]
        %v1084 = vld [vmem:[%s397 + $0x28] sm:$0x3]
        %v1085 = vld [vmem:[%s397 + $0x30] sm:$0xff]
        %v1086 = vld [vmem:[%s397 + $0x38] sm:$0x3]
        %v1087 = vld [vmem:[%s397 + $0x40] sm:$0xff]
        %v1088 = vld [vmem:[%s397 + $0x48] sm:$0x3]
        %v1089 = vld [vmem:[%s397 + $0x50] sm:$0xff]
        %v1090 = vld [vmem:[%s397 + $0x58] sm:$0x3]
        %v1091 = vld [vmem:[%s397 + $0x60] sm:$0xff]
        %v1092 = vld [vmem:[%s397 + $0x68] sm:$0x3]
        %v1093 = vld [vmem:[%s397 + $0x70] sm:$0xff]
        %v1094 = vld [vmem:[%s397 + $0x78] sm:$0x3]
        %v1095 = vld [vmem:[%s397 + $0x80] sm:$0xff]
        %v1096 = vld [vmem:[%s397 + $0x88] sm:$0x3]
        %v1097 = vld [vmem:[%s397 + $0x90] sm:$0xff]
        %v1098 = vld [vmem:[%s397 + $0x98] sm:$0x3]
        %s1099 = scalar_lea.vmem %s321, 480
        %v1100 = vld [vmem:[%s1099] sm:$0xff]
        %v1101 = vld [vmem:[%s1099 + $0x8] sm:$0x3]
        %v1102 = vld [vmem:[%s1099 + $0x10] sm:$0xff]
        %v1103 = vld [vmem:[%s1099 + $0x18] sm:$0x3]
        %v1104 = vld [vmem:[%s1099 + $0x20] sm:$0xff]
        %v1105 = vld [vmem:[%s1099 + $0x28] sm:$0x3]
        %v1106 = vld [vmem:[%s1099 + $0x30] sm:$0xff]
        %v1107 = vld [vmem:[%s1099 + $0x38] sm:$0x3]
        %v1108 = vld [vmem:[%s1099 + $0x40] sm:$0xff]
        %v1109 = vld [vmem:[%s1099 + $0x48] sm:$0x3]
        %v1110 = vld [vmem:[%s1099 + $0x50] sm:$0xff]
        %v1111 = vld [vmem:[%s1099 + $0x58] sm:$0x3]
        %v1112 = vld [vmem:[%s1099 + $0x60] sm:$0xff]
        %v1113 = vld [vmem:[%s1099 + $0x68] sm:$0x3]
        %v1114 = vld [vmem:[%s1099 + $0x70] sm:$0xff]
        %v1115 = vld [vmem:[%s1099 + $0x78] sm:$0x3]
        %v1116 = vld [vmem:[%s1099 + $0x80] sm:$0xff]
        %v1117 = vld [vmem:[%s1099 + $0x88] sm:$0x3]
        %v1118 = vld [vmem:[%s1099 + $0x90] sm:$0xff]
        %v1119 = vld [vmem:[%s1099 + $0x98] sm:$0x3]
        %1140 = vrot.lane.b32.xlu0 %v1079, 8
        %v1141 = vpop.permute.xlu0 %1140
        %1142 = vrot.lane.b32.xlu0 %v1080, 8
        %v1143 = vpop.permute.xlu0 %1142
        %1144 = vrot.lane.b32.xlu0 %v1081, 8
        %v1145 = vpop.permute.xlu0 %1144
        %1146 = vrot.lane.b32.xlu0 %v1082, 8
        %v1147 = vpop.permute.xlu0 %1146
        %1148 = vrot.lane.b32.xlu0 %v1083, 8
        %v1149 = vpop.permute.xlu0 %1148
        %1150 = vrot.lane.b32.xlu0 %v1084, 8
        %v1151 = vpop.permute.xlu0 %1150
        %1152 = vrot.lane.b32.xlu0 %v1085, 8
        %v1153 = vpop.permute.xlu0 %1152
        %1154 = vrot.lane.b32.xlu0 %v1086, 8
        %v1155 = vpop.permute.xlu0 %1154
        %1156 = vrot.lane.b32.xlu0 %v1087, 8
        %v1157 = vpop.permute.xlu0 %1156
        %1158 = vrot.lane.b32.xlu0 %v1088, 8
        %v1159 = vpop.permute.xlu0 %1158
        %1160 = vrot.lane.b32.xlu0 %v1089, 8
        %v1161 = vpop.permute.xlu0 %1160
        %1162 = vrot.lane.b32.xlu0 %v1090, 8
        %v1163 = vpop.permute.xlu0 %1162
        %1164 = vrot.lane.b32.xlu0 %v1091, 8
        %v1165 = vpop.permute.xlu0 %1164
        %1166 = vrot.lane.b32.xlu0 %v1092, 8
        %v1167 = vpop.permute.xlu0 %1166
        %1168 = vrot.lane.b32.xlu0 %v1093, 8
        %v1169 = vpop.permute.xlu0 %1168
        %1170 = vrot.lane.b32.xlu0 %v1094, 8
        %v1171 = vpop.permute.xlu0 %1170
        %1172 = vrot.lane.b32.xlu0 %v1095, 8
        %v1173 = vpop.permute.xlu0 %1172
        %1174 = vrot.lane.b32.xlu0 %v1096, 8
        %v1175 = vpop.permute.xlu0 %1174
        %1176 = vrot.lane.b32.xlu0 %v1097, 8
        %v1177 = vpop.permute.xlu0 %1176
        %1178 = vrot.lane.b32.xlu0 %v1098, 8
        %v1179 = vpop.permute.xlu0 %1178
        %1220 = vrot.lane.b32.xlu0 %v1100, 16
        %v1221 = vpop.permute.xlu0 %1220
        %1222 = vrot.lane.b32.xlu0 %v1101, 16
        %v1223 = vpop.permute.xlu0 %1222
        %1224 = vrot.lane.b32.xlu0 %v1102, 16
        %v1225 = vpop.permute.xlu0 %1224
        %1226 = vrot.lane.b32.xlu0 %v1103, 16
        %v1227 = vpop.permute.xlu0 %1226
        %1228 = vrot.lane.b32.xlu0 %v1104, 16
        %v1229 = vpop.permute.xlu0 %1228
        %1230 = vrot.lane.b32.xlu0 %v1105, 16
        %v1231 = vpop.permute.xlu0 %1230
        %1232 = vrot.lane.b32.xlu0 %v1106, 16
        %v1233 = vpop.permute.xlu0 %1232
        %1234 = vrot.lane.b32.xlu0 %v1107, 16
        %v1235 = vpop.permute.xlu0 %1234
        %1236 = vrot.lane.b32.xlu0 %v1108, 16
        %v1237 = vpop.permute.xlu0 %1236
        %1238 = vrot.lane.b32.xlu0 %v1109, 16
        %v1239 = vpop.permute.xlu0 %1238
        %1240 = vrot.lane.b32.xlu0 %v1110, 16
        %v1241 = vpop.permute.xlu0 %1240
        %1242 = vrot.lane.b32.xlu0 %v1111, 16
        %v1243 = vpop.permute.xlu0 %1242
        %1244 = vrot.lane.b32.xlu0 %v1112, 16
        %v1245 = vpop.permute.xlu0 %1244
        %1246 = vrot.lane.b32.xlu0 %v1113, 16
        %v1247 = vpop.permute.xlu0 %1246
        %1248 = vrot.lane.b32.xlu0 %v1114, 16
        %v1249 = vpop.permute.xlu0 %1248
        %1250 = vrot.lane.b32.xlu0 %v1115, 16
        %v1251 = vpop.permute.xlu0 %1250
        %1252 = vrot.lane.b32.xlu0 %v1116, 16
        %v1253 = vpop.permute.xlu0 %1252
        %1254 = vrot.lane.b32.xlu0 %v1117, 16
        %v1255 = vpop.permute.xlu0 %1254
        %1256 = vrot.lane.b32.xlu0 %v1118, 16
        %v1257 = vpop.permute.xlu0 %1256
        %1258 = vrot.lane.b32.xlu0 %v1119, 16
        %v1259 = vpop.permute.xlu0 %1258
        %v1280 = vsel %vm578, %v1059, %v1141
        %v1281 = vsel %vm578, %v1060, %v1143
        %v1282 = vsel %vm578, %v1061, %v1145
        %v1283 = vsel %vm578, %v1062, %v1147
        %v1284 = vsel %vm578, %v1063, %v1149
        %v1285 = vsel %vm578, %v1064, %v1151
        %v1286 = vsel %vm578, %v1065, %v1153
        %v1287 = vsel %vm578, %v1066, %v1155
        %v1288 = vsel %vm578, %v1067, %v1157
        %v1289 = vsel %vm578, %v1068, %v1159
        %v1290 = vsel %vm578, %v1069, %v1161
        %v1291 = vsel %vm578, %v1070, %v1163
        %v1292 = vsel %vm578, %v1071, %v1165
        %v1293 = vsel %vm578, %v1072, %v1167
        %v1294 = vsel %vm578, %v1073, %v1169
        %v1295 = vsel %vm578, %v1074, %v1171
        %v1296 = vsel %vm578, %v1075, %v1173
        %v1297 = vsel %vm578, %v1076, %v1175
        %v1298 = vsel %vm578, %v1077, %v1177
        %v1299 = vsel %vm578, %v1078, %v1179
        %v1300 = vsel %vm599, %v1280, %v1221
        %v1301 = vsel %vm599, %v1281, %v1223
        %v1302 = vsel %vm599, %v1282, %v1225
        %v1303 = vsel %vm599, %v1283, %v1227
        %v1304 = vsel %vm599, %v1284, %v1229
        %v1305 = vsel %vm599, %v1285, %v1231
        %v1306 = vsel %vm599, %v1286, %v1233
        %v1307 = vsel %vm599, %v1287, %v1235
        %v1308 = vsel %vm599, %v1288, %v1237
        %v1309 = vsel %vm599, %v1289, %v1239
        %v1310 = vsel %vm599, %v1290, %v1241
        %v1311 = vsel %vm599, %v1291, %v1243
        %v1312 = vsel %vm599, %v1292, %v1245
        %v1313 = vsel %vm599, %v1293, %v1247
        %v1314 = vsel %vm599, %v1294, %v1249
        %v1315 = vsel %vm599, %v1295, %v1251
        %v1316 = vsel %vm599, %v1296, %v1253
        %v1317 = vsel %vm599, %v1297, %v1255
        %v1318 = vsel %vm599, %v1298, %v1257
        %v1319 = vsel %vm599, %v1299, %v1259
        %1336 = vrot.lane.b32.xlu0 %v1302, 24
        %v1337 = vpop.permute.xlu0 %1336
        %1338 = vrot.lane.b32.xlu0 %v1303, 24
        %v1339 = vpop.permute.xlu0 %1338
        %1340 = vrot.lane.b32.xlu0 %v1304, 24
        %v1341 = vpop.permute.xlu0 %1340
        %1342 = vrot.lane.b32.xlu0 %v1305, 24
        %v1343 = vpop.permute.xlu0 %1342
        %1344 = vrot.lane.b32.xlu0 %v1306, 24
        %v1345 = vpop.permute.xlu0 %1344
        %1346 = vrot.lane.b32.xlu0 %v1307, 24
        %v1347 = vpop.permute.xlu0 %1346
        %1348 = vrot.lane.b32.xlu0 %v1308, 24
        %v1349 = vpop.permute.xlu0 %1348
        %1350 = vrot.lane.b32.xlu0 %v1309, 24
        %v1351 = vpop.permute.xlu0 %1350
        %1352 = vrot.lane.b32.xlu0 %v1310, 24
        %v1353 = vpop.permute.xlu0 %1352
        %1354 = vrot.lane.b32.xlu0 %v1311, 24
        %v1355 = vpop.permute.xlu0 %1354
        %1356 = vrot.lane.b32.xlu0 %v1312, 24
        %v1357 = vpop.permute.xlu0 %1356
        %1358 = vrot.lane.b32.xlu0 %v1313, 24
        %v1359 = vpop.permute.xlu0 %1358
        %1360 = vrot.lane.b32.xlu0 %v1314, 24
        %v1361 = vpop.permute.xlu0 %1360
        %1362 = vrot.lane.b32.xlu0 %v1315, 24
        %v1363 = vpop.permute.xlu0 %1362
        %1364 = vrot.lane.b32.xlu0 %v1316, 24
        %v1365 = vpop.permute.xlu0 %1364
        %1366 = vrot.lane.b32.xlu0 %v1317, 24
        %v1367 = vpop.permute.xlu0 %1366
        %1386 = vrot.lane.b32.xlu0 %v1304, 48
        %v1387 = vpop.permute.xlu0 %1386
        %1388 = vrot.lane.b32.xlu0 %v1305, 48
        %v1389 = vpop.permute.xlu0 %1388
        %1390 = vrot.lane.b32.xlu0 %v1306, 48
        %v1391 = vpop.permute.xlu0 %1390
        %1392 = vrot.lane.b32.xlu0 %v1307, 48
        %v1393 = vpop.permute.xlu0 %1392
        %1394 = vrot.lane.b32.xlu0 %v1308, 48
        %v1395 = vpop.permute.xlu0 %1394
        %1396 = vrot.lane.b32.xlu0 %v1309, 48
        %v1397 = vpop.permute.xlu0 %1396
        %1398 = vrot.lane.b32.xlu0 %v1310, 48
        %v1399 = vpop.permute.xlu0 %1398
        %1400 = vrot.lane.b32.xlu0 %v1311, 48
        %v1401 = vpop.permute.xlu0 %1400
        %1402 = vrot.lane.b32.xlu0 %v1312, 48
        %v1403 = vpop.permute.xlu0 %1402
        %1404 = vrot.lane.b32.xlu0 %v1313, 48
        %v1405 = vpop.permute.xlu0 %1404
        %1406 = vrot.lane.b32.xlu0 %v1314, 48
        %v1407 = vpop.permute.xlu0 %1406
        %1408 = vrot.lane.b32.xlu0 %v1315, 48
        %v1409 = vpop.permute.xlu0 %1408
        %1410 = vrot.lane.b32.xlu0 %v1316, 48
        %v1411 = vpop.permute.xlu0 %1410
        %1412 = vrot.lane.b32.xlu0 %v1317, 48
        %v1413 = vpop.permute.xlu0 %1412
        %1414 = vrot.lane.b32.xlu0 %v1318, 48
        %v1415 = vpop.permute.xlu0 %1414
        %1416 = vrot.lane.b32.xlu0 %v1319, 48
        %v1417 = vpop.permute.xlu0 %1416
        %v1434 = vsel %vm734, %v1300, %v1337
        %v1435 = vsel %vm734, %v1301, %v1339
        %v1436 = vsel %vm734, %v1302, %v1341
        %v1437 = vsel %vm734, %v1303, %v1343
        %v1438 = vsel %vm734, %v1304, %v1345
        %v1439 = vsel %vm734, %v1305, %v1347
        %v1440 = vsel %vm734, %v1306, %v1349
        %v1441 = vsel %vm734, %v1307, %v1351
        %v1442 = vsel %vm734, %v1308, %v1353
        %v1443 = vsel %vm734, %v1309, %v1355
        %v1444 = vsel %vm734, %v1310, %v1357
        %v1445 = vsel %vm734, %v1311, %v1359
        %v1446 = vsel %vm734, %v1312, %v1361
        %v1447 = vsel %vm734, %v1313, %v1363
        %v1448 = vsel %vm734, %v1314, %v1365
        %v1449 = vsel %vm734, %v1315, %v1367
        %v1450 = vsel %vm751, %v1434, %v1387
        %v1451 = vsel %vm751, %v1435, %v1389
        %v1452 = vsel %vm751, %v1436, %v1391
        %v1453 = vsel %vm751, %v1437, %v1393
        %v1454 = vsel %vm751, %v1438, %v1395
        %v1455 = vsel %vm751, %v1439, %v1397
        %v1456 = vsel %vm751, %v1440, %v1399
        %v1457 = vsel %vm751, %v1441, %v1401
        %v1458 = vsel %vm751, %v1442, %v1403
        %v1459 = vsel %vm751, %v1443, %v1405
        %v1460 = vsel %vm751, %v1444, %v1407
        %v1461 = vsel %vm751, %v1445, %v1409
        %v1462 = vsel %vm751, %v1446, %v1411
        %v1463 = vsel %vm751, %v1447, %v1413
        %v1464 = vsel %vm751, %v1448, %v1415
        %v1465 = vsel %vm751, %v1449, %v1417
        %v1466 = vld [vmem:[%s3] sm:$0xff]
        %v1467 = vld [vmem:[%s3 + $0x8] sm:$0xff]
        %v1468 = vld [vmem:[%s3 + $0x10] sm:$0xff]
        %v1469 = vld [vmem:[%s3 + $0x18] sm:$0xff]
        %v1470 = vld [vmem:[%s3 + $0x20] sm:$0xff]
        %v1471 = vld [vmem:[%s3 + $0x28] sm:$0xff]
        %v1472 = vld [vmem:[%s3 + $0x30] sm:$0xff]
        %v1473 = vld [vmem:[%s3 + $0x38] sm:$0xff]
        %v1474 = vld [vmem:[%s3 + $0x40] sm:$0xff]
        %v1491 = vrot.slane %v1450, 1
        %v1492 = vrot.slane %v1451, 1
        %v1493 = vsel %vm793, %v1491, %v1492
        %v1494 = vrot.slane %v1452, 1
        %v1495 = vrot.slane %v1453, 1
        %v1496 = vsel %vm793, %v1494, %v1495
        %v1497 = vrot.slane %v1454, 1
        %v1498 = vrot.slane %v1455, 1
        %v1499 = vsel %vm793, %v1497, %v1498
        %v1500 = vrot.slane %v1456, 1
        %v1501 = vrot.slane %v1457, 1
        %v1502 = vsel %vm793, %v1500, %v1501
        %v1503 = vrot.slane %v1458, 1
        %v1504 = vrot.slane %v1459, 1
        %v1505 = vsel %vm793, %v1503, %v1504
        %v1506 = vrot.slane %v1460, 1
        %v1507 = vrot.slane %v1461, 1
        %v1508 = vsel %vm793, %v1506, %v1507
        %v1509 = vrot.slane %v1462, 1
        %v1510 = vrot.slane %v1463, 1
        %v1511 = vsel %vm793, %v1509, %v1510
        %v1512 = vrot.slane %v1464, 1
        %v1513 = vrot.slane %v1465, 1
        %v1514 = vsel %vm793, %v1512, %v1513
        %v1515 = vld [vmem:[%s818] sm:$0xff]
        %v1516 = vld [vmem:[%s818 + $0x8] sm:$0xff]
        %v1517 = vld [vmem:[%s818 + $0x10] sm:$0xff]
        %v1518 = vld [vmem:[%s818 + $0x18] sm:$0xff]
        %v1519 = vld [vmem:[%s818 + $0x20] sm:$0xff]
        %v1520 = vld [vmem:[%s818 + $0x28] sm:$0xff]
        %v1521 = vld [vmem:[%s818 + $0x30] sm:$0xff]
        %v1522 = vld [vmem:[%s818 + $0x38] sm:$0xff]
        %v1523 = vld [vmem:[%s818 + $0x40] sm:$0xff]
        %v1524 = vsel %vm828, %v1493, 0
        %v1526 = vsel %vm828, %v1496, 0
        %v1528 = vsel %vm828, %v1499, 0
        %v1530 = vsel %vm828, %v1502, 0
        %v1532 = vsel %vm828, %v1505, 0
        %v1534 = vsel %vm828, %v1508, 0
        %v1536 = vsel %vm828, %v1511, 0
        %v1538 = vsel %vm828, %v1514, 0
        %1540 = vmatpush.msra.mxu0 0.0
        %1541 = vmatpush.msra.mxu0 0.0
        %1542 = vmatpush.msra.mxu0 0.0
        %1543 = vmatpush.msra.mxu0 0.0
        %1544 = vmatpush.msra.mxu0 0.0
        %1545 = vmatpush.msra.mxu0 0.0
        %1546 = vmatpush.msra.mxu0 0.0
        %1547 = vmatpush.msra.mxu0 %v1523
        %1548 = vmatpush.msra.mxu0 %v1522
        %1549 = vmatpush.msra.mxu0 %v1521
        %1550 = vmatpush.msra.mxu0 %v1520
        %1551 = vmatpush.msra.mxu0 %v1519
        %1552 = vmatpush.msra.mxu0 %v1518
        %1553 = vmatpush.msra.mxu0 %v1517
        %1554 = vmatpush.msra.mxu0 %v1516
        %1555 = vmatpush.msra.mxu0 %v1515
        %1556 = vmatmul.f32.gmra.mxu0 %v1524
        %v1557 = vpop.f32.mrf.mxu0
        %v1558 = vadd.f32 0.0, %v1557
        %1559 = vmatmul.f32.gmra.mxu0 %v1526
        %v1560 = vpop.f32.mrf.mxu0
        %v1561 = vadd.f32 0.0, %v1560
        %1562 = vmatmul.f32.gmra.mxu0 %v1528
        %v1563 = vpop.f32.mrf.mxu0
        %v1564 = vadd.f32 0.0, %v1563
        %1565 = vmatmul.f32.gmra.mxu0 %v1530
        %v1566 = vpop.f32.mrf.mxu0
        %v1567 = vadd.f32 0.0, %v1566
        %1568 = vmatmul.f32.gmra.mxu0 %v1532
        %v1569 = vpop.f32.mrf.mxu0
        %v1570 = vadd.f32 0.0, %v1569
        %1571 = vmatmul.f32.gmra.mxu0 %v1534
        %v1572 = vpop.f32.mrf.mxu0
        %v1573 = vadd.f32 0.0, %v1572
        %1574 = vmatmul.f32.gmra.mxu0 %v1536
        %v1575 = vpop.f32.mrf.mxu0
        %v1576 = vadd.f32 0.0, %v1575
        %1577 = vmatmul.f32.gmra.mxu0 %v1538
        %v1578 = vpop.f32.mrf.mxu0
        %v1579 = vadd.f32 0.0, %v1578
        %1580 = vdwg.mxu0
        %v1581 = vsel %vm828, %v1450, 0
        %v1583 = vsel %vm828, %v1452, 0
        %v1585 = vsel %vm828, %v1454, 0
        %v1587 = vsel %vm828, %v1456, 0
        %v1589 = vsel %vm828, %v1458, 0
        %v1591 = vsel %vm828, %v1460, 0
        %v1593 = vsel %vm828, %v1462, 0
        %v1595 = vsel %vm828, %v1464, 0
        %1597 = vmatpush.msra.mxu0 0.0
        %1598 = vmatpush.msra.mxu0 0.0
        %1599 = vmatpush.msra.mxu0 0.0
        %1600 = vmatpush.msra.mxu0 0.0
        %1601 = vmatpush.msra.mxu0 0.0
        %1602 = vmatpush.msra.mxu0 0.0
        %1603 = vmatpush.msra.mxu0 0.0
        %1604 = vmatpush.msra.mxu0 %v1474
        %1605 = vmatpush.msra.mxu0 %v1473
        %1606 = vmatpush.msra.mxu0 %v1472
        %1607 = vmatpush.msra.mxu0 %v1471
        %1608 = vmatpush.msra.mxu0 %v1470
        %1609 = vmatpush.msra.mxu0 %v1469
        %1610 = vmatpush.msra.mxu0 %v1468
        %1611 = vmatpush.msra.mxu0 %v1467
        %1612 = vmatpush.msra.mxu0 %v1466
        %1613 = vmatmul.f32.gmra.mxu0 %v1581
        %v1614 = vpop.f32.mrf.mxu0
        %v1615 = vadd.f32 %v1558, %v1614
        %1616 = vmatmul.f32.gmra.mxu0 %v1583
        %v1617 = vpop.f32.mrf.mxu0
        %v1618 = vadd.f32 %v1561, %v1617
        %1619 = vmatmul.f32.gmra.mxu0 %v1585
        %v1620 = vpop.f32.mrf.mxu0
        %v1621 = vadd.f32 %v1564, %v1620
        %1622 = vmatmul.f32.gmra.mxu0 %v1587
        %v1623 = vpop.f32.mrf.mxu0
        %v1624 = vadd.f32 %v1567, %v1623
        %1625 = vmatmul.f32.gmra.mxu0 %v1589
        %v1626 = vpop.f32.mrf.mxu0
        %v1627 = vadd.f32 %v1570, %v1626
        %1628 = vmatmul.f32.gmra.mxu0 %v1591
        %v1629 = vpop.f32.mrf.mxu0
        %v1630 = vadd.f32 %v1573, %v1629
        %1631 = vmatmul.f32.gmra.mxu0 %v1593
        %v1632 = vpop.f32.mrf.mxu0
        %v1633 = vadd.f32 %v1576, %v1632
        %1634 = vmatmul.f32.gmra.mxu0 %v1595
        %v1635 = vpop.f32.mrf.mxu0
        %v1636 = vadd.f32 %v1579, %v1635
        %1637 = vdwg.mxu0
        %v1638 = vrot.slane %v1450, 2
        %v1639 = vrot.slane %v1451, 2
        %v1640 = vsel %vm943, %v1638, %v1639
        %v1641 = vrot.slane %v1452, 2
        %v1642 = vrot.slane %v1453, 2
        %v1643 = vsel %vm943, %v1641, %v1642
        %v1644 = vrot.slane %v1454, 2
        %v1645 = vrot.slane %v1455, 2
        %v1646 = vsel %vm943, %v1644, %v1645
        %v1647 = vrot.slane %v1456, 2
        %v1648 = vrot.slane %v1457, 2
        %v1649 = vsel %vm943, %v1647, %v1648
        %v1650 = vrot.slane %v1458, 2
        %v1651 = vrot.slane %v1459, 2
        %v1652 = vsel %vm943, %v1650, %v1651
        %v1653 = vrot.slane %v1460, 2
        %v1654 = vrot.slane %v1461, 2
        %v1655 = vsel %vm943, %v1653, %v1654
        %v1656 = vrot.slane %v1462, 2
        %v1657 = vrot.slane %v1463, 2
        %v1658 = vsel %vm943, %v1656, %v1657
        %v1659 = vrot.slane %v1464, 2
        %v1660 = vrot.slane %v1465, 2
        %v1661 = vsel %vm943, %v1659, %v1660
        %v1662 = vld [vmem:[%s968] sm:$0xff]
        %v1663 = vld [vmem:[%s968 + $0x8] sm:$0xff]
        %v1664 = vld [vmem:[%s968 + $0x10] sm:$0xff]
        %v1665 = vld [vmem:[%s968 + $0x18] sm:$0xff]
        %v1666 = vld [vmem:[%s968 + $0x20] sm:$0xff]
        %v1667 = vld [vmem:[%s968 + $0x28] sm:$0xff]
        %v1668 = vld [vmem:[%s968 + $0x30] sm:$0xff]
        %v1669 = vld [vmem:[%s968 + $0x38] sm:$0xff]
        %v1670 = vld [vmem:[%s968 + $0x40] sm:$0xff]
        %v1671 = vsel %vm828, %v1640, 0
        %v1673 = vsel %vm828, %v1643, 0
        %v1675 = vsel %vm828, %v1646, 0
        %v1677 = vsel %vm828, %v1649, 0
        %v1679 = vsel %vm828, %v1652, 0
        %v1681 = vsel %vm828, %v1655, 0
        %v1683 = vsel %vm828, %v1658, 0
        %v1685 = vsel %vm828, %v1661, 0
        %1687 = vmatpush.msra.mxu0 0.0
        %1688 = vmatpush.msra.mxu0 0.0
        %1689 = vmatpush.msra.mxu0 0.0
        %1690 = vmatpush.msra.mxu0 0.0
        %1691 = vmatpush.msra.mxu0 0.0
        %1692 = vmatpush.msra.mxu0 0.0
        %1693 = vmatpush.msra.mxu0 0.0
        %1694 = vmatpush.msra.mxu0 %v1670
        %1695 = vmatpush.msra.mxu0 %v1669
        %1696 = vmatpush.msra.mxu0 %v1668
        %1697 = vmatpush.msra.mxu0 %v1667
        %1698 = vmatpush.msra.mxu0 %v1666
        %1699 = vmatpush.msra.mxu0 %v1665
        %1700 = vmatpush.msra.mxu0 %v1664
        %1701 = vmatpush.msra.mxu0 %v1663
        %1702 = vmatpush.msra.mxu0 %v1662
        %1703 = vmatmul.f32.gmra.mxu0 %v1671
        %v1704 = vpop.f32.mrf.mxu0
        %v1705 = vadd.f32 0.0, %v1704
        %1706 = vmatmul.f32.gmra.mxu0 %v1673
        %v1707 = vpop.f32.mrf.mxu0
        %v1708 = vadd.f32 0.0, %v1707
        %1709 = vmatmul.f32.gmra.mxu0 %v1675
        %v1710 = vpop.f32.mrf.mxu0
        %v1711 = vadd.f32 0.0, %v1710
        %1712 = vmatmul.f32.gmra.mxu0 %v1677
        %v1713 = vpop.f32.mrf.mxu0
        %v1714 = vadd.f32 0.0, %v1713
        %1715 = vmatmul.f32.gmra.mxu0 %v1679
        %v1716 = vpop.f32.mrf.mxu0
        %v1717 = vadd.f32 0.0, %v1716
        %1718 = vmatmul.f32.gmra.mxu0 %v1681
        %v1719 = vpop.f32.mrf.mxu0
        %v1720 = vadd.f32 0.0, %v1719
        %1721 = vmatmul.f32.gmra.mxu0 %v1683
        %v1722 = vpop.f32.mrf.mxu0
        %v1723 = vadd.f32 0.0, %v1722
        %1724 = vmatmul.f32.gmra.mxu0 %v1685
        %v1725 = vpop.f32.mrf.mxu0
        %v1726 = vadd.f32 0.0, %v1725
        %1727 = vdwg.mxu0
        %v1728 = vadd.f32 %v1615, %v1705
        %v1729 = vadd.f32 %v1618, %v1708
        %v1730 = vadd.f32 %v1621, %v1711
        %v1731 = vadd.f32 %v1624, %v1714
        %v1732 = vadd.f32 %v1627, %v1717
        %v1733 = vadd.f32 %v1630, %v1720
        %v1734 = vadd.f32 %v1633, %v1723
        %v1735 = vadd.f32 %v1636, %v1726
        %v1736 = vmax.f32 %v1728, 0.0
        %v1737 = vmax.f32 %v1729, 0.0
        %v1738 = vmax.f32 %v1730, 0.0
        %v1739 = vmax.f32 %v1731, 0.0
        %v1740 = vmax.f32 %v1732, 0.0
        %v1741 = vmax.f32 %v1733, 0.0
        %v1742 = vmax.f32 %v1734, 0.0
        %v1743 = vmax.f32 %v1735, 0.0
        %s1744 = scalar_lea.vmem %s305, 64 [#allocation2]
        %1745 = vst.msk [vmem:[%s1744] sm:$0xff] %vm599, %v1736
        %1746 = vst.msk [vmem:[%s1744 + $0x8] sm:$0xff] %vm599, %v1737
        %1747 = vst.msk [vmem:[%s1744 + $0x10] sm:$0xff] %vm599, %v1738
        %1748 = vst.msk [vmem:[%s1744 + $0x18] sm:$0xff] %vm599, %v1739
        %1749 = vst.msk [vmem:[%s1744 + $0x20] sm:$0xff] %vm599, %v1740
        %1750 = vst.msk [vmem:[%s1744 + $0x28] sm:$0xff] %vm599, %v1741
        %1751 = vst.msk [vmem:[%s1744 + $0x30] sm:$0xff] %vm599, %v1742
        %1752 = vst.msk [vmem:[%s1744 + $0x38] sm:$0xff] %vm599, %v1743
        %v1753 = vld [vmem:[%s397] sm:$0xff]
        %v1754 = vld [vmem:[%s397 + $0x8] sm:$0x3]
        %v1755 = vld [vmem:[%s397 + $0x10] sm:$0xff]
        %v1756 = vld [vmem:[%s397 + $0x18] sm:$0x3]
        %v1757 = vld [vmem:[%s397 + $0x20] sm:$0xff]
        %v1758 = vld [vmem:[%s397 + $0x28] sm:$0x3]
        %v1759 = vld [vmem:[%s397 + $0x30] sm:$0xff]
        %v1760 = vld [vmem:[%s397 + $0x38] sm:$0x3]
        %v1761 = vld [vmem:[%s397 + $0x40] sm:$0xff]
        %v1762 = vld [vmem:[%s397 + $0x48] sm:$0x3]
        %v1763 = vld [vmem:[%s397 + $0x50] sm:$0xff]
        %v1764 = vld [vmem:[%s397 + $0x58] sm:$0x3]
        %v1765 = vld [vmem:[%s397 + $0x60] sm:$0xff]
        %v1766 = vld [vmem:[%s397 + $0x68] sm:$0x3]
        %v1767 = vld [vmem:[%s397 + $0x70] sm:$0xff]
        %v1768 = vld [vmem:[%s397 + $0x78] sm:$0x3]
        %v1769 = vld [vmem:[%s397 + $0x80] sm:$0xff]
        %v1770 = vld [vmem:[%s397 + $0x88] sm:$0x3]
        %v1771 = vld [vmem:[%s397 + $0x90] sm:$0xff]
        %v1772 = vld [vmem:[%s397 + $0x98] sm:$0x3]
        %v1773 = vld [vmem:[%s1099] sm:$0xff]
        %v1774 = vld [vmem:[%s1099 + $0x8] sm:$0x3]
        %v1775 = vld [vmem:[%s1099 + $0x10] sm:$0xff]
        %v1776 = vld [vmem:[%s1099 + $0x18] sm:$0x3]
        %v1777 = vld [vmem:[%s1099 + $0x20] sm:$0xff]
        %v1778 = vld [vmem:[%s1099 + $0x28] sm:$0x3]
        %v1779 = vld [vmem:[%s1099 + $0x30] sm:$0xff]
        %v1780 = vld [vmem:[%s1099 + $0x38] sm:$0x3]
        %v1781 = vld [vmem:[%s1099 + $0x40] sm:$0xff]
        %v1782 = vld [vmem:[%s1099 + $0x48] sm:$0x3]
        %v1783 = vld [vmem:[%s1099 + $0x50] sm:$0xff]
        %v1784 = vld [vmem:[%s1099 + $0x58] sm:$0x3]
        %v1785 = vld [vmem:[%s1099 + $0x60] sm:$0xff]
        %v1786 = vld [vmem:[%s1099 + $0x68] sm:$0x3]
        %v1787 = vld [vmem:[%s1099 + $0x70] sm:$0xff]
        %v1788 = vld [vmem:[%s1099 + $0x78] sm:$0x3]
        %v1789 = vld [vmem:[%s1099 + $0x80] sm:$0xff]
        %v1790 = vld [vmem:[%s1099 + $0x88] sm:$0x3]
        %v1791 = vld [vmem:[%s1099 + $0x90] sm:$0xff]
        %v1792 = vld [vmem:[%s1099 + $0x98] sm:$0x3]
        %s1793 = scalar_lea.vmem %s321, 640
        %v1794 = vld [vmem:[%s1793] sm:$0xff]
        %v1795 = vld [vmem:[%s1793 + $0x8] sm:$0x3]
        %v1796 = vld [vmem:[%s1793 + $0x10] sm:$0xff]
        %v1797 = vld [vmem:[%s1793 + $0x18] sm:$0x3]
        %v1798 = vld [vmem:[%s1793 + $0x20] sm:$0xff]
        %v1799 = vld [vmem:[%s1793 + $0x28] sm:$0x3]
        %v1800 = vld [vmem:[%s1793 + $0x30] sm:$0xff]
        %v1801 = vld [vmem:[%s1793 + $0x38] sm:$0x3]
        %v1802 = vld [vmem:[%s1793 + $0x40] sm:$0xff]
        %v1803 = vld [vmem:[%s1793 + $0x48] sm:$0x3]
        %v1804 = vld [vmem:[%s1793 + $0x50] sm:$0xff]
        %v1805 = vld [vmem:[%s1793 + $0x58] sm:$0x3]
        %v1806 = vld [vmem:[%s1793 + $0x60] sm:$0xff]
        %v1807 = vld [vmem:[%s1793 + $0x68] sm:$0x3]
        %v1808 = vld [vmem:[%s1793 + $0x70] sm:$0xff]
        %v1809 = vld [vmem:[%s1793 + $0x78] sm:$0x3]
        %v1810 = vld [vmem:[%s1793 + $0x80] sm:$0xff]
        %v1811 = vld [vmem:[%s1793 + $0x88] sm:$0x3]
        %v1812 = vld [vmem:[%s1793 + $0x90] sm:$0xff]
        %v1813 = vld [vmem:[%s1793 + $0x98] sm:$0x3]
        %1834 = vrot.lane.b32.xlu0 %v1773, 8
        %v1835 = vpop.permute.xlu0 %1834
        %1836 = vrot.lane.b32.xlu0 %v1774, 8
        %v1837 = vpop.permute.xlu0 %1836
        %1838 = vrot.lane.b32.xlu0 %v1775, 8
        %v1839 = vpop.permute.xlu0 %1838
        %1840 = vrot.lane.b32.xlu0 %v1776, 8
        %v1841 = vpop.permute.xlu0 %1840
        %1842 = vrot.lane.b32.xlu0 %v1777, 8
        %v1843 = vpop.permute.xlu0 %1842
        %1844 = vrot.lane.b32.xlu0 %v1778, 8
        %v1845 = vpop.permute.xlu0 %1844
        %1846 = vrot.lane.b32.xlu0 %v1779, 8
        %v1847 = vpop.permute.xlu0 %1846
        %1848 = vrot.lane.b32.xlu0 %v1780, 8
        %v1849 = vpop.permute.xlu0 %1848
        %1850 = vrot.lane.b32.xlu0 %v1781, 8
        %v1851 = vpop.permute.xlu0 %1850
        %1852 = vrot.lane.b32.xlu0 %v1782, 8
        %v1853 = vpop.permute.xlu0 %1852
        %1854 = vrot.lane.b32.xlu0 %v1783, 8
        %v1855 = vpop.permute.xlu0 %1854
        %1856 = vrot.lane.b32.xlu0 %v1784, 8
        %v1857 = vpop.permute.xlu0 %1856
        %1858 = vrot.lane.b32.xlu0 %v1785, 8
        %v1859 = vpop.permute.xlu0 %1858
        %1860 = vrot.lane.b32.xlu0 %v1786, 8
        %v1861 = vpop.permute.xlu0 %1860
        %1862 = vrot.lane.b32.xlu0 %v1787, 8
        %v1863 = vpop.permute.xlu0 %1862
        %1864 = vrot.lane.b32.xlu0 %v1788, 8
        %v1865 = vpop.permute.xlu0 %1864
        %1866 = vrot.lane.b32.xlu0 %v1789, 8
        %v1867 = vpop.permute.xlu0 %1866
        %1868 = vrot.lane.b32.xlu0 %v1790, 8
        %v1869 = vpop.permute.xlu0 %1868
        %1870 = vrot.lane.b32.xlu0 %v1791, 8
        %v1871 = vpop.permute.xlu0 %1870
        %1872 = vrot.lane.b32.xlu0 %v1792, 8
        %v1873 = vpop.permute.xlu0 %1872
        %1914 = vrot.lane.b32.xlu0 %v1794, 16
        %v1915 = vpop.permute.xlu0 %1914
        %1916 = vrot.lane.b32.xlu0 %v1795, 16
        %v1917 = vpop.permute.xlu0 %1916
        %1918 = vrot.lane.b32.xlu0 %v1796, 16
        %v1919 = vpop.permute.xlu0 %1918
        %1920 = vrot.lane.b32.xlu0 %v1797, 16
        %v1921 = vpop.permute.xlu0 %1920
        %1922 = vrot.lane.b32.xlu0 %v1798, 16
        %v1923 = vpop.permute.xlu0 %1922
        %1924 = vrot.lane.b32.xlu0 %v1799, 16
        %v1925 = vpop.permute.xlu0 %1924
        %1926 = vrot.lane.b32.xlu0 %v1800, 16
        %v1927 = vpop.permute.xlu0 %1926
        %1928 = vrot.lane.b32.xlu0 %v1801, 16
        %v1929 = vpop.permute.xlu0 %1928
        %1930 = vrot.lane.b32.xlu0 %v1802, 16
        %v1931 = vpop.permute.xlu0 %1930
        %1932 = vrot.lane.b32.xlu0 %v1803, 16
        %v1933 = vpop.permute.xlu0 %1932
        %1934 = vrot.lane.b32.xlu0 %v1804, 16
        %v1935 = vpop.permute.xlu0 %1934
        %1936 = vrot.lane.b32.xlu0 %v1805, 16
        %v1937 = vpop.permute.xlu0 %1936
        %1938 = vrot.lane.b32.xlu0 %v1806, 16
        %v1939 = vpop.permute.xlu0 %1938
        %1940 = vrot.lane.b32.xlu0 %v1807, 16
        %v1941 = vpop.permute.xlu0 %1940
        %1942 = vrot.lane.b32.xlu0 %v1808, 16
        %v1943 = vpop.permute.xlu0 %1942
        %1944 = vrot.lane.b32.xlu0 %v1809, 16
        %v1945 = vpop.permute.xlu0 %1944
        %1946 = vrot.lane.b32.xlu0 %v1810, 16
        %v1947 = vpop.permute.xlu0 %1946
        %1948 = vrot.lane.b32.xlu0 %v1811, 16
        %v1949 = vpop.permute.xlu0 %1948
        %1950 = vrot.lane.b32.xlu0 %v1812, 16
        %v1951 = vpop.permute.xlu0 %1950
        %1952 = vrot.lane.b32.xlu0 %v1813, 16
        %v1953 = vpop.permute.xlu0 %1952
        %v1974 = vsel %vm578, %v1753, %v1835
        %v1975 = vsel %vm578, %v1754, %v1837
        %v1976 = vsel %vm578, %v1755, %v1839
        %v1977 = vsel %vm578, %v1756, %v1841
        %v1978 = vsel %vm578, %v1757, %v1843
        %v1979 = vsel %vm578, %v1758, %v1845
        %v1980 = vsel %vm578, %v1759, %v1847
        %v1981 = vsel %vm578, %v1760, %v1849
        %v1982 = vsel %vm578, %v1761, %v1851
        %v1983 = vsel %vm578, %v1762, %v1853
        %v1984 = vsel %vm578, %v1763, %v1855
        %v1985 = vsel %vm578, %v1764, %v1857
        %v1986 = vsel %vm578, %v1765, %v1859
        %v1987 = vsel %vm578, %v1766, %v1861
        %v1988 = vsel %vm578, %v1767, %v1863
        %v1989 = vsel %vm578, %v1768, %v1865
        %v1990 = vsel %vm578, %v1769, %v1867
        %v1991 = vsel %vm578, %v1770, %v1869
        %v1992 = vsel %vm578, %v1771, %v1871
        %v1993 = vsel %vm578, %v1772, %v1873
        %v1994 = vsel %vm599, %v1974, %v1915
        %v1995 = vsel %vm599, %v1975, %v1917
        %v1996 = vsel %vm599, %v1976, %v1919
        %v1997 = vsel %vm599, %v1977, %v1921
        %v1998 = vsel %vm599, %v1978, %v1923
        %v1999 = vsel %vm599, %v1979, %v1925
        %v2000 = vsel %vm599, %v1980, %v1927
        %v2001 = vsel %vm599, %v1981, %v1929
        %v2002 = vsel %vm599, %v1982, %v1931
        %v2003 = vsel %vm599, %v1983, %v1933
        %v2004 = vsel %vm599, %v1984, %v1935
        %v2005 = vsel %vm599, %v1985, %v1937
        %v2006 = vsel %vm599, %v1986, %v1939
        %v2007 = vsel %vm599, %v1987, %v1941
        %v2008 = vsel %vm599, %v1988, %v1943
        %v2009 = vsel %vm599, %v1989, %v1945
        %v2010 = vsel %vm599, %v1990, %v1947
        %v2011 = vsel %vm599, %v1991, %v1949
        %v2012 = vsel %vm599, %v1992, %v1951
        %v2013 = vsel %vm599, %v1993, %v1953
        %2030 = vrot.lane.b32.xlu0 %v1996, 24
        %v2031 = vpop.permute.xlu0 %2030
        %2032 = vrot.lane.b32.xlu0 %v1997, 24
        %v2033 = vpop.permute.xlu0 %2032
        %2034 = vrot.lane.b32.xlu0 %v1998, 24
        %v2035 = vpop.permute.xlu0 %2034
        %2036 = vrot.lane.b32.xlu0 %v1999, 24
        %v2037 = vpop.permute.xlu0 %2036
        %2038 = vrot.lane.b32.xlu0 %v2000, 24
        %v2039 = vpop.permute.xlu0 %2038
        %2040 = vrot.lane.b32.xlu0 %v2001, 24
        %v2041 = vpop.permute.xlu0 %2040
        %2042 = vrot.lane.b32.xlu0 %v2002, 24
        %v2043 = vpop.permute.xlu0 %2042
        %2044 = vrot.lane.b32.xlu0 %v2003, 24
        %v2045 = vpop.permute.xlu0 %2044
        %2046 = vrot.lane.b32.xlu0 %v2004, 24
        %v2047 = vpop.permute.xlu0 %2046
        %2048 = vrot.lane.b32.xlu0 %v2005, 24
        %v2049 = vpop.permute.xlu0 %2048
        %2050 = vrot.lane.b32.xlu0 %v2006, 24
        %v2051 = vpop.permute.xlu0 %2050
        %2052 = vrot.lane.b32.xlu0 %v2007, 24
        %v2053 = vpop.permute.xlu0 %2052
        %2054 = vrot.lane.b32.xlu0 %v2008, 24
        %v2055 = vpop.permute.xlu0 %2054
        %2056 = vrot.lane.b32.xlu0 %v2009, 24
        %v2057 = vpop.permute.xlu0 %2056
        %2058 = vrot.lane.b32.xlu0 %v2010, 24
        %v2059 = vpop.permute.xlu0 %2058
        %2060 = vrot.lane.b32.xlu0 %v2011, 24
        %v2061 = vpop.permute.xlu0 %2060
        %2080 = vrot.lane.b32.xlu0 %v1998, 48
        %v2081 = vpop.permute.xlu0 %2080
        %2082 = vrot.lane.b32.xlu0 %v1999, 48
        %v2083 = vpop.permute.xlu0 %2082
        %2084 = vrot.lane.b32.xlu0 %v2000, 48
        %v2085 = vpop.permute.xlu0 %2084
        %2086 = vrot.lane.b32.xlu0 %v2001, 48
        %v2087 = vpop.permute.xlu0 %2086
        %2088 = vrot.lane.b32.xlu0 %v2002, 48
        %v2089 = vpop.permute.xlu0 %2088
        %2090 = vrot.lane.b32.xlu0 %v2003, 48
        %v2091 = vpop.permute.xlu0 %2090
        %2092 = vrot.lane.b32.xlu0 %v2004, 48
        %v2093 = vpop.permute.xlu0 %2092
        %2094 = vrot.lane.b32.xlu0 %v2005, 48
        %v2095 = vpop.permute.xlu0 %2094
        %2096 = vrot.lane.b32.xlu0 %v2006, 48
        %v2097 = vpop.permute.xlu0 %2096
        %2098 = vrot.lane.b32.xlu0 %v2007, 48
        %v2099 = vpop.permute.xlu0 %2098
        %2100 = vrot.lane.b32.xlu0 %v2008, 48
        %v2101 = vpop.permute.xlu0 %2100
        %2102 = vrot.lane.b32.xlu0 %v2009, 48
        %v2103 = vpop.permute.xlu0 %2102
        %2104 = vrot.lane.b32.xlu0 %v2010, 48
        %v2105 = vpop.permute.xlu0 %2104
        %2106 = vrot.lane.b32.xlu0 %v2011, 48
        %v2107 = vpop.permute.xlu0 %2106
        %2108 = vrot.lane.b32.xlu0 %v2012, 48
        %v2109 = vpop.permute.xlu0 %2108
        %2110 = vrot.lane.b32.xlu0 %v2013, 48
        %v2111 = vpop.permute.xlu0 %2110
        %v2128 = vsel %vm734, %v1994, %v2031
        %v2129 = vsel %vm734, %v1995, %v2033
        %v2130 = vsel %vm734, %v1996, %v2035
        %v2131 = vsel %vm734, %v1997, %v2037
        %v2132 = vsel %vm734, %v1998, %v2039
        %v2133 = vsel %vm734, %v1999, %v2041
        %v2134 = vsel %vm734, %v2000, %v2043
        %v2135 = vsel %vm734, %v2001, %v2045
        %v2136 = vsel %vm734, %v2002, %v2047
        %v2137 = vsel %vm734, %v2003, %v2049
        %v2138 = vsel %vm734, %v2004, %v2051
        %v2139 = vsel %vm734, %v2005, %v2053
        %v2140 = vsel %vm734, %v2006, %v2055
        %v2141 = vsel %vm734, %v2007, %v2057
        %v2142 = vsel %vm734, %v2008, %v2059
        %v2143 = vsel %vm734, %v2009, %v2061
        %v2144 = vsel %vm751, %v2128, %v2081
        %v2145 = vsel %vm751, %v2129, %v2083
        %v2146 = vsel %vm751, %v2130, %v2085
        %v2147 = vsel %vm751, %v2131, %v2087
        %v2148 = vsel %vm751, %v2132, %v2089
        %v2149 = vsel %vm751, %v2133, %v2091
        %v2150 = vsel %vm751, %v2134, %v2093
        %v2151 = vsel %vm751, %v2135, %v2095
        %v2152 = vsel %vm751, %v2136, %v2097
        %v2153 = vsel %vm751, %v2137, %v2099
        %v2154 = vsel %vm751, %v2138, %v2101
        %v2155 = vsel %vm751, %v2139, %v2103
        %v2156 = vsel %vm751, %v2140, %v2105
        %v2157 = vsel %vm751, %v2141, %v2107
        %v2158 = vsel %vm751, %v2142, %v2109
        %v2159 = vsel %vm751, %v2143, %v2111
        %v2160 = vld [vmem:[%s3] sm:$0xff]
        %v2161 = vld [vmem:[%s3 + $0x8] sm:$0xff]
        %v2162 = vld [vmem:[%s3 + $0x10] sm:$0xff]
        %v2163 = vld [vmem:[%s3 + $0x18] sm:$0xff]
        %v2164 = vld [vmem:[%s3 + $0x20] sm:$0xff]
        %v2165 = vld [vmem:[%s3 + $0x28] sm:$0xff]
        %v2166 = vld [vmem:[%s3 + $0x30] sm:$0xff]
        %v2167 = vld [vmem:[%s3 + $0x38] sm:$0xff]
        %v2168 = vld [vmem:[%s3 + $0x40] sm:$0xff]
        %v2185 = vrot.slane %v2144, 1
        %v2186 = vrot.slane %v2145, 1
        %v2187 = vsel %vm793, %v2185, %v2186
        %v2188 = vrot.slane %v2146, 1
        %v2189 = vrot.slane %v2147, 1
        %v2190 = vsel %vm793, %v2188, %v2189
        %v2191 = vrot.slane %v2148, 1
        %v2192 = vrot.slane %v2149, 1
        %v2193 = vsel %vm793, %v2191, %v2192
        %v2194 = vrot.slane %v2150, 1
        %v2195 = vrot.slane %v2151, 1
        %v2196 = vsel %vm793, %v2194, %v2195
        %v2197 = vrot.slane %v2152, 1
        %v2198 = vrot.slane %v2153, 1
        %v2199 = vsel %vm793, %v2197, %v2198
        %v2200 = vrot.slane %v2154, 1
        %v2201 = vrot.slane %v2155, 1
        %v2202 = vsel %vm793, %v2200, %v2201
        %v2203 = vrot.slane %v2156, 1
        %v2204 = vrot.slane %v2157, 1
        %v2205 = vsel %vm793, %v2203, %v2204
        %v2206 = vrot.slane %v2158, 1
        %v2207 = vrot.slane %v2159, 1
        %v2208 = vsel %vm793, %v2206, %v2207
        %v2209 = vld [vmem:[%s818] sm:$0xff]
        %v2210 = vld [vmem:[%s818 + $0x8] sm:$0xff]
        %v2211 = vld [vmem:[%s818 + $0x10] sm:$0xff]
        %v2212 = vld [vmem:[%s818 + $0x18] sm:$0xff]
        %v2213 = vld [vmem:[%s818 + $0x20] sm:$0xff]
        %v2214 = vld [vmem:[%s818 + $0x28] sm:$0xff]
        %v2215 = vld [vmem:[%s818 + $0x30] sm:$0xff]
        %v2216 = vld [vmem:[%s818 + $0x38] sm:$0xff]
        %v2217 = vld [vmem:[%s818 + $0x40] sm:$0xff]
        %v2218 = vsel %vm828, %v2187, 0
        %v2220 = vsel %vm828, %v2190, 0
        %v2222 = vsel %vm828, %v2193, 0
        %v2224 = vsel %vm828, %v2196, 0
        %v2226 = vsel %vm828, %v2199, 0
        %v2228 = vsel %vm828, %v2202, 0
        %v2230 = vsel %vm828, %v2205, 0
        %v2232 = vsel %vm828, %v2208, 0
        %2234 = vmatpush.msra.mxu0 0.0
        %2235 = vmatpush.msra.mxu0 0.0
        %2236 = vmatpush.msra.mxu0 0.0
        %2237 = vmatpush.msra.mxu0 0.0
        %2238 = vmatpush.msra.mxu0 0.0
        %2239 = vmatpush.msra.mxu0 0.0
        %2240 = vmatpush.msra.mxu0 0.0
        %2241 = vmatpush.msra.mxu0 %v2217
        %2242 = vmatpush.msra.mxu0 %v2216
        %2243 = vmatpush.msra.mxu0 %v2215
        %2244 = vmatpush.msra.mxu0 %v2214
        %2245 = vmatpush.msra.mxu0 %v2213
        %2246 = vmatpush.msra.mxu0 %v2212
        %2247 = vmatpush.msra.mxu0 %v2211
        %2248 = vmatpush.msra.mxu0 %v2210
        %2249 = vmatpush.msra.mxu0 %v2209
        %2250 = vmatmul.f32.gmra.mxu0 %v2218
        %v2251 = vpop.f32.mrf.mxu0
        %v2252 = vadd.f32 0.0, %v2251
        %2253 = vmatmul.f32.gmra.mxu0 %v2220
        %v2254 = vpop.f32.mrf.mxu0
        %v2255 = vadd.f32 0.0, %v2254
        %2256 = vmatmul.f32.gmra.mxu0 %v2222
        %v2257 = vpop.f32.mrf.mxu0
        %v2258 = vadd.f32 0.0, %v2257
        %2259 = vmatmul.f32.gmra.mxu0 %v2224
        %v2260 = vpop.f32.mrf.mxu0
        %v2261 = vadd.f32 0.0, %v2260
        %2262 = vmatmul.f32.gmra.mxu0 %v2226
        %v2263 = vpop.f32.mrf.mxu0
        %v2264 = vadd.f32 0.0, %v2263
        %2265 = vmatmul.f32.gmra.mxu0 %v2228
        %v2266 = vpop.f32.mrf.mxu0
        %v2267 = vadd.f32 0.0, %v2266
        %2268 = vmatmul.f32.gmra.mxu0 %v2230
        %v2269 = vpop.f32.mrf.mxu0
        %v2270 = vadd.f32 0.0, %v2269
        %2271 = vmatmul.f32.gmra.mxu0 %v2232
        %v2272 = vpop.f32.mrf.mxu0
        %v2273 = vadd.f32 0.0, %v2272
        %2274 = vdwg.mxu0
        %v2275 = vsel %vm828, %v2144, 0
        %v2277 = vsel %vm828, %v2146, 0
        %v2279 = vsel %vm828, %v2148, 0
        %v2281 = vsel %vm828, %v2150, 0
        %v2283 = vsel %vm828, %v2152, 0
        %v2285 = vsel %vm828, %v2154, 0
        %v2287 = vsel %vm828, %v2156, 0
        %v2289 = vsel %vm828, %v2158, 0
        %2291 = vmatpush.msra.mxu0 0.0
        %2292 = vmatpush.msra.mxu0 0.0
        %2293 = vmatpush.msra.mxu0 0.0
        %2294 = vmatpush.msra.mxu0 0.0
        %2295 = vmatpush.msra.mxu0 0.0
        %2296 = vmatpush.msra.mxu0 0.0
        %2297 = vmatpush.msra.mxu0 0.0
        %2298 = vmatpush.msra.mxu0 %v2168
        %2299 = vmatpush.msra.mxu0 %v2167
        %2300 = vmatpush.msra.mxu0 %v2166
        %2301 = vmatpush.msra.mxu0 %v2165
        %2302 = vmatpush.msra.mxu0 %v2164
        %2303 = vmatpush.msra.mxu0 %v2163
        %2304 = vmatpush.msra.mxu0 %v2162
        %2305 = vmatpush.msra.mxu0 %v2161
        %2306 = vmatpush.msra.mxu0 %v2160
        %2307 = vmatmul.f32.gmra.mxu0 %v2275
        %v2308 = vpop.f32.mrf.mxu0
        %v2309 = vadd.f32 %v2252, %v2308
        %2310 = vmatmul.f32.gmra.mxu0 %v2277
        %v2311 = vpop.f32.mrf.mxu0
        %v2312 = vadd.f32 %v2255, %v2311
        %2313 = vmatmul.f32.gmra.mxu0 %v2279
        %v2314 = vpop.f32.mrf.mxu0
        %v2315 = vadd.f32 %v2258, %v2314
        %2316 = vmatmul.f32.gmra.mxu0 %v2281
        %v2317 = vpop.f32.mrf.mxu0
        %v2318 = vadd.f32 %v2261, %v2317
        %2319 = vmatmul.f32.gmra.mxu0 %v2283
        %v2320 = vpop.f32.mrf.mxu0
        %v2321 = vadd.f32 %v2264, %v2320
        %2322 = vmatmul.f32.gmra.mxu0 %v2285
        %v2323 = vpop.f32.mrf.mxu0
        %v2324 = vadd.f32 %v2267, %v2323
        %2325 = vmatmul.f32.gmra.mxu0 %v2287
        %v2326 = vpop.f32.mrf.mxu0
        %v2327 = vadd.f32 %v2270, %v2326
        %2328 = vmatmul.f32.gmra.mxu0 %v2289
        %v2329 = vpop.f32.mrf.mxu0
        %v2330 = vadd.f32 %v2273, %v2329
        %2331 = vdwg.mxu0
        %v2332 = vrot.slane %v2144, 2
        %v2333 = vrot.slane %v2145, 2
        %v2334 = vsel %vm943, %v2332, %v2333
        %v2335 = vrot.slane %v2146, 2
        %v2336 = vrot.slane %v2147, 2
        %v2337 = vsel %vm943, %v2335, %v2336
        %v2338 = vrot.slane %v2148, 2
        %v2339 = vrot.slane %v2149, 2
        %v2340 = vsel %vm943, %v2338, %v2339
        %v2341 = vrot.slane %v2150, 2
        %v2342 = vrot.slane %v2151, 2
        %v2343 = vsel %vm943, %v2341, %v2342
        %v2344 = vrot.slane %v2152, 2
        %v2345 = vrot.slane %v2153, 2
        %v2346 = vsel %vm943, %v2344, %v2345
        %v2347 = vrot.slane %v2154, 2
        %v2348 = vrot.slane %v2155, 2
        %v2349 = vsel %vm943, %v2347, %v2348
        %v2350 = vrot.slane %v2156, 2
        %v2351 = vrot.slane %v2157, 2
        %v2352 = vsel %vm943, %v2350, %v2351
        %v2353 = vrot.slane %v2158, 2
        %v2354 = vrot.slane %v2159, 2
        %v2355 = vsel %vm943, %v2353, %v2354
        %v2356 = vld [vmem:[%s968] sm:$0xff]
        %v2357 = vld [vmem:[%s968 + $0x8] sm:$0xff]
        %v2358 = vld [vmem:[%s968 + $0x10] sm:$0xff]
        %v2359 = vld [vmem:[%s968 + $0x18] sm:$0xff]
        %v2360 = vld [vmem:[%s968 + $0x20] sm:$0xff]
        %v2361 = vld [vmem:[%s968 + $0x28] sm:$0xff]
        %v2362 = vld [vmem:[%s968 + $0x30] sm:$0xff]
        %v2363 = vld [vmem:[%s968 + $0x38] sm:$0xff]
        %v2364 = vld [vmem:[%s968 + $0x40] sm:$0xff]
        %v2365 = vsel %vm828, %v2334, 0
        %v2367 = vsel %vm828, %v2337, 0
        %v2369 = vsel %vm828, %v2340, 0
        %v2371 = vsel %vm828, %v2343, 0
        %v2373 = vsel %vm828, %v2346, 0
        %v2375 = vsel %vm828, %v2349, 0
        %v2377 = vsel %vm828, %v2352, 0
        %v2379 = vsel %vm828, %v2355, 0
        %2381 = vmatpush.msra.mxu0 0.0
        %2382 = vmatpush.msra.mxu0 0.0
        %2383 = vmatpush.msra.mxu0 0.0
        %2384 = vmatpush.msra.mxu0 0.0
        %2385 = vmatpush.msra.mxu0 0.0
        %2386 = vmatpush.msra.mxu0 0.0
        %2387 = vmatpush.msra.mxu0 0.0
        %2388 = vmatpush.msra.mxu0 %v2364
        %2389 = vmatpush.msra.mxu0 %v2363
        %2390 = vmatpush.msra.mxu0 %v2362
        %2391 = vmatpush.msra.mxu0 %v2361
        %2392 = vmatpush.msra.mxu0 %v2360
        %2393 = vmatpush.msra.mxu0 %v2359
        %2394 = vmatpush.msra.mxu0 %v2358
        %2395 = vmatpush.msra.mxu0 %v2357
        %2396 = vmatpush.msra.mxu0 %v2356
        %2397 = vmatmul.f32.gmra.mxu0 %v2365
        %v2398 = vpop.f32.mrf.mxu0
        %v2399 = vadd.f32 0.0, %v2398
        %2400 = vmatmul.f32.gmra.mxu0 %v2367
        %v2401 = vpop.f32.mrf.mxu0
        %v2402 = vadd.f32 0.0, %v2401
        %2403 = vmatmul.f32.gmra.mxu0 %v2369
        %v2404 = vpop.f32.mrf.mxu0
        %v2405 = vadd.f32 0.0, %v2404
        %2406 = vmatmul.f32.gmra.mxu0 %v2371
        %v2407 = vpop.f32.mrf.mxu0
        %v2408 = vadd.f32 0.0, %v2407
        %2409 = vmatmul.f32.gmra.mxu0 %v2373
        %v2410 = vpop.f32.mrf.mxu0
        %v2411 = vadd.f32 0.0, %v2410
        %2412 = vmatmul.f32.gmra.mxu0 %v2375
        %v2413 = vpop.f32.mrf.mxu0
        %v2414 = vadd.f32 0.0, %v2413
        %2415 = vmatmul.f32.gmra.mxu0 %v2377
        %v2416 = vpop.f32.mrf.mxu0
        %v2417 = vadd.f32 0.0, %v2416
        %2418 = vmatmul.f32.gmra.mxu0 %v2379
        %v2419 = vpop.f32.mrf.mxu0
        %v2420 = vadd.f32 0.0, %v2419
        %2421 = vdwg.mxu0
        %v2422 = vadd.f32 %v2309, %v2399
        %v2423 = vadd.f32 %v2312, %v2402
        %v2424 = vadd.f32 %v2315, %v2405
        %v2425 = vadd.f32 %v2318, %v2408
        %v2426 = vadd.f32 %v2321, %v2411
        %v2427 = vadd.f32 %v2324, %v2414
        %v2428 = vadd.f32 %v2327, %v2417
        %v2429 = vadd.f32 %v2330, %v2420
        %v2430 = vmax.f32 %v2422, 0.0
        %v2431 = vmax.f32 %v2423, 0.0
        %v2432 = vmax.f32 %v2424, 0.0
        %v2433 = vmax.f32 %v2425, 0.0
        %v2434 = vmax.f32 %v2426, 0.0
        %v2435 = vmax.f32 %v2427, 0.0
        %v2436 = vmax.f32 %v2428, 0.0
        %v2437 = vmax.f32 %v2429, 0.0
        %s2438 = scalar_lea.vmem %s305, 128 [#allocation2]
        %2439 = vst.msk [vmem:[%s2438] sm:$0xff] %vm599, %v2430
        %2440 = vst.msk [vmem:[%s2438 + $0x8] sm:$0xff] %vm599, %v2431
        %2441 = vst.msk [vmem:[%s2438 + $0x10] sm:$0xff] %vm599, %v2432
        %2442 = vst.msk [vmem:[%s2438 + $0x18] sm:$0xff] %vm599, %v2433
        %2443 = vst.msk [vmem:[%s2438 + $0x20] sm:$0xff] %vm599, %v2434
        %2444 = vst.msk [vmem:[%s2438 + $0x28] sm:$0xff] %vm599, %v2435
        %2445 = vst.msk [vmem:[%s2438 + $0x30] sm:$0xff] %vm599, %v2436
        %2446 = vst.msk [vmem:[%s2438 + $0x38] sm:$0xff] %vm599, %v2437
        %v2447 = vld [vmem:[%s1099] sm:$0xff]
        %v2448 = vld [vmem:[%s1099 + $0x8] sm:$0x3]
        %v2449 = vld [vmem:[%s1099 + $0x10] sm:$0xff]
        %v2450 = vld [vmem:[%s1099 + $0x18] sm:$0x3]
        %v2451 = vld [vmem:[%s1099 + $0x20] sm:$0xff]
        %v2452 = vld [vmem:[%s1099 + $0x28] sm:$0x3]
        %v2453 = vld [vmem:[%s1099 + $0x30] sm:$0xff]
        %v2454 = vld [vmem:[%s1099 + $0x38] sm:$0x3]
        %v2455 = vld [vmem:[%s1099 + $0x40] sm:$0xff]
        %v2456 = vld [vmem:[%s1099 + $0x48] sm:$0x3]
        %v2457 = vld [vmem:[%s1099 + $0x50] sm:$0xff]
        %v2458 = vld [vmem:[%s1099 + $0x58] sm:$0x3]
        %v2459 = vld [vmem:[%s1099 + $0x60] sm:$0xff]
        %v2460 = vld [vmem:[%s1099 + $0x68] sm:$0x3]
        %v2461 = vld [vmem:[%s1099 + $0x70] sm:$0xff]
        %v2462 = vld [vmem:[%s1099 + $0x78] sm:$0x3]
        %v2463 = vld [vmem:[%s1099 + $0x80] sm:$0xff]
        %v2464 = vld [vmem:[%s1099 + $0x88] sm:$0x3]
        %v2465 = vld [vmem:[%s1099 + $0x90] sm:$0xff]
        %v2466 = vld [vmem:[%s1099 + $0x98] sm:$0x3]
        %v2467 = vld [vmem:[%s1793] sm:$0xff]
        %v2468 = vld [vmem:[%s1793 + $0x8] sm:$0x3]
        %v2469 = vld [vmem:[%s1793 + $0x10] sm:$0xff]
        %v2470 = vld [vmem:[%s1793 + $0x18] sm:$0x3]
        %v2471 = vld [vmem:[%s1793 + $0x20] sm:$0xff]
        %v2472 = vld [vmem:[%s1793 + $0x28] sm:$0x3]
        %v2473 = vld [vmem:[%s1793 + $0x30] sm:$0xff]
        %v2474 = vld [vmem:[%s1793 + $0x38] sm:$0x3]
        %v2475 = vld [vmem:[%s1793 + $0x40] sm:$0xff]
        %v2476 = vld [vmem:[%s1793 + $0x48] sm:$0x3]
        %v2477 = vld [vmem:[%s1793 + $0x50] sm:$0xff]
        %v2478 = vld [vmem:[%s1793 + $0x58] sm:$0x3]
        %v2479 = vld [vmem:[%s1793 + $0x60] sm:$0xff]
        %v2480 = vld [vmem:[%s1793 + $0x68] sm:$0x3]
        %v2481 = vld [vmem:[%s1793 + $0x70] sm:$0xff]
        %v2482 = vld [vmem:[%s1793 + $0x78] sm:$0x3]
        %v2483 = vld [vmem:[%s1793 + $0x80] sm:$0xff]
        %v2484 = vld [vmem:[%s1793 + $0x88] sm:$0x3]
        %v2485 = vld [vmem:[%s1793 + $0x90] sm:$0xff]
        %v2486 = vld [vmem:[%s1793 + $0x98] sm:$0x3]
        %s2487 = scalar_lea.vmem %s321, 800
        %v2488 = vld [vmem:[%s2487] sm:$0xff]
        %v2489 = vld [vmem:[%s2487 + $0x8] sm:$0x3]
        %v2490 = vld [vmem:[%s2487 + $0x10] sm:$0xff]
        %v2491 = vld [vmem:[%s2487 + $0x18] sm:$0x3]
        %v2492 = vld [vmem:[%s2487 + $0x20] sm:$0xff]
        %v2493 = vld [vmem:[%s2487 + $0x28] sm:$0x3]
        %v2494 = vld [vmem:[%s2487 + $0x30] sm:$0xff]
        %v2495 = vld [vmem:[%s2487 + $0x38] sm:$0x3]
        %v2496 = vld [vmem:[%s2487 + $0x40] sm:$0xff]
        %v2497 = vld [vmem:[%s2487 + $0x48] sm:$0x3]
        %v2498 = vld [vmem:[%s2487 + $0x50] sm:$0xff]
        %v2499 = vld [vmem:[%s2487 + $0x58] sm:$0x3]
        %v2500 = vld [vmem:[%s2487 + $0x60] sm:$0xff]
        %v2501 = vld [vmem:[%s2487 + $0x68] sm:$0x3]
        %v2502 = vld [vmem:[%s2487 + $0x70] sm:$0xff]
        %v2503 = vld [vmem:[%s2487 + $0x78] sm:$0x3]
        %v2504 = vld [vmem:[%s2487 + $0x80] sm:$0xff]
        %v2505 = vld [vmem:[%s2487 + $0x88] sm:$0x3]
        %v2506 = vld [vmem:[%s2487 + $0x90] sm:$0xff]
        %v2507 = vld [vmem:[%s2487 + $0x98] sm:$0x3]
        %2528 = vrot.lane.b32.xlu0 %v2467, 8
        %v2529 = vpop.permute.xlu0 %2528
        %2530 = vrot.lane.b32.xlu0 %v2468, 8
        %v2531 = vpop.permute.xlu0 %2530
        %2532 = vrot.lane.b32.xlu0 %v2469, 8
        %v2533 = vpop.permute.xlu0 %2532
        %2534 = vrot.lane.b32.xlu0 %v2470, 8
        %v2535 = vpop.permute.xlu0 %2534
        %2536 = vrot.lane.b32.xlu0 %v2471, 8
        %v2537 = vpop.permute.xlu0 %2536
        %2538 = vrot.lane.b32.xlu0 %v2472, 8
        %v2539 = vpop.permute.xlu0 %2538
        %2540 = vrot.lane.b32.xlu0 %v2473, 8
        %v2541 = vpop.permute.xlu0 %2540
        %2542 = vrot.lane.b32.xlu0 %v2474, 8
        %v2543 = vpop.permute.xlu0 %2542
        %2544 = vrot.lane.b32.xlu0 %v2475, 8
        %v2545 = vpop.permute.xlu0 %2544
        %2546 = vrot.lane.b32.xlu0 %v2476, 8
        %v2547 = vpop.permute.xlu0 %2546
        %2548 = vrot.lane.b32.xlu0 %v2477, 8
        %v2549 = vpop.permute.xlu0 %2548
        %2550 = vrot.lane.b32.xlu0 %v2478, 8
        %v2551 = vpop.permute.xlu0 %2550
        %2552 = vrot.lane.b32.xlu0 %v2479, 8
        %v2553 = vpop.permute.xlu0 %2552
        %2554 = vrot.lane.b32.xlu0 %v2480, 8
        %v2555 = vpop.permute.xlu0 %2554
        %2556 = vrot.lane.b32.xlu0 %v2481, 8
        %v2557 = vpop.permute.xlu0 %2556
        %2558 = vrot.lane.b32.xlu0 %v2482, 8
        %v2559 = vpop.permute.xlu0 %2558
        %2560 = vrot.lane.b32.xlu0 %v2483, 8
        %v2561 = vpop.permute.xlu0 %2560
        %2562 = vrot.lane.b32.xlu0 %v2484, 8
        %v2563 = vpop.permute.xlu0 %2562
        %2564 = vrot.lane.b32.xlu0 %v2485, 8
        %v2565 = vpop.permute.xlu0 %2564
        %2566 = vrot.lane.b32.xlu0 %v2486, 8
        %v2567 = vpop.permute.xlu0 %2566
        %2608 = vrot.lane.b32.xlu0 %v2488, 16
        %v2609 = vpop.permute.xlu0 %2608
        %2610 = vrot.lane.b32.xlu0 %v2489, 16
        %v2611 = vpop.permute.xlu0 %2610
        %2612 = vrot.lane.b32.xlu0 %v2490, 16
        %v2613 = vpop.permute.xlu0 %2612
        %2614 = vrot.lane.b32.xlu0 %v2491, 16
        %v2615 = vpop.permute.xlu0 %2614
        %2616 = vrot.lane.b32.xlu0 %v2492, 16
        %v2617 = vpop.permute.xlu0 %2616
        %2618 = vrot.lane.b32.xlu0 %v2493, 16
        %v2619 = vpop.permute.xlu0 %2618
        %2620 = vrot.lane.b32.xlu0 %v2494, 16
        %v2621 = vpop.permute.xlu0 %2620
        %2622 = vrot.lane.b32.xlu0 %v2495, 16
        %v2623 = vpop.permute.xlu0 %2622
        %2624 = vrot.lane.b32.xlu0 %v2496, 16
        %v2625 = vpop.permute.xlu0 %2624
        %2626 = vrot.lane.b32.xlu0 %v2497, 16
        %v2627 = vpop.permute.xlu0 %2626
        %2628 = vrot.lane.b32.xlu0 %v2498, 16
        %v2629 = vpop.permute.xlu0 %2628
        %2630 = vrot.lane.b32.xlu0 %v2499, 16
        %v2631 = vpop.permute.xlu0 %2630
        %2632 = vrot.lane.b32.xlu0 %v2500, 16
        %v2633 = vpop.permute.xlu0 %2632
        %2634 = vrot.lane.b32.xlu0 %v2501, 16
        %v2635 = vpop.permute.xlu0 %2634
        %2636 = vrot.lane.b32.xlu0 %v2502, 16
        %v2637 = vpop.permute.xlu0 %2636
        %2638 = vrot.lane.b32.xlu0 %v2503, 16
        %v2639 = vpop.permute.xlu0 %2638
        %2640 = vrot.lane.b32.xlu0 %v2504, 16
        %v2641 = vpop.permute.xlu0 %2640
        %2642 = vrot.lane.b32.xlu0 %v2505, 16
        %v2643 = vpop.permute.xlu0 %2642
        %2644 = vrot.lane.b32.xlu0 %v2506, 16
        %v2645 = vpop.permute.xlu0 %2644
        %2646 = vrot.lane.b32.xlu0 %v2507, 16
        %v2647 = vpop.permute.xlu0 %2646
        %v2668 = vsel %vm578, %v2447, %v2529
        %v2669 = vsel %vm578, %v2448, %v2531
        %v2670 = vsel %vm578, %v2449, %v2533
        %v2671 = vsel %vm578, %v2450, %v2535
        %v2672 = vsel %vm578, %v2451, %v2537
        %v2673 = vsel %vm578, %v2452, %v2539
        %v2674 = vsel %vm578, %v2453, %v2541
        %v2675 = vsel %vm578, %v2454, %v2543
        %v2676 = vsel %vm578, %v2455, %v2545
        %v2677 = vsel %vm578, %v2456, %v2547
        %v2678 = vsel %vm578, %v2457, %v2549
        %v2679 = vsel %vm578, %v2458, %v2551
        %v2680 = vsel %vm578, %v2459, %v2553
        %v2681 = vsel %vm578, %v2460, %v2555
        %v2682 = vsel %vm578, %v2461, %v2557
        %v2683 = vsel %vm578, %v2462, %v2559
        %v2684 = vsel %vm578, %v2463, %v2561
        %v2685 = vsel %vm578, %v2464, %v2563
        %v2686 = vsel %vm578, %v2465, %v2565
        %v2687 = vsel %vm578, %v2466, %v2567
        %v2688 = vsel %vm599, %v2668, %v2609
        %v2689 = vsel %vm599, %v2669, %v2611
        %v2690 = vsel %vm599, %v2670, %v2613
        %v2691 = vsel %vm599, %v2671, %v2615
        %v2692 = vsel %vm599, %v2672, %v2617
        %v2693 = vsel %vm599, %v2673, %v2619
        %v2694 = vsel %vm599, %v2674, %v2621
        %v2695 = vsel %vm599, %v2675, %v2623
        %v2696 = vsel %vm599, %v2676, %v2625
        %v2697 = vsel %vm599, %v2677, %v2627
        %v2698 = vsel %vm599, %v2678, %v2629
        %v2699 = vsel %vm599, %v2679, %v2631
        %v2700 = vsel %vm599, %v2680, %v2633
        %v2701 = vsel %vm599, %v2681, %v2635
        %v2702 = vsel %vm599, %v2682, %v2637
        %v2703 = vsel %vm599, %v2683, %v2639
        %v2704 = vsel %vm599, %v2684, %v2641
        %v2705 = vsel %vm599, %v2685, %v2643
        %v2706 = vsel %vm599, %v2686, %v2645
        %v2707 = vsel %vm599, %v2687, %v2647
        %2724 = vrot.lane.b32.xlu0 %v2690, 24
        %v2725 = vpop.permute.xlu0 %2724
        %2726 = vrot.lane.b32.xlu0 %v2691, 24
        %v2727 = vpop.permute.xlu0 %2726
        %2728 = vrot.lane.b32.xlu0 %v2692, 24
        %v2729 = vpop.permute.xlu0 %2728
        %2730 = vrot.lane.b32.xlu0 %v2693, 24
        %v2731 = vpop.permute.xlu0 %2730
        %2732 = vrot.lane.b32.xlu0 %v2694, 24
        %v2733 = vpop.permute.xlu0 %2732
        %2734 = vrot.lane.b32.xlu0 %v2695, 24
        %v2735 = vpop.permute.xlu0 %2734
        %2736 = vrot.lane.b32.xlu0 %v2696, 24
        %v2737 = vpop.permute.xlu0 %2736
        %2738 = vrot.lane.b32.xlu0 %v2697, 24
        %v2739 = vpop.permute.xlu0 %2738
        %2740 = vrot.lane.b32.xlu0 %v2698, 24
        %v2741 = vpop.permute.xlu0 %2740
        %2742 = vrot.lane.b32.xlu0 %v2699, 24
        %v2743 = vpop.permute.xlu0 %2742
        %2744 = vrot.lane.b32.xlu0 %v2700, 24
        %v2745 = vpop.permute.xlu0 %2744
        %2746 = vrot.lane.b32.xlu0 %v2701, 24
        %v2747 = vpop.permute.xlu0 %2746
        %2748 = vrot.lane.b32.xlu0 %v2702, 24
        %v2749 = vpop.permute.xlu0 %2748
        %2750 = vrot.lane.b32.xlu0 %v2703, 24
        %v2751 = vpop.permute.xlu0 %2750
        %2752 = vrot.lane.b32.xlu0 %v2704, 24
        %v2753 = vpop.permute.xlu0 %2752
        %2754 = vrot.lane.b32.xlu0 %v2705, 24
        %v2755 = vpop.permute.xlu0 %2754
        %2774 = vrot.lane.b32.xlu0 %v2692, 48
        %v2775 = vpop.permute.xlu0 %2774
        %2776 = vrot.lane.b32.xlu0 %v2693, 48
        %v2777 = vpop.permute.xlu0 %2776
        %2778 = vrot.lane.b32.xlu0 %v2694, 48
        %v2779 = vpop.permute.xlu0 %2778
        %2780 = vrot.lane.b32.xlu0 %v2695, 48
        %v2781 = vpop.permute.xlu0 %2780
        %2782 = vrot.lane.b32.xlu0 %v2696, 48
        %v2783 = vpop.permute.xlu0 %2782
        %2784 = vrot.lane.b32.xlu0 %v2697, 48
        %v2785 = vpop.permute.xlu0 %2784
        %2786 = vrot.lane.b32.xlu0 %v2698, 48
        %v2787 = vpop.permute.xlu0 %2786
        %2788 = vrot.lane.b32.xlu0 %v2699, 48
        %v2789 = vpop.permute.xlu0 %2788
        %2790 = vrot.lane.b32.xlu0 %v2700, 48
        %v2791 = vpop.permute.xlu0 %2790
        %2792 = vrot.lane.b32.xlu0 %v2701, 48
        %v2793 = vpop.permute.xlu0 %2792
        %2794 = vrot.lane.b32.xlu0 %v2702, 48
        %v2795 = vpop.permute.xlu0 %2794
        %2796 = vrot.lane.b32.xlu0 %v2703, 48
        %v2797 = vpop.permute.xlu0 %2796
        %2798 = vrot.lane.b32.xlu0 %v2704, 48
        %v2799 = vpop.permute.xlu0 %2798
        %2800 = vrot.lane.b32.xlu0 %v2705, 48
        %v2801 = vpop.permute.xlu0 %2800
        %2802 = vrot.lane.b32.xlu0 %v2706, 48
        %v2803 = vpop.permute.xlu0 %2802
        %2804 = vrot.lane.b32.xlu0 %v2707, 48
        %v2805 = vpop.permute.xlu0 %2804
        %v2822 = vsel %vm734, %v2688, %v2725
        %v2823 = vsel %vm734, %v2689, %v2727
        %v2824 = vsel %vm734, %v2690, %v2729
        %v2825 = vsel %vm734, %v2691, %v2731
        %v2826 = vsel %vm734, %v2692, %v2733
        %v2827 = vsel %vm734, %v2693, %v2735
        %v2828 = vsel %vm734, %v2694, %v2737
        %v2829 = vsel %vm734, %v2695, %v2739
        %v2830 = vsel %vm734, %v2696, %v2741
        %v2831 = vsel %vm734, %v2697, %v2743
        %v2832 = vsel %vm734, %v2698, %v2745
        %v2833 = vsel %vm734, %v2699, %v2747
        %v2834 = vsel %vm734, %v2700, %v2749
        %v2835 = vsel %vm734, %v2701, %v2751
        %v2836 = vsel %vm734, %v2702, %v2753
        %v2837 = vsel %vm734, %v2703, %v2755
        %v2838 = vsel %vm751, %v2822, %v2775
        %v2839 = vsel %vm751, %v2823, %v2777
        %v2840 = vsel %vm751, %v2824, %v2779
        %v2841 = vsel %vm751, %v2825, %v2781
        %v2842 = vsel %vm751, %v2826, %v2783
        %v2843 = vsel %vm751, %v2827, %v2785
        %v2844 = vsel %vm751, %v2828, %v2787
        %v2845 = vsel %vm751, %v2829, %v2789
        %v2846 = vsel %vm751, %v2830, %v2791
        %v2847 = vsel %vm751, %v2831, %v2793
        %v2848 = vsel %vm751, %v2832, %v2795
        %v2849 = vsel %vm751, %v2833, %v2797
        %v2850 = vsel %vm751, %v2834, %v2799
        %v2851 = vsel %vm751, %v2835, %v2801
        %v2852 = vsel %vm751, %v2836, %v2803
        %v2853 = vsel %vm751, %v2837, %v2805
        %v2854 = vld [vmem:[%s3] sm:$0xff]
        %v2855 = vld [vmem:[%s3 + $0x8] sm:$0xff]
        %v2856 = vld [vmem:[%s3 + $0x10] sm:$0xff]
        %v2857 = vld [vmem:[%s3 + $0x18] sm:$0xff]
        %v2858 = vld [vmem:[%s3 + $0x20] sm:$0xff]
        %v2859 = vld [vmem:[%s3 + $0x28] sm:$0xff]
        %v2860 = vld [vmem:[%s3 + $0x30] sm:$0xff]
        %v2861 = vld [vmem:[%s3 + $0x38] sm:$0xff]
        %v2862 = vld [vmem:[%s3 + $0x40] sm:$0xff]
        %v2879 = vrot.slane %v2838, 1
        %v2880 = vrot.slane %v2839, 1
        %v2881 = vsel %vm793, %v2879, %v2880
        %v2882 = vrot.slane %v2840, 1
        %v2883 = vrot.slane %v2841, 1
        %v2884 = vsel %vm793, %v2882, %v2883
        %v2885 = vrot.slane %v2842, 1
        %v2886 = vrot.slane %v2843, 1
        %v2887 = vsel %vm793, %v2885, %v2886
        %v2888 = vrot.slane %v2844, 1
        %v2889 = vrot.slane %v2845, 1
        %v2890 = vsel %vm793, %v2888, %v2889
        %v2891 = vrot.slane %v2846, 1
        %v2892 = vrot.slane %v2847, 1
        %v2893 = vsel %vm793, %v2891, %v2892
        %v2894 = vrot.slane %v2848, 1
        %v2895 = vrot.slane %v2849, 1
        %v2896 = vsel %vm793, %v2894, %v2895
        %v2897 = vrot.slane %v2850, 1
        %v2898 = vrot.slane %v2851, 1
        %v2899 = vsel %vm793, %v2897, %v2898
        %v2900 = vrot.slane %v2852, 1
        %v2901 = vrot.slane %v2853, 1
        %v2902 = vsel %vm793, %v2900, %v2901
        %v2903 = vld [vmem:[%s818] sm:$0xff]
        %v2904 = vld [vmem:[%s818 + $0x8] sm:$0xff]
        %v2905 = vld [vmem:[%s818 + $0x10] sm:$0xff]
        %v2906 = vld [vmem:[%s818 + $0x18] sm:$0xff]
        %v2907 = vld [vmem:[%s818 + $0x20] sm:$0xff]
        %v2908 = vld [vmem:[%s818 + $0x28] sm:$0xff]
        %v2909 = vld [vmem:[%s818 + $0x30] sm:$0xff]
        %v2910 = vld [vmem:[%s818 + $0x38] sm:$0xff]
        %v2911 = vld [vmem:[%s818 + $0x40] sm:$0xff]
        %v2912 = vsel %vm828, %v2881, 0
        %v2914 = vsel %vm828, %v2884, 0
        %v2916 = vsel %vm828, %v2887, 0
        %v2918 = vsel %vm828, %v2890, 0
        %v2920 = vsel %vm828, %v2893, 0
        %v2922 = vsel %vm828, %v2896, 0
        %v2924 = vsel %vm828, %v2899, 0
        %v2926 = vsel %vm828, %v2902, 0
        %2928 = vmatpush.msra.mxu0 0.0
        %2929 = vmatpush.msra.mxu0 0.0
        %2930 = vmatpush.msra.mxu0 0.0
        %2931 = vmatpush.msra.mxu0 0.0
        %2932 = vmatpush.msra.mxu0 0.0
        %2933 = vmatpush.msra.mxu0 0.0
        %2934 = vmatpush.msra.mxu0 0.0
        %2935 = vmatpush.msra.mxu0 %v2911
        %2936 = vmatpush.msra.mxu0 %v2910
        %2937 = vmatpush.msra.mxu0 %v2909
        %2938 = vmatpush.msra.mxu0 %v2908
        %2939 = vmatpush.msra.mxu0 %v2907
        %2940 = vmatpush.msra.mxu0 %v2906
        %2941 = vmatpush.msra.mxu0 %v2905
        %2942 = vmatpush.msra.mxu0 %v2904
        %2943 = vmatpush.msra.mxu0 %v2903
        %2944 = vmatmul.f32.gmra.mxu0 %v2912
        %v2945 = vpop.f32.mrf.mxu0
        %v2946 = vadd.f32 0.0, %v2945
        %2947 = vmatmul.f32.gmra.mxu0 %v2914
        %v2948 = vpop.f32.mrf.mxu0
        %v2949 = vadd.f32 0.0, %v2948
        %2950 = vmatmul.f32.gmra.mxu0 %v2916
        %v2951 = vpop.f32.mrf.mxu0
        %v2952 = vadd.f32 0.0, %v2951
        %2953 = vmatmul.f32.gmra.mxu0 %v2918
        %v2954 = vpop.f32.mrf.mxu0
        %v2955 = vadd.f32 0.0, %v2954
        %2956 = vmatmul.f32.gmra.mxu0 %v2920
        %v2957 = vpop.f32.mrf.mxu0
        %v2958 = vadd.f32 0.0, %v2957
        %2959 = vmatmul.f32.gmra.mxu0 %v2922
        %v2960 = vpop.f32.mrf.mxu0
        %v2961 = vadd.f32 0.0, %v2960
        %2962 = vmatmul.f32.gmra.mxu0 %v2924
        %v2963 = vpop.f32.mrf.mxu0
        %v2964 = vadd.f32 0.0, %v2963
        %2965 = vmatmul.f32.gmra.mxu0 %v2926
        %v2966 = vpop.f32.mrf.mxu0
        %v2967 = vadd.f32 0.0, %v2966
        %2968 = vdwg.mxu0
        %v2969 = vsel %vm828, %v2838, 0
        %v2971 = vsel %vm828, %v2840, 0
        %v2973 = vsel %vm828, %v2842, 0
        %v2975 = vsel %vm828, %v2844, 0
        %v2977 = vsel %vm828, %v2846, 0
        %v2979 = vsel %vm828, %v2848, 0
        %v2981 = vsel %vm828, %v2850, 0
        %v2983 = vsel %vm828, %v2852, 0
        %2985 = vmatpush.msra.mxu0 0.0
        %2986 = vmatpush.msra.mxu0 0.0
        %2987 = vmatpush.msra.mxu0 0.0
        %2988 = vmatpush.msra.mxu0 0.0
        %2989 = vmatpush.msra.mxu0 0.0
        %2990 = vmatpush.msra.mxu0 0.0
        %2991 = vmatpush.msra.mxu0 0.0
        %2992 = vmatpush.msra.mxu0 %v2862
        %2993 = vmatpush.msra.mxu0 %v2861
        %2994 = vmatpush.msra.mxu0 %v2860
        %2995 = vmatpush.msra.mxu0 %v2859
        %2996 = vmatpush.msra.mxu0 %v2858
        %2997 = vmatpush.msra.mxu0 %v2857
        %2998 = vmatpush.msra.mxu0 %v2856
        %2999 = vmatpush.msra.mxu0 %v2855
        %3000 = vmatpush.msra.mxu0 %v2854
        %3001 = vmatmul.f32.gmra.mxu0 %v2969
        %v3002 = vpop.f32.mrf.mxu0
        %v3003 = vadd.f32 %v2946, %v3002
        %3004 = vmatmul.f32.gmra.mxu0 %v2971
        %v3005 = vpop.f32.mrf.mxu0
        %v3006 = vadd.f32 %v2949, %v3005
        %3007 = vmatmul.f32.gmra.mxu0 %v2973
        %v3008 = vpop.f32.mrf.mxu0
        %v3009 = vadd.f32 %v2952, %v3008
        %3010 = vmatmul.f32.gmra.mxu0 %v2975
        %v3011 = vpop.f32.mrf.mxu0
        %v3012 = vadd.f32 %v2955, %v3011
        %3013 = vmatmul.f32.gmra.mxu0 %v2977
        %v3014 = vpop.f32.mrf.mxu0
        %v3015 = vadd.f32 %v2958, %v3014
        %3016 = vmatmul.f32.gmra.mxu0 %v2979
        %v3017 = vpop.f32.mrf.mxu0
        %v3018 = vadd.f32 %v2961, %v3017
        %3019 = vmatmul.f32.gmra.mxu0 %v2981
        %v3020 = vpop.f32.mrf.mxu0
        %v3021 = vadd.f32 %v2964, %v3020
        %3022 = vmatmul.f32.gmra.mxu0 %v2983
        %v3023 = vpop.f32.mrf.mxu0
        %v3024 = vadd.f32 %v2967, %v3023
        %3025 = vdwg.mxu0
        %v3026 = vrot.slane %v2838, 2
        %v3027 = vrot.slane %v2839, 2
        %v3028 = vsel %vm943, %v3026, %v3027
        %v3029 = vrot.slane %v2840, 2
        %v3030 = vrot.slane %v2841, 2
        %v3031 = vsel %vm943, %v3029, %v3030
        %v3032 = vrot.slane %v2842, 2
        %v3033 = vrot.slane %v2843, 2
        %v3034 = vsel %vm943, %v3032, %v3033
        %v3035 = vrot.slane %v2844, 2
        %v3036 = vrot.slane %v2845, 2
        %v3037 = vsel %vm943, %v3035, %v3036
        %v3038 = vrot.slane %v2846, 2
        %v3039 = vrot.slane %v2847, 2
        %v3040 = vsel %vm943, %v3038, %v3039
        %v3041 = vrot.slane %v2848, 2
        %v3042 = vrot.slane %v2849, 2
        %v3043 = vsel %vm943, %v3041, %v3042
        %v3044 = vrot.slane %v2850, 2
        %v3045 = vrot.slane %v2851, 2
        %v3046 = vsel %vm943, %v3044, %v3045
        %v3047 = vrot.slane %v2852, 2
        %v3048 = vrot.slane %v2853, 2
        %v3049 = vsel %vm943, %v3047, %v3048
        %v3050 = vld [vmem:[%s968] sm:$0xff]
        %v3051 = vld [vmem:[%s968 + $0x8] sm:$0xff]
        %v3052 = vld [vmem:[%s968 + $0x10] sm:$0xff]
        %v3053 = vld [vmem:[%s968 + $0x18] sm:$0xff]
        %v3054 = vld [vmem:[%s968 + $0x20] sm:$0xff]
        %v3055 = vld [vmem:[%s968 + $0x28] sm:$0xff]
        %v3056 = vld [vmem:[%s968 + $0x30] sm:$0xff]
        %v3057 = vld [vmem:[%s968 + $0x38] sm:$0xff]
        %v3058 = vld [vmem:[%s968 + $0x40] sm:$0xff]
        %v3059 = vsel %vm828, %v3028, 0
        %v3061 = vsel %vm828, %v3031, 0
        %v3063 = vsel %vm828, %v3034, 0
        %v3065 = vsel %vm828, %v3037, 0
        %v3067 = vsel %vm828, %v3040, 0
        %v3069 = vsel %vm828, %v3043, 0
        %v3071 = vsel %vm828, %v3046, 0
        %v3073 = vsel %vm828, %v3049, 0
        %3075 = vmatpush.msra.mxu0 0.0
        %3076 = vmatpush.msra.mxu0 0.0
        %3077 = vmatpush.msra.mxu0 0.0
        %3078 = vmatpush.msra.mxu0 0.0
        %3079 = vmatpush.msra.mxu0 0.0
        %3080 = vmatpush.msra.mxu0 0.0
        %3081 = vmatpush.msra.mxu0 0.0
        %3082 = vmatpush.msra.mxu0 %v3058
        %3083 = vmatpush.msra.mxu0 %v3057
        %3084 = vmatpush.msra.mxu0 %v3056
        %3085 = vmatpush.msra.mxu0 %v3055
        %3086 = vmatpush.msra.mxu0 %v3054
        %3087 = vmatpush.msra.mxu0 %v3053
        %3088 = vmatpush.msra.mxu0 %v3052
        %3089 = vmatpush.msra.mxu0 %v3051
        %3090 = vmatpush.msra.mxu0 %v3050
        %3091 = vmatmul.f32.gmra.mxu0 %v3059
        %v3092 = vpop.f32.mrf.mxu0
        %v3093 = vadd.f32 0.0, %v3092
        %3094 = vmatmul.f32.gmra.mxu0 %v3061
        %v3095 = vpop.f32.mrf.mxu0
        %v3096 = vadd.f32 0.0, %v3095
        %3097 = vmatmul.f32.gmra.mxu0 %v3063
        %v3098 = vpop.f32.mrf.mxu0
        %v3099 = vadd.f32 0.0, %v3098
        %3100 = vmatmul.f32.gmra.mxu0 %v3065
        %v3101 = vpop.f32.mrf.mxu0
        %v3102 = vadd.f32 0.0, %v3101
        %3103 = vmatmul.f32.gmra.mxu0 %v3067
        %v3104 = vpop.f32.mrf.mxu0
        %v3105 = vadd.f32 0.0, %v3104
        %3106 = vmatmul.f32.gmra.mxu0 %v3069
        %v3107 = vpop.f32.mrf.mxu0
        %v3108 = vadd.f32 0.0, %v3107
        %3109 = vmatmul.f32.gmra.mxu0 %v3071
        %v3110 = vpop.f32.mrf.mxu0
        %v3111 = vadd.f32 0.0, %v3110
        %3112 = vmatmul.f32.gmra.mxu0 %v3073
        %v3113 = vpop.f32.mrf.mxu0
        %v3114 = vadd.f32 0.0, %v3113
        %3115 = vdwg.mxu0
        %v3116 = vadd.f32 %v3003, %v3093
        %v3117 = vadd.f32 %v3006, %v3096
        %v3118 = vadd.f32 %v3009, %v3099
        %v3119 = vadd.f32 %v3012, %v3102
        %v3120 = vadd.f32 %v3015, %v3105
        %v3121 = vadd.f32 %v3018, %v3108
        %v3122 = vadd.f32 %v3021, %v3111
        %v3123 = vadd.f32 %v3024, %v3114
        %v3124 = vmax.f32 %v3116, 0.0
        %v3125 = vmax.f32 %v3117, 0.0
        %v3126 = vmax.f32 %v3118, 0.0
        %v3127 = vmax.f32 %v3119, 0.0
        %v3128 = vmax.f32 %v3120, 0.0
        %v3129 = vmax.f32 %v3121, 0.0
        %v3130 = vmax.f32 %v3122, 0.0
        %v3131 = vmax.f32 %v3123, 0.0
        %s3132 = scalar_lea.vmem %s305, 192 [#allocation2]
        %3133 = vst.msk [vmem:[%s3132] sm:$0xff] %vm599, %v3124
        %3134 = vst.msk [vmem:[%s3132 + $0x8] sm:$0xff] %vm599, %v3125
        %3135 = vst.msk [vmem:[%s3132 + $0x10] sm:$0xff] %vm599, %v3126
        %3136 = vst.msk [vmem:[%s3132 + $0x18] sm:$0xff] %vm599, %v3127
        %3137 = vst.msk [vmem:[%s3132 + $0x20] sm:$0xff] %vm599, %v3128
        %3138 = vst.msk [vmem:[%s3132 + $0x28] sm:$0xff] %vm599, %v3129
        %3139 = vst.msk [vmem:[%s3132 + $0x30] sm:$0xff] %vm599, %v3130
        %3140 = vst.msk [vmem:[%s3132 + $0x38] sm:$0xff] %vm599, %v3131
        %v3141 = vld [vmem:[%s1793] sm:$0xff]
        %v3142 = vld [vmem:[%s1793 + $0x8] sm:$0x3]
        %v3143 = vld [vmem:[%s1793 + $0x10] sm:$0xff]
        %v3144 = vld [vmem:[%s1793 + $0x18] sm:$0x3]
        %v3145 = vld [vmem:[%s1793 + $0x20] sm:$0xff]
        %v3146 = vld [vmem:[%s1793 + $0x28] sm:$0x3]
        %v3147 = vld [vmem:[%s1793 + $0x30] sm:$0xff]
        %v3148 = vld [vmem:[%s1793 + $0x38] sm:$0x3]
        %v3149 = vld [vmem:[%s1793 + $0x40] sm:$0xff]
        %v3150 = vld [vmem:[%s1793 + $0x48] sm:$0x3]
        %v3151 = vld [vmem:[%s1793 + $0x50] sm:$0xff]
        %v3152 = vld [vmem:[%s1793 + $0x58] sm:$0x3]
        %v3153 = vld [vmem:[%s1793 + $0x60] sm:$0xff]
        %v3154 = vld [vmem:[%s1793 + $0x68] sm:$0x3]
        %v3155 = vld [vmem:[%s1793 + $0x70] sm:$0xff]
        %v3156 = vld [vmem:[%s1793 + $0x78] sm:$0x3]
        %v3157 = vld [vmem:[%s1793 + $0x80] sm:$0xff]
        %v3158 = vld [vmem:[%s1793 + $0x88] sm:$0x3]
        %v3159 = vld [vmem:[%s1793 + $0x90] sm:$0xff]
        %v3160 = vld [vmem:[%s1793 + $0x98] sm:$0x3]
        %v3161 = vld [vmem:[%s2487] sm:$0xff]
        %v3162 = vld [vmem:[%s2487 + $0x8] sm:$0x3]
        %v3163 = vld [vmem:[%s2487 + $0x10] sm:$0xff]
        %v3164 = vld [vmem:[%s2487 + $0x18] sm:$0x3]
        %v3165 = vld [vmem:[%s2487 + $0x20] sm:$0xff]
        %v3166 = vld [vmem:[%s2487 + $0x28] sm:$0x3]
        %v3167 = vld [vmem:[%s2487 + $0x30] sm:$0xff]
        %v3168 = vld [vmem:[%s2487 + $0x38] sm:$0x3]
        %v3169 = vld [vmem:[%s2487 + $0x40] sm:$0xff]
        %v3170 = vld [vmem:[%s2487 + $0x48] sm:$0x3]
        %v3171 = vld [vmem:[%s2487 + $0x50] sm:$0xff]
        %v3172 = vld [vmem:[%s2487 + $0x58] sm:$0x3]
        %v3173 = vld [vmem:[%s2487 + $0x60] sm:$0xff]
        %v3174 = vld [vmem:[%s2487 + $0x68] sm:$0x3]
        %v3175 = vld [vmem:[%s2487 + $0x70] sm:$0xff]
        %v3176 = vld [vmem:[%s2487 + $0x78] sm:$0x3]
        %v3177 = vld [vmem:[%s2487 + $0x80] sm:$0xff]
        %v3178 = vld [vmem:[%s2487 + $0x88] sm:$0x3]
        %v3179 = vld [vmem:[%s2487 + $0x90] sm:$0xff]
        %v3180 = vld [vmem:[%s2487 + $0x98] sm:$0x3]
        %s3181 = scalar_lea.vmem %s321, 960
        %v3182 = vld [vmem:[%s3181] sm:$0xff]
        %v3183 = vld [vmem:[%s3181 + $0x8] sm:$0x3]
        %v3184 = vld [vmem:[%s3181 + $0x10] sm:$0xff]
        %v3185 = vld [vmem:[%s3181 + $0x18] sm:$0x3]
        %v3186 = vld [vmem:[%s3181 + $0x20] sm:$0xff]
        %v3187 = vld [vmem:[%s3181 + $0x28] sm:$0x3]
        %v3188 = vld [vmem:[%s3181 + $0x30] sm:$0xff]
        %v3189 = vld [vmem:[%s3181 + $0x38] sm:$0x3]
        %v3190 = vld [vmem:[%s3181 + $0x40] sm:$0xff]
        %v3191 = vld [vmem:[%s3181 + $0x48] sm:$0x3]
        %v3192 = vld [vmem:[%s3181 + $0x50] sm:$0xff]
        %v3193 = vld [vmem:[%s3181 + $0x58] sm:$0x3]
        %v3194 = vld [vmem:[%s3181 + $0x60] sm:$0xff]
        %v3195 = vld [vmem:[%s3181 + $0x68] sm:$0x3]
        %v3196 = vld [vmem:[%s3181 + $0x70] sm:$0xff]
        %v3197 = vld [vmem:[%s3181 + $0x78] sm:$0x3]
        %v3198 = vld [vmem:[%s3181 + $0x80] sm:$0xff]
        %v3199 = vld [vmem:[%s3181 + $0x88] sm:$0x3]
        %v3200 = vld [vmem:[%s3181 + $0x90] sm:$0xff]
        %v3201 = vld [vmem:[%s3181 + $0x98] sm:$0x3]
        %3222 = vrot.lane.b32.xlu0 %v3161, 8
        %v3223 = vpop.permute.xlu0 %3222
        %3224 = vrot.lane.b32.xlu0 %v3162, 8
        %v3225 = vpop.permute.xlu0 %3224
        %3226 = vrot.lane.b32.xlu0 %v3163, 8
        %v3227 = vpop.permute.xlu0 %3226
        %3228 = vrot.lane.b32.xlu0 %v3164, 8
        %v3229 = vpop.permute.xlu0 %3228
        %3230 = vrot.lane.b32.xlu0 %v3165, 8
        %v3231 = vpop.permute.xlu0 %3230
        %3232 = vrot.lane.b32.xlu0 %v3166, 8
        %v3233 = vpop.permute.xlu0 %3232
        %3234 = vrot.lane.b32.xlu0 %v3167, 8
        %v3235 = vpop.permute.xlu0 %3234
        %3236 = vrot.lane.b32.xlu0 %v3168, 8
        %v3237 = vpop.permute.xlu0 %3236
        %3238 = vrot.lane.b32.xlu0 %v3169, 8
        %v3239 = vpop.permute.xlu0 %3238
        %3240 = vrot.lane.b32.xlu0 %v3170, 8
        %v3241 = vpop.permute.xlu0 %3240
        %3242 = vrot.lane.b32.xlu0 %v3171, 8
        %v3243 = vpop.permute.xlu0 %3242
        %3244 = vrot.lane.b32.xlu0 %v3172, 8
        %v3245 = vpop.permute.xlu0 %3244
        %3246 = vrot.lane.b32.xlu0 %v3173, 8
        %v3247 = vpop.permute.xlu0 %3246
        %3248 = vrot.lane.b32.xlu0 %v3174, 8
        %v3249 = vpop.permute.xlu0 %3248
        %3250 = vrot.lane.b32.xlu0 %v3175, 8
        %v3251 = vpop.permute.xlu0 %3250
        %3252 = vrot.lane.b32.xlu0 %v3176, 8
        %v3253 = vpop.permute.xlu0 %3252
        %3254 = vrot.lane.b32.xlu0 %v3177, 8
        %v3255 = vpop.permute.xlu0 %3254
        %3256 = vrot.lane.b32.xlu0 %v3178, 8
        %v3257 = vpop.permute.xlu0 %3256
        %3258 = vrot.lane.b32.xlu0 %v3179, 8
        %v3259 = vpop.permute.xlu0 %3258
        %3260 = vrot.lane.b32.xlu0 %v3180, 8
        %v3261 = vpop.permute.xlu0 %3260
        %3302 = vrot.lane.b32.xlu0 %v3182, 16
        %v3303 = vpop.permute.xlu0 %3302
        %3304 = vrot.lane.b32.xlu0 %v3183, 16
        %v3305 = vpop.permute.xlu0 %3304
        %3306 = vrot.lane.b32.xlu0 %v3184, 16
        %v3307 = vpop.permute.xlu0 %3306
        %3308 = vrot.lane.b32.xlu0 %v3185, 16
        %v3309 = vpop.permute.xlu0 %3308
        %3310 = vrot.lane.b32.xlu0 %v3186, 16
        %v3311 = vpop.permute.xlu0 %3310
        %3312 = vrot.lane.b32.xlu0 %v3187, 16
        %v3313 = vpop.permute.xlu0 %3312
        %3314 = vrot.lane.b32.xlu0 %v3188, 16
        %v3315 = vpop.permute.xlu0 %3314
        %3316 = vrot.lane.b32.xlu0 %v3189, 16
        %v3317 = vpop.permute.xlu0 %3316
        %3318 = vrot.lane.b32.xlu0 %v3190, 16
        %v3319 = vpop.permute.xlu0 %3318
        %3320 = vrot.lane.b32.xlu0 %v3191, 16
        %v3321 = vpop.permute.xlu0 %3320
        %3322 = vrot.lane.b32.xlu0 %v3192, 16
        %v3323 = vpop.permute.xlu0 %3322
        %3324 = vrot.lane.b32.xlu0 %v3193, 16
        %v3325 = vpop.permute.xlu0 %3324
        %3326 = vrot.lane.b32.xlu0 %v3194, 16
        %v3327 = vpop.permute.xlu0 %3326
        %3328 = vrot.lane.b32.xlu0 %v3195, 16
        %v3329 = vpop.permute.xlu0 %3328
        %3330 = vrot.lane.b32.xlu0 %v3196, 16
        %v3331 = vpop.permute.xlu0 %3330
        %3332 = vrot.lane.b32.xlu0 %v3197, 16
        %v3333 = vpop.permute.xlu0 %3332
        %3334 = vrot.lane.b32.xlu0 %v3198, 16
        %v3335 = vpop.permute.xlu0 %3334
        %3336 = vrot.lane.b32.xlu0 %v3199, 16
        %v3337 = vpop.permute.xlu0 %3336
        %3338 = vrot.lane.b32.xlu0 %v3200, 16
        %v3339 = vpop.permute.xlu0 %3338
        %3340 = vrot.lane.b32.xlu0 %v3201, 16
        %v3341 = vpop.permute.xlu0 %3340
        %v3362 = vsel %vm578, %v3141, %v3223
        %v3363 = vsel %vm578, %v3142, %v3225
        %v3364 = vsel %vm578, %v3143, %v3227
        %v3365 = vsel %vm578, %v3144, %v3229
        %v3366 = vsel %vm578, %v3145, %v3231
        %v3367 = vsel %vm578, %v3146, %v3233
        %v3368 = vsel %vm578, %v3147, %v3235
        %v3369 = vsel %vm578, %v3148, %v3237
        %v3370 = vsel %vm578, %v3149, %v3239
        %v3371 = vsel %vm578, %v3150, %v3241
        %v3372 = vsel %vm578, %v3151, %v3243
        %v3373 = vsel %vm578, %v3152, %v3245
        %v3374 = vsel %vm578, %v3153, %v3247
        %v3375 = vsel %vm578, %v3154, %v3249
        %v3376 = vsel %vm578, %v3155, %v3251
        %v3377 = vsel %vm578, %v3156, %v3253
        %v3378 = vsel %vm578, %v3157, %v3255
        %v3379 = vsel %vm578, %v3158, %v3257
        %v3380 = vsel %vm578, %v3159, %v3259
        %v3381 = vsel %vm578, %v3160, %v3261
        %v3382 = vsel %vm599, %v3362, %v3303
        %v3383 = vsel %vm599, %v3363, %v3305
        %v3384 = vsel %vm599, %v3364, %v3307
        %v3385 = vsel %vm599, %v3365, %v3309
        %v3386 = vsel %vm599, %v3366, %v3311
        %v3387 = vsel %vm599, %v3367, %v3313
        %v3388 = vsel %vm599, %v3368, %v3315
        %v3389 = vsel %vm599, %v3369, %v3317
        %v3390 = vsel %vm599, %v3370, %v3319
        %v3391 = vsel %vm599, %v3371, %v3321
        %v3392 = vsel %vm599, %v3372, %v3323
        %v3393 = vsel %vm599, %v3373, %v3325
        %v3394 = vsel %vm599, %v3374, %v3327
        %v3395 = vsel %vm599, %v3375, %v3329
        %v3396 = vsel %vm599, %v3376, %v3331
        %v3397 = vsel %vm599, %v3377, %v3333
        %v3398 = vsel %vm599, %v3378, %v3335
        %v3399 = vsel %vm599, %v3379, %v3337
        %v3400 = vsel %vm599, %v3380, %v3339
        %v3401 = vsel %vm599, %v3381, %v3341
        %3418 = vrot.lane.b32.xlu0 %v3384, 24
        %v3419 = vpop.permute.xlu0 %3418
        %3420 = vrot.lane.b32.xlu0 %v3385, 24
        %v3421 = vpop.permute.xlu0 %3420
        %3422 = vrot.lane.b32.xlu0 %v3386, 24
        %v3423 = vpop.permute.xlu0 %3422
        %3424 = vrot.lane.b32.xlu0 %v3387, 24
        %v3425 = vpop.permute.xlu0 %3424
        %3426 = vrot.lane.b32.xlu0 %v3388, 24
        %v3427 = vpop.permute.xlu0 %3426
        %3428 = vrot.lane.b32.xlu0 %v3389, 24
        %v3429 = vpop.permute.xlu0 %3428
        %3430 = vrot.lane.b32.xlu0 %v3390, 24
        %v3431 = vpop.permute.xlu0 %3430
        %3432 = vrot.lane.b32.xlu0 %v3391, 24
        %v3433 = vpop.permute.xlu0 %3432
        %3434 = vrot.lane.b32.xlu0 %v3392, 24
        %v3435 = vpop.permute.xlu0 %3434
        %3436 = vrot.lane.b32.xlu0 %v3393, 24
        %v3437 = vpop.permute.xlu0 %3436
        %3438 = vrot.lane.b32.xlu0 %v3394, 24
        %v3439 = vpop.permute.xlu0 %3438
        %3440 = vrot.lane.b32.xlu0 %v3395, 24
        %v3441 = vpop.permute.xlu0 %3440
        %3442 = vrot.lane.b32.xlu0 %v3396, 24
        %v3443 = vpop.permute.xlu0 %3442
        %3444 = vrot.lane.b32.xlu0 %v3397, 24
        %v3445 = vpop.permute.xlu0 %3444
        %3446 = vrot.lane.b32.xlu0 %v3398, 24
        %v3447 = vpop.permute.xlu0 %3446
        %3448 = vrot.lane.b32.xlu0 %v3399, 24
        %v3449 = vpop.permute.xlu0 %3448
        %3468 = vrot.lane.b32.xlu0 %v3386, 48
        %v3469 = vpop.permute.xlu0 %3468
        %3470 = vrot.lane.b32.xlu0 %v3387, 48
        %v3471 = vpop.permute.xlu0 %3470
        %3472 = vrot.lane.b32.xlu0 %v3388, 48
        %v3473 = vpop.permute.xlu0 %3472
        %3474 = vrot.lane.b32.xlu0 %v3389, 48
        %v3475 = vpop.permute.xlu0 %3474
        %3476 = vrot.lane.b32.xlu0 %v3390, 48
        %v3477 = vpop.permute.xlu0 %3476
        %3478 = vrot.lane.b32.xlu0 %v3391, 48
        %v3479 = vpop.permute.xlu0 %3478
        %3480 = vrot.lane.b32.xlu0 %v3392, 48
        %v3481 = vpop.permute.xlu0 %3480
        %3482 = vrot.lane.b32.xlu0 %v3393, 48
        %v3483 = vpop.permute.xlu0 %3482
        %3484 = vrot.lane.b32.xlu0 %v3394, 48
        %v3485 = vpop.permute.xlu0 %3484
        %3486 = vrot.lane.b32.xlu0 %v3395, 48
        %v3487 = vpop.permute.xlu0 %3486
        %3488 = vrot.lane.b32.xlu0 %v3396, 48
        %v3489 = vpop.permute.xlu0 %3488
        %3490 = vrot.lane.b32.xlu0 %v3397, 48
        %v3491 = vpop.permute.xlu0 %3490
        %3492 = vrot.lane.b32.xlu0 %v3398, 48
        %v3493 = vpop.permute.xlu0 %3492
        %3494 = vrot.lane.b32.xlu0 %v3399, 48
        %v3495 = vpop.permute.xlu0 %3494
        %3496 = vrot.lane.b32.xlu0 %v3400, 48
        %v3497 = vpop.permute.xlu0 %3496
        %3498 = vrot.lane.b32.xlu0 %v3401, 48
        %v3499 = vpop.permute.xlu0 %3498
        %v3516 = vsel %vm734, %v3382, %v3419
        %v3517 = vsel %vm734, %v3383, %v3421
        %v3518 = vsel %vm734, %v3384, %v3423
        %v3519 = vsel %vm734, %v3385, %v3425
        %v3520 = vsel %vm734, %v3386, %v3427
        %v3521 = vsel %vm734, %v3387, %v3429
        %v3522 = vsel %vm734, %v3388, %v3431
        %v3523 = vsel %vm734, %v3389, %v3433
        %v3524 = vsel %vm734, %v3390, %v3435
        %v3525 = vsel %vm734, %v3391, %v3437
        %v3526 = vsel %vm734, %v3392, %v3439
        %v3527 = vsel %vm734, %v3393, %v3441
        %v3528 = vsel %vm734, %v3394, %v3443
        %v3529 = vsel %vm734, %v3395, %v3445
        %v3530 = vsel %vm734, %v3396, %v3447
        %v3531 = vsel %vm734, %v3397, %v3449
        %v3532 = vsel %vm751, %v3516, %v3469
        %v3533 = vsel %vm751, %v3517, %v3471
        %v3534 = vsel %vm751, %v3518, %v3473
        %v3535 = vsel %vm751, %v3519, %v3475
        %v3536 = vsel %vm751, %v3520, %v3477
        %v3537 = vsel %vm751, %v3521, %v3479
        %v3538 = vsel %vm751, %v3522, %v3481
        %v3539 = vsel %vm751, %v3523, %v3483
        %v3540 = vsel %vm751, %v3524, %v3485
        %v3541 = vsel %vm751, %v3525, %v3487
        %v3542 = vsel %vm751, %v3526, %v3489
        %v3543 = vsel %vm751, %v3527, %v3491
        %v3544 = vsel %vm751, %v3528, %v3493
        %v3545 = vsel %vm751, %v3529, %v3495
        %v3546 = vsel %vm751, %v3530, %v3497
        %v3547 = vsel %vm751, %v3531, %v3499
        %v3548 = vld [vmem:[%s3] sm:$0xff]
        %v3549 = vld [vmem:[%s3 + $0x8] sm:$0xff]
        %v3550 = vld [vmem:[%s3 + $0x10] sm:$0xff]
        %v3551 = vld [vmem:[%s3 + $0x18] sm:$0xff]
        %v3552 = vld [vmem:[%s3 + $0x20] sm:$0xff]
        %v3553 = vld [vmem:[%s3 + $0x28] sm:$0xff]
        %v3554 = vld [vmem:[%s3 + $0x30] sm:$0xff]
        %v3555 = vld [vmem:[%s3 + $0x38] sm:$0xff]
        %v3556 = vld [vmem:[%s3 + $0x40] sm:$0xff]
        %v3573 = vrot.slane %v3532, 1
        %v3574 = vrot.slane %v3533, 1
        %v3575 = vsel %vm793, %v3573, %v3574
        %v3576 = vrot.slane %v3534, 1
        %v3577 = vrot.slane %v3535, 1
        %v3578 = vsel %vm793, %v3576, %v3577
        %v3579 = vrot.slane %v3536, 1
        %v3580 = vrot.slane %v3537, 1
        %v3581 = vsel %vm793, %v3579, %v3580
        %v3582 = vrot.slane %v3538, 1
        %v3583 = vrot.slane %v3539, 1
        %v3584 = vsel %vm793, %v3582, %v3583
        %v3585 = vrot.slane %v3540, 1
        %v3586 = vrot.slane %v3541, 1
        %v3587 = vsel %vm793, %v3585, %v3586
        %v3588 = vrot.slane %v3542, 1
        %v3589 = vrot.slane %v3543, 1
        %v3590 = vsel %vm793, %v3588, %v3589
        %v3591 = vrot.slane %v3544, 1
        %v3592 = vrot.slane %v3545, 1
        %v3593 = vsel %vm793, %v3591, %v3592
        %v3594 = vrot.slane %v3546, 1
        %v3595 = vrot.slane %v3547, 1
        %v3596 = vsel %vm793, %v3594, %v3595
        %v3597 = vld [vmem:[%s818] sm:$0xff]
        %v3598 = vld [vmem:[%s818 + $0x8] sm:$0xff]
        %v3599 = vld [vmem:[%s818 + $0x10] sm:$0xff]
        %v3600 = vld [vmem:[%s818 + $0x18] sm:$0xff]
        %v3601 = vld [vmem:[%s818 + $0x20] sm:$0xff]
        %v3602 = vld [vmem:[%s818 + $0x28] sm:$0xff]
        %v3603 = vld [vmem:[%s818 + $0x30] sm:$0xff]
        %v3604 = vld [vmem:[%s818 + $0x38] sm:$0xff]
        %v3605 = vld [vmem:[%s818 + $0x40] sm:$0xff]
        %v3606 = vsel %vm828, %v3575, 0
        %v3608 = vsel %vm828, %v3578, 0
        %v3610 = vsel %vm828, %v3581, 0
        %v3612 = vsel %vm828, %v3584, 0
        %v3614 = vsel %vm828, %v3587, 0
        %v3616 = vsel %vm828, %v3590, 0
        %v3618 = vsel %vm828, %v3593, 0
        %v3620 = vsel %vm828, %v3596, 0
        %3622 = vmatpush.msra.mxu0 0.0
        %3623 = vmatpush.msra.mxu0 0.0
        %3624 = vmatpush.msra.mxu0 0.0
        %3625 = vmatpush.msra.mxu0 0.0
        %3626 = vmatpush.msra.mxu0 0.0
        %3627 = vmatpush.msra.mxu0 0.0
        %3628 = vmatpush.msra.mxu0 0.0
        %3629 = vmatpush.msra.mxu0 %v3605
        %3630 = vmatpush.msra.mxu0 %v3604
        %3631 = vmatpush.msra.mxu0 %v3603
        %3632 = vmatpush.msra.mxu0 %v3602
        %3633 = vmatpush.msra.mxu0 %v3601
        %3634 = vmatpush.msra.mxu0 %v3600
        %3635 = vmatpush.msra.mxu0 %v3599
        %3636 = vmatpush.msra.mxu0 %v3598
        %3637 = vmatpush.msra.mxu0 %v3597
        %3638 = vmatmul.f32.gmra.mxu0 %v3606
        %v3639 = vpop.f32.mrf.mxu0
        %v3640 = vadd.f32 0.0, %v3639
        %3641 = vmatmul.f32.gmra.mxu0 %v3608
        %v3642 = vpop.f32.mrf.mxu0
        %v3643 = vadd.f32 0.0, %v3642
        %3644 = vmatmul.f32.gmra.mxu0 %v3610
        %v3645 = vpop.f32.mrf.mxu0
        %v3646 = vadd.f32 0.0, %v3645
        %3647 = vmatmul.f32.gmra.mxu0 %v3612
        %v3648 = vpop.f32.mrf.mxu0
        %v3649 = vadd.f32 0.0, %v3648
        %3650 = vmatmul.f32.gmra.mxu0 %v3614
        %v3651 = vpop.f32.mrf.mxu0
        %v3652 = vadd.f32 0.0, %v3651
        %3653 = vmatmul.f32.gmra.mxu0 %v3616
        %v3654 = vpop.f32.mrf.mxu0
        %v3655 = vadd.f32 0.0, %v3654
        %3656 = vmatmul.f32.gmra.mxu0 %v3618
        %v3657 = vpop.f32.mrf.mxu0
        %v3658 = vadd.f32 0.0, %v3657
        %3659 = vmatmul.f32.gmra.mxu0 %v3620
        %v3660 = vpop.f32.mrf.mxu0
        %v3661 = vadd.f32 0.0, %v3660
        %3662 = vdwg.mxu0
        %v3663 = vsel %vm828, %v3532, 0
        %v3665 = vsel %vm828, %v3534, 0
        %v3667 = vsel %vm828, %v3536, 0
        %v3669 = vsel %vm828, %v3538, 0
        %v3671 = vsel %vm828, %v3540, 0
        %v3673 = vsel %vm828, %v3542, 0
        %v3675 = vsel %vm828, %v3544, 0
        %v3677 = vsel %vm828, %v3546, 0
        %3679 = vmatpush.msra.mxu0 0.0
        %3680 = vmatpush.msra.mxu0 0.0
        %3681 = vmatpush.msra.mxu0 0.0
        %3682 = vmatpush.msra.mxu0 0.0
        %3683 = vmatpush.msra.mxu0 0.0
        %3684 = vmatpush.msra.mxu0 0.0
        %3685 = vmatpush.msra.mxu0 0.0
        %3686 = vmatpush.msra.mxu0 %v3556
        %3687 = vmatpush.msra.mxu0 %v3555
        %3688 = vmatpush.msra.mxu0 %v3554
        %3689 = vmatpush.msra.mxu0 %v3553
        %3690 = vmatpush.msra.mxu0 %v3552
        %3691 = vmatpush.msra.mxu0 %v3551
        %3692 = vmatpush.msra.mxu0 %v3550
        %3693 = vmatpush.msra.mxu0 %v3549
        %3694 = vmatpush.msra.mxu0 %v3548
        %3695 = vmatmul.f32.gmra.mxu0 %v3663
        %v3696 = vpop.f32.mrf.mxu0
        %v3697 = vadd.f32 %v3640, %v3696
        %3698 = vmatmul.f32.gmra.mxu0 %v3665
        %v3699 = vpop.f32.mrf.mxu0
        %v3700 = vadd.f32 %v3643, %v3699
        %3701 = vmatmul.f32.gmra.mxu0 %v3667
        %v3702 = vpop.f32.mrf.mxu0
        %v3703 = vadd.f32 %v3646, %v3702
        %3704 = vmatmul.f32.gmra.mxu0 %v3669
        %v3705 = vpop.f32.mrf.mxu0
        %v3706 = vadd.f32 %v3649, %v3705
        %3707 = vmatmul.f32.gmra.mxu0 %v3671
        %v3708 = vpop.f32.mrf.mxu0
        %v3709 = vadd.f32 %v3652, %v3708
        %3710 = vmatmul.f32.gmra.mxu0 %v3673
        %v3711 = vpop.f32.mrf.mxu0
        %v3712 = vadd.f32 %v3655, %v3711
        %3713 = vmatmul.f32.gmra.mxu0 %v3675
        %v3714 = vpop.f32.mrf.mxu0
        %v3715 = vadd.f32 %v3658, %v3714
        %3716 = vmatmul.f32.gmra.mxu0 %v3677
        %v3717 = vpop.f32.mrf.mxu0
        %v3718 = vadd.f32 %v3661, %v3717
        %3719 = vdwg.mxu0
        %v3720 = vrot.slane %v3532, 2
        %v3721 = vrot.slane %v3533, 2
        %v3722 = vsel %vm943, %v3720, %v3721
        %v3723 = vrot.slane %v3534, 2
        %v3724 = vrot.slane %v3535, 2
        %v3725 = vsel %vm943, %v3723, %v3724
        %v3726 = vrot.slane %v3536, 2
        %v3727 = vrot.slane %v3537, 2
        %v3728 = vsel %vm943, %v3726, %v3727
        %v3729 = vrot.slane %v3538, 2
        %v3730 = vrot.slane %v3539, 2
        %v3731 = vsel %vm943, %v3729, %v3730
        %v3732 = vrot.slane %v3540, 2
        %v3733 = vrot.slane %v3541, 2
        %v3734 = vsel %vm943, %v3732, %v3733
        %v3735 = vrot.slane %v3542, 2
        %v3736 = vrot.slane %v3543, 2
        %v3737 = vsel %vm943, %v3735, %v3736
        %v3738 = vrot.slane %v3544, 2
        %v3739 = vrot.slane %v3545, 2
        %v3740 = vsel %vm943, %v3738, %v3739
        %v3741 = vrot.slane %v3546, 2
        %v3742 = vrot.slane %v3547, 2
        %v3743 = vsel %vm943, %v3741, %v3742
        %v3744 = vld [vmem:[%s968] sm:$0xff]
        %v3745 = vld [vmem:[%s968 + $0x8] sm:$0xff]
        %v3746 = vld [vmem:[%s968 + $0x10] sm:$0xff]
        %v3747 = vld [vmem:[%s968 + $0x18] sm:$0xff]
        %v3748 = vld [vmem:[%s968 + $0x20] sm:$0xff]
        %v3749 = vld [vmem:[%s968 + $0x28] sm:$0xff]
        %v3750 = vld [vmem:[%s968 + $0x30] sm:$0xff]
        %v3751 = vld [vmem:[%s968 + $0x38] sm:$0xff]
        %v3752 = vld [vmem:[%s968 + $0x40] sm:$0xff]
        %v3753 = vsel %vm828, %v3722, 0
        %v3755 = vsel %vm828, %v3725, 0
        %v3757 = vsel %vm828, %v3728, 0
        %v3759 = vsel %vm828, %v3731, 0
        %v3761 = vsel %vm828, %v3734, 0
        %v3763 = vsel %vm828, %v3737, 0
        %v3765 = vsel %vm828, %v3740, 0
        %v3767 = vsel %vm828, %v3743, 0
        %3769 = vmatpush.msra.mxu0 0.0
        %3770 = vmatpush.msra.mxu0 0.0
        %3771 = vmatpush.msra.mxu0 0.0
        %3772 = vmatpush.msra.mxu0 0.0
        %3773 = vmatpush.msra.mxu0 0.0
        %3774 = vmatpush.msra.mxu0 0.0
        %3775 = vmatpush.msra.mxu0 0.0
        %3776 = vmatpush.msra.mxu0 %v3752
        %3777 = vmatpush.msra.mxu0 %v3751
        %3778 = vmatpush.msra.mxu0 %v3750
        %3779 = vmatpush.msra.mxu0 %v3749
        %3780 = vmatpush.msra.mxu0 %v3748
        %3781 = vmatpush.msra.mxu0 %v3747
        %3782 = vmatpush.msra.mxu0 %v3746
        %3783 = vmatpush.msra.mxu0 %v3745
        %3784 = vmatpush.msra.mxu0 %v3744
        %3785 = vmatmul.f32.gmra.mxu0 %v3753
        %v3786 = vpop.f32.mrf.mxu0
        %v3787 = vadd.f32 0.0, %v3786
        %3788 = vmatmul.f32.gmra.mxu0 %v3755
        %v3789 = vpop.f32.mrf.mxu0
        %v3790 = vadd.f32 0.0, %v3789
        %3791 = vmatmul.f32.gmra.mxu0 %v3757
        %v3792 = vpop.f32.mrf.mxu0
        %v3793 = vadd.f32 0.0, %v3792
        %3794 = vmatmul.f32.gmra.mxu0 %v3759
        %v3795 = vpop.f32.mrf.mxu0
        %v3796 = vadd.f32 0.0, %v3795
        %3797 = vmatmul.f32.gmra.mxu0 %v3761
        %v3798 = vpop.f32.mrf.mxu0
        %v3799 = vadd.f32 0.0, %v3798
        %3800 = vmatmul.f32.gmra.mxu0 %v3763
        %v3801 = vpop.f32.mrf.mxu0
        %v3802 = vadd.f32 0.0, %v3801
        %3803 = vmatmul.f32.gmra.mxu0 %v3765
        %v3804 = vpop.f32.mrf.mxu0
        %v3805 = vadd.f32 0.0, %v3804
        %3806 = vmatmul.f32.gmra.mxu0 %v3767
        %v3807 = vpop.f32.mrf.mxu0
        %v3808 = vadd.f32 0.0, %v3807
        %3809 = vdwg.mxu0
        %v3810 = vadd.f32 %v3697, %v3787
        %v3811 = vadd.f32 %v3700, %v3790
        %v3812 = vadd.f32 %v3703, %v3793
        %v3813 = vadd.f32 %v3706, %v3796
        %v3814 = vadd.f32 %v3709, %v3799
        %v3815 = vadd.f32 %v3712, %v3802
        %v3816 = vadd.f32 %v3715, %v3805
        %v3817 = vadd.f32 %v3718, %v3808
        %v3818 = vmax.f32 %v3810, 0.0
        %v3819 = vmax.f32 %v3811, 0.0
        %v3820 = vmax.f32 %v3812, 0.0
        %v3821 = vmax.f32 %v3813, 0.0
        %v3822 = vmax.f32 %v3814, 0.0
        %v3823 = vmax.f32 %v3815, 0.0
        %v3824 = vmax.f32 %v3816, 0.0
        %v3825 = vmax.f32 %v3817, 0.0
        %s3826 = scalar_lea.vmem %s305, 256 [#allocation2]
        %3827 = vst.msk [vmem:[%s3826] sm:$0xff] %vm599, %v3818
        %3828 = vst.msk [vmem:[%s3826 + $0x8] sm:$0xff] %vm599, %v3819
        %3829 = vst.msk [vmem:[%s3826 + $0x10] sm:$0xff] %vm599, %v3820
        %3830 = vst.msk [vmem:[%s3826 + $0x18] sm:$0xff] %vm599, %v3821
        %3831 = vst.msk [vmem:[%s3826 + $0x20] sm:$0xff] %vm599, %v3822
        %3832 = vst.msk [vmem:[%s3826 + $0x28] sm:$0xff] %vm599, %v3823
        %3833 = vst.msk [vmem:[%s3826 + $0x30] sm:$0xff] %vm599, %v3824
        %3834 = vst.msk [vmem:[%s3826 + $0x38] sm:$0xff] %vm599, %v3825
        %v3835 = vld [vmem:[%s2487] sm:$0xff]
        %v3836 = vld [vmem:[%s2487 + $0x8] sm:$0x3]
        %v3837 = vld [vmem:[%s2487 + $0x10] sm:$0xff]
        %v3838 = vld [vmem:[%s2487 + $0x18] sm:$0x3]
        %v3839 = vld [vmem:[%s2487 + $0x20] sm:$0xff]
        %v3840 = vld [vmem:[%s2487 + $0x28] sm:$0x3]
        %v3841 = vld [vmem:[%s2487 + $0x30] sm:$0xff]
        %v3842 = vld [vmem:[%s2487 + $0x38] sm:$0x3]
        %v3843 = vld [vmem:[%s2487 + $0x40] sm:$0xff]
        %v3844 = vld [vmem:[%s2487 + $0x48] sm:$0x3]
        %v3845 = vld [vmem:[%s2487 + $0x50] sm:$0xff]
        %v3846 = vld [vmem:[%s2487 + $0x58] sm:$0x3]
        %v3847 = vld [vmem:[%s2487 + $0x60] sm:$0xff]
        %v3848 = vld [vmem:[%s2487 + $0x68] sm:$0x3]
        %v3849 = vld [vmem:[%s2487 + $0x70] sm:$0xff]
        %v3850 = vld [vmem:[%s2487 + $0x78] sm:$0x3]
        %v3851 = vld [vmem:[%s2487 + $0x80] sm:$0xff]
        %v3852 = vld [vmem:[%s2487 + $0x88] sm:$0x3]
        %v3853 = vld [vmem:[%s2487 + $0x90] sm:$0xff]
        %v3854 = vld [vmem:[%s2487 + $0x98] sm:$0x3]
        %v3855 = vld [vmem:[%s3181] sm:$0xff]
        %v3856 = vld [vmem:[%s3181 + $0x8] sm:$0x3]
        %v3857 = vld [vmem:[%s3181 + $0x10] sm:$0xff]
        %v3858 = vld [vmem:[%s3181 + $0x18] sm:$0x3]
        %v3859 = vld [vmem:[%s3181 + $0x20] sm:$0xff]
        %v3860 = vld [vmem:[%s3181 + $0x28] sm:$0x3]
        %v3861 = vld [vmem:[%s3181 + $0x30] sm:$0xff]
        %v3862 = vld [vmem:[%s3181 + $0x38] sm:$0x3]
        %v3863 = vld [vmem:[%s3181 + $0x40] sm:$0xff]
        %v3864 = vld [vmem:[%s3181 + $0x48] sm:$0x3]
        %v3865 = vld [vmem:[%s3181 + $0x50] sm:$0xff]
        %v3866 = vld [vmem:[%s3181 + $0x58] sm:$0x3]
        %v3867 = vld [vmem:[%s3181 + $0x60] sm:$0xff]
        %v3868 = vld [vmem:[%s3181 + $0x68] sm:$0x3]
        %v3869 = vld [vmem:[%s3181 + $0x70] sm:$0xff]
        %v3870 = vld [vmem:[%s3181 + $0x78] sm:$0x3]
        %v3871 = vld [vmem:[%s3181 + $0x80] sm:$0xff]
        %v3872 = vld [vmem:[%s3181 + $0x88] sm:$0x3]
        %v3873 = vld [vmem:[%s3181 + $0x90] sm:$0xff]
        %v3874 = vld [vmem:[%s3181 + $0x98] sm:$0x3]
        %s3875 = scalar_lea.vmem %s321, 1120
        %v3876 = vld [vmem:[%s3875] sm:$0xff]
        %v3877 = vld [vmem:[%s3875 + $0x8] sm:$0x3]
        %v3878 = vld [vmem:[%s3875 + $0x10] sm:$0xff]
        %v3879 = vld [vmem:[%s3875 + $0x18] sm:$0x3]
        %v3880 = vld [vmem:[%s3875 + $0x20] sm:$0xff]
        %v3881 = vld [vmem:[%s3875 + $0x28] sm:$0x3]
        %v3882 = vld [vmem:[%s3875 + $0x30] sm:$0xff]
        %v3883 = vld [vmem:[%s3875 + $0x38] sm:$0x3]
        %v3884 = vld [vmem:[%s3875 + $0x40] sm:$0xff]
        %v3885 = vld [vmem:[%s3875 + $0x48] sm:$0x3]
        %v3886 = vld [vmem:[%s3875 + $0x50] sm:$0xff]
        %v3887 = vld [vmem:[%s3875 + $0x58] sm:$0x3]
        %v3888 = vld [vmem:[%s3875 + $0x60] sm:$0xff]
        %v3889 = vld [vmem:[%s3875 + $0x68] sm:$0x3]
        %v3890 = vld [vmem:[%s3875 + $0x70] sm:$0xff]
        %v3891 = vld [vmem:[%s3875 + $0x78] sm:$0x3]
        %v3892 = vld [vmem:[%s3875 + $0x80] sm:$0xff]
        %v3893 = vld [vmem:[%s3875 + $0x88] sm:$0x3]
        %v3894 = vld [vmem:[%s3875 + $0x90] sm:$0xff]
        %v3895 = vld [vmem:[%s3875 + $0x98] sm:$0x3]
        %3916 = vrot.lane.b32.xlu0 %v3855, 8
        %v3917 = vpop.permute.xlu0 %3916
        %3918 = vrot.lane.b32.xlu0 %v3856, 8
        %v3919 = vpop.permute.xlu0 %3918
        %3920 = vrot.lane.b32.xlu0 %v3857, 8
        %v3921 = vpop.permute.xlu0 %3920
        %3922 = vrot.lane.b32.xlu0 %v3858, 8
        %v3923 = vpop.permute.xlu0 %3922
        %3924 = vrot.lane.b32.xlu0 %v3859, 8
        %v3925 = vpop.permute.xlu0 %3924
        %3926 = vrot.lane.b32.xlu0 %v3860, 8
        %v3927 = vpop.permute.xlu0 %3926
        %3928 = vrot.lane.b32.xlu0 %v3861, 8
        %v3929 = vpop.permute.xlu0 %3928
        %3930 = vrot.lane.b32.xlu0 %v3862, 8
        %v3931 = vpop.permute.xlu0 %3930
        %3932 = vrot.lane.b32.xlu0 %v3863, 8
        %v3933 = vpop.permute.xlu0 %3932
        %3934 = vrot.lane.b32.xlu0 %v3864, 8
        %v3935 = vpop.permute.xlu0 %3934
        %3936 = vrot.lane.b32.xlu0 %v3865, 8
        %v3937 = vpop.permute.xlu0 %3936
        %3938 = vrot.lane.b32.xlu0 %v3866, 8
        %v3939 = vpop.permute.xlu0 %3938
        %3940 = vrot.lane.b32.xlu0 %v3867, 8
        %v3941 = vpop.permute.xlu0 %3940
        %3942 = vrot.lane.b32.xlu0 %v3868, 8
        %v3943 = vpop.permute.xlu0 %3942
        %3944 = vrot.lane.b32.xlu0 %v3869, 8
        %v3945 = vpop.permute.xlu0 %3944
        %3946 = vrot.lane.b32.xlu0 %v3870, 8
        %v3947 = vpop.permute.xlu0 %3946
        %3948 = vrot.lane.b32.xlu0 %v3871, 8
        %v3949 = vpop.permute.xlu0 %3948
        %3950 = vrot.lane.b32.xlu0 %v3872, 8
        %v3951 = vpop.permute.xlu0 %3950
        %3952 = vrot.lane.b32.xlu0 %v3873, 8
        %v3953 = vpop.permute.xlu0 %3952
        %3954 = vrot.lane.b32.xlu0 %v3874, 8
        %v3955 = vpop.permute.xlu0 %3954
        %3996 = vrot.lane.b32.xlu0 %v3876, 16
        %v3997 = vpop.permute.xlu0 %3996
        %3998 = vrot.lane.b32.xlu0 %v3877, 16
        %v3999 = vpop.permute.xlu0 %3998
        %4000 = vrot.lane.b32.xlu0 %v3878, 16
        %v4001 = vpop.permute.xlu0 %4000
        %4002 = vrot.lane.b32.xlu0 %v3879, 16
        %v4003 = vpop.permute.xlu0 %4002
        %4004 = vrot.lane.b32.xlu0 %v3880, 16
        %v4005 = vpop.permute.xlu0 %4004
        %4006 = vrot.lane.b32.xlu0 %v3881, 16
        %v4007 = vpop.permute.xlu0 %4006
        %4008 = vrot.lane.b32.xlu0 %v3882, 16
        %v4009 = vpop.permute.xlu0 %4008
        %4010 = vrot.lane.b32.xlu0 %v3883, 16
        %v4011 = vpop.permute.xlu0 %4010
        %4012 = vrot.lane.b32.xlu0 %v3884, 16
        %v4013 = vpop.permute.xlu0 %4012
        %4014 = vrot.lane.b32.xlu0 %v3885, 16
        %v4015 = vpop.permute.xlu0 %4014
        %4016 = vrot.lane.b32.xlu0 %v3886, 16
        %v4017 = vpop.permute.xlu0 %4016
        %4018 = vrot.lane.b32.xlu0 %v3887, 16
        %v4019 = vpop.permute.xlu0 %4018
        %4020 = vrot.lane.b32.xlu0 %v3888, 16
        %v4021 = vpop.permute.xlu0 %4020
        %4022 = vrot.lane.b32.xlu0 %v3889, 16
        %v4023 = vpop.permute.xlu0 %4022
        %4024 = vrot.lane.b32.xlu0 %v3890, 16
        %v4025 = vpop.permute.xlu0 %4024
        %4026 = vrot.lane.b32.xlu0 %v3891, 16
        %v4027 = vpop.permute.xlu0 %4026
        %4028 = vrot.lane.b32.xlu0 %v3892, 16
        %v4029 = vpop.permute.xlu0 %4028
        %4030 = vrot.lane.b32.xlu0 %v3893, 16
        %v4031 = vpop.permute.xlu0 %4030
        %4032 = vrot.lane.b32.xlu0 %v3894, 16
        %v4033 = vpop.permute.xlu0 %4032
        %4034 = vrot.lane.b32.xlu0 %v3895, 16
        %v4035 = vpop.permute.xlu0 %4034
        %v4056 = vsel %vm578, %v3835, %v3917
        %v4057 = vsel %vm578, %v3836, %v3919
        %v4058 = vsel %vm578, %v3837, %v3921
        %v4059 = vsel %vm578, %v3838, %v3923
        %v4060 = vsel %vm578, %v3839, %v3925
        %v4061 = vsel %vm578, %v3840, %v3927
        %v4062 = vsel %vm578, %v3841, %v3929
        %v4063 = vsel %vm578, %v3842, %v3931
        %v4064 = vsel %vm578, %v3843, %v3933
        %v4065 = vsel %vm578, %v3844, %v3935
        %v4066 = vsel %vm578, %v3845, %v3937
        %v4067 = vsel %vm578, %v3846, %v3939
        %v4068 = vsel %vm578, %v3847, %v3941
        %v4069 = vsel %vm578, %v3848, %v3943
        %v4070 = vsel %vm578, %v3849, %v3945
        %v4071 = vsel %vm578, %v3850, %v3947
        %v4072 = vsel %vm578, %v3851, %v3949
        %v4073 = vsel %vm578, %v3852, %v3951
        %v4074 = vsel %vm578, %v3853, %v3953
        %v4075 = vsel %vm578, %v3854, %v3955
        %v4076 = vsel %vm599, %v4056, %v3997
        %v4077 = vsel %vm599, %v4057, %v3999
        %v4078 = vsel %vm599, %v4058, %v4001
        %v4079 = vsel %vm599, %v4059, %v4003
        %v4080 = vsel %vm599, %v4060, %v4005
        %v4081 = vsel %vm599, %v4061, %v4007
        %v4082 = vsel %vm599, %v4062, %v4009
        %v4083 = vsel %vm599, %v4063, %v4011
        %v4084 = vsel %vm599, %v4064, %v4013
        %v4085 = vsel %vm599, %v4065, %v4015
        %v4086 = vsel %vm599, %v4066, %v4017
        %v4087 = vsel %vm599, %v4067, %v4019
        %v4088 = vsel %vm599, %v4068, %v4021
        %v4089 = vsel %vm599, %v4069, %v4023
        %v4090 = vsel %vm599, %v4070, %v4025
        %v4091 = vsel %vm599, %v4071, %v4027
        %v4092 = vsel %vm599, %v4072, %v4029
        %v4093 = vsel %vm599, %v4073, %v4031
        %v4094 = vsel %vm599, %v4074, %v4033
        %v4095 = vsel %vm599, %v4075, %v4035
        %4112 = vrot.lane.b32.xlu0 %v4078, 24
        %v4113 = vpop.permute.xlu0 %4112
        %4114 = vrot.lane.b32.xlu0 %v4079, 24
        %v4115 = vpop.permute.xlu0 %4114
        %4116 = vrot.lane.b32.xlu0 %v4080, 24
        %v4117 = vpop.permute.xlu0 %4116
        %4118 = vrot.lane.b32.xlu0 %v4081, 24
        %v4119 = vpop.permute.xlu0 %4118
        %4120 = vrot.lane.b32.xlu0 %v4082, 24
        %v4121 = vpop.permute.xlu0 %4120
        %4122 = vrot.lane.b32.xlu0 %v4083, 24
        %v4123 = vpop.permute.xlu0 %4122
        %4124 = vrot.lane.b32.xlu0 %v4084, 24
        %v4125 = vpop.permute.xlu0 %4124
        %4126 = vrot.lane.b32.xlu0 %v4085, 24
        %v4127 = vpop.permute.xlu0 %4126
        %4128 = vrot.lane.b32.xlu0 %v4086, 24
        %v4129 = vpop.permute.xlu0 %4128
        %4130 = vrot.lane.b32.xlu0 %v4087, 24
        %v4131 = vpop.permute.xlu0 %4130
        %4132 = vrot.lane.b32.xlu0 %v4088, 24
        %v4133 = vpop.permute.xlu0 %4132
        %4134 = vrot.lane.b32.xlu0 %v4089, 24
        %v4135 = vpop.permute.xlu0 %4134
        %4136 = vrot.lane.b32.xlu0 %v4090, 24
        %v4137 = vpop.permute.xlu0 %4136
        %4138 = vrot.lane.b32.xlu0 %v4091, 24
        %v4139 = vpop.permute.xlu0 %4138
        %4140 = vrot.lane.b32.xlu0 %v4092, 24
        %v4141 = vpop.permute.xlu0 %4140
        %4142 = vrot.lane.b32.xlu0 %v4093, 24
        %v4143 = vpop.permute.xlu0 %4142
        %4162 = vrot.lane.b32.xlu0 %v4080, 48
        %v4163 = vpop.permute.xlu0 %4162
        %4164 = vrot.lane.b32.xlu0 %v4081, 48
        %v4165 = vpop.permute.xlu0 %4164
        %4166 = vrot.lane.b32.xlu0 %v4082, 48
        %v4167 = vpop.permute.xlu0 %4166
        %4168 = vrot.lane.b32.xlu0 %v4083, 48
        %v4169 = vpop.permute.xlu0 %4168
        %4170 = vrot.lane.b32.xlu0 %v4084, 48
        %v4171 = vpop.permute.xlu0 %4170
        %4172 = vrot.lane.b32.xlu0 %v4085, 48
        %v4173 = vpop.permute.xlu0 %4172
        %4174 = vrot.lane.b32.xlu0 %v4086, 48
        %v4175 = vpop.permute.xlu0 %4174
        %4176 = vrot.lane.b32.xlu0 %v4087, 48
        %v4177 = vpop.permute.xlu0 %4176
        %4178 = vrot.lane.b32.xlu0 %v4088, 48
        %v4179 = vpop.permute.xlu0 %4178
        %4180 = vrot.lane.b32.xlu0 %v4089, 48
        %v4181 = vpop.permute.xlu0 %4180
        %4182 = vrot.lane.b32.xlu0 %v4090, 48
        %v4183 = vpop.permute.xlu0 %4182
        %4184 = vrot.lane.b32.xlu0 %v4091, 48
        %v4185 = vpop.permute.xlu0 %4184
        %4186 = vrot.lane.b32.xlu0 %v4092, 48
        %v4187 = vpop.permute.xlu0 %4186
        %4188 = vrot.lane.b32.xlu0 %v4093, 48
        %v4189 = vpop.permute.xlu0 %4188
        %4190 = vrot.lane.b32.xlu0 %v4094, 48
        %v4191 = vpop.permute.xlu0 %4190
        %4192 = vrot.lane.b32.xlu0 %v4095, 48
        %v4193 = vpop.permute.xlu0 %4192
        %v4210 = vsel %vm734, %v4076, %v4113
        %v4211 = vsel %vm734, %v4077, %v4115
        %v4212 = vsel %vm734, %v4078, %v4117
        %v4213 = vsel %vm734, %v4079, %v4119
        %v4214 = vsel %vm734, %v4080, %v4121
        %v4215 = vsel %vm734, %v4081, %v4123
        %v4216 = vsel %vm734, %v4082, %v4125
        %v4217 = vsel %vm734, %v4083, %v4127
        %v4218 = vsel %vm734, %v4084, %v4129
        %v4219 = vsel %vm734, %v4085, %v4131
        %v4220 = vsel %vm734, %v4086, %v4133
        %v4221 = vsel %vm734, %v4087, %v4135
        %v4222 = vsel %vm734, %v4088, %v4137
        %v4223 = vsel %vm734, %v4089, %v4139
        %v4224 = vsel %vm734, %v4090, %v4141
        %v4225 = vsel %vm734, %v4091, %v4143
        %v4226 = vsel %vm751, %v4210, %v4163
        %v4227 = vsel %vm751, %v4211, %v4165
        %v4228 = vsel %vm751, %v4212, %v4167
        %v4229 = vsel %vm751, %v4213, %v4169
        %v4230 = vsel %vm751, %v4214, %v4171
        %v4231 = vsel %vm751, %v4215, %v4173
        %v4232 = vsel %vm751, %v4216, %v4175
        %v4233 = vsel %vm751, %v4217, %v4177
        %v4234 = vsel %vm751, %v4218, %v4179
        %v4235 = vsel %vm751, %v4219, %v4181
        %v4236 = vsel %vm751, %v4220, %v4183
        %v4237 = vsel %vm751, %v4221, %v4185
        %v4238 = vsel %vm751, %v4222, %v4187
        %v4239 = vsel %vm751, %v4223, %v4189
        %v4240 = vsel %vm751, %v4224, %v4191
        %v4241 = vsel %vm751, %v4225, %v4193
        %v4242 = vld [vmem:[%s3] sm:$0xff]
        %v4243 = vld [vmem:[%s3 + $0x8] sm:$0xff]
        %v4244 = vld [vmem:[%s3 + $0x10] sm:$0xff]
        %v4245 = vld [vmem:[%s3 + $0x18] sm:$0xff]
        %v4246 = vld [vmem:[%s3 + $0x20] sm:$0xff]
        %v4247 = vld [vmem:[%s3 + $0x28] sm:$0xff]
        %v4248 = vld [vmem:[%s3 + $0x30] sm:$0xff]
        %v4249 = vld [vmem:[%s3 + $0x38] sm:$0xff]
        %v4250 = vld [vmem:[%s3 + $0x40] sm:$0xff]
        %v4267 = vrot.slane %v4226, 1
        %v4268 = vrot.slane %v4227, 1
        %v4269 = vsel %vm793, %v4267, %v4268
        %v4270 = vrot.slane %v4228, 1
        %v4271 = vrot.slane %v4229, 1
        %v4272 = vsel %vm793, %v4270, %v4271
        %v4273 = vrot.slane %v4230, 1
        %v4274 = vrot.slane %v4231, 1
        %v4275 = vsel %vm793, %v4273, %v4274
        %v4276 = vrot.slane %v4232, 1
        %v4277 = vrot.slane %v4233, 1
        %v4278 = vsel %vm793, %v4276, %v4277
        %v4279 = vrot.slane %v4234, 1
        %v4280 = vrot.slane %v4235, 1
        %v4281 = vsel %vm793, %v4279, %v4280
        %v4282 = vrot.slane %v4236, 1
        %v4283 = vrot.slane %v4237, 1
        %v4284 = vsel %vm793, %v4282, %v4283
        %v4285 = vrot.slane %v4238, 1
        %v4286 = vrot.slane %v4239, 1
        %v4287 = vsel %vm793, %v4285, %v4286
        %v4288 = vrot.slane %v4240, 1
        %v4289 = vrot.slane %v4241, 1
        %v4290 = vsel %vm793, %v4288, %v4289
        %v4291 = vld [vmem:[%s818] sm:$0xff]
        %v4292 = vld [vmem:[%s818 + $0x8] sm:$0xff]
        %v4293 = vld [vmem:[%s818 + $0x10] sm:$0xff]
        %v4294 = vld [vmem:[%s818 + $0x18] sm:$0xff]
        %v4295 = vld [vmem:[%s818 + $0x20] sm:$0xff]
        %v4296 = vld [vmem:[%s818 + $0x28] sm:$0xff]
        %v4297 = vld [vmem:[%s818 + $0x30] sm:$0xff]
        %v4298 = vld [vmem:[%s818 + $0x38] sm:$0xff]
        %v4299 = vld [vmem:[%s818 + $0x40] sm:$0xff]
        %v4300 = vsel %vm828, %v4269, 0
        %v4302 = vsel %vm828, %v4272, 0
        %v4304 = vsel %vm828, %v4275, 0
        %v4306 = vsel %vm828, %v4278, 0
        %v4308 = vsel %vm828, %v4281, 0
        %v4310 = vsel %vm828, %v4284, 0
        %v4312 = vsel %vm828, %v4287, 0
        %v4314 = vsel %vm828, %v4290, 0
        %4316 = vmatpush.msra.mxu0 0.0
        %4317 = vmatpush.msra.mxu0 0.0
        %4318 = vmatpush.msra.mxu0 0.0
        %4319 = vmatpush.msra.mxu0 0.0
        %4320 = vmatpush.msra.mxu0 0.0
        %4321 = vmatpush.msra.mxu0 0.0
        %4322 = vmatpush.msra.mxu0 0.0
        %4323 = vmatpush.msra.mxu0 %v4299
        %4324 = vmatpush.msra.mxu0 %v4298
        %4325 = vmatpush.msra.mxu0 %v4297
        %4326 = vmatpush.msra.mxu0 %v4296
        %4327 = vmatpush.msra.mxu0 %v4295
        %4328 = vmatpush.msra.mxu0 %v4294
        %4329 = vmatpush.msra.mxu0 %v4293
        %4330 = vmatpush.msra.mxu0 %v4292
        %4331 = vmatpush.msra.mxu0 %v4291
        %4332 = vmatmul.f32.gmra.mxu0 %v4300
        %v4333 = vpop.f32.mrf.mxu0
        %v4334 = vadd.f32 0.0, %v4333
        %4335 = vmatmul.f32.gmra.mxu0 %v4302
        %v4336 = vpop.f32.mrf.mxu0
        %v4337 = vadd.f32 0.0, %v4336
        %4338 = vmatmul.f32.gmra.mxu0 %v4304
        %v4339 = vpop.f32.mrf.mxu0
        %v4340 = vadd.f32 0.0, %v4339
        %4341 = vmatmul.f32.gmra.mxu0 %v4306
        %v4342 = vpop.f32.mrf.mxu0
        %v4343 = vadd.f32 0.0, %v4342
        %4344 = vmatmul.f32.gmra.mxu0 %v4308
        %v4345 = vpop.f32.mrf.mxu0
        %v4346 = vadd.f32 0.0, %v4345
        %4347 = vmatmul.f32.gmra.mxu0 %v4310
        %v4348 = vpop.f32.mrf.mxu0
        %v4349 = vadd.f32 0.0, %v4348
        %4350 = vmatmul.f32.gmra.mxu0 %v4312
        %v4351 = vpop.f32.mrf.mxu0
        %v4352 = vadd.f32 0.0, %v4351
        %4353 = vmatmul.f32.gmra.mxu0 %v4314
        %v4354 = vpop.f32.mrf.mxu0
        %v4355 = vadd.f32 0.0, %v4354
        %4356 = vdwg.mxu0
        %v4357 = vsel %vm828, %v4226, 0
        %v4359 = vsel %vm828, %v4228, 0
        %v4361 = vsel %vm828, %v4230, 0
        %v4363 = vsel %vm828, %v4232, 0
        %v4365 = vsel %vm828, %v4234, 0
        %v4367 = vsel %vm828, %v4236, 0
        %v4369 = vsel %vm828, %v4238, 0
        %v4371 = vsel %vm828, %v4240, 0
        %4373 = vmatpush.msra.mxu0 0.0
        %4374 = vmatpush.msra.mxu0 0.0
        %4375 = vmatpush.msra.mxu0 0.0
        %4376 = vmatpush.msra.mxu0 0.0
        %4377 = vmatpush.msra.mxu0 0.0
        %4378 = vmatpush.msra.mxu0 0.0
        %4379 = vmatpush.msra.mxu0 0.0
        %4380 = vmatpush.msra.mxu0 %v4250
        %4381 = vmatpush.msra.mxu0 %v4249
        %4382 = vmatpush.msra.mxu0 %v4248
        %4383 = vmatpush.msra.mxu0 %v4247
        %4384 = vmatpush.msra.mxu0 %v4246
        %4385 = vmatpush.msra.mxu0 %v4245
        %4386 = vmatpush.msra.mxu0 %v4244
        %4387 = vmatpush.msra.mxu0 %v4243
        %4388 = vmatpush.msra.mxu0 %v4242
        %4389 = vmatmul.f32.gmra.mxu0 %v4357
        %v4390 = vpop.f32.mrf.mxu0
        %v4391 = vadd.f32 %v4334, %v4390
        %4392 = vmatmul.f32.gmra.mxu0 %v4359
        %v4393 = vpop.f32.mrf.mxu0
        %v4394 = vadd.f32 %v4337, %v4393
        %4395 = vmatmul.f32.gmra.mxu0 %v4361
        %v4396 = vpop.f32.mrf.mxu0
        %v4397 = vadd.f32 %v4340, %v4396
        %4398 = vmatmul.f32.gmra.mxu0 %v4363
        %v4399 = vpop.f32.mrf.mxu0
        %v4400 = vadd.f32 %v4343, %v4399
        %4401 = vmatmul.f32.gmra.mxu0 %v4365
        %v4402 = vpop.f32.mrf.mxu0
        %v4403 = vadd.f32 %v4346, %v4402
        %4404 = vmatmul.f32.gmra.mxu0 %v4367
        %v4405 = vpop.f32.mrf.mxu0
        %v4406 = vadd.f32 %v4349, %v4405
        %4407 = vmatmul.f32.gmra.mxu0 %v4369
        %v4408 = vpop.f32.mrf.mxu0
        %v4409 = vadd.f32 %v4352, %v4408
        %4410 = vmatmul.f32.gmra.mxu0 %v4371
        %v4411 = vpop.f32.mrf.mxu0
        %v4412 = vadd.f32 %v4355, %v4411
        %4413 = vdwg.mxu0
        %v4414 = vrot.slane %v4226, 2
        %v4415 = vrot.slane %v4227, 2
        %v4416 = vsel %vm943, %v4414, %v4415
        %v4417 = vrot.slane %v4228, 2
        %v4418 = vrot.slane %v4229, 2
        %v4419 = vsel %vm943, %v4417, %v4418
        %v4420 = vrot.slane %v4230, 2
        %v4421 = vrot.slane %v4231, 2
        %v4422 = vsel %vm943, %v4420, %v4421
        %v4423 = vrot.slane %v4232, 2
        %v4424 = vrot.slane %v4233, 2
        %v4425 = vsel %vm943, %v4423, %v4424
        %v4426 = vrot.slane %v4234, 2
        %v4427 = vrot.slane %v4235, 2
        %v4428 = vsel %vm943, %v4426, %v4427
        %v4429 = vrot.slane %v4236, 2
        %v4430 = vrot.slane %v4237, 2
        %v4431 = vsel %vm943, %v4429, %v4430
        %v4432 = vrot.slane %v4238, 2
        %v4433 = vrot.slane %v4239, 2
        %v4434 = vsel %vm943, %v4432, %v4433
        %v4435 = vrot.slane %v4240, 2
        %v4436 = vrot.slane %v4241, 2
        %v4437 = vsel %vm943, %v4435, %v4436
        %v4438 = vld [vmem:[%s968] sm:$0xff]
        %v4439 = vld [vmem:[%s968 + $0x8] sm:$0xff]
        %v4440 = vld [vmem:[%s968 + $0x10] sm:$0xff]
        %v4441 = vld [vmem:[%s968 + $0x18] sm:$0xff]
        %v4442 = vld [vmem:[%s968 + $0x20] sm:$0xff]
        %v4443 = vld [vmem:[%s968 + $0x28] sm:$0xff]
        %v4444 = vld [vmem:[%s968 + $0x30] sm:$0xff]
        %v4445 = vld [vmem:[%s968 + $0x38] sm:$0xff]
        %v4446 = vld [vmem:[%s968 + $0x40] sm:$0xff]
        %v4447 = vsel %vm828, %v4416, 0
        %v4449 = vsel %vm828, %v4419, 0
        %v4451 = vsel %vm828, %v4422, 0
        %v4453 = vsel %vm828, %v4425, 0
        %v4455 = vsel %vm828, %v4428, 0
        %v4457 = vsel %vm828, %v4431, 0
        %v4459 = vsel %vm828, %v4434, 0
        %v4461 = vsel %vm828, %v4437, 0
        %4463 = vmatpush.msra.mxu0 0.0
        %4464 = vmatpush.msra.mxu0 0.0
        %4465 = vmatpush.msra.mxu0 0.0
        %4466 = vmatpush.msra.mxu0 0.0
        %4467 = vmatpush.msra.mxu0 0.0
        %4468 = vmatpush.msra.mxu0 0.0
        %4469 = vmatpush.msra.mxu0 0.0
        %4470 = vmatpush.msra.mxu0 %v4446
        %4471 = vmatpush.msra.mxu0 %v4445
        %4472 = vmatpush.msra.mxu0 %v4444
        %4473 = vmatpush.msra.mxu0 %v4443
        %4474 = vmatpush.msra.mxu0 %v4442
        %4475 = vmatpush.msra.mxu0 %v4441
        %4476 = vmatpush.msra.mxu0 %v4440
        %4477 = vmatpush.msra.mxu0 %v4439
        %4478 = vmatpush.msra.mxu0 %v4438
        %4479 = vmatmul.f32.gmra.mxu0 %v4447
        %v4480 = vpop.f32.mrf.mxu0
        %v4481 = vadd.f32 0.0, %v4480
        %4482 = vmatmul.f32.gmra.mxu0 %v4449
        %v4483 = vpop.f32.mrf.mxu0
        %v4484 = vadd.f32 0.0, %v4483
        %4485 = vmatmul.f32.gmra.mxu0 %v4451
        %v4486 = vpop.f32.mrf.mxu0
        %v4487 = vadd.f32 0.0, %v4486
        %4488 = vmatmul.f32.gmra.mxu0 %v4453
        %v4489 = vpop.f32.mrf.mxu0
        %v4490 = vadd.f32 0.0, %v4489
        %4491 = vmatmul.f32.gmra.mxu0 %v4455
        %v4492 = vpop.f32.mrf.mxu0
        %v4493 = vadd.f32 0.0, %v4492
        %4494 = vmatmul.f32.gmra.mxu0 %v4457
        %v4495 = vpop.f32.mrf.mxu0
        %v4496 = vadd.f32 0.0, %v4495
        %4497 = vmatmul.f32.gmra.mxu0 %v4459
        %v4498 = vpop.f32.mrf.mxu0
        %v4499 = vadd.f32 0.0, %v4498
        %4500 = vmatmul.f32.gmra.mxu0 %v4461
        %v4501 = vpop.f32.mrf.mxu0
        %v4502 = vadd.f32 0.0, %v4501
        %4503 = vdwg.mxu0
        %v4504 = vadd.f32 %v4391, %v4481
        %v4505 = vadd.f32 %v4394, %v4484
        %v4506 = vadd.f32 %v4397, %v4487
        %v4507 = vadd.f32 %v4400, %v4490
        %v4508 = vadd.f32 %v4403, %v4493
        %v4509 = vadd.f32 %v4406, %v4496
        %v4510 = vadd.f32 %v4409, %v4499
        %v4511 = vadd.f32 %v4412, %v4502
        %v4512 = vmax.f32 %v4504, 0.0
        %v4513 = vmax.f32 %v4505, 0.0
        %v4514 = vmax.f32 %v4506, 0.0
        %v4515 = vmax.f32 %v4507, 0.0
        %v4516 = vmax.f32 %v4508, 0.0
        %v4517 = vmax.f32 %v4509, 0.0
        %v4518 = vmax.f32 %v4510, 0.0
        %v4519 = vmax.f32 %v4511, 0.0
        %s4520 = scalar_lea.vmem %s305, 320 [#allocation2]
        %4521 = vst.msk [vmem:[%s4520] sm:$0xff] %vm599, %v4512
        %4522 = vst.msk [vmem:[%s4520 + $0x8] sm:$0xff] %vm599, %v4513
        %4523 = vst.msk [vmem:[%s4520 + $0x10] sm:$0xff] %vm599, %v4514
        %4524 = vst.msk [vmem:[%s4520 + $0x18] sm:$0xff] %vm599, %v4515
        %4525 = vst.msk [vmem:[%s4520 + $0x20] sm:$0xff] %vm599, %v4516
        %4526 = vst.msk [vmem:[%s4520 + $0x28] sm:$0xff] %vm599, %v4517
        %4527 = vst.msk [vmem:[%s4520 + $0x30] sm:$0xff] %vm599, %v4518
        %4528 = vst.msk [vmem:[%s4520 + $0x38] sm:$0xff] %vm599, %v4519
        %v4529 = vld [vmem:[%s3181] sm:$0xff]
        %v4530 = vld [vmem:[%s3181 + $0x8] sm:$0x3]
        %v4531 = vld [vmem:[%s3181 + $0x10] sm:$0xff]
        %v4532 = vld [vmem:[%s3181 + $0x18] sm:$0x3]
        %v4533 = vld [vmem:[%s3181 + $0x20] sm:$0xff]
        %v4534 = vld [vmem:[%s3181 + $0x28] sm:$0x3]
        %v4535 = vld [vmem:[%s3181 + $0x30] sm:$0xff]
        %v4536 = vld [vmem:[%s3181 + $0x38] sm:$0x3]
        %v4537 = vld [vmem:[%s3181 + $0x40] sm:$0xff]
        %v4538 = vld [vmem:[%s3181 + $0x48] sm:$0x3]
        %v4539 = vld [vmem:[%s3181 + $0x50] sm:$0xff]
        %v4540 = vld [vmem:[%s3181 + $0x58] sm:$0x3]
        %v4541 = vld [vmem:[%s3181 + $0x60] sm:$0xff]
        %v4542 = vld [vmem:[%s3181 + $0x68] sm:$0x3]
        %v4543 = vld [vmem:[%s3181 + $0x70] sm:$0xff]
        %v4544 = vld [vmem:[%s3181 + $0x78] sm:$0x3]
        %v4545 = vld [vmem:[%s3181 + $0x80] sm:$0xff]
        %v4546 = vld [vmem:[%s3181 + $0x88] sm:$0x3]
        %v4547 = vld [vmem:[%s3181 + $0x90] sm:$0xff]
        %v4548 = vld [vmem:[%s3181 + $0x98] sm:$0x3]
        %v4549 = vld [vmem:[%s3875] sm:$0xff]
        %v4550 = vld [vmem:[%s3875 + $0x8] sm:$0x3]
        %v4551 = vld [vmem:[%s3875 + $0x10] sm:$0xff]
        %v4552 = vld [vmem:[%s3875 + $0x18] sm:$0x3]
        %v4553 = vld [vmem:[%s3875 + $0x20] sm:$0xff]
        %v4554 = vld [vmem:[%s3875 + $0x28] sm:$0x3]
        %v4555 = vld [vmem:[%s3875 + $0x30] sm:$0xff]
        %v4556 = vld [vmem:[%s3875 + $0x38] sm:$0x3]
        %v4557 = vld [vmem:[%s3875 + $0x40] sm:$0xff]
        %v4558 = vld [vmem:[%s3875 + $0x48] sm:$0x3]
        %v4559 = vld [vmem:[%s3875 + $0x50] sm:$0xff]
        %v4560 = vld [vmem:[%s3875 + $0x58] sm:$0x3]
        %v4561 = vld [vmem:[%s3875 + $0x60] sm:$0xff]
        %v4562 = vld [vmem:[%s3875 + $0x68] sm:$0x3]
        %v4563 = vld [vmem:[%s3875 + $0x70] sm:$0xff]
        %v4564 = vld [vmem:[%s3875 + $0x78] sm:$0x3]
        %v4565 = vld [vmem:[%s3875 + $0x80] sm:$0xff]
        %v4566 = vld [vmem:[%s3875 + $0x88] sm:$0x3]
        %v4567 = vld [vmem:[%s3875 + $0x90] sm:$0xff]
        %v4568 = vld [vmem:[%s3875 + $0x98] sm:$0x3]
        %v4569 = vld [vmem:[%s339] sm:$0xff]
        %v4570 = vld [vmem:[%s339 + $0x8] sm:$0x3]
        %v4571 = vld [vmem:[%s339 + $0x10] sm:$0xff]
        %v4572 = vld [vmem:[%s339 + $0x18] sm:$0x3]
        %v4573 = vld [vmem:[%s339 + $0x20] sm:$0xff]
        %v4574 = vld [vmem:[%s339 + $0x28] sm:$0x3]
        %v4575 = vld [vmem:[%s339 + $0x30] sm:$0xff]
        %v4576 = vld [vmem:[%s339 + $0x38] sm:$0x3]
        %v4577 = vld [vmem:[%s339 + $0x40] sm:$0xff]
        %v4578 = vld [vmem:[%s339 + $0x48] sm:$0x3]
        %v4579 = vld [vmem:[%s339 + $0x50] sm:$0xff]
        %v4580 = vld [vmem:[%s339 + $0x58] sm:$0x3]
        %v4581 = vld [vmem:[%s339 + $0x60] sm:$0xff]
        %v4582 = vld [vmem:[%s339 + $0x68] sm:$0x3]
        %v4583 = vld [vmem:[%s339 + $0x70] sm:$0xff]
        %v4584 = vld [vmem:[%s339 + $0x78] sm:$0x3]
        %v4585 = vld [vmem:[%s339 + $0x80] sm:$0xff]
        %v4586 = vld [vmem:[%s339 + $0x88] sm:$0x3]
        %v4587 = vld [vmem:[%s339 + $0x90] sm:$0xff]
        %v4588 = vld [vmem:[%s339 + $0x98] sm:$0x3]
        %4609 = vrot.lane.b32.xlu0 %v4549, 8
        %v4610 = vpop.permute.xlu0 %4609
        %4611 = vrot.lane.b32.xlu0 %v4550, 8
        %v4612 = vpop.permute.xlu0 %4611
        %4613 = vrot.lane.b32.xlu0 %v4551, 8
        %v4614 = vpop.permute.xlu0 %4613
        %4615 = vrot.lane.b32.xlu0 %v4552, 8
        %v4616 = vpop.permute.xlu0 %4615
        %4617 = vrot.lane.b32.xlu0 %v4553, 8
        %v4618 = vpop.permute.xlu0 %4617
        %4619 = vrot.lane.b32.xlu0 %v4554, 8
        %v4620 = vpop.permute.xlu0 %4619
        %4621 = vrot.lane.b32.xlu0 %v4555, 8
        %v4622 = vpop.permute.xlu0 %4621
        %4623 = vrot.lane.b32.xlu0 %v4556, 8
        %v4624 = vpop.permute.xlu0 %4623
        %4625 = vrot.lane.b32.xlu0 %v4557, 8
        %v4626 = vpop.permute.xlu0 %4625
        %4627 = vrot.lane.b32.xlu0 %v4558, 8
        %v4628 = vpop.permute.xlu0 %4627
        %4629 = vrot.lane.b32.xlu0 %v4559, 8
        %v4630 = vpop.permute.xlu0 %4629
        %4631 = vrot.lane.b32.xlu0 %v4560, 8
        %v4632 = vpop.permute.xlu0 %4631
        %4633 = vrot.lane.b32.xlu0 %v4561, 8
        %v4634 = vpop.permute.xlu0 %4633
        %4635 = vrot.lane.b32.xlu0 %v4562, 8
        %v4636 = vpop.permute.xlu0 %4635
        %4637 = vrot.lane.b32.xlu0 %v4563, 8
        %v4638 = vpop.permute.xlu0 %4637
        %4639 = vrot.lane.b32.xlu0 %v4564, 8
        %v4640 = vpop.permute.xlu0 %4639
        %4641 = vrot.lane.b32.xlu0 %v4565, 8
        %v4642 = vpop.permute.xlu0 %4641
        %4643 = vrot.lane.b32.xlu0 %v4566, 8
        %v4644 = vpop.permute.xlu0 %4643
        %4645 = vrot.lane.b32.xlu0 %v4567, 8
        %v4646 = vpop.permute.xlu0 %4645
        %4647 = vrot.lane.b32.xlu0 %v4568, 8
        %v4648 = vpop.permute.xlu0 %4647
        %4689 = vrot.lane.b32.xlu0 %v4569, 16
        %v4690 = vpop.permute.xlu0 %4689
        %4691 = vrot.lane.b32.xlu0 %v4570, 16
        %v4692 = vpop.permute.xlu0 %4691
        %4693 = vrot.lane.b32.xlu0 %v4571, 16
        %v4694 = vpop.permute.xlu0 %4693
        %4695 = vrot.lane.b32.xlu0 %v4572, 16
        %v4696 = vpop.permute.xlu0 %4695
        %4697 = vrot.lane.b32.xlu0 %v4573, 16
        %v4698 = vpop.permute.xlu0 %4697
        %4699 = vrot.lane.b32.xlu0 %v4574, 16
        %v4700 = vpop.permute.xlu0 %4699
        %4701 = vrot.lane.b32.xlu0 %v4575, 16
        %v4702 = vpop.permute.xlu0 %4701
        %4703 = vrot.lane.b32.xlu0 %v4576, 16
        %v4704 = vpop.permute.xlu0 %4703
        %4705 = vrot.lane.b32.xlu0 %v4577, 16
        %v4706 = vpop.permute.xlu0 %4705
        %4707 = vrot.lane.b32.xlu0 %v4578, 16
        %v4708 = vpop.permute.xlu0 %4707
        %4709 = vrot.lane.b32.xlu0 %v4579, 16
        %v4710 = vpop.permute.xlu0 %4709
        %4711 = vrot.lane.b32.xlu0 %v4580, 16
        %v4712 = vpop.permute.xlu0 %4711
        %4713 = vrot.lane.b32.xlu0 %v4581, 16
        %v4714 = vpop.permute.xlu0 %4713
        %4715 = vrot.lane.b32.xlu0 %v4582, 16
        %v4716 = vpop.permute.xlu0 %4715
        %4717 = vrot.lane.b32.xlu0 %v4583, 16
        %v4718 = vpop.permute.xlu0 %4717
        %4719 = vrot.lane.b32.xlu0 %v4584, 16
        %v4720 = vpop.permute.xlu0 %4719
        %4721 = vrot.lane.b32.xlu0 %v4585, 16
        %v4722 = vpop.permute.xlu0 %4721
        %4723 = vrot.lane.b32.xlu0 %v4586, 16
        %v4724 = vpop.permute.xlu0 %4723
        %4725 = vrot.lane.b32.xlu0 %v4587, 16
        %v4726 = vpop.permute.xlu0 %4725
        %4727 = vrot.lane.b32.xlu0 %v4588, 16
        %v4728 = vpop.permute.xlu0 %4727
        %v4749 = vsel %vm578, %v4529, %v4610
        %v4750 = vsel %vm578, %v4530, %v4612
        %v4751 = vsel %vm578, %v4531, %v4614
        %v4752 = vsel %vm578, %v4532, %v4616
        %v4753 = vsel %vm578, %v4533, %v4618
        %v4754 = vsel %vm578, %v4534, %v4620
        %v4755 = vsel %vm578, %v4535, %v4622
        %v4756 = vsel %vm578, %v4536, %v4624
        %v4757 = vsel %vm578, %v4537, %v4626
        %v4758 = vsel %vm578, %v4538, %v4628
        %v4759 = vsel %vm578, %v4539, %v4630
        %v4760 = vsel %vm578, %v4540, %v4632
        %v4761 = vsel %vm578, %v4541, %v4634
        %v4762 = vsel %vm578, %v4542, %v4636
        %v4763 = vsel %vm578, %v4543, %v4638
        %v4764 = vsel %vm578, %v4544, %v4640
        %v4765 = vsel %vm578, %v4545, %v4642
        %v4766 = vsel %vm578, %v4546, %v4644
        %v4767 = vsel %vm578, %v4547, %v4646
        %v4768 = vsel %vm578, %v4548, %v4648
        %v4769 = vsel %vm599, %v4749, %v4690
        %v4770 = vsel %vm599, %v4750, %v4692
        %v4771 = vsel %vm599, %v4751, %v4694
        %v4772 = vsel %vm599, %v4752, %v4696
        %v4773 = vsel %vm599, %v4753, %v4698
        %v4774 = vsel %vm599, %v4754, %v4700
        %v4775 = vsel %vm599, %v4755, %v4702
        %v4776 = vsel %vm599, %v4756, %v4704
        %v4777 = vsel %vm599, %v4757, %v4706
        %v4778 = vsel %vm599, %v4758, %v4708
        %v4779 = vsel %vm599, %v4759, %v4710
        %v4780 = vsel %vm599, %v4760, %v4712
        %v4781 = vsel %vm599, %v4761, %v4714
        %v4782 = vsel %vm599, %v4762, %v4716
        %v4783 = vsel %vm599, %v4763, %v4718
        %v4784 = vsel %vm599, %v4764, %v4720
        %v4785 = vsel %vm599, %v4765, %v4722
        %v4786 = vsel %vm599, %v4766, %v4724
        %v4787 = vsel %vm599, %v4767, %v4726
        %v4788 = vsel %vm599, %v4768, %v4728
        %4805 = vrot.lane.b32.xlu0 %v4771, 24
        %v4806 = vpop.permute.xlu0 %4805
        %4807 = vrot.lane.b32.xlu0 %v4772, 24
        %v4808 = vpop.permute.xlu0 %4807
        %4809 = vrot.lane.b32.xlu0 %v4773, 24
        %v4810 = vpop.permute.xlu0 %4809
        %4811 = vrot.lane.b32.xlu0 %v4774, 24
        %v4812 = vpop.permute.xlu0 %4811
        %4813 = vrot.lane.b32.xlu0 %v4775, 24
        %v4814 = vpop.permute.xlu0 %4813
        %4815 = vrot.lane.b32.xlu0 %v4776, 24
        %v4816 = vpop.permute.xlu0 %4815
        %4817 = vrot.lane.b32.xlu0 %v4777, 24
        %v4818 = vpop.permute.xlu0 %4817
        %4819 = vrot.lane.b32.xlu0 %v4778, 24
        %v4820 = vpop.permute.xlu0 %4819
        %4821 = vrot.lane.b32.xlu0 %v4779, 24
        %v4822 = vpop.permute.xlu0 %4821
        %4823 = vrot.lane.b32.xlu0 %v4780, 24
        %v4824 = vpop.permute.xlu0 %4823
        %4825 = vrot.lane.b32.xlu0 %v4781, 24
        %v4826 = vpop.permute.xlu0 %4825
        %4827 = vrot.lane.b32.xlu0 %v4782, 24
        %v4828 = vpop.permute.xlu0 %4827
        %4829 = vrot.lane.b32.xlu0 %v4783, 24
        %v4830 = vpop.permute.xlu0 %4829
        %4831 = vrot.lane.b32.xlu0 %v4784, 24
        %v4832 = vpop.permute.xlu0 %4831
        %4833 = vrot.lane.b32.xlu0 %v4785, 24
        %v4834 = vpop.permute.xlu0 %4833
        %4835 = vrot.lane.b32.xlu0 %v4786, 24
        %v4836 = vpop.permute.xlu0 %4835
        %4855 = vrot.lane.b32.xlu0 %v4773, 48
        %v4856 = vpop.permute.xlu0 %4855
        %4857 = vrot.lane.b32.xlu0 %v4774, 48
        %v4858 = vpop.permute.xlu0 %4857
        %4859 = vrot.lane.b32.xlu0 %v4775, 48
        %v4860 = vpop.permute.xlu0 %4859
        %4861 = vrot.lane.b32.xlu0 %v4776, 48
        %v4862 = vpop.permute.xlu0 %4861
        %4863 = vrot.lane.b32.xlu0 %v4777, 48
        %v4864 = vpop.permute.xlu0 %4863
        %4865 = vrot.lane.b32.xlu0 %v4778, 48
        %v4866 = vpop.permute.xlu0 %4865
        %4867 = vrot.lane.b32.xlu0 %v4779, 48
        %v4868 = vpop.permute.xlu0 %4867
        %4869 = vrot.lane.b32.xlu0 %v4780, 48
        %v4870 = vpop.permute.xlu0 %4869
        %4871 = vrot.lane.b32.xlu0 %v4781, 48
        %v4872 = vpop.permute.xlu0 %4871
        %4873 = vrot.lane.b32.xlu0 %v4782, 48
        %v4874 = vpop.permute.xlu0 %4873
        %4875 = vrot.lane.b32.xlu0 %v4783, 48
        %v4876 = vpop.permute.xlu0 %4875
        %4877 = vrot.lane.b32.xlu0 %v4784, 48
        %v4878 = vpop.permute.xlu0 %4877
        %4879 = vrot.lane.b32.xlu0 %v4785, 48
        %v4880 = vpop.permute.xlu0 %4879
        %4881 = vrot.lane.b32.xlu0 %v4786, 48
        %v4882 = vpop.permute.xlu0 %4881
        %4883 = vrot.lane.b32.xlu0 %v4787, 48
        %v4884 = vpop.permute.xlu0 %4883
        %4885 = vrot.lane.b32.xlu0 %v4788, 48
        %v4886 = vpop.permute.xlu0 %4885
        %v4903 = vsel %vm734, %v4769, %v4806
        %v4904 = vsel %vm734, %v4770, %v4808
        %v4905 = vsel %vm734, %v4771, %v4810
        %v4906 = vsel %vm734, %v4772, %v4812
        %v4907 = vsel %vm734, %v4773, %v4814
        %v4908 = vsel %vm734, %v4774, %v4816
        %v4909 = vsel %vm734, %v4775, %v4818
        %v4910 = vsel %vm734, %v4776, %v4820
        %v4911 = vsel %vm734, %v4777, %v4822
        %v4912 = vsel %vm734, %v4778, %v4824
        %v4913 = vsel %vm734, %v4779, %v4826
        %v4914 = vsel %vm734, %v4780, %v4828
        %v4915 = vsel %vm734, %v4781, %v4830
        %v4916 = vsel %vm734, %v4782, %v4832
        %v4917 = vsel %vm734, %v4783, %v4834
        %v4918 = vsel %vm734, %v4784, %v4836
        %v4919 = vsel %vm751, %v4903, %v4856
        %v4920 = vsel %vm751, %v4904, %v4858
        %v4921 = vsel %vm751, %v4905, %v4860
        %v4922 = vsel %vm751, %v4906, %v4862
        %v4923 = vsel %vm751, %v4907, %v4864
        %v4924 = vsel %vm751, %v4908, %v4866
        %v4925 = vsel %vm751, %v4909, %v4868
        %v4926 = vsel %vm751, %v4910, %v4870
        %v4927 = vsel %vm751, %v4911, %v4872
        %v4928 = vsel %vm751, %v4912, %v4874
        %v4929 = vsel %vm751, %v4913, %v4876
        %v4930 = vsel %vm751, %v4914, %v4878
        %v4931 = vsel %vm751, %v4915, %v4880
        %v4932 = vsel %vm751, %v4916, %v4882
        %v4933 = vsel %vm751, %v4917, %v4884
        %v4934 = vsel %vm751, %v4918, %v4886
        %v4935 = vld [vmem:[%s3] sm:$0xff]
        %v4936 = vld [vmem:[%s3 + $0x8] sm:$0xff]
        %v4937 = vld [vmem:[%s3 + $0x10] sm:$0xff]
        %v4938 = vld [vmem:[%s3 + $0x18] sm:$0xff]
        %v4939 = vld [vmem:[%s3 + $0x20] sm:$0xff]
        %v4940 = vld [vmem:[%s3 + $0x28] sm:$0xff]
        %v4941 = vld [vmem:[%s3 + $0x30] sm:$0xff]
        %v4942 = vld [vmem:[%s3 + $0x38] sm:$0xff]
        %v4943 = vld [vmem:[%s3 + $0x40] sm:$0xff]
        %v4960 = vrot.slane %v4919, 1
        %v4961 = vrot.slane %v4920, 1
        %v4962 = vsel %vm793, %v4960, %v4961
        %v4963 = vrot.slane %v4921, 1
        %v4964 = vrot.slane %v4922, 1
        %v4965 = vsel %vm793, %v4963, %v4964
        %v4966 = vrot.slane %v4923, 1
        %v4967 = vrot.slane %v4924, 1
        %v4968 = vsel %vm793, %v4966, %v4967
        %v4969 = vrot.slane %v4925, 1
        %v4970 = vrot.slane %v4926, 1
        %v4971 = vsel %vm793, %v4969, %v4970
        %v4972 = vrot.slane %v4927, 1
        %v4973 = vrot.slane %v4928, 1
        %v4974 = vsel %vm793, %v4972, %v4973
        %v4975 = vrot.slane %v4929, 1
        %v4976 = vrot.slane %v4930, 1
        %v4977 = vsel %vm793, %v4975, %v4976
        %v4978 = vrot.slane %v4931, 1
        %v4979 = vrot.slane %v4932, 1
        %v4980 = vsel %vm793, %v4978, %v4979
        %v4981 = vrot.slane %v4933, 1
        %v4982 = vrot.slane %v4934, 1
        %v4983 = vsel %vm793, %v4981, %v4982
        %v4984 = vld [vmem:[%s818] sm:$0xff]
        %v4985 = vld [vmem:[%s818 + $0x8] sm:$0xff]
        %v4986 = vld [vmem:[%s818 + $0x10] sm:$0xff]
        %v4987 = vld [vmem:[%s818 + $0x18] sm:$0xff]
        %v4988 = vld [vmem:[%s818 + $0x20] sm:$0xff]
        %v4989 = vld [vmem:[%s818 + $0x28] sm:$0xff]
        %v4990 = vld [vmem:[%s818 + $0x30] sm:$0xff]
        %v4991 = vld [vmem:[%s818 + $0x38] sm:$0xff]
        %v4992 = vld [vmem:[%s818 + $0x40] sm:$0xff]
        %v4993 = vsel %vm828, %v4962, 0
        %v4995 = vsel %vm828, %v4965, 0
        %v4997 = vsel %vm828, %v4968, 0
        %v4999 = vsel %vm828, %v4971, 0
        %v5001 = vsel %vm828, %v4974, 0
        %v5003 = vsel %vm828, %v4977, 0
        %v5005 = vsel %vm828, %v4980, 0
        %v5007 = vsel %vm828, %v4983, 0
        %5009 = vmatpush.msra.mxu0 0.0
        %5010 = vmatpush.msra.mxu0 0.0
        %5011 = vmatpush.msra.mxu0 0.0
        %5012 = vmatpush.msra.mxu0 0.0
        %5013 = vmatpush.msra.mxu0 0.0
        %5014 = vmatpush.msra.mxu0 0.0
        %5015 = vmatpush.msra.mxu0 0.0
        %5016 = vmatpush.msra.mxu0 %v4992
        %5017 = vmatpush.msra.mxu0 %v4991
        %5018 = vmatpush.msra.mxu0 %v4990
        %5019 = vmatpush.msra.mxu0 %v4989
        %5020 = vmatpush.msra.mxu0 %v4988
        %5021 = vmatpush.msra.mxu0 %v4987
        %5022 = vmatpush.msra.mxu0 %v4986
        %5023 = vmatpush.msra.mxu0 %v4985
        %5024 = vmatpush.msra.mxu0 %v4984
        %5025 = vmatmul.f32.gmra.mxu0 %v4993
        %v5026 = vpop.f32.mrf.mxu0
        %v5027 = vadd.f32 0.0, %v5026
        %5028 = vmatmul.f32.gmra.mxu0 %v4995
        %v5029 = vpop.f32.mrf.mxu0
        %v5030 = vadd.f32 0.0, %v5029
        %5031 = vmatmul.f32.gmra.mxu0 %v4997
        %v5032 = vpop.f32.mrf.mxu0
        %v5033 = vadd.f32 0.0, %v5032
        %5034 = vmatmul.f32.gmra.mxu0 %v4999
        %v5035 = vpop.f32.mrf.mxu0
        %v5036 = vadd.f32 0.0, %v5035
        %5037 = vmatmul.f32.gmra.mxu0 %v5001
        %v5038 = vpop.f32.mrf.mxu0
        %v5039 = vadd.f32 0.0, %v5038
        %5040 = vmatmul.f32.gmra.mxu0 %v5003
        %v5041 = vpop.f32.mrf.mxu0
        %v5042 = vadd.f32 0.0, %v5041
        %5043 = vmatmul.f32.gmra.mxu0 %v5005
        %v5044 = vpop.f32.mrf.mxu0
        %v5045 = vadd.f32 0.0, %v5044
        %5046 = vmatmul.f32.gmra.mxu0 %v5007
        %v5047 = vpop.f32.mrf.mxu0
        %v5048 = vadd.f32 0.0, %v5047
        %5049 = vdwg.mxu0
        %v5050 = vsel %vm828, %v4919, 0
        %v5052 = vsel %vm828, %v4921, 0
        %v5054 = vsel %vm828, %v4923, 0
        %v5056 = vsel %vm828, %v4925, 0
        %v5058 = vsel %vm828, %v4927, 0
        %v5060 = vsel %vm828, %v4929, 0
        %v5062 = vsel %vm828, %v4931, 0
        %v5064 = vsel %vm828, %v4933, 0
        %5066 = vmatpush.msra.mxu0 0.0
        %5067 = vmatpush.msra.mxu0 0.0
        %5068 = vmatpush.msra.mxu0 0.0
        %5069 = vmatpush.msra.mxu0 0.0
        %5070 = vmatpush.msra.mxu0 0.0
        %5071 = vmatpush.msra.mxu0 0.0
        %5072 = vmatpush.msra.mxu0 0.0
        %5073 = vmatpush.msra.mxu0 %v4943
        %5074 = vmatpush.msra.mxu0 %v4942
        %5075 = vmatpush.msra.mxu0 %v4941
        %5076 = vmatpush.msra.mxu0 %v4940
        %5077 = vmatpush.msra.mxu0 %v4939
        %5078 = vmatpush.msra.mxu0 %v4938
        %5079 = vmatpush.msra.mxu0 %v4937
        %5080 = vmatpush.msra.mxu0 %v4936
        %5081 = vmatpush.msra.mxu0 %v4935
        %5082 = vmatmul.f32.gmra.mxu0 %v5050
        %v5083 = vpop.f32.mrf.mxu0
        %v5084 = vadd.f32 %v5027, %v5083
        %5085 = vmatmul.f32.gmra.mxu0 %v5052
        %v5086 = vpop.f32.mrf.mxu0
        %v5087 = vadd.f32 %v5030, %v5086
        %5088 = vmatmul.f32.gmra.mxu0 %v5054
        %v5089 = vpop.f32.mrf.mxu0
        %v5090 = vadd.f32 %v5033, %v5089
        %5091 = vmatmul.f32.gmra.mxu0 %v5056
        %v5092 = vpop.f32.mrf.mxu0
        %v5093 = vadd.f32 %v5036, %v5092
        %5094 = vmatmul.f32.gmra.mxu0 %v5058
        %v5095 = vpop.f32.mrf.mxu0
        %v5096 = vadd.f32 %v5039, %v5095
        %5097 = vmatmul.f32.gmra.mxu0 %v5060
        %v5098 = vpop.f32.mrf.mxu0
        %v5099 = vadd.f32 %v5042, %v5098
        %5100 = vmatmul.f32.gmra.mxu0 %v5062
        %v5101 = vpop.f32.mrf.mxu0
        %v5102 = vadd.f32 %v5045, %v5101
        %5103 = vmatmul.f32.gmra.mxu0 %v5064
        %v5104 = vpop.f32.mrf.mxu0
        %v5105 = vadd.f32 %v5048, %v5104
        %5106 = vdwg.mxu0
        %v5107 = vrot.slane %v4919, 2
        %v5108 = vrot.slane %v4920, 2
        %v5109 = vsel %vm943, %v5107, %v5108
        %v5110 = vrot.slane %v4921, 2
        %v5111 = vrot.slane %v4922, 2
        %v5112 = vsel %vm943, %v5110, %v5111
        %v5113 = vrot.slane %v4923, 2
        %v5114 = vrot.slane %v4924, 2
        %v5115 = vsel %vm943, %v5113, %v5114
        %v5116 = vrot.slane %v4925, 2
        %v5117 = vrot.slane %v4926, 2
        %v5118 = vsel %vm943, %v5116, %v5117
        %v5119 = vrot.slane %v4927, 2
        %v5120 = vrot.slane %v4928, 2
        %v5121 = vsel %vm943, %v5119, %v5120
        %v5122 = vrot.slane %v4929, 2
        %v5123 = vrot.slane %v4930, 2
        %v5124 = vsel %vm943, %v5122, %v5123
        %v5125 = vrot.slane %v4931, 2
        %v5126 = vrot.slane %v4932, 2
        %v5127 = vsel %vm943, %v5125, %v5126
        %v5128 = vrot.slane %v4933, 2
        %v5129 = vrot.slane %v4934, 2
        %v5130 = vsel %vm943, %v5128, %v5129
        %v5131 = vld [vmem:[%s968] sm:$0xff]
        %v5132 = vld [vmem:[%s968 + $0x8] sm:$0xff]
        %v5133 = vld [vmem:[%s968 + $0x10] sm:$0xff]
        %v5134 = vld [vmem:[%s968 + $0x18] sm:$0xff]
        %v5135 = vld [vmem:[%s968 + $0x20] sm:$0xff]
        %v5136 = vld [vmem:[%s968 + $0x28] sm:$0xff]
        %v5137 = vld [vmem:[%s968 + $0x30] sm:$0xff]
        %v5138 = vld [vmem:[%s968 + $0x38] sm:$0xff]
        %v5139 = vld [vmem:[%s968 + $0x40] sm:$0xff]
        %v5140 = vsel %vm828, %v5109, 0
        %v5142 = vsel %vm828, %v5112, 0
        %v5144 = vsel %vm828, %v5115, 0
        %v5146 = vsel %vm828, %v5118, 0
        %v5148 = vsel %vm828, %v5121, 0
        %v5150 = vsel %vm828, %v5124, 0
        %v5152 = vsel %vm828, %v5127, 0
        %v5154 = vsel %vm828, %v5130, 0
        %5156 = vmatpush.msra.mxu0 0.0
        %5157 = vmatpush.msra.mxu0 0.0
        %5158 = vmatpush.msra.mxu0 0.0
        %5159 = vmatpush.msra.mxu0 0.0
        %5160 = vmatpush.msra.mxu0 0.0
        %5161 = vmatpush.msra.mxu0 0.0
        %5162 = vmatpush.msra.mxu0 0.0
        %5163 = vmatpush.msra.mxu0 %v5139
        %5164 = vmatpush.msra.mxu0 %v5138
        %5165 = vmatpush.msra.mxu0 %v5137
        %5166 = vmatpush.msra.mxu0 %v5136
        %5167 = vmatpush.msra.mxu0 %v5135
        %5168 = vmatpush.msra.mxu0 %v5134
        %5169 = vmatpush.msra.mxu0 %v5133
        %5170 = vmatpush.msra.mxu0 %v5132
        %5171 = vmatpush.msra.mxu0 %v5131
        %5172 = vmatmul.f32.gmra.mxu0 %v5140
        %v5173 = vpop.f32.mrf.mxu0
        %v5174 = vadd.f32 0.0, %v5173
        %5175 = vmatmul.f32.gmra.mxu0 %v5142
        %v5176 = vpop.f32.mrf.mxu0
        %v5177 = vadd.f32 0.0, %v5176
        %5178 = vmatmul.f32.gmra.mxu0 %v5144
        %v5179 = vpop.f32.mrf.mxu0
        %v5180 = vadd.f32 0.0, %v5179
        %5181 = vmatmul.f32.gmra.mxu0 %v5146
        %v5182 = vpop.f32.mrf.mxu0
        %v5183 = vadd.f32 0.0, %v5182
        %5184 = vmatmul.f32.gmra.mxu0 %v5148
        %v5185 = vpop.f32.mrf.mxu0
        %v5186 = vadd.f32 0.0, %v5185
        %5187 = vmatmul.f32.gmra.mxu0 %v5150
        %v5188 = vpop.f32.mrf.mxu0
        %v5189 = vadd.f32 0.0, %v5188
        %5190 = vmatmul.f32.gmra.mxu0 %v5152
        %v5191 = vpop.f32.mrf.mxu0
        %v5192 = vadd.f32 0.0, %v5191
        %5193 = vmatmul.f32.gmra.mxu0 %v5154
        %v5194 = vpop.f32.mrf.mxu0
        %v5195 = vadd.f32 0.0, %v5194
        %5196 = vdwg.mxu0
        %v5197 = vadd.f32 %v5084, %v5174
        %v5198 = vadd.f32 %v5087, %v5177
        %v5199 = vadd.f32 %v5090, %v5180
        %v5200 = vadd.f32 %v5093, %v5183
        %v5201 = vadd.f32 %v5096, %v5186
        %v5202 = vadd.f32 %v5099, %v5189
        %v5203 = vadd.f32 %v5102, %v5192
        %v5204 = vadd.f32 %v5105, %v5195
        %v5205 = vmax.f32 %v5197, 0.0
        %v5206 = vmax.f32 %v5198, 0.0
        %v5207 = vmax.f32 %v5199, 0.0
        %v5208 = vmax.f32 %v5200, 0.0
        %v5209 = vmax.f32 %v5201, 0.0
        %v5210 = vmax.f32 %v5202, 0.0
        %v5211 = vmax.f32 %v5203, 0.0
        %v5212 = vmax.f32 %v5204, 0.0
        %s5213 = scalar_lea.vmem %s305, 384 [#allocation2]
        %5214 = vst.msk [vmem:[%s5213] sm:$0xff] %vm599, %v5205
        %5215 = vst.msk [vmem:[%s5213 + $0x8] sm:$0xff] %vm599, %v5206
        %5216 = vst.msk [vmem:[%s5213 + $0x10] sm:$0xff] %vm599, %v5207
        %5217 = vst.msk [vmem:[%s5213 + $0x18] sm:$0xff] %vm599, %v5208
        %5218 = vst.msk [vmem:[%s5213 + $0x20] sm:$0xff] %vm599, %v5209
        %5219 = vst.msk [vmem:[%s5213 + $0x28] sm:$0xff] %vm599, %v5210
        %5220 = vst.msk [vmem:[%s5213 + $0x30] sm:$0xff] %vm599, %v5211
        %5221 = vst.msk [vmem:[%s5213 + $0x38] sm:$0xff] %vm599, %v5212
        %v5222 = vld [vmem:[%s3875] sm:$0xff]
        %v5223 = vld [vmem:[%s3875 + $0x8] sm:$0x3]
        %v5224 = vld [vmem:[%s3875 + $0x10] sm:$0xff]
        %v5225 = vld [vmem:[%s3875 + $0x18] sm:$0x3]
        %v5226 = vld [vmem:[%s3875 + $0x20] sm:$0xff]
        %v5227 = vld [vmem:[%s3875 + $0x28] sm:$0x3]
        %v5228 = vld [vmem:[%s3875 + $0x30] sm:$0xff]
        %v5229 = vld [vmem:[%s3875 + $0x38] sm:$0x3]
        %v5230 = vld [vmem:[%s3875 + $0x40] sm:$0xff]
        %v5231 = vld [vmem:[%s3875 + $0x48] sm:$0x3]
        %v5232 = vld [vmem:[%s3875 + $0x50] sm:$0xff]
        %v5233 = vld [vmem:[%s3875 + $0x58] sm:$0x3]
        %v5234 = vld [vmem:[%s3875 + $0x60] sm:$0xff]
        %v5235 = vld [vmem:[%s3875 + $0x68] sm:$0x3]
        %v5236 = vld [vmem:[%s3875 + $0x70] sm:$0xff]
        %v5237 = vld [vmem:[%s3875 + $0x78] sm:$0x3]
        %v5238 = vld [vmem:[%s3875 + $0x80] sm:$0xff]
        %v5239 = vld [vmem:[%s3875 + $0x88] sm:$0x3]
        %v5240 = vld [vmem:[%s3875 + $0x90] sm:$0xff]
        %v5241 = vld [vmem:[%s3875 + $0x98] sm:$0x3]
        %v5242 = vld [vmem:[%s339] sm:$0xff]
        %v5243 = vld [vmem:[%s339 + $0x8] sm:$0x3]
        %v5244 = vld [vmem:[%s339 + $0x10] sm:$0xff]
        %v5245 = vld [vmem:[%s339 + $0x18] sm:$0x3]
        %v5246 = vld [vmem:[%s339 + $0x20] sm:$0xff]
        %v5247 = vld [vmem:[%s339 + $0x28] sm:$0x3]
        %v5248 = vld [vmem:[%s339 + $0x30] sm:$0xff]
        %v5249 = vld [vmem:[%s339 + $0x38] sm:$0x3]
        %v5250 = vld [vmem:[%s339 + $0x40] sm:$0xff]
        %v5251 = vld [vmem:[%s339 + $0x48] sm:$0x3]
        %v5252 = vld [vmem:[%s339 + $0x50] sm:$0xff]
        %v5253 = vld [vmem:[%s339 + $0x58] sm:$0x3]
        %v5254 = vld [vmem:[%s339 + $0x60] sm:$0xff]
        %v5255 = vld [vmem:[%s339 + $0x68] sm:$0x3]
        %v5256 = vld [vmem:[%s339 + $0x70] sm:$0xff]
        %v5257 = vld [vmem:[%s339 + $0x78] sm:$0x3]
        %v5258 = vld [vmem:[%s339 + $0x80] sm:$0xff]
        %v5259 = vld [vmem:[%s339 + $0x88] sm:$0x3]
        %v5260 = vld [vmem:[%s339 + $0x90] sm:$0xff]
        %v5261 = vld [vmem:[%s339 + $0x98] sm:$0x3]
        %v5262 = vld [vmem:[%s352] sm:$0xff]
        %v5263 = vld [vmem:[%s352 + $0x8] sm:$0x3]
        %v5264 = vld [vmem:[%s352 + $0x10] sm:$0xff]
        %v5265 = vld [vmem:[%s352 + $0x18] sm:$0x3]
        %v5266 = vld [vmem:[%s352 + $0x20] sm:$0xff]
        %v5267 = vld [vmem:[%s352 + $0x28] sm:$0x3]
        %v5268 = vld [vmem:[%s352 + $0x30] sm:$0xff]
        %v5269 = vld [vmem:[%s352 + $0x38] sm:$0x3]
        %v5270 = vld [vmem:[%s352 + $0x40] sm:$0xff]
        %v5271 = vld [vmem:[%s352 + $0x48] sm:$0x3]
        %v5272 = vld [vmem:[%s352 + $0x50] sm:$0xff]
        %v5273 = vld [vmem:[%s352 + $0x58] sm:$0x3]
        %v5274 = vld [vmem:[%s352 + $0x60] sm:$0xff]
        %v5275 = vld [vmem:[%s352 + $0x68] sm:$0x3]
        %v5276 = vld [vmem:[%s352 + $0x70] sm:$0xff]
        %v5277 = vld [vmem:[%s352 + $0x78] sm:$0x3]
        %v5278 = vld [vmem:[%s352 + $0x80] sm:$0xff]
        %v5279 = vld [vmem:[%s352 + $0x88] sm:$0x3]
        %v5280 = vld [vmem:[%s352 + $0x90] sm:$0xff]
        %v5281 = vld [vmem:[%s352 + $0x98] sm:$0x3]
        %5302 = vrot.lane.b32.xlu0 %v5242, 8
        %v5303 = vpop.permute.xlu0 %5302
        %5304 = vrot.lane.b32.xlu0 %v5243, 8
        %v5305 = vpop.permute.xlu0 %5304
        %5306 = vrot.lane.b32.xlu0 %v5244, 8
        %v5307 = vpop.permute.xlu0 %5306
        %5308 = vrot.lane.b32.xlu0 %v5245, 8
        %v5309 = vpop.permute.xlu0 %5308
        %5310 = vrot.lane.b32.xlu0 %v5246, 8
        %v5311 = vpop.permute.xlu0 %5310
        %5312 = vrot.lane.b32.xlu0 %v5247, 8
        %v5313 = vpop.permute.xlu0 %5312
        %5314 = vrot.lane.b32.xlu0 %v5248, 8
        %v5315 = vpop.permute.xlu0 %5314
        %5316 = vrot.lane.b32.xlu0 %v5249, 8
        %v5317 = vpop.permute.xlu0 %5316
        %5318 = vrot.lane.b32.xlu0 %v5250, 8
        %v5319 = vpop.permute.xlu0 %5318
        %5320 = vrot.lane.b32.xlu0 %v5251, 8
        %v5321 = vpop.permute.xlu0 %5320
        %5322 = vrot.lane.b32.xlu0 %v5252, 8
        %v5323 = vpop.permute.xlu0 %5322
        %5324 = vrot.lane.b32.xlu0 %v5253, 8
        %v5325 = vpop.permute.xlu0 %5324
        %5326 = vrot.lane.b32.xlu0 %v5254, 8
        %v5327 = vpop.permute.xlu0 %5326
        %5328 = vrot.lane.b32.xlu0 %v5255, 8
        %v5329 = vpop.permute.xlu0 %5328
        %5330 = vrot.lane.b32.xlu0 %v5256, 8
        %v5331 = vpop.permute.xlu0 %5330
        %5332 = vrot.lane.b32.xlu0 %v5257, 8
        %v5333 = vpop.permute.xlu0 %5332
        %5334 = vrot.lane.b32.xlu0 %v5258, 8
        %v5335 = vpop.permute.xlu0 %5334
        %5336 = vrot.lane.b32.xlu0 %v5259, 8
        %v5337 = vpop.permute.xlu0 %5336
        %5338 = vrot.lane.b32.xlu0 %v5260, 8
        %v5339 = vpop.permute.xlu0 %5338
        %5340 = vrot.lane.b32.xlu0 %v5261, 8
        %v5341 = vpop.permute.xlu0 %5340
        %5382 = vrot.lane.b32.xlu0 %v5262, 16
        %v5383 = vpop.permute.xlu0 %5382
        %5384 = vrot.lane.b32.xlu0 %v5263, 16
        %v5385 = vpop.permute.xlu0 %5384
        %5386 = vrot.lane.b32.xlu0 %v5264, 16
        %v5387 = vpop.permute.xlu0 %5386
        %5388 = vrot.lane.b32.xlu0 %v5265, 16
        %v5389 = vpop.permute.xlu0 %5388
        %5390 = vrot.lane.b32.xlu0 %v5266, 16
        %v5391 = vpop.permute.xlu0 %5390
        %5392 = vrot.lane.b32.xlu0 %v5267, 16
        %v5393 = vpop.permute.xlu0 %5392
        %5394 = vrot.lane.b32.xlu0 %v5268, 16
        %v5395 = vpop.permute.xlu0 %5394
        %5396 = vrot.lane.b32.xlu0 %v5269, 16
        %v5397 = vpop.permute.xlu0 %5396
        %5398 = vrot.lane.b32.xlu0 %v5270, 16
        %v5399 = vpop.permute.xlu0 %5398
        %5400 = vrot.lane.b32.xlu0 %v5271, 16
        %v5401 = vpop.permute.xlu0 %5400
        %5402 = vrot.lane.b32.xlu0 %v5272, 16
        %v5403 = vpop.permute.xlu0 %5402
        %5404 = vrot.lane.b32.xlu0 %v5273, 16
        %v5405 = vpop.permute.xlu0 %5404
        %5406 = vrot.lane.b32.xlu0 %v5274, 16
        %v5407 = vpop.permute.xlu0 %5406
        %5408 = vrot.lane.b32.xlu0 %v5275, 16
        %v5409 = vpop.permute.xlu0 %5408
        %5410 = vrot.lane.b32.xlu0 %v5276, 16
        %v5411 = vpop.permute.xlu0 %5410
        %5412 = vrot.lane.b32.xlu0 %v5277, 16
        %v5413 = vpop.permute.xlu0 %5412
        %5414 = vrot.lane.b32.xlu0 %v5278, 16
        %v5415 = vpop.permute.xlu0 %5414
        %5416 = vrot.lane.b32.xlu0 %v5279, 16
        %v5417 = vpop.permute.xlu0 %5416
        %5418 = vrot.lane.b32.xlu0 %v5280, 16
        %v5419 = vpop.permute.xlu0 %5418
        %5420 = vrot.lane.b32.xlu0 %v5281, 16
        %v5421 = vpop.permute.xlu0 %5420
        %v5442 = vsel %vm578, %v5222, %v5303
        %v5443 = vsel %vm578, %v5223, %v5305
        %v5444 = vsel %vm578, %v5224, %v5307
        %v5445 = vsel %vm578, %v5225, %v5309
        %v5446 = vsel %vm578, %v5226, %v5311
        %v5447 = vsel %vm578, %v5227, %v5313
        %v5448 = vsel %vm578, %v5228, %v5315
        %v5449 = vsel %vm578, %v5229, %v5317
        %v5450 = vsel %vm578, %v5230, %v5319
        %v5451 = vsel %vm578, %v5231, %v5321
        %v5452 = vsel %vm578, %v5232, %v5323
        %v5453 = vsel %vm578, %v5233, %v5325
        %v5454 = vsel %vm578, %v5234, %v5327
        %v5455 = vsel %vm578, %v5235, %v5329
        %v5456 = vsel %vm578, %v5236, %v5331
        %v5457 = vsel %vm578, %v5237, %v5333
        %v5458 = vsel %vm578, %v5238, %v5335
        %v5459 = vsel %vm578, %v5239, %v5337
        %v5460 = vsel %vm578, %v5240, %v5339
        %v5461 = vsel %vm578, %v5241, %v5341
        %v5462 = vsel %vm599, %v5442, %v5383
        %v5463 = vsel %vm599, %v5443, %v5385
        %v5464 = vsel %vm599, %v5444, %v5387
        %v5465 = vsel %vm599, %v5445, %v5389
        %v5466 = vsel %vm599, %v5446, %v5391
        %v5467 = vsel %vm599, %v5447, %v5393
        %v5468 = vsel %vm599, %v5448, %v5395
        %v5469 = vsel %vm599, %v5449, %v5397
        %v5470 = vsel %vm599, %v5450, %v5399
        %v5471 = vsel %vm599, %v5451, %v5401
        %v5472 = vsel %vm599, %v5452, %v5403
        %v5473 = vsel %vm599, %v5453, %v5405
        %v5474 = vsel %vm599, %v5454, %v5407
        %v5475 = vsel %vm599, %v5455, %v5409
        %v5476 = vsel %vm599, %v5456, %v5411
        %v5477 = vsel %vm599, %v5457, %v5413
        %v5478 = vsel %vm599, %v5458, %v5415
        %v5479 = vsel %vm599, %v5459, %v5417
        %v5480 = vsel %vm599, %v5460, %v5419
        %v5481 = vsel %vm599, %v5461, %v5421
        %5498 = vrot.lane.b32.xlu0 %v5464, 24
        %v5499 = vpop.permute.xlu0 %5498
        %5500 = vrot.lane.b32.xlu0 %v5465, 24
        %v5501 = vpop.permute.xlu0 %5500
        %5502 = vrot.lane.b32.xlu0 %v5466, 24
        %v5503 = vpop.permute.xlu0 %5502
        %5504 = vrot.lane.b32.xlu0 %v5467, 24
        %v5505 = vpop.permute.xlu0 %5504
        %5506 = vrot.lane.b32.xlu0 %v5468, 24
        %v5507 = vpop.permute.xlu0 %5506
        %5508 = vrot.lane.b32.xlu0 %v5469, 24
        %v5509 = vpop.permute.xlu0 %5508
        %5510 = vrot.lane.b32.xlu0 %v5470, 24
        %v5511 = vpop.permute.xlu0 %5510
        %5512 = vrot.lane.b32.xlu0 %v5471, 24
        %v5513 = vpop.permute.xlu0 %5512
        %5514 = vrot.lane.b32.xlu0 %v5472, 24
        %v5515 = vpop.permute.xlu0 %5514
        %5516 = vrot.lane.b32.xlu0 %v5473, 24
        %v5517 = vpop.permute.xlu0 %5516
        %5518 = vrot.lane.b32.xlu0 %v5474, 24
        %v5519 = vpop.permute.xlu0 %5518
        %5520 = vrot.lane.b32.xlu0 %v5475, 24
        %v5521 = vpop.permute.xlu0 %5520
        %5522 = vrot.lane.b32.xlu0 %v5476, 24
        %v5523 = vpop.permute.xlu0 %5522
        %5524 = vrot.lane.b32.xlu0 %v5477, 24
        %v5525 = vpop.permute.xlu0 %5524
        %5526 = vrot.lane.b32.xlu0 %v5478, 24
        %v5527 = vpop.permute.xlu0 %5526
        %5528 = vrot.lane.b32.xlu0 %v5479, 24
        %v5529 = vpop.permute.xlu0 %5528
        %5548 = vrot.lane.b32.xlu0 %v5466, 48
        %v5549 = vpop.permute.xlu0 %5548
        %5550 = vrot.lane.b32.xlu0 %v5467, 48
        %v5551 = vpop.permute.xlu0 %5550
        %5552 = vrot.lane.b32.xlu0 %v5468, 48
        %v5553 = vpop.permute.xlu0 %5552
        %5554 = vrot.lane.b32.xlu0 %v5469, 48
        %v5555 = vpop.permute.xlu0 %5554
        %5556 = vrot.lane.b32.xlu0 %v5470, 48
        %v5557 = vpop.permute.xlu0 %5556
        %5558 = vrot.lane.b32.xlu0 %v5471, 48
        %v5559 = vpop.permute.xlu0 %5558
        %5560 = vrot.lane.b32.xlu0 %v5472, 48
        %v5561 = vpop.permute.xlu0 %5560
        %5562 = vrot.lane.b32.xlu0 %v5473, 48
        %v5563 = vpop.permute.xlu0 %5562
        %5564 = vrot.lane.b32.xlu0 %v5474, 48
        %v5565 = vpop.permute.xlu0 %5564
        %5566 = vrot.lane.b32.xlu0 %v5475, 48
        %v5567 = vpop.permute.xlu0 %5566
        %5568 = vrot.lane.b32.xlu0 %v5476, 48
        %v5569 = vpop.permute.xlu0 %5568
        %5570 = vrot.lane.b32.xlu0 %v5477, 48
        %v5571 = vpop.permute.xlu0 %5570
        %5572 = vrot.lane.b32.xlu0 %v5478, 48
        %v5573 = vpop.permute.xlu0 %5572
        %5574 = vrot.lane.b32.xlu0 %v5479, 48
        %v5575 = vpop.permute.xlu0 %5574
        %5576 = vrot.lane.b32.xlu0 %v5480, 48
        %v5577 = vpop.permute.xlu0 %5576
        %5578 = vrot.lane.b32.xlu0 %v5481, 48
        %v5579 = vpop.permute.xlu0 %5578
        %v5596 = vsel %vm734, %v5462, %v5499
        %v5597 = vsel %vm734, %v5463, %v5501
        %v5598 = vsel %vm734, %v5464, %v5503
        %v5599 = vsel %vm734, %v5465, %v5505
        %v5600 = vsel %vm734, %v5466, %v5507
        %v5601 = vsel %vm734, %v5467, %v5509
        %v5602 = vsel %vm734, %v5468, %v5511
        %v5603 = vsel %vm734, %v5469, %v5513
        %v5604 = vsel %vm734, %v5470, %v5515
        %v5605 = vsel %vm734, %v5471, %v5517
        %v5606 = vsel %vm734, %v5472, %v5519
        %v5607 = vsel %vm734, %v5473, %v5521
        %v5608 = vsel %vm734, %v5474, %v5523
        %v5609 = vsel %vm734, %v5475, %v5525
        %v5610 = vsel %vm734, %v5476, %v5527
        %v5611 = vsel %vm734, %v5477, %v5529
        %v5612 = vsel %vm751, %v5596, %v5549
        %v5613 = vsel %vm751, %v5597, %v5551
        %v5614 = vsel %vm751, %v5598, %v5553
        %v5615 = vsel %vm751, %v5599, %v5555
        %v5616 = vsel %vm751, %v5600, %v5557
        %v5617 = vsel %vm751, %v5601, %v5559
        %v5618 = vsel %vm751, %v5602, %v5561
        %v5619 = vsel %vm751, %v5603, %v5563
        %v5620 = vsel %vm751, %v5604, %v5565
        %v5621 = vsel %vm751, %v5605, %v5567
        %v5622 = vsel %vm751, %v5606, %v5569
        %v5623 = vsel %vm751, %v5607, %v5571
        %v5624 = vsel %vm751, %v5608, %v5573
        %v5625 = vsel %vm751, %v5609, %v5575
        %v5626 = vsel %vm751, %v5610, %v5577
        %v5627 = vsel %vm751, %v5611, %v5579
        %v5628 = vld [vmem:[%s3] sm:$0xff]
        %v5629 = vld [vmem:[%s3 + $0x8] sm:$0xff]
        %v5630 = vld [vmem:[%s3 + $0x10] sm:$0xff]
        %v5631 = vld [vmem:[%s3 + $0x18] sm:$0xff]
        %v5632 = vld [vmem:[%s3 + $0x20] sm:$0xff]
        %v5633 = vld [vmem:[%s3 + $0x28] sm:$0xff]
        %v5634 = vld [vmem:[%s3 + $0x30] sm:$0xff]
        %v5635 = vld [vmem:[%s3 + $0x38] sm:$0xff]
        %v5636 = vld [vmem:[%s3 + $0x40] sm:$0xff]
        %v5653 = vrot.slane %v5612, 1
        %v5654 = vrot.slane %v5613, 1
        %v5655 = vsel %vm793, %v5653, %v5654
        %v5656 = vrot.slane %v5614, 1
        %v5657 = vrot.slane %v5615, 1
        %v5658 = vsel %vm793, %v5656, %v5657
        %v5659 = vrot.slane %v5616, 1
        %v5660 = vrot.slane %v5617, 1
        %v5661 = vsel %vm793, %v5659, %v5660
        %v5662 = vrot.slane %v5618, 1
        %v5663 = vrot.slane %v5619, 1
        %v5664 = vsel %vm793, %v5662, %v5663
        %v5665 = vrot.slane %v5620, 1
        %v5666 = vrot.slane %v5621, 1
        %v5667 = vsel %vm793, %v5665, %v5666
        %v5668 = vrot.slane %v5622, 1
        %v5669 = vrot.slane %v5623, 1
        %v5670 = vsel %vm793, %v5668, %v5669
        %v5671 = vrot.slane %v5624, 1
        %v5672 = vrot.slane %v5625, 1
        %v5673 = vsel %vm793, %v5671, %v5672
        %v5674 = vrot.slane %v5626, 1
        %v5675 = vrot.slane %v5627, 1
        %v5676 = vsel %vm793, %v5674, %v5675
        %v5677 = vld [vmem:[%s818] sm:$0xff]
        %v5678 = vld [vmem:[%s818 + $0x8] sm:$0xff]
        %v5679 = vld [vmem:[%s818 + $0x10] sm:$0xff]
        %v5680 = vld [vmem:[%s818 + $0x18] sm:$0xff]
        %v5681 = vld [vmem:[%s818 + $0x20] sm:$0xff]
        %v5682 = vld [vmem:[%s818 + $0x28] sm:$0xff]
        %v5683 = vld [vmem:[%s818 + $0x30] sm:$0xff]
        %v5684 = vld [vmem:[%s818 + $0x38] sm:$0xff]
        %v5685 = vld [vmem:[%s818 + $0x40] sm:$0xff]
        %v5686 = vsel %vm828, %v5655, 0
        %v5688 = vsel %vm828, %v5658, 0
        %v5690 = vsel %vm828, %v5661, 0
        %v5692 = vsel %vm828, %v5664, 0
        %v5694 = vsel %vm828, %v5667, 0
        %v5696 = vsel %vm828, %v5670, 0
        %v5698 = vsel %vm828, %v5673, 0
        %v5700 = vsel %vm828, %v5676, 0
        %5702 = vmatpush.msra.mxu0 0.0
        %5703 = vmatpush.msra.mxu0 0.0
        %5704 = vmatpush.msra.mxu0 0.0
        %5705 = vmatpush.msra.mxu0 0.0
        %5706 = vmatpush.msra.mxu0 0.0
        %5707 = vmatpush.msra.mxu0 0.0
        %5708 = vmatpush.msra.mxu0 0.0
        %5709 = vmatpush.msra.mxu0 %v5685
        %5710 = vmatpush.msra.mxu0 %v5684
        %5711 = vmatpush.msra.mxu0 %v5683
        %5712 = vmatpush.msra.mxu0 %v5682
        %5713 = vmatpush.msra.mxu0 %v5681
        %5714 = vmatpush.msra.mxu0 %v5680
        %5715 = vmatpush.msra.mxu0 %v5679
        %5716 = vmatpush.msra.mxu0 %v5678
        %5717 = vmatpush.msra.mxu0 %v5677
        %5718 = vmatmul.f32.gmra.mxu0 %v5686
        %v5719 = vpop.f32.mrf.mxu0
        %v5720 = vadd.f32 0.0, %v5719
        %5721 = vmatmul.f32.gmra.mxu0 %v5688
        %v5722 = vpop.f32.mrf.mxu0
        %v5723 = vadd.f32 0.0, %v5722
        %5724 = vmatmul.f32.gmra.mxu0 %v5690
        %v5725 = vpop.f32.mrf.mxu0
        %v5726 = vadd.f32 0.0, %v5725
        %5727 = vmatmul.f32.gmra.mxu0 %v5692
        %v5728 = vpop.f32.mrf.mxu0
        %v5729 = vadd.f32 0.0, %v5728
        %5730 = vmatmul.f32.gmra.mxu0 %v5694
        %v5731 = vpop.f32.mrf.mxu0
        %v5732 = vadd.f32 0.0, %v5731
        %5733 = vmatmul.f32.gmra.mxu0 %v5696
        %v5734 = vpop.f32.mrf.mxu0
        %v5735 = vadd.f32 0.0, %v5734
        %5736 = vmatmul.f32.gmra.mxu0 %v5698
        %v5737 = vpop.f32.mrf.mxu0
        %v5738 = vadd.f32 0.0, %v5737
        %5739 = vmatmul.f32.gmra.mxu0 %v5700
        %v5740 = vpop.f32.mrf.mxu0
        %v5741 = vadd.f32 0.0, %v5740
        %5742 = vdwg.mxu0
        %v5743 = vsel %vm828, %v5612, 0
        %v5745 = vsel %vm828, %v5614, 0
        %v5747 = vsel %vm828, %v5616, 0
        %v5749 = vsel %vm828, %v5618, 0
        %v5751 = vsel %vm828, %v5620, 0
        %v5753 = vsel %vm828, %v5622, 0
        %v5755 = vsel %vm828, %v5624, 0
        %v5757 = vsel %vm828, %v5626, 0
        %5759 = vmatpush.msra.mxu0 0.0
        %5760 = vmatpush.msra.mxu0 0.0
        %5761 = vmatpush.msra.mxu0 0.0
        %5762 = vmatpush.msra.mxu0 0.0
        %5763 = vmatpush.msra.mxu0 0.0
        %5764 = vmatpush.msra.mxu0 0.0
        %5765 = vmatpush.msra.mxu0 0.0
        %5766 = vmatpush.msra.mxu0 %v5636
        %5767 = vmatpush.msra.mxu0 %v5635
        %5768 = vmatpush.msra.mxu0 %v5634
        %5769 = vmatpush.msra.mxu0 %v5633
        %5770 = vmatpush.msra.mxu0 %v5632
        %5771 = vmatpush.msra.mxu0 %v5631
        %5772 = vmatpush.msra.mxu0 %v5630
        %5773 = vmatpush.msra.mxu0 %v5629
        %5774 = vmatpush.msra.mxu0 %v5628
        %5775 = vmatmul.f32.gmra.mxu0 %v5743
        %v5776 = vpop.f32.mrf.mxu0
        %v5777 = vadd.f32 %v5720, %v5776
        %5778 = vmatmul.f32.gmra.mxu0 %v5745
        %v5779 = vpop.f32.mrf.mxu0
        %v5780 = vadd.f32 %v5723, %v5779
        %5781 = vmatmul.f32.gmra.mxu0 %v5747
        %v5782 = vpop.f32.mrf.mxu0
        %v5783 = vadd.f32 %v5726, %v5782
        %5784 = vmatmul.f32.gmra.mxu0 %v5749
        %v5785 = vpop.f32.mrf.mxu0
        %v5786 = vadd.f32 %v5729, %v5785
        %5787 = vmatmul.f32.gmra.mxu0 %v5751
        %v5788 = vpop.f32.mrf.mxu0
        %v5789 = vadd.f32 %v5732, %v5788
        %5790 = vmatmul.f32.gmra.mxu0 %v5753
        %v5791 = vpop.f32.mrf.mxu0
        %v5792 = vadd.f32 %v5735, %v5791
        %5793 = vmatmul.f32.gmra.mxu0 %v5755
        %v5794 = vpop.f32.mrf.mxu0
        %v5795 = vadd.f32 %v5738, %v5794
        %5796 = vmatmul.f32.gmra.mxu0 %v5757
        %v5797 = vpop.f32.mrf.mxu0
        %v5798 = vadd.f32 %v5741, %v5797
        %5799 = vdwg.mxu0
        %v5800 = vrot.slane %v5612, 2
        %v5801 = vrot.slane %v5613, 2
        %v5802 = vsel %vm943, %v5800, %v5801
        %v5803 = vrot.slane %v5614, 2
        %v5804 = vrot.slane %v5615, 2
        %v5805 = vsel %vm943, %v5803, %v5804
        %v5806 = vrot.slane %v5616, 2
        %v5807 = vrot.slane %v5617, 2
        %v5808 = vsel %vm943, %v5806, %v5807
        %v5809 = vrot.slane %v5618, 2
        %v5810 = vrot.slane %v5619, 2
        %v5811 = vsel %vm943, %v5809, %v5810
        %v5812 = vrot.slane %v5620, 2
        %v5813 = vrot.slane %v5621, 2
        %v5814 = vsel %vm943, %v5812, %v5813
        %v5815 = vrot.slane %v5622, 2
        %v5816 = vrot.slane %v5623, 2
        %v5817 = vsel %vm943, %v5815, %v5816
        %v5818 = vrot.slane %v5624, 2
        %v5819 = vrot.slane %v5625, 2
        %v5820 = vsel %vm943, %v5818, %v5819
        %v5821 = vrot.slane %v5626, 2
        %v5822 = vrot.slane %v5627, 2
        %v5823 = vsel %vm943, %v5821, %v5822
        %v5824 = vld [vmem:[%s968] sm:$0xff]
        %v5825 = vld [vmem:[%s968 + $0x8] sm:$0xff]
        %v5826 = vld [vmem:[%s968 + $0x10] sm:$0xff]
        %v5827 = vld [vmem:[%s968 + $0x18] sm:$0xff]
        %v5828 = vld [vmem:[%s968 + $0x20] sm:$0xff]
        %v5829 = vld [vmem:[%s968 + $0x28] sm:$0xff]
        %v5830 = vld [vmem:[%s968 + $0x30] sm:$0xff]
        %v5831 = vld [vmem:[%s968 + $0x38] sm:$0xff]
        %v5832 = vld [vmem:[%s968 + $0x40] sm:$0xff]
        %v5833 = vsel %vm828, %v5802, 0
        %v5835 = vsel %vm828, %v5805, 0
        %v5837 = vsel %vm828, %v5808, 0
        %v5839 = vsel %vm828, %v5811, 0
        %v5841 = vsel %vm828, %v5814, 0
        %v5843 = vsel %vm828, %v5817, 0
        %v5845 = vsel %vm828, %v5820, 0
        %v5847 = vsel %vm828, %v5823, 0
        %5849 = vmatpush.msra.mxu0 0.0
        %5850 = vmatpush.msra.mxu0 0.0
        %5851 = vmatpush.msra.mxu0 0.0
        %5852 = vmatpush.msra.mxu0 0.0
        %5853 = vmatpush.msra.mxu0 0.0
        %5854 = vmatpush.msra.mxu0 0.0
        %5855 = vmatpush.msra.mxu0 0.0
        %5856 = vmatpush.msra.mxu0 %v5832
        %5857 = vmatpush.msra.mxu0 %v5831
        %5858 = vmatpush.msra.mxu0 %v5830
        %5859 = vmatpush.msra.mxu0 %v5829
        %5860 = vmatpush.msra.mxu0 %v5828
        %5861 = vmatpush.msra.mxu0 %v5827
        %5862 = vmatpush.msra.mxu0 %v5826
        %5863 = vmatpush.msra.mxu0 %v5825
        %5864 = vmatpush.msra.mxu0 %v5824
        %5865 = vmatmul.f32.gmra.mxu0 %v5833
        %v5866 = vpop.f32.mrf.mxu0
        %v5867 = vadd.f32 0.0, %v5866
        %5868 = vmatmul.f32.gmra.mxu0 %v5835
        %v5869 = vpop.f32.mrf.mxu0
        %v5870 = vadd.f32 0.0, %v5869
        %5871 = vmatmul.f32.gmra.mxu0 %v5837
        %v5872 = vpop.f32.mrf.mxu0
        %v5873 = vadd.f32 0.0, %v5872
        %5874 = vmatmul.f32.gmra.mxu0 %v5839
        %v5875 = vpop.f32.mrf.mxu0
        %v5876 = vadd.f32 0.0, %v5875
        %5877 = vmatmul.f32.gmra.mxu0 %v5841
        %v5878 = vpop.f32.mrf.mxu0
        %v5879 = vadd.f32 0.0, %v5878
        %5880 = vmatmul.f32.gmra.mxu0 %v5843
        %v5881 = vpop.f32.mrf.mxu0
        %v5882 = vadd.f32 0.0, %v5881
        %5883 = vmatmul.f32.gmra.mxu0 %v5845
        %v5884 = vpop.f32.mrf.mxu0
        %v5885 = vadd.f32 0.0, %v5884
        %5886 = vmatmul.f32.gmra.mxu0 %v5847
        %v5887 = vpop.f32.mrf.mxu0
        %v5888 = vadd.f32 0.0, %v5887
        %5889 = vdwg.mxu0
        %v5890 = vadd.f32 %v5777, %v5867
        %v5891 = vadd.f32 %v5780, %v5870
        %v5892 = vadd.f32 %v5783, %v5873
        %v5893 = vadd.f32 %v5786, %v5876
        %v5894 = vadd.f32 %v5789, %v5879
        %v5895 = vadd.f32 %v5792, %v5882
        %v5896 = vadd.f32 %v5795, %v5885
        %v5897 = vadd.f32 %v5798, %v5888
        %v5898 = vmax.f32 %v5890, 0.0
        %v5899 = vmax.f32 %v5891, 0.0
        %v5900 = vmax.f32 %v5892, 0.0
        %v5901 = vmax.f32 %v5893, 0.0
        %v5902 = vmax.f32 %v5894, 0.0
        %v5903 = vmax.f32 %v5895, 0.0
        %v5904 = vmax.f32 %v5896, 0.0
        %v5905 = vmax.f32 %v5897, 0.0
        %s5906 = scalar_lea.vmem %s305, 448 [#allocation2]
        %5907 = vst.msk [vmem:[%s5906] sm:$0xff] %vm599, %v5898
        %5908 = vst.msk [vmem:[%s5906 + $0x8] sm:$0xff] %vm599, %v5899
        %5909 = vst.msk [vmem:[%s5906 + $0x10] sm:$0xff] %vm599, %v5900
        %5910 = vst.msk [vmem:[%s5906 + $0x18] sm:$0xff] %vm599, %v5901
        %5911 = vst.msk [vmem:[%s5906 + $0x20] sm:$0xff] %vm599, %v5902
        %5912 = vst.msk [vmem:[%s5906 + $0x28] sm:$0xff] %vm599, %v5903
        %5913 = vst.msk [vmem:[%s5906 + $0x30] sm:$0xff] %vm599, %v5904
        %5914 = vst.msk [vmem:[%s5906 + $0x38] sm:$0xff] %vm599, %v5905
        %s5915 = sand.u32 %s153, 1
        %s5916 = scalar_lea.sflag [#allocation3], %s5915
        %s5917 = sand.u32 %s153, 1
        %s5918 = smul.addr %s5917, 512
        %s5919 = scalar_lea.vmem [#allocation2], %s5918
        // Predicated region
        $region37: #{_lambda_.3} parent=35 // pred_check
          %p5920 = pneg %p163
        $region38: #{_lambda_.3} parent=35 // pred_check_branch
          %5922 = sbr.rel (%p5920) target = $region40
        $region39: #{_lambda_.3} parent=35 // pred_region
          %s5923 = smul.u32 8, %s23
          %5925 = vsyncadd %s5916, 0
          %s5926 = smul.addr %s5923, 8
          %s5927 = smul.addr %s22, 64
          %s5928 = sadd.s32 %s5926, %s5927
          %s5929 = smul.addr %s5928, 8
          %s5930 = scalar_lea.hbm %s4, %s5929
          %s5931 = sshll.u32 %s5919, 4
          %s5932 = int_to_ptr.vmem [resolvable:$true] %s5931
          %s5933 = sshll.u32 %s5930, 4
          %s5934 = int_to_ptr.hbm [resolvable:$true] %s5933
          %5939 = dma.vmem_to_hbm [thread:$0]  %s5932, 8192, %s5934, %s5916, 128, 128, 8
        $region40: #{_lambda_.3} parent=35 // pred_fallthru
          _
      $region36: #{_lambda_.3} parent=5 // pred_fallthru
        _
      %p5940 = scmp.le.s32.totalorder 2, %s13
      // Predicated region
      $region41: #{_lambda_.3} parent=5 // pred_check
        %p5941 = pneg %p5940
      $region42: #{_lambda_.3} parent=5 // pred_check_branch
        %5943 = sbr.rel (%p5941) target = $region44
      $region43: #{_lambda_.3} parent=5 // pred_region
        %s5944 = ssub.s32 %s13, 2
        // Predicated region
        $region45: #{_lambda_.3} parent=43 // pred_check
          %p5945 = pneg %p169
        $region46: #{_lambda_.3} parent=43 // pred_check_branch
          %5947 = sbr.rel (%p5945) target = $region48
        $region47: #{_lambda_.3} parent=43 // pred_region
          %s5948 = sand.u32 %s154, 1
          %s5949 = scalar_lea.sflag [#allocation3], %s5948
          %s5950 = sand.u32 %s154, 1
          %s5951 = smul.addr %s5950, 512
          %s5952 = scalar_lea.vmem [#allocation2], %s5951
          %5954 = dma.done %s5949, 8192
        $region48: #{_lambda_.3} parent=43 // pred_fallthru
          _
      $region44: #{_lambda_.3} parent=5 // pred_fallthru
        _
    $region6: #{_lambda_.3} parent=1 // loop_footer
      %s17 = sadd.s32 1, %s13
    $region7: #{_lambda_.3} parent=1 // loop_footer_branch
      %12 = sbr.rel target = $region3
    $region8: #{_lambda_.3} parent=1 // loop_exit
      _
    %5955 = vsyncpa [#allocation3], 1
    %s5956 = scalar_lea.sflag [#allocation3], 1
    %5957 = vsyncpa %s5956, 1

</llo_original>
